<compile_context>
chip_gen: v6e
topology: v6e:2x2x1
jax: 0.10.0
libtpu: 0.0.40
codegen_flags: <defaults>
</compile_context>

<pallas_src>
import functools

import jax
import jax.numpy as jnp
from jax.experimental import pallas as pl
from jax.experimental.pallas import tpu as pltpu

LANE = 128
_VMEM_LIMIT = 48 * 1024 * 1024  # fits v5e/v6e/v7x physical VMEM with headroom


def _round_up(x, m):
    return ((x + m - 1) // m) * m


# ----------------------------------------------------------------------------
# Kernel 1: fused 3x3 stride-1 conv (fast path, requires W % 8 == 0).
#   grid = (row_tiles, 3)  -- kh tap is the (last, "arbitrary") reduction axis.
#   Per kh step: 3 large matmuls (one per kw tap) over the whole row tile.
# ----------------------------------------------------------------------------
def _conv3x3_s1_kernel(x_ref, w_ref, b_ref, o_ref, acc_ref, *, valid_rows,
                       apply_sigmoid):
    kh = pl.program_id(1)

    @pl.when(kh == 0)
    def _init():
        acc_ref[...] = jnp.zeros_like(acc_ref)

    x = x_ref[...]                               # (TRWp, Cin_p) bf16
    L = valid_rows                               # multiple of 8
    acc = acc_ref[0:L, :]
    acc = acc + jnp.dot(x[0:L, :], w_ref[0],
                        preferred_element_type=jnp.float32)
    acc = acc + jnp.dot(x[1:L + 1, :], w_ref[1],
                        preferred_element_type=jnp.float32)
    acc = acc + jnp.dot(x[2:L + 2, :], w_ref[2],
                        preferred_element_type=jnp.float32)
    acc_ref[0:L, :] = acc

    @pl.when(kh == pl.num_programs(1) - 1)
    def _finalize():
        y = acc_ref[...] + b_ref[...]            # f32 bias add
        if apply_sigmoid:
            y = jax.nn.sigmoid(y)
        o_ref[...] = y.astype(o_ref.dtype)


def _conv3x3_s1_fused(x, w, b, apply_sigmoid, out_dtype):
    """3x3, stride-1, pad-1 conv (W % 8 == 0).  x: (N,H,W,Cin) -> (N,H,W,Cout)."""
    N, H, W, Cin = x.shape
    Cout = w.shape[0]
    Coutp = _round_up(Cout, LANE)          # lane-dense output stores
    Cin_p = _round_up(Cin, 8)              # avoid degenerate K (e.g. Cin=1)
    Hout, Wout = H, W
    Wp = Wout + 8                          # left pad 1, right pad 7 (>=8 junk tail rows)
    R = N * Hout

    xb = x.astype(jnp.bfloat16)
    xp = jnp.pad(xb, ((0, 0), (1, 1), (1, 7), (0, Cin_p - Cin)))
    # Three row-tap (kh) views only; kw handled by in-kernel shifted slices.
    xt = jnp.stack([xp[:, kh:kh + Hout, :, :] for kh in range(3)], axis=0)
    xt = xt.reshape(3, R * Wp, Cin_p)

    # (Cout, Cin, 3, 3) -> (kh, kw, Cin_p, Coutp), bf16, zero padded.
    wt = jnp.transpose(w, (2, 3, 1, 0)).astype(jnp.bfloat16)
    wt = jnp.pad(wt, ((0, 0), (0, 0), (0, Cin_p - Cin), (0, Coutp - Cout)))
    bp = jnp.pad(b.astype(jnp.float32), (0, Coutp - Cout)).reshape(1, Coutp)

    # Rows of the original image per grid step; TR*Wp is a multiple of 8 (Wp % 8 == 0).
    acc_budget = 8 * 1024 * 1024
    tr = max(1, min(R, max(1, 4096 // Wp),
                    max(1, acc_budget // (Wp * Coutp * 4))))
    trwp = tr * Wp
    valid = trwp - 8                       # last valid output row index is trwp - 9
    num_row_tiles = pl.cdiv(R, tr)
    grid = (num_row_tiles, 3)

    out_itemsize = jnp.dtype(out_dtype).itemsize
    cost = pl.CostEstimate(
        flops=2 * R * Wp * 9 * Cin_p * Coutp,
        transcendentals=R * Wout * Coutp if apply_sigmoid else 0,
        bytes_accessed=(xt.size * 2 + num_row_tiles * 9 * Cin_p * Coutp * 2
                        + R * Wp * Coutp * out_itemsize),
    )

    kernel = functools.partial(_conv3x3_s1_kernel, valid_rows=valid,
                               apply_sigmoid=apply_sigmoid)
    out = pl.pallas_call(
        kernel,
        out_shape=jax.ShapeDtypeStruct((R * Wp, Coutp), out_dtype),
        grid=grid,
        in_specs=[
            # row-tile of tap kh (flattened rows of padded width)
            pl.BlockSpec((None, trwp, Cin_p), lambda rt, kh: (kh, rt, 0)),
            # weights for tap kh: (3 kw, Cin_p, Coutp), VMEM-resident
            pl.BlockSpec((None, 3, Cin_p, Coutp), lambda rt, kh: (kh, 0, 0, 0)),
            # bias (resident)
            pl.BlockSpec((1, Coutp), lambda rt, kh: (0, 0)),
        ],
        out_specs=pl.BlockSpec((trwp, Coutp), lambda rt, kh: (rt, 0)),
        scratch_shapes=[pltpu.VMEM((trwp, Coutp), jnp.float32)],
        compiler_params=pltpu.CompilerParams(
            dimension_semantics=("parallel", "arbitrary"),
            vmem_limit_bytes=_VMEM_LIMIT),
        cost_estimate=cost,
    )(xt, wt, bp)

    out = out.reshape(N, Hout, Wp, Coutp)
    return out[:, :, :Wout, :Cout]


# ----------------------------------------------------------------------------
# Kernel 2: tiled matmul + bias (+ optional fused sigmoid), bf16 in / f32 acc.
# Used for stride-2 "pool" convs, the tiny low-res stride-1 convs, and deconvs.
# ----------------------------------------------------------------------------
def _matmul_bias_kernel(lhs_ref, rhs_ref, b_ref, o_ref, *, apply_sigmoid):
    acc = jnp.dot(lhs_ref[...], rhs_ref[...],
                  preferred_element_type=jnp.float32)
    acc = acc + b_ref[...]
    if apply_sigmoid:
        acc = jax.nn.sigmoid(acc)
    o_ref[...] = acc.astype(o_ref.dtype)


def matmul_bias(lhs, rhs, bias, apply_sigmoid=False, out_dtype=jnp.bfloat16,
                tile_m=512):
    """lhs: (M, K), rhs: (K, N), bias: (N,) -> (M, N)."""
    M, K = lhs.shape
    Nl = rhs.shape[1]
    Np = _round_up(Nl, LANE)        # lane-dense output
    Mp = _round_up(M, 8)            # minimal sublane pad only (usually no-op)

    lhs_b = lhs.astype(jnp.bfloat16)
    if Mp != M:
        lhs_b = jnp.pad(lhs_b, ((0, Mp - M), (0, 0)))
    rhs_b = rhs.astype(jnp.bfloat16)
    if Np != Nl:
        rhs_b = jnp.pad(rhs_b, ((0, 0), (0, Np - Nl)))
    bp = jnp.pad(bias.astype(jnp.float32), (0, Np - Nl)).reshape(1, Np)

    tm = min(tile_m, Mp)
    grid = (pl.cdiv(Mp, tm),)

    out_itemsize = jnp.dtype(out_dtype).itemsize
    cost = pl.CostEstimate(
        flops=2 * Mp * K * Np,
        transcendentals=Mp * Np if apply_sigmoid else 0,
        bytes_accessed=Mp * K * 2 + K * Np * 2 + Np * 4 + Mp * Np * out_itemsize,
    )

    out = pl.pallas_call(
        functools.partial(_matmul_bias_kernel, apply_sigmoid=apply_sigmoid),
        out_shape=jax.ShapeDtypeStruct((Mp, Np), out_dtype),
        grid=grid,
        in_specs=[
            pl.BlockSpec((tm, K), lambda i: (i, 0)),   # lhs tile over M
            pl.BlockSpec((K, Np), lambda i: (0, 0)),   # rhs resident (bf16)
            pl.BlockSpec((1, Np), lambda i: (0, 0)),   # bias resident
        ],
        out_specs=pl.BlockSpec((tm, Np), lambda i: (i, 0)),
        compiler_params=pltpu.CompilerParams(
            dimension_semantics=("parallel",),
            vmem_limit_bytes=_VMEM_LIMIT),
        cost_estimate=cost,
    )(lhs_b, rhs_b, bp)
    return out[:M, :Nl]


# ----------------------------------------------------------------------------
# Conv2d 3x3 dispatch (PyTorch weight layout (Cout, Cin, 3, 3))
# ----------------------------------------------------------------------------
def conv2d_3x3(x, w, b, stride=1, apply_sigmoid=False, out_dtype=jnp.bfloat16):
    if stride == 1 and x.shape[2] % 8 == 0:
        return _conv3x3_s1_fused(x, w, b, apply_sigmoid, out_dtype)
    return _conv3x3_im2col(x, w, b, stride, apply_sigmoid, out_dtype)


def _conv3x3_im2col(x, w, b, stride, apply_sigmoid, out_dtype):
    # Stride-2 "pool" convs (output 4x smaller) and tiny low-res stride-1 convs:
    # a bf16 im2col is cheap here and keeps the tap gather out of the kernel.
    N, H, W, Cin = x.shape
    Cout = w.shape[0]
    p = 1
    Hout = (H + 2 * p - 3) // stride + 1
    Wout = (W + 2 * p - 3) // stride + 1
    xp = jnp.pad(x.astype(jnp.bfloat16), ((0, 0), (p, p), (p, p), (0, 0)))
    cols = []
    for kh in range(3):
        for kw in range(3):
            sl = jax.lax.slice(
                xp, (0, kh, kw, 0),
                (N, kh + stride * (Hout - 1) + 1,
                 kw + stride * (Wout - 1) + 1, Cin),
                (1, stride, stride, 1))
            cols.append(sl)
    patches = jnp.concatenate(cols, axis=-1).reshape(N * Hout * Wout, 9 * Cin)
    rhs = jnp.transpose(w, (2, 3, 1, 0)).reshape(9 * Cin, Cout)
    y = matmul_bias(patches, rhs, b, apply_sigmoid=apply_sigmoid,
                    out_dtype=out_dtype)
    return y.reshape(N, Hout, Wout, Cout)


# ----------------------------------------------------------------------------
# ConvTranspose2d k=2, s=2, pad=0 (PyTorch weight layout (Cin, Cout, 2, 2))
# ----------------------------------------------------------------------------
def deconv2d_2x2(x, w, b, out_dtype=jnp.bfloat16):
    """x: (N, H, W, Cin) -> (N, 2H, 2W, Cout). Non-overlapping => one matmul."""
    N, H, W, Cin = x.shape
    Cout = w.shape[1]
    lhs = x.reshape(N * H * W, Cin)
    rhs = jnp.transpose(w, (0, 2, 3, 1)).reshape(Cin, 4 * Cout)
    bias_full = jnp.tile(b, 4)
    y = matmul_bias(lhs, rhs, bias_full, apply_sigmoid=False,
                    out_dtype=out_dtype)          # (M, 4*Cout)
    # TODO(synk): fuse this 2x2 pixel interleave into the kernel's store path.
    y = y.reshape(N, H, W, 2, 2, Cout)
    y = jnp.transpose(y, (0, 1, 3, 2, 4, 5)).reshape(N, 2 * H, 2 * W, Cout)
    return y


# ----------------------------------------------------------------------------
# Parameter init (deterministic, synthetic)
# ----------------------------------------------------------------------------
def init_params(key, in_planes, channels, num_hologram):
    params = {}

    def conv_p(key, cin, cout):
        k1, k2 = jax.random.split(key)
        w = jax.random.normal(k1, (cout, cin, 3, 3), jnp.float32) * 0.1
        b = jax.random.normal(k2, (cout,), jnp.float32) * 0.1
        return {"w": w, "b": b}

    def deconv_p(key, cin, cout):
        k1, k2 = jax.random.split(key)
        w = jax.random.normal(k1, (cin, cout, 2, 2), jnp.float32) * 0.1
        b = jax.random.normal(k2, (cout,), jnp.float32) * 0.1
        return {"w": w, "b": b}

    ch = channels
    layer_defs = [
        ("enc1_1", "c", in_planes, ch[0]), ("enc1_2", "c", ch[0], ch[0]), ("pool1", "c", ch[0], ch[0]),
        ("enc2_1", "c", ch[0], ch[1]), ("enc2_2", "c", ch[1], ch[1]), ("pool2", "c", ch[1], ch[1]),
        ("enc3_1", "c", ch[1], ch[2]), ("enc3_2", "c", ch[2], ch[2]), ("pool3", "c", ch[2], ch[2]),
        ("enc4_1", "c", ch[2], ch[3]), ("enc4_2", "c", ch[3], ch[3]), ("pool4", "c", ch[3], ch[3]),
        ("enc5_1", "c", ch[3], ch[4]), ("enc5_2", "c", ch[4], ch[4]),
        ("deconv4", "d", ch[4], ch[3]), ("dec4_1", "c", ch[4], ch[3]), ("dec4_2", "c", ch[3], ch[3]),
        ("deconv3", "d", ch[3], ch[2]), ("dec3_1", "c", ch[3], ch[2]), ("dec3_2", "c", ch[2], ch[2]),
        ("deconv2", "d", ch[2], ch[1]), ("dec2_1", "c", ch[2], ch[1]), ("dec2_2", "c", ch[1], ch[1]),
        ("deconv1", "d", ch[1], ch[0]), ("dec1_1", "c", ch[1], ch[0]), ("dec1_2", "c", ch[0], ch[0]),
        ("classifier", "c", ch[0], num_hologram),
    ]
    keys = jax.random.split(key, len(layer_defs))
    for k, (name, kind, cin, cout) in zip(keys, layer_defs):
        params[name] = conv_p(k, cin, cout) if kind == "c" else deconv_p(k, cin, cout)
    return params


# ----------------------------------------------------------------------------
# Forward pass (matches BinaryNet with all ReLU/BN flags = False)
# ----------------------------------------------------------------------------
def binary_net_forward(params, x_nchw):
    x = jnp.transpose(x_nchw, (0, 2, 3, 1))   # NCHW -> NHWC

    def c(name, z, stride=1, sig=False, out_dtype=jnp.bfloat16):
        p = params[name]
        return conv2d_3x3(z, p["w"], p["b"], stride=stride,
                          apply_sigmoid=sig, out_dtype=out_dtype)

    def d(name, z):
        p = params[name]
        return deconv2d_2x2(z, p["w"], p["b"])

    enc1_1 = c("enc1_1", x)
    enc1_2 = c("enc1_2", enc1_1)
    pool1 = c("pool1", enc1_2, stride=2)
    enc2_1 = c("enc2_1", pool1)
    enc2_2 = c("enc2_2", enc2_1)
    pool2 = c("pool2", enc2_2, stride=2)
    enc3_1 = c("enc3_1", pool2)
    enc3_2 = c("enc3_2", enc3_1)
    pool3 = c("pool3", enc3_2, stride=2)
    enc4_1 = c("enc4_1", pool3)
    enc4_2 = c("enc4_2", enc4_1)
    pool4 = c("pool4", enc4_2, stride=2)
    enc5_1 = c("enc5_1", pool4)
    enc5_2 = c("enc5_2", enc5_1)

    deconv4 = d("deconv4", enc5_2)
    concat4 = jnp.concatenate((deconv4, enc4_2), axis=-1)   # torch.cat dim=1
    dec4_1 = c("dec4_1", concat4)
    dec4_2 = c("dec4_2", dec4_1)

    deconv3 = d("deconv3", dec4_2)
    concat3 = jnp.concatenate((deconv3, enc3_2), axis=-1)
    dec3_1 = c("dec3_1", concat3)
    dec3_2 = c("dec3_2", dec3_1)

    deconv2 = d("deconv2", dec3_2)
    concat2 = jnp.concatenate((deconv2, enc2_2), axis=-1)
    dec2_1 = c("dec2_1", concat2)
    dec2_2 = c("dec2_2", dec2_1)

    deconv1 = d("deconv1", dec2_2)
    concat1 = jnp.concatenate((deconv1, enc1_2), axis=-1)
    dec1_1 = c("dec1_1", concat1)
    dec1_2 = c("dec1_2", dec1_1)

    # classifier: conv + fused in-kernel Sigmoid, f32 output.
    out = c("classifier", dec1_2, sig=True, out_dtype=jnp.float32)
    return jnp.transpose(out, (0, 3, 1, 2))                 # back to NCHW


# ----------------------------------------------------------------------------
if __name__ == "__main__":
    # Small shapes consistent with the module: batch=1, in_planes=1, spatial=16,
    # channels scaled down to [4, 8, 16, 32, 64], num_hologram=8.
    batch, in_planes, spatial = 1, 1, 16
    channels = [4, 8, 16, 32, 64]
    num_hologram = 8

    key = jax.random.PRNGKey(0)
    k_params, k_x = jax.random.split(key)
    params = init_params(k_params, in_planes, channels, num_hologram)
    x = jax.random.normal(k_x, (batch, in_planes, spatial, spatial), jnp.float32)

    fwd = jax.jit(binary_net_forward)
    out = fwd(params, x)
    out = jax.block_until_ready(out)

    assert out.shape == (batch, num_hologram, spatial, spatial), out.shape
    assert bool(jnp.all(jnp.isfinite(out)))
    assert bool(jnp.all((out >= 0.0) & (out <= 1.0)))  # sigmoid range
    print("KERNEL_OK")
</pallas_src>

<mosaic_0001>
module attributes {stable_mosaic.version = 11 : i64} {
  func.func @_conv3x3_s1_kernel(%arg0: i32, %arg1: i32, %arg2: memref<1x384x8xbf16, #tpu.memory_space<vmem>>, %arg3: memref<1x3x8x128xbf16, #tpu.memory_space<vmem>>, %arg4: memref<1x128xf32, #tpu.memory_space<vmem>>, %arg5: memref<384x128xbf16, #tpu.memory_space<vmem>>, %arg6: memref<384x128xf32, #tpu.memory_space<vmem>>) attributes {dimension_semantics = [#tpu.dimension_semantics<parallel>, #tpu.dimension_semantics<arbitrary>], iteration_bounds = array<i64: 1, 3>, scalar_prefetch = 0 : i64, scratch_operands = 1 : i64, tpu.core_type = #tpu.core_type<tc>, window_params = [{transform_indices = @transform_0, window_bounds = array<i64: 1, 384, 8>}, {transform_indices = @transform_1, window_bounds = array<i64: 1, 3, 8, 128>}, {pipeline_mode = #tpu.pipeline_mode<synchronous>, transform_indices = @transform_2, window_bounds = array<i64: 1, 128>}, {transform_indices = @transform_3, window_bounds = array<i64: 384, 128>}]} {
    %c0_i32 = arith.constant 0 : i32
    %0 = arith.cmpi eq, %arg1, %c0_i32 : i32
    %1 = arith.extui %0 : i1 to i32
    %c0_i32_0 = arith.constant 0 : i32
    %2 = arith.cmpi ne, %1, %c0_i32_0 : i32
    scf.if %2 {
      %cst_20 = arith.constant 0.000000e+00 : f32
      %25 = vector.broadcast %cst_20 : f32 to vector<384x128xf32>
      %c0_21 = arith.constant 0 : index
      %c0_22 = arith.constant 0 : index
      %26 = vector.load %arg6[%c0_21, %c0_22] : memref<384x128xf32, #tpu.memory_space<vmem>>, vector<384x128xf32>
      tpu.vector_store %arg6[%c0_21, %c0_22], %25 {strides = array<i32>} : memref<384x128xf32, #tpu.memory_space<vmem>>, vector<384x128xf32>,
    } else {
    }
    %c0 = arith.constant 0 : index
    %c0_1 = arith.constant 0 : index
    %c0_2 = arith.constant 0 : index
    %3 = vector.load %arg2[%c0, %c0_1, %c0_2] : memref<1x384x8xbf16, #tpu.memory_space<vmem>>, vector<1x384x8xbf16>
    %4 = vector.shape_cast %3 : vector<1x384x8xbf16> to vector<384x8xbf16>
    %c0_3 = arith.constant 0 : index
    %c0_4 = arith.constant 0 : index
    %5 = vector.load %arg6[%c0_3, %c0_4] : memref<384x128xf32, #tpu.memory_space<vmem>>, vector<376x128xf32>
    %6 = vector.extract_strided_slice %4 {offsets = [0, 0], sizes = [376, 8], strides = [1, 1]} : vector<384x8xbf16> to vector<376x8xbf16>
    %c0_5 = arith.constant 0 : index
    %c0_6 = arith.constant 0 : index
    %c0_7 = arith.constant 0 : index
    %c0_8 = arith.constant 0 : index
    %7 = vector.load %arg3[%c0_5, %c0_6, %c0_7, %c0_8] : memref<1x3x8x128xbf16, #tpu.memory_space<vmem>>, vector<1x1x8x128xbf16>
    %8 = vector.shape_cast %7 : vector<1x1x8x128xbf16> to vector<8x128xbf16>
    %cst = arith.constant dense<0.000000e+00> : vector<376x128xf32>
    %9 = tpu.matmul %6, %8, %cst {dimension_numbers = #tpu.dot_dimension_numbers<[1], [0], [0], [1], [0, 0, 1, 1], [], []>} : vector<376x8xbf16>, vector<8x128xbf16>, vector<376x128xf32> -> vector<376x128xf32>
    %10 = arith.addf %5, %9 : vector<376x128xf32>
    %11 = vector.extract_strided_slice %4 {offsets = [1, 0], sizes = [376, 8], strides = [1, 1]} : vector<384x8xbf16> to vector<376x8xbf16>
    %c0_9 = arith.constant 0 : index
    %c1 = arith.constant 1 : index
    %c0_10 = arith.constant 0 : index
    %c0_11 = arith.constant 0 : index
    %12 = vector.load %arg3[%c0_9, %c1, %c0_10, %c0_11] : memref<1x3x8x128xbf16, #tpu.memory_space<vmem>>, vector<1x1x8x128xbf16>
    %13 = vector.shape_cast %12 : vector<1x1x8x128xbf16> to vector<8x128xbf16>
    %cst_12 = arith.constant dense<0.000000e+00> : vector<376x128xf32>
    %14 = tpu.matmul %11, %13, %cst_12 {dimension_numbers = #tpu.dot_dimension_numbers<[1], [0], [0], [1], [0, 0, 1, 1], [], []>} : vector<376x8xbf16>, vector<8x128xbf16>, vector<376x128xf32> -> vector<376x128xf32>
    %15 = arith.addf %10, %14 : vector<376x128xf32>
    %16 = vector.extract_strided_slice %4 {offsets = [2, 0], sizes = [376, 8], strides = [1, 1]} : vector<384x8xbf16> to vector<376x8xbf16>
    %c0_13 = arith.constant 0 : index
    %c2 = arith.constant 2 : index
    %c0_14 = arith.constant 0 : index
    %c0_15 = arith.constant 0 : index
    %17 = vector.load %arg3[%c0_13, %c2, %c0_14, %c0_15] : memref<1x3x8x128xbf16, #tpu.memory_space<vmem>>, vector<1x1x8x128xbf16>
    %18 = vector.shape_cast %17 : vector<1x1x8x128xbf16> to vector<8x128xbf16>
    %cst_16 = arith.constant dense<0.000000e+00> : vector<376x128xf32>
    %19 = tpu.matmul %16, %18, %cst_16 {dimension_numbers = #tpu.dot_dimension_numbers<[1], [0], [0], [1], [0, 0, 1, 1], [], []>} : vector<376x8xbf16>, vector<8x128xbf16>, vector<376x128xf32> -> vector<376x128xf32>
    %20 = arith.addf %15, %19 : vector<376x128xf32>
    %c0_17 = arith.constant 0 : index
    %c0_18 = arith.constant 0 : index
    %21 = vector.load %arg6[%c0_17, %c0_18] : memref<384x128xf32, #tpu.memory_space<vmem>>, vector<376x128xf32>
    tpu.vector_store %arg6[%c0_17, %c0_18], %20 {strides = array<i32>} : memref<384x128xf32, #tpu.memory_space<vmem>>, vector<376x128xf32>,
    %c2_i32 = arith.constant 2 : i32
    %22 = arith.cmpi eq, %arg1, %c2_i32 : i32
    %23 = arith.extui %22 : i1 to i32
    %c0_i32_19 = arith.constant 0 : i32
    %24 = arith.cmpi ne, %23, %c0_i32_19 : i32
    scf.if %24 {
      %c0_20 = arith.constant 0 : index
      %c0_21 = arith.constant 0 : index
      %25 = vector.load %arg6[%c0_20, %c0_21] : memref<384x128xf32, #tpu.memory_space<vmem>>, vector<384x128xf32>
      %c0_22 = arith.constant 0 : index
      %c0_23 = arith.constant 0 : index
      %26 = vector.load %arg4[%c0_22, %c0_23] : memref<1x128xf32, #tpu.memory_space<vmem>>, vector<1x128xf32>
      %27 = vector.broadcast %26 : vector<1x128xf32> to vector<384x128xf32>
      %28 = arith.addf %25, %27 : vector<384x128xf32>
      %29 = arith.truncf %28 : vector<384x128xf32> to vector<384x128xbf16>
      %c0_24 = arith.constant 0 : index
      %c0_25 = arith.constant 0 : index
      %30 = vector.load %arg5[%c0_24, %c0_25] : memref<384x128xbf16, #tpu.memory_space<vmem>>, vector<384x128xbf16>
      tpu.vector_store %arg5[%c0_24, %c0_25], %29 {strides = array<i32>} : memref<384x128xbf16, #tpu.memory_space<vmem>>, vector<384x128xbf16>,
    } else {
    }
    return
  }
  func.func @transform_0(%arg0: i32, %arg1: i32) -> (i32, i32, i32) {
    %c0_i32 = arith.constant 0 : i32
    %c0_i32_0 = arith.constant 0 : i32
    return %arg1, %arg0, %c0_i32 : i32, i32, i32
  }
  func.func @transform_1(%arg0: i32, %arg1: i32) -> (i32, i32, i32, i32) {
    %c0_i32 = arith.constant 0 : i32
    %c0_i32_0 = arith.constant 0 : i32
    %c0_i32_1 = arith.constant 0 : i32
    %c0_i32_2 = arith.constant 0 : i32
    return %arg1, %c0_i32, %c0_i32_0, %c0_i32_1 : i32, i32, i32, i32
  }
  func.func @transform_2(%arg0: i32, %arg1: i32) -> (i32, i32) {
    %c0_i32 = arith.constant 0 : i32
    %c0_i32_0 = arith.constant 0 : i32
    %c0_i32_1 = arith.constant 0 : i32
    return %c0_i32, %c0_i32_0 : i32, i32
  }
  func.func @transform_3(%arg0: i32, %arg1: i32) -> (i32, i32) {
    %c0_i32 = arith.constant 0 : i32
    %c0_i32_0 = arith.constant 0 : i32
    return %arg0, %c0_i32 : i32, i32
  }
}

module attributes {stable_mosaic.version = 11 : i64} {
  func.func @_matmul_bias_kernel(%arg0: i32, %arg1: memref<64x36xbf16, #tpu.memory_space<vmem>>, %arg2: memref<36x128xbf16, #tpu.memory_space<vmem>>, %arg3: memref<1x128xf32, #tpu.memory_space<vmem>>, %arg4: memref<64x128xbf16, #tpu.memory_space<vmem>>) attributes {dimension_semantics = [#tpu.dimension_semantics<parallel>], iteration_bounds = array<i64: 1>, scalar_prefetch = 0 : i64, scratch_operands = 0 : i64, tpu.core_type = #tpu.core_type<tc>, window_params = [{transform_indices = @transform_0, window_bounds = array<i64: 64, 36>}, {pipeline_mode = #tpu.pipeline_mode<synchronous>, transform_indices = @transform_1, window_bounds = array<i64: 36, 128>}, {pipeline_mode = #tpu.pipeline_mode<synchronous>, transform_indices = @transform_2, window_bounds = array<i64: 1, 128>}, {transform_indices = @transform_3, window_bounds = array<i64: 64, 128>}]} {
    %c0 = arith.constant 0 : index
    %c0_0 = arith.constant 0 : index
    %0 = vector.load %arg1[%c0, %c0_0] : memref<64x36xbf16, #tpu.memory_space<vmem>>, vector<64x36xbf16>
    %c0_1 = arith.constant 0 : index
    %c0_2 = arith.constant 0 : index
    %1 = vector.load %arg2[%c0_1, %c0_2] : memref<36x128xbf16, #tpu.memory_space<vmem>>, vector<36x128xbf16>
    %cst = arith.constant dense<0.000000e+00> : vector<64x128xf32>
    %2 = tpu.matmul %0, %1, %cst {dimension_numbers = #tpu.dot_dimension_numbers<[1], [0], [0], [1], [0, 0, 1, 1], [], []>} : vector<64x36xbf16>, vector<36x128xbf16>, vector<64x128xf32> -> vector<64x128xf32>
    %c0_3 = arith.constant 0 : index
    %c0_4 = arith.constant 0 : index
    %3 = vector.load %arg3[%c0_3, %c0_4] : memref<1x128xf32, #tpu.memory_space<vmem>>, vector<1x128xf32>
    %4 = vector.broadcast %3 : vector<1x128xf32> to vector<64x128xf32>
    %5 = arith.addf %2, %4 : vector<64x128xf32>
    %6 = arith.truncf %5 : vector<64x128xf32> to vector<64x128xbf16>
    %c0_5 = arith.constant 0 : index
    %c0_6 = arith.constant 0 : index
    %7 = vector.load %arg4[%c0_5, %c0_6] : memref<64x128xbf16, #tpu.memory_space<vmem>>, vector<64x128xbf16>
    tpu.vector_store %arg4[%c0_5, %c0_6], %6 {strides = array<i32>} : memref<64x128xbf16, #tpu.memory_space<vmem>>, vector<64x128xbf16>,
    return
  }
  func.func @transform_0(%arg0: i32) -> (i32, i32) {
    %c0_i32 = arith.constant 0 : i32
    %c0_i32_0 = arith.constant 0 : i32
    return %arg0, %c0_i32 : i32, i32
  }
  func.func @transform_1(%arg0: i32) -> (i32, i32) {
    %c0_i32 = arith.constant 0 : i32
    %c0_i32_0 = arith.constant 0 : i32
    %c0_i32_1 = arith.constant 0 : i32
    return %c0_i32, %c0_i32_0 : i32, i32
  }
  func.func @transform_2(%arg0: i32) -> (i32, i32) {
    %c0_i32 = arith.constant 0 : i32
    %c0_i32_0 = arith.constant 0 : i32
    %c0_i32_1 = arith.constant 0 : i32
    return %c0_i32, %c0_i32_0 : i32, i32
  }
  func.func @transform_3(%arg0: i32) -> (i32, i32) {
    %c0_i32 = arith.constant 0 : i32
    %c0_i32_0 = arith.constant 0 : i32
    return %arg0, %c0_i32 : i32, i32
  }
}

module attributes {stable_mosaic.version = 11 : i64} {
  func.func @_conv3x3_s1_kernel(%arg0: i32, %arg1: i32, %arg2: memref<1x128x8xbf16, #tpu.memory_space<vmem>>, %arg3: memref<1x3x8x128xbf16, #tpu.memory_space<vmem>>, %arg4: memref<1x128xf32, #tpu.memory_space<vmem>>, %arg5: memref<128x128xbf16, #tpu.memory_space<vmem>>, %arg6: memref<128x128xf32, #tpu.memory_space<vmem>>) attributes {dimension_semantics = [#tpu.dimension_semantics<parallel>, #tpu.dimension_semantics<arbitrary>], iteration_bounds = array<i64: 1, 3>, scalar_prefetch = 0 : i64, scratch_operands = 1 : i64, tpu.core_type = #tpu.core_type<tc>, window_params = [{transform_indices = @transform_0, window_bounds = array<i64: 1, 128, 8>}, {transform_indices = @transform_1, window_bounds = array<i64: 1, 3, 8, 128>}, {pipeline_mode = #tpu.pipeline_mode<synchronous>, transform_indices = @transform_2, window_bounds = array<i64: 1, 128>}, {transform_indices = @transform_3, window_bounds = array<i64: 128, 128>}]} {
    %c0_i32 = arith.constant 0 : i32
    %0 = arith.cmpi eq, %arg1, %c0_i32 : i32
    %1 = arith.extui %0 : i1 to i32
    %c0_i32_0 = arith.constant 0 : i32
    %2 = arith.cmpi ne, %1, %c0_i32_0 : i32
    scf.if %2 {
      %cst_20 = arith.constant 0.000000e+00 : f32
      %25 = vector.broadcast %cst_20 : f32 to vector<128x128xf32>
      %c0_21 = arith.constant 0 : index
      %c0_22 = arith.constant 0 : index
      %26 = vector.load %arg6[%c0_21, %c0_22] : memref<128x128xf32, #tpu.memory_space<vmem>>, vector<128x128xf32>
      tpu.vector_store %arg6[%c0_21, %c0_22], %25 {strides = array<i32>} : memref<128x128xf32, #tpu.memory_space<vmem>>, vector<128x128xf32>,
    } else {
    }
    %c0 = arith.constant 0 : index
    %c0_1 = arith.constant 0 : index
    %c0_2 = arith.constant 0 : index
    %3 = vector.load %arg2[%c0, %c0_1, %c0_2] : memref<1x128x8xbf16, #tpu.memory_space<vmem>>, vector<1x128x8xbf16>
    %4 = vector.shape_cast %3 : vector<1x128x8xbf16> to vector<128x8xbf16>
    %c0_3 = arith.constant 0 : index
    %c0_4 = arith.constant 0 : index
    %5 = vector.load %arg6[%c0_3, %c0_4] : memref<128x128xf32, #tpu.memory_space<vmem>>, vector<120x128xf32>
    %6 = vector.extract_strided_slice %4 {offsets = [0, 0], sizes = [120, 8], strides = [1, 1]} : vector<128x8xbf16> to vector<120x8xbf16>
    %c0_5 = arith.constant 0 : index
    %c0_6 = arith.constant 0 : index
    %c0_7 = arith.constant 0 : index
    %c0_8 = arith.constant 0 : index
    %7 = vector.load %arg3[%c0_5, %c0_6, %c0_7, %c0_8] : memref<1x3x8x128xbf16, #tpu.memory_space<vmem>>, vector<1x1x8x128xbf16>
    %8 = vector.shape_cast %7 : vector<1x1x8x128xbf16> to vector<8x128xbf16>
    %cst = arith.constant dense<0.000000e+00> : vector<120x128xf32>
    %9 = tpu.matmul %6, %8, %cst {dimension_numbers = #tpu.dot_dimension_numbers<[1], [0], [0], [1], [0, 0, 1, 1], [], []>} : vector<120x8xbf16>, vector<8x128xbf16>, vector<120x128xf32> -> vector<120x128xf32>
    %10 = arith.addf %5, %9 : vector<120x128xf32>
    %11 = vector.extract_strided_slice %4 {offsets = [1, 0], sizes = [120, 8], strides = [1, 1]} : vector<128x8xbf16> to vector<120x8xbf16>
    %c0_9 = arith.constant 0 : index
    %c1 = arith.constant 1 : index
    %c0_10 = arith.constant 0 : index
    %c0_11 = arith.constant 0 : index
    %12 = vector.load %arg3[%c0_9, %c1, %c0_10, %c0_11] : memref<1x3x8x128xbf16, #tpu.memory_space<vmem>>, vector<1x1x8x128xbf16>
    %13 = vector.shape_cast %12 : vector<1x1x8x128xbf16> to vector<8x128xbf16>
    %cst_12 = arith.constant dense<0.000000e+00> : vector<120x128xf32>
    %14 = tpu.matmul %11, %13, %cst_12 {dimension_numbers = #tpu.dot_dimension_numbers<[1], [0], [0], [1], [0, 0, 1, 1], [], []>} : vector<120x8xbf16>, vector<8x128xbf16>, vector<120x128xf32> -> vector<120x128xf32>
    %15 = arith.addf %10, %14 : vector<120x128xf32>
    %16 = vector.extract_strided_slice %4 {offsets = [2, 0], sizes = [120, 8], strides = [1, 1]} : vector<128x8xbf16> to vector<120x8xbf16>
    %c0_13 = arith.constant 0 : index
    %c2 = arith.constant 2 : index
    %c0_14 = arith.constant 0 : index
    %c0_15 = arith.constant 0 : index
    %17 = vector.load %arg3[%c0_13, %c2, %c0_14, %c0_15] : memref<1x3x8x128xbf16, #tpu.memory_space<vmem>>, vector<1x1x8x128xbf16>
    %18 = vector.shape_cast %17 : vector<1x1x8x128xbf16> to vector<8x128xbf16>
    %cst_16 = arith.constant dense<0.000000e+00> : vector<120x128xf32>
    %19 = tpu.matmul %16, %18, %cst_16 {dimension_numbers = #tpu.dot_dimension_numbers<[1], [0], [0], [1], [0, 0, 1, 1], [], []>} : vector<120x8xbf16>, vector<8x128xbf16>, vector<120x128xf32> -> vector<120x128xf32>
    %20 = arith.addf %15, %19 : vector<120x128xf32>
    %c0_17 = arith.constant 0 : index
    %c0_18 = arith.constant 0 : index
    %21 = vector.load %arg6[%c0_17, %c0_18] : memref<128x128xf32, #tpu.memory_space<vmem>>, vector<120x128xf32>
    tpu.vector_store %arg6[%c0_17, %c0_18], %20 {strides = array<i32>} : memref<128x128xf32, #tpu.memory_space<vmem>>, vector<120x128xf32>,
    %c2_i32 = arith.constant 2 : i32
    %22 = arith.cmpi eq, %arg1, %c2_i32 : i32
    %23 = arith.extui %22 : i1 to i32
    %c0_i32_19 = arith.constant 0 : i32
    %24 = arith.cmpi ne, %23, %c0_i32_19 : i32
    scf.if %24 {
      %c0_20 = arith.constant 0 : index
      %c0_21 = arith.constant 0 : index
      %25 = vector.load %arg6[%c0_20, %c0_21] : memref<128x128xf32, #tpu.memory_space<vmem>>, vector<128x128xf32>
      %c0_22 = arith.constant 0 : index
      %c0_23 = arith.constant 0 : index
      %26 = vector.load %arg4[%c0_22, %c0_23] : memref<1x128xf32, #tpu.memory_space<vmem>>, vector<1x128xf32>
      %27 = vector.broadcast %26 : vector<1x128xf32> to vector<128x128xf32>
      %28 = arith.addf %25, %27 : vector<128x128xf32>
      %29 = arith.truncf %28 : vector<128x128xf32> to vector<128x128xbf16>
      %c0_24 = arith.constant 0 : index
      %c0_25 = arith.constant 0 : index
      %30 = vector.load %arg5[%c0_24, %c0_25] : memref<128x128xbf16, #tpu.memory_space<vmem>>, vector<128x128xbf16>
      tpu.vector_store %arg5[%c0_24, %c0_25], %29 {strides = array<i32>} : memref<128x128xbf16, #tpu.memory_space<vmem>>, vector<128x128xbf16>,
    } else {
    }
    return
  }
  func.func @transform_0(%arg0: i32, %arg1: i32) -> (i32, i32, i32) {
    %c0_i32 = arith.constant 0 : i32
    %c0_i32_0 = arith.constant 0 : i32
    return %arg1, %arg0, %c0_i32 : i32, i32, i32
  }
  func.func @transform_1(%arg0: i32, %arg1: i32) -> (i32, i32, i32, i32) {
    %c0_i32 = arith.constant 0 : i32
    %c0_i32_0 = arith.constant 0 : i32
    %c0_i32_1 = arith.constant 0 : i32
    %c0_i32_2 = arith.constant 0 : i32
    return %arg1, %c0_i32, %c0_i32_0, %c0_i32_1 : i32, i32, i32, i32
  }
  func.func @transform_2(%arg0: i32, %arg1: i32) -> (i32, i32) {
    %c0_i32 = arith.constant 0 : i32
    %c0_i32_0 = arith.constant 0 : i32
    %c0_i32_1 = arith.constant 0 : i32
    return %c0_i32, %c0_i32_0 : i32, i32
  }
  func.func @transform_3(%arg0: i32, %arg1: i32) -> (i32, i32) {
    %c0_i32 = arith.constant 0 : i32
    %c0_i32_0 = arith.constant 0 : i32
    return %arg0, %c0_i32 : i32, i32
  }
}

module attributes {stable_mosaic.version = 11 : i64} {
  func.func @_matmul_bias_kernel(%arg0: i32, %arg1: memref<16x72xbf16, #tpu.memory_space<vmem>>, %arg2: memref<72x128xbf16, #tpu.memory_space<vmem>>, %arg3: memref<1x128xf32, #tpu.memory_space<vmem>>, %arg4: memref<16x128xbf16, #tpu.memory_space<vmem>>) attributes {dimension_semantics = [#tpu.dimension_semantics<parallel>], iteration_bounds = array<i64: 1>, scalar_prefetch = 0 : i64, scratch_operands = 0 : i64, tpu.core_type = #tpu.core_type<tc>, window_params = [{transform_indices = @transform_0, window_bounds = array<i64: 16, 72>}, {pipeline_mode = #tpu.pipeline_mode<synchronous>, transform_indices = @transform_1, window_bounds = array<i64: 72, 128>}, {pipeline_mode = #tpu.pipeline_mode<synchronous>, transform_indices = @transform_2, window_bounds = array<i64: 1, 128>}, {transform_indices = @transform_3, window_bounds = array<i64: 16, 128>}]} {
    %c0 = arith.constant 0 : index
    %c0_0 = arith.constant 0 : index
    %0 = vector.load %arg1[%c0, %c0_0] : memref<16x72xbf16, #tpu.memory_space<vmem>>, vector<16x72xbf16>
    %c0_1 = arith.constant 0 : index
    %c0_2 = arith.constant 0 : index
    %1 = vector.load %arg2[%c0_1, %c0_2] : memref<72x128xbf16, #tpu.memory_space<vmem>>, vector<72x128xbf16>
    %cst = arith.constant dense<0.000000e+00> : vector<16x128xf32>
    %2 = tpu.matmul %0, %1, %cst {dimension_numbers = #tpu.dot_dimension_numbers<[1], [0], [0], [1], [0, 0, 1, 1], [], []>} : vector<16x72xbf16>, vector<72x128xbf16>, vector<16x128xf32> -> vector<16x128xf32>
    %c0_3 = arith.constant 0 : index
    %c0_4 = arith.constant 0 : index
    %3 = vector.load %arg3[%c0_3, %c0_4] : memref<1x128xf32, #tpu.memory_space<vmem>>, vector<1x128xf32>
    %4 = vector.broadcast %3 : vector<1x128xf32> to vector<16x128xf32>
    %5 = arith.addf %2, %4 : vector<16x128xf32>
    %6 = arith.truncf %5 : vector<16x128xf32> to vector<16x128xbf16>
    %c0_5 = arith.constant 0 : index
    %c0_6 = arith.constant 0 : index
    %7 = vector.load %arg4[%c0_5, %c0_6] : memref<16x128xbf16, #tpu.memory_space<vmem>>, vector<16x128xbf16>
    tpu.vector_store %arg4[%c0_5, %c0_6], %6 {strides = array<i32>} : memref<16x128xbf16, #tpu.memory_space<vmem>>, vector<16x128xbf16>,
    return
  }
  func.func @transform_0(%arg0: i32) -> (i32, i32) {
    %c0_i32 = arith.constant 0 : i32
    %c0_i32_0 = arith.constant 0 : i32
    return %arg0, %c0_i32 : i32, i32
  }
  func.func @transform_1(%arg0: i32) -> (i32, i32) {
    %c0_i32 = arith.constant 0 : i32
    %c0_i32_0 = arith.constant 0 : i32
    %c0_i32_1 = arith.constant 0 : i32
    return %c0_i32, %c0_i32_0 : i32, i32
  }
  func.func @transform_2(%arg0: i32) -> (i32, i32) {
    %c0_i32 = arith.constant 0 : i32
    %c0_i32_0 = arith.constant 0 : i32
    %c0_i32_1 = arith.constant 0 : i32
    return %c0_i32, %c0_i32_0 : i32, i32
  }
  func.func @transform_3(%arg0: i32) -> (i32, i32) {
    %c0_i32 = arith.constant 0 : i32
    %c0_i32_0 = arith.constant 0 : i32
    return %arg0, %c0_i32 : i32, i32
  }
}

module attributes {stable_mosaic.version = 11 : i64} {
  func.func @_matmul_bias_kernel(%arg0: i32, %arg1: memref<16x144xbf16, #tpu.memory_space<vmem>>, %arg2: memref<144x128xbf16, #tpu.memory_space<vmem>>, %arg3: memref<1x128xf32, #tpu.memory_space<vmem>>, %arg4: memref<16x128xbf16, #tpu.memory_space<vmem>>) attributes {dimension_semantics = [#tpu.dimension_semantics<parallel>], iteration_bounds = array<i64: 1>, scalar_prefetch = 0 : i64, scratch_operands = 0 : i64, tpu.core_type = #tpu.core_type<tc>, window_params = [{transform_indices = @transform_0, window_bounds = array<i64: 16, 144>}, {pipeline_mode = #tpu.pipeline_mode<synchronous>, transform_indices = @transform_1, window_bounds = array<i64: 144, 128>}, {pipeline_mode = #tpu.pipeline_mode<synchronous>, transform_indices = @transform_2, window_bounds = array<i64: 1, 128>}, {transform_indices = @transform_3, window_bounds = array<i64: 16, 128>}]} {
    %c0 = arith.constant 0 : index
    %c0_0 = arith.constant 0 : index
    %0 = vector.load %arg1[%c0, %c0_0] : memref<16x144xbf16, #tpu.memory_space<vmem>>, vector<16x144xbf16>
    %c0_1 = arith.constant 0 : index
    %c0_2 = arith.constant 0 : index
    %1 = vector.load %arg2[%c0_1, %c0_2] : memref<144x128xbf16, #tpu.memory_space<vmem>>, vector<144x128xbf16>
    %cst = arith.constant dense<0.000000e+00> : vector<16x128xf32>
    %2 = tpu.matmul %0, %1, %cst {dimension_numbers = #tpu.dot_dimension_numbers<[1], [0], [0], [1], [0, 0, 1, 1], [], []>} : vector<16x144xbf16>, vector<144x128xbf16>, vector<16x128xf32> -> vector<16x128xf32>
    %c0_3 = arith.constant 0 : index
    %c0_4 = arith.constant 0 : index
    %3 = vector.load %arg3[%c0_3, %c0_4] : memref<1x128xf32, #tpu.memory_space<vmem>>, vector<1x128xf32>
    %4 = vector.broadcast %3 : vector<1x128xf32> to vector<16x128xf32>
    %5 = arith.addf %2, %4 : vector<16x128xf32>
    %6 = arith.truncf %5 : vector<16x128xf32> to vector<16x128xbf16>
    %c0_5 = arith.constant 0 : index
    %c0_6 = arith.constant 0 : index
    %7 = vector.load %arg4[%c0_5, %c0_6] : memref<16x128xbf16, #tpu.memory_space<vmem>>, vector<16x128xbf16>
    tpu.vector_store %arg4[%c0_5, %c0_6], %6 {strides = array<i32>} : memref<16x128xbf16, #tpu.memory_space<vmem>>, vector<16x128xbf16>,
    return
  }
  func.func @transform_0(%arg0: i32) -> (i32, i32) {
    %c0_i32 = arith.constant 0 : i32
    %c0_i32_0 = arith.constant 0 : i32
    return %arg0, %c0_i32 : i32, i32
  }
  func.func @transform_1(%arg0: i32) -> (i32, i32) {
    %c0_i32 = arith.constant 0 : i32
    %c0_i32_0 = arith.constant 0 : i32
    %c0_i32_1 = arith.constant 0 : i32
    return %c0_i32, %c0_i32_0 : i32, i32
  }
  func.func @transform_2(%arg0: i32) -> (i32, i32) {
    %c0_i32 = arith.constant 0 : i32
    %c0_i32_0 = arith.constant 0 : i32
    %c0_i32_1 = arith.constant 0 : i32
    return %c0_i32, %c0_i32_0 : i32, i32
  }
  func.func @transform_3(%arg0: i32) -> (i32, i32) {
    %c0_i32 = arith.constant 0 : i32
    %c0_i32_0 = arith.constant 0 : i32
    return %arg0, %c0_i32 : i32, i32
  }
}

module attributes {stable_mosaic.version = 11 : i64} {
  func.func @_matmul_bias_kernel(%arg0: i32, %arg1: memref<8x144xbf16, #tpu.memory_space<vmem>>, %arg2: memref<144x128xbf16, #tpu.memory_space<vmem>>, %arg3: memref<1x128xf32, #tpu.memory_space<vmem>>, %arg4: memref<8x128xbf16, #tpu.memory_space<vmem>>) attributes {dimension_semantics = [#tpu.dimension_semantics<parallel>], iteration_bounds = array<i64: 1>, scalar_prefetch = 0 : i64, scratch_operands = 0 : i64, tpu.core_type = #tpu.core_type<tc>, window_params = [{transform_indices = @transform_0, window_bounds = array<i64: 8, 144>}, {pipeline_mode = #tpu.pipeline_mode<synchronous>, transform_indices = @transform_1, window_bounds = array<i64: 144, 128>}, {pipeline_mode = #tpu.pipeline_mode<synchronous>, transform_indices = @transform_2, window_bounds = array<i64: 1, 128>}, {transform_indices = @transform_3, window_bounds = array<i64: 8, 128>}]} {
    %c0 = arith.constant 0 : index
    %c0_0 = arith.constant 0 : index
    %0 = vector.load %arg1[%c0, %c0_0] : memref<8x144xbf16, #tpu.memory_space<vmem>>, vector<8x144xbf16>
    %c0_1 = arith.constant 0 : index
    %c0_2 = arith.constant 0 : index
    %1 = vector.load %arg2[%c0_1, %c0_2] : memref<144x128xbf16, #tpu.memory_space<vmem>>, vector<144x128xbf16>
    %cst = arith.constant dense<0.000000e+00> : vector<8x128xf32>
    %2 = tpu.matmul %0, %1, %cst {dimension_numbers = #tpu.dot_dimension_numbers<[1], [0], [0], [1], [0, 0, 1, 1], [], []>} : vector<8x144xbf16>, vector<144x128xbf16>, vector<8x128xf32> -> vector<8x128xf32>
    %c0_3 = arith.constant 0 : index
    %c0_4 = arith.constant 0 : index
    %3 = vector.load %arg3[%c0_3, %c0_4] : memref<1x128xf32, #tpu.memory_space<vmem>>, vector<1x128xf32>
    %4 = vector.broadcast %3 : vector<1x128xf32> to vector<8x128xf32>
    %5 = arith.addf %2, %4 : vector<8x128xf32>
    %6 = arith.truncf %5 : vector<8x128xf32> to vector<8x128xbf16>
    %c0_5 = arith.constant 0 : index
    %c0_6 = arith.constant 0 : index
    %7 = vector.load %arg4[%c0_5, %c0_6] : memref<8x128xbf16, #tpu.memory_space<vmem>>, vector<8x128xbf16>
    tpu.vector_store %arg4[%c0_5, %c0_6], %6 {strides = array<i32>} : memref<8x128xbf16, #tpu.memory_space<vmem>>, vector<8x128xbf16>,
    return
  }
  func.func @transform_0(%arg0: i32) -> (i32, i32) {
    %c0_i32 = arith.constant 0 : i32
    %c0_i32_0 = arith.constant 0 : i32
    return %arg0, %c0_i32 : i32, i32
  }
  func.func @transform_1(%arg0: i32) -> (i32, i32) {
    %c0_i32 = arith.constant 0 : i32
    %c0_i32_0 = arith.constant 0 : i32
    %c0_i32_1 = arith.constant 0 : i32
    return %c0_i32, %c0_i32_0 : i32, i32
  }
  func.func @transform_2(%arg0: i32) -> (i32, i32) {
    %c0_i32 = arith.constant 0 : i32
    %c0_i32_0 = arith.constant 0 : i32
    %c0_i32_1 = arith.constant 0 : i32
    return %c0_i32, %c0_i32_0 : i32, i32
  }
  func.func @transform_3(%arg0: i32) -> (i32, i32) {
    %c0_i32 = arith.constant 0 : i32
    %c0_i32_0 = arith.constant 0 : i32
    return %arg0, %c0_i32 : i32, i32
  }
}

module attributes {stable_mosaic.version = 11 : i64} {
  func.func @_matmul_bias_kernel(%arg0: i32, %arg1: memref<8x288xbf16, #tpu.memory_space<vmem>>, %arg2: memref<288x128xbf16, #tpu.memory_space<vmem>>, %arg3: memref<1x128xf32, #tpu.memory_space<vmem>>, %arg4: memref<8x128xbf16, #tpu.memory_space<vmem>>) attributes {dimension_semantics = [#tpu.dimension_semantics<parallel>], iteration_bounds = array<i64: 1>, scalar_prefetch = 0 : i64, scratch_operands = 0 : i64, tpu.core_type = #tpu.core_type<tc>, window_params = [{transform_indices = @transform_0, window_bounds = array<i64: 8, 288>}, {pipeline_mode = #tpu.pipeline_mode<synchronous>, transform_indices = @transform_1, window_bounds = array<i64: 288, 128>}, {pipeline_mode = #tpu.pipeline_mode<synchronous>, transform_indices = @transform_2, window_bounds = array<i64: 1, 128>}, {transform_indices = @transform_3, window_bounds = array<i64: 8, 128>}]} {
    %c0 = arith.constant 0 : index
    %c0_0 = arith.constant 0 : index
    %0 = vector.load %arg1[%c0, %c0_0] : memref<8x288xbf16, #tpu.memory_space<vmem>>, vector<8x288xbf16>
    %c0_1 = arith.constant 0 : index
    %c0_2 = arith.constant 0 : index
    %1 = vector.load %arg2[%c0_1, %c0_2] : memref<288x128xbf16, #tpu.memory_space<vmem>>, vector<288x128xbf16>
    %cst = arith.constant dense<0.000000e+00> : vector<8x128xf32>
    %2 = tpu.matmul %0, %1, %cst {dimension_numbers = #tpu.dot_dimension_numbers<[1], [0], [0], [1], [0, 0, 1, 1], [], []>} : vector<8x288xbf16>, vector<288x128xbf16>, vector<8x128xf32> -> vector<8x128xf32>
    %c0_3 = arith.constant 0 : index
    %c0_4 = arith.constant 0 : index
    %3 = vector.load %arg3[%c0_3, %c0_4] : memref<1x128xf32, #tpu.memory_space<vmem>>, vector<1x128xf32>
    %4 = vector.broadcast %3 : vector<1x128xf32> to vector<8x128xf32>
    %5 = arith.addf %2, %4 : vector<8x128xf32>
    %6 = arith.truncf %5 : vector<8x128xf32> to vector<8x128xbf16>
    %c0_5 = arith.constant 0 : index
    %c0_6 = arith.constant 0 : index
    %7 = vector.load %arg4[%c0_5, %c0_6] : memref<8x128xbf16, #tpu.memory_space<vmem>>, vector<8x128xbf16>
    tpu.vector_store %arg4[%c0_5, %c0_6], %6 {strides = array<i32>} : memref<8x128xbf16, #tpu.memory_space<vmem>>, vector<8x128xbf16>,
    return
  }
  func.func @transform_0(%arg0: i32) -> (i32, i32) {
    %c0_i32 = arith.constant 0 : i32
    %c0_i32_0 = arith.constant 0 : i32
    return %arg0, %c0_i32 : i32, i32
  }
  func.func @transform_1(%arg0: i32) -> (i32, i32) {
    %c0_i32 = arith.constant 0 : i32
    %c0_i32_0 = arith.constant 0 : i32
    %c0_i32_1 = arith.constant 0 : i32
    return %c0_i32, %c0_i32_0 : i32, i32
  }
  func.func @transform_2(%arg0: i32) -> (i32, i32) {
    %c0_i32 = arith.constant 0 : i32
    %c0_i32_0 = arith.constant 0 : i32
    %c0_i32_1 = arith.constant 0 : i32
    return %c0_i32, %c0_i32_0 : i32, i32
  }
  func.func @transform_3(%arg0: i32) -> (i32, i32) {
    %c0_i32 = arith.constant 0 : i32
    %c0_i32_0 = arith.constant 0 : i32
    return %arg0, %c0_i32 : i32, i32
  }
}

module attributes {stable_mosaic.version = 11 : i64} {
  func.func @_matmul_bias_kernel(%arg0: i32, %arg1: memref<8x576xbf16, #tpu.memory_space<vmem>>, %arg2: memref<576x128xbf16, #tpu.memory_space<vmem>>, %arg3: memref<1x128xf32, #tpu.memory_space<vmem>>, %arg4: memref<8x128xbf16, #tpu.memory_space<vmem>>) attributes {dimension_semantics = [#tpu.dimension_semantics<parallel>], iteration_bounds = array<i64: 1>, scalar_prefetch = 0 : i64, scratch_operands = 0 : i64, tpu.core_type = #tpu.core_type<tc>, window_params = [{transform_indices = @transform_0, window_bounds = array<i64: 8, 576>}, {pipeline_mode = #tpu.pipeline_mode<synchronous>, transform_indices = @transform_1, window_bounds = array<i64: 576, 128>}, {pipeline_mode = #tpu.pipeline_mode<synchronous>, transform_indices = @transform_2, window_bounds = array<i64: 1, 128>}, {transform_indices = @transform_3, window_bounds = array<i64: 8, 128>}]} {
    %c0 = arith.constant 0 : index
    %c0_0 = arith.constant 0 : index
    %0 = vector.load %arg1[%c0, %c0_0] : memref<8x576xbf16, #tpu.memory_space<vmem>>, vector<8x576xbf16>
    %c0_1 = arith.constant 0 : index
    %c0_2 = arith.constant 0 : index
    %1 = vector.load %arg2[%c0_1, %c0_2] : memref<576x128xbf16, #tpu.memory_space<vmem>>, vector<576x128xbf16>
    %cst = arith.constant dense<0.000000e+00> : vector<8x128xf32>
    %2 = tpu.matmul %0, %1, %cst {dimension_numbers = #tpu.dot_dimension_numbers<[1], [0], [0], [1], [0, 0, 1, 1], [], []>} : vector<8x576xbf16>, vector<576x128xbf16>, vector<8x128xf32> -> vector<8x128xf32>
    %c0_3 = arith.constant 0 : index
    %c0_4 = arith.constant 0 : index
    %3 = vector.load %arg3[%c0_3, %c0_4] : memref<1x128xf32, #tpu.memory_space<vmem>>, vector<1x128xf32>
    %4 = vector.broadcast %3 : vector<1x128xf32> to vector<8x128xf32>
    %5 = arith.addf %2, %4 : vector<8x128xf32>
    %6 = arith.truncf %5 : vector<8x128xf32> to vector<8x128xbf16>
    %c0_5 = arith.constant 0 : index
    %c0_6 = arith.constant 0 : index
    %7 = vector.load %arg4[%c0_5, %c0_6] : memref<8x128xbf16, #tpu.memory_space<vmem>>, vector<8x128xbf16>
    tpu.vector_store %arg4[%c0_5, %c0_6], %6 {strides = array<i32>} : memref<8x128xbf16, #tpu.memory_space<vmem>>, vector<8x128xbf16>,
    return
  }
  func.func @transform_0(%arg0: i32) -> (i32, i32) {
    %c0_i32 = arith.constant 0 : i32
    %c0_i32_0 = arith.constant 0 : i32
    return %arg0, %c0_i32 : i32, i32
  }
  func.func @transform_1(%arg0: i32) -> (i32, i32) {
    %c0_i32 = arith.constant 0 : i32
    %c0_i32_0 = arith.constant 0 : i32
    %c0_i32_1 = arith.constant 0 : i32
    return %c0_i32, %c0_i32_0 : i32, i32
  }
  func.func @transform_2(%arg0: i32) -> (i32, i32) {
    %c0_i32 = arith.constant 0 : i32
    %c0_i32_0 = arith.constant 0 : i32
    %c0_i32_1 = arith.constant 0 : i32
    return %c0_i32, %c0_i32_0 : i32, i32
  }
  func.func @transform_3(%arg0: i32) -> (i32, i32) {
    %c0_i32 = arith.constant 0 : i32
    %c0_i32_0 = arith.constant 0 : i32
    return %arg0, %c0_i32 : i32, i32
  }
}

module attributes {stable_mosaic.version = 11 : i64} {
  func.func @_matmul_bias_kernel(%arg0: i32, %arg1: memref<8x64xbf16, #tpu.memory_space<vmem>>, %arg2: memref<64x128xbf16, #tpu.memory_space<vmem>>, %arg3: memref<1x128xf32, #tpu.memory_space<vmem>>, %arg4: memref<8x128xbf16, #tpu.memory_space<vmem>>) attributes {dimension_semantics = [#tpu.dimension_semantics<parallel>], iteration_bounds = array<i64: 1>, scalar_prefetch = 0 : i64, scratch_operands = 0 : i64, tpu.core_type = #tpu.core_type<tc>, window_params = [{transform_indices = @transform_0, window_bounds = array<i64: 8, 64>}, {pipeline_mode = #tpu.pipeline_mode<synchronous>, transform_indices = @transform_1, window_bounds = array<i64: 64, 128>}, {pipeline_mode = #tpu.pipeline_mode<synchronous>, transform_indices = @transform_2, window_bounds = array<i64: 1, 128>}, {transform_indices = @transform_3, window_bounds = array<i64: 8, 128>}]} {
    %c0 = arith.constant 0 : index
    %c0_0 = arith.constant 0 : index
    %0 = vector.load %arg1[%c0, %c0_0] : memref<8x64xbf16, #tpu.memory_space<vmem>>, vector<8x64xbf16>
    %c0_1 = arith.constant 0 : index
    %c0_2 = arith.constant 0 : index
    %1 = vector.load %arg2[%c0_1, %c0_2] : memref<64x128xbf16, #tpu.memory_space<vmem>>, vector<64x128xbf16>
    %cst = arith.constant dense<0.000000e+00> : vector<8x128xf32>
    %2 = tpu.matmul %0, %1, %cst {dimension_numbers = #tpu.dot_dimension_numbers<[1], [0], [0], [1], [0, 0, 1, 1], [], []>} : vector<8x64xbf16>, vector<64x128xbf16>, vector<8x128xf32> -> vector<8x128xf32>
    %c0_3 = arith.constant 0 : index
    %c0_4 = arith.constant 0 : index
    %3 = vector.load %arg3[%c0_3, %c0_4] : memref<1x128xf32, #tpu.memory_space<vmem>>, vector<1x128xf32>
    %4 = vector.broadcast %3 : vector<1x128xf32> to vector<8x128xf32>
    %5 = arith.addf %2, %4 : vector<8x128xf32>
    %6 = arith.truncf %5 : vector<8x128xf32> to vector<8x128xbf16>
    %c0_5 = arith.constant 0 : index
    %c0_6 = arith.constant 0 : index
    %7 = vector.load %arg4[%c0_5, %c0_6] : memref<8x128xbf16, #tpu.memory_space<vmem>>, vector<8x128xbf16>
    tpu.vector_store %arg4[%c0_5, %c0_6], %6 {strides = array<i32>} : memref<8x128xbf16, #tpu.memory_space<vmem>>, vector<8x128xbf16>,
    return
  }
  func.func @transform_0(%arg0: i32) -> (i32, i32) {
    %c0_i32 = arith.constant 0 : i32
    %c0_i32_0 = arith.constant 0 : i32
    return %arg0, %c0_i32 : i32, i32
  }
  func.func @transform_1(%arg0: i32) -> (i32, i32) {
    %c0_i32 = arith.constant 0 : i32
    %c0_i32_0 = arith.constant 0 : i32
    %c0_i32_1 = arith.constant 0 : i32
    return %c0_i32, %c0_i32_0 : i32, i32
  }
  func.func @transform_2(%arg0: i32) -> (i32, i32) {
    %c0_i32 = arith.constant 0 : i32
    %c0_i32_0 = arith.constant 0 : i32
    %c0_i32_1 = arith.constant 0 : i32
    return %c0_i32, %c0_i32_0 : i32, i32
  }
  func.func @transform_3(%arg0: i32) -> (i32, i32) {
    %c0_i32 = arith.constant 0 : i32
    %c0_i32_0 = arith.constant 0 : i32
    return %arg0, %c0_i32 : i32, i32
  }
}

module attributes {stable_mosaic.version = 11 : i64} {
  func.func @_matmul_bias_kernel(%arg0: i32, %arg1: memref<8x32xbf16, #tpu.memory_space<vmem>>, %arg2: memref<32x128xbf16, #tpu.memory_space<vmem>>, %arg3: memref<1x128xf32, #tpu.memory_space<vmem>>, %arg4: memref<8x128xbf16, #tpu.memory_space<vmem>>) attributes {dimension_semantics = [#tpu.dimension_semantics<parallel>], iteration_bounds = array<i64: 1>, scalar_prefetch = 0 : i64, scratch_operands = 0 : i64, tpu.core_type = #tpu.core_type<tc>, window_params = [{transform_indices = @transform_0, window_bounds = array<i64: 8, 32>}, {pipeline_mode = #tpu.pipeline_mode<synchronous>, transform_indices = @transform_1, window_bounds = array<i64: 32, 128>}, {pipeline_mode = #tpu.pipeline_mode<synchronous>, transform_indices = @transform_2, window_bounds = array<i64: 1, 128>}, {transform_indices = @transform_3, window_bounds = array<i64: 8, 128>}]} {
    %c0 = arith.constant 0 : index
    %c0_0 = arith.constant 0 : index
    %0 = vector.load %arg1[%c0, %c0_0] : memref<8x32xbf16, #tpu.memory_space<vmem>>, vector<8x32xbf16>
    %c0_1 = arith.constant 0 : index
    %c0_2 = arith.constant 0 : index
    %1 = vector.load %arg2[%c0_1, %c0_2] : memref<32x128xbf16, #tpu.memory_space<vmem>>, vector<32x128xbf16>
    %cst = arith.constant dense<0.000000e+00> : vector<8x128xf32>
    %2 = tpu.matmul %0, %1, %cst {dimension_numbers = #tpu.dot_dimension_numbers<[1], [0], [0], [1], [0, 0, 1, 1], [], []>} : vector<8x32xbf16>, vector<32x128xbf16>, vector<8x128xf32> -> vector<8x128xf32>
    %c0_3 = arith.constant 0 : index
    %c0_4 = arith.constant 0 : index
    %3 = vector.load %arg3[%c0_3, %c0_4] : memref<1x128xf32, #tpu.memory_space<vmem>>, vector<1x128xf32>
    %4 = vector.broadcast %3 : vector<1x128xf32> to vector<8x128xf32>
    %5 = arith.addf %2, %4 : vector<8x128xf32>
    %6 = arith.truncf %5 : vector<8x128xf32> to vector<8x128xbf16>
    %c0_5 = arith.constant 0 : index
    %c0_6 = arith.constant 0 : index
    %7 = vector.load %arg4[%c0_5, %c0_6] : memref<8x128xbf16, #tpu.memory_space<vmem>>, vector<8x128xbf16>
    tpu.vector_store %arg4[%c0_5, %c0_6], %6 {strides = array<i32>} : memref<8x128xbf16, #tpu.memory_space<vmem>>, vector<8x128xbf16>,
    return
  }
  func.func @transform_0(%arg0: i32) -> (i32, i32) {
    %c0_i32 = arith.constant 0 : i32
    %c0_i32_0 = arith.constant 0 : i32
    return %arg0, %c0_i32 : i32, i32
  }
  func.func @transform_1(%arg0: i32) -> (i32, i32) {
    %c0_i32 = arith.constant 0 : i32
    %c0_i32_0 = arith.constant 0 : i32
    %c0_i32_1 = arith.constant 0 : i32
    return %c0_i32, %c0_i32_0 : i32, i32
  }
  func.func @transform_2(%arg0: i32) -> (i32, i32) {
    %c0_i32 = arith.constant 0 : i32
    %c0_i32_0 = arith.constant 0 : i32
    %c0_i32_1 = arith.constant 0 : i32
    return %c0_i32, %c0_i32_0 : i32, i32
  }
  func.func @transform_3(%arg0: i32) -> (i32, i32) {
    %c0_i32 = arith.constant 0 : i32
    %c0_i32_0 = arith.constant 0 : i32
    return %arg0, %c0_i32 : i32, i32
  }
}

module attributes {stable_mosaic.version = 11 : i64} {
  func.func @_matmul_bias_kernel(%arg0: i32, %arg1: memref<16x288xbf16, #tpu.memory_space<vmem>>, %arg2: memref<288x128xbf16, #tpu.memory_space<vmem>>, %arg3: memref<1x128xf32, #tpu.memory_space<vmem>>, %arg4: memref<16x128xbf16, #tpu.memory_space<vmem>>) attributes {dimension_semantics = [#tpu.dimension_semantics<parallel>], iteration_bounds = array<i64: 1>, scalar_prefetch = 0 : i64, scratch_operands = 0 : i64, tpu.core_type = #tpu.core_type<tc>, window_params = [{transform_indices = @transform_0, window_bounds = array<i64: 16, 288>}, {pipeline_mode = #tpu.pipeline_mode<synchronous>, transform_indices = @transform_1, window_bounds = array<i64: 288, 128>}, {pipeline_mode = #tpu.pipeline_mode<synchronous>, transform_indices = @transform_2, window_bounds = array<i64: 1, 128>}, {transform_indices = @transform_3, window_bounds = array<i64: 16, 128>}]} {
    %c0 = arith.constant 0 : index
    %c0_0 = arith.constant 0 : index
    %0 = vector.load %arg1[%c0, %c0_0] : memref<16x288xbf16, #tpu.memory_space<vmem>>, vector<16x288xbf16>
    %c0_1 = arith.constant 0 : index
    %c0_2 = arith.constant 0 : index
    %1 = vector.load %arg2[%c0_1, %c0_2] : memref<288x128xbf16, #tpu.memory_space<vmem>>, vector<288x128xbf16>
    %cst = arith.constant dense<0.000000e+00> : vector<16x128xf32>
    %2 = tpu.matmul %0, %1, %cst {dimension_numbers = #tpu.dot_dimension_numbers<[1], [0], [0], [1], [0, 0, 1, 1], [], []>} : vector<16x288xbf16>, vector<288x128xbf16>, vector<16x128xf32> -> vector<16x128xf32>
    %c0_3 = arith.constant 0 : index
    %c0_4 = arith.constant 0 : index
    %3 = vector.load %arg3[%c0_3, %c0_4] : memref<1x128xf32, #tpu.memory_space<vmem>>, vector<1x128xf32>
    %4 = vector.broadcast %3 : vector<1x128xf32> to vector<16x128xf32>
    %5 = arith.addf %2, %4 : vector<16x128xf32>
    %6 = arith.truncf %5 : vector<16x128xf32> to vector<16x128xbf16>
    %c0_5 = arith.constant 0 : index
    %c0_6 = arith.constant 0 : index
    %7 = vector.load %arg4[%c0_5, %c0_6] : memref<16x128xbf16, #tpu.memory_space<vmem>>, vector<16x128xbf16>
    tpu.vector_store %arg4[%c0_5, %c0_6], %6 {strides = array<i32>} : memref<16x128xbf16, #tpu.memory_space<vmem>>, vector<16x128xbf16>,
    return
  }
  func.func @transform_0(%arg0: i32) -> (i32, i32) {
    %c0_i32 = arith.constant 0 : i32
    %c0_i32_0 = arith.constant 0 : i32
    return %arg0, %c0_i32 : i32, i32
  }
  func.func @transform_1(%arg0: i32) -> (i32, i32) {
    %c0_i32 = arith.constant 0 : i32
    %c0_i32_0 = arith.constant 0 : i32
    %c0_i32_1 = arith.constant 0 : i32
    return %c0_i32, %c0_i32_0 : i32, i32
  }
  func.func @transform_2(%arg0: i32) -> (i32, i32) {
    %c0_i32 = arith.constant 0 : i32
    %c0_i32_0 = arith.constant 0 : i32
    %c0_i32_1 = arith.constant 0 : i32
    return %c0_i32, %c0_i32_0 : i32, i32
  }
  func.func @transform_3(%arg0: i32) -> (i32, i32) {
    %c0_i32 = arith.constant 0 : i32
    %c0_i32_0 = arith.constant 0 : i32
    return %arg0, %c0_i32 : i32, i32
  }
}

module attributes {stable_mosaic.version = 11 : i64} {
  func.func @_matmul_bias_kernel(%arg0: i32, %arg1: memref<16x16xbf16, #tpu.memory_space<vmem>>, %arg2: memref<16x128xbf16, #tpu.memory_space<vmem>>, %arg3: memref<1x128xf32, #tpu.memory_space<vmem>>, %arg4: memref<16x128xbf16, #tpu.memory_space<vmem>>) attributes {dimension_semantics = [#tpu.dimension_semantics<parallel>], iteration_bounds = array<i64: 1>, scalar_prefetch = 0 : i64, scratch_operands = 0 : i64, tpu.core_type = #tpu.core_type<tc>, window_params = [{transform_indices = @transform_0, window_bounds = array<i64: 16, 16>}, {pipeline_mode = #tpu.pipeline_mode<synchronous>, transform_indices = @transform_1, window_bounds = array<i64: 16, 128>}, {pipeline_mode = #tpu.pipeline_mode<synchronous>, transform_indices = @transform_2, window_bounds = array<i64: 1, 128>}, {transform_indices = @transform_3, window_bounds = array<i64: 16, 128>}]} {
    %c0 = arith.constant 0 : index
    %c0_0 = arith.constant 0 : index
    %0 = vector.load %arg1[%c0, %c0_0] : memref<16x16xbf16, #tpu.memory_space<vmem>>, vector<16x16xbf16>
    %c0_1 = arith.constant 0 : index
    %c0_2 = arith.constant 0 : index
    %1 = vector.load %arg2[%c0_1, %c0_2] : memref<16x128xbf16, #tpu.memory_space<vmem>>, vector<16x128xbf16>
    %cst = arith.constant dense<0.000000e+00> : vector<16x128xf32>
    %2 = tpu.matmul %0, %1, %cst {dimension_numbers = #tpu.dot_dimension_numbers<[1], [0], [0], [1], [0, 0, 1, 1], [], []>} : vector<16x16xbf16>, vector<16x128xbf16>, vector<16x128xf32> -> vector<16x128xf32>
    %c0_3 = arith.constant 0 : index
    %c0_4 = arith.constant 0 : index
    %3 = vector.load %arg3[%c0_3, %c0_4] : memref<1x128xf32, #tpu.memory_space<vmem>>, vector<1x128xf32>
    %4 = vector.broadcast %3 : vector<1x128xf32> to vector<16x128xf32>
    %5 = arith.addf %2, %4 : vector<16x128xf32>
    %6 = arith.truncf %5 : vector<16x128xf32> to vector<16x128xbf16>
    %c0_5 = arith.constant 0 : index
    %c0_6 = arith.constant 0 : index
    %7 = vector.load %arg4[%c0_5, %c0_6] : memref<16x128xbf16, #tpu.memory_space<vmem>>, vector<16x128xbf16>
    tpu.vector_store %arg4[%c0_5, %c0_6], %6 {strides = array<i32>} : memref<16x128xbf16, #tpu.memory_space<vmem>>, vector<16x128xbf16>,
    return
  }
  func.func @transform_0(%arg0: i32) -> (i32, i32) {
    %c0_i32 = arith.constant 0 : i32
    %c0_i32_0 = arith.constant 0 : i32
    return %arg0, %c0_i32 : i32, i32
  }
  func.func @transform_1(%arg0: i32) -> (i32, i32) {
    %c0_i32 = arith.constant 0 : i32
    %c0_i32_0 = arith.constant 0 : i32
    %c0_i32_1 = arith.constant 0 : i32
    return %c0_i32, %c0_i32_0 : i32, i32
  }
  func.func @transform_2(%arg0: i32) -> (i32, i32) {
    %c0_i32 = arith.constant 0 : i32
    %c0_i32_0 = arith.constant 0 : i32
    %c0_i32_1 = arith.constant 0 : i32
    return %c0_i32, %c0_i32_0 : i32, i32
  }
  func.func @transform_3(%arg0: i32) -> (i32, i32) {
    %c0_i32 = arith.constant 0 : i32
    %c0_i32_0 = arith.constant 0 : i32
    return %arg0, %c0_i32 : i32, i32
  }
}

module attributes {stable_mosaic.version = 11 : i64} {
  func.func @_conv3x3_s1_kernel(%arg0: i32, %arg1: i32, %arg2: memref<1x128x16xbf16, #tpu.memory_space<vmem>>, %arg3: memref<1x3x16x128xbf16, #tpu.memory_space<vmem>>, %arg4: memref<1x128xf32, #tpu.memory_space<vmem>>, %arg5: memref<128x128xbf16, #tpu.memory_space<vmem>>, %arg6: memref<128x128xf32, #tpu.memory_space<vmem>>) attributes {dimension_semantics = [#tpu.dimension_semantics<parallel>, #tpu.dimension_semantics<arbitrary>], iteration_bounds = array<i64: 1, 3>, scalar_prefetch = 0 : i64, scratch_operands = 1 : i64, tpu.core_type = #tpu.core_type<tc>, window_params = [{transform_indices = @transform_0, window_bounds = array<i64: 1, 128, 16>}, {transform_indices = @transform_1, window_bounds = array<i64: 1, 3, 16, 128>}, {pipeline_mode = #tpu.pipeline_mode<synchronous>, transform_indices = @transform_2, window_bounds = array<i64: 1, 128>}, {transform_indices = @transform_3, window_bounds = array<i64: 128, 128>}]} {
    %c0_i32 = arith.constant 0 : i32
    %0 = arith.cmpi eq, %arg1, %c0_i32 : i32
    %1 = arith.extui %0 : i1 to i32
    %c0_i32_0 = arith.constant 0 : i32
    %2 = arith.cmpi ne, %1, %c0_i32_0 : i32
    scf.if %2 {
      %cst_20 = arith.constant 0.000000e+00 : f32
      %25 = vector.broadcast %cst_20 : f32 to vector<128x128xf32>
      %c0_21 = arith.constant 0 : index
      %c0_22 = arith.constant 0 : index
      %26 = vector.load %arg6[%c0_21, %c0_22] : memref<128x128xf32, #tpu.memory_space<vmem>>, vector<128x128xf32>
      tpu.vector_store %arg6[%c0_21, %c0_22], %25 {strides = array<i32>} : memref<128x128xf32, #tpu.memory_space<vmem>>, vector<128x128xf32>,
    } else {
    }
    %c0 = arith.constant 0 : index
    %c0_1 = arith.constant 0 : index
    %c0_2 = arith.constant 0 : index
    %3 = vector.load %arg2[%c0, %c0_1, %c0_2] : memref<1x128x16xbf16, #tpu.memory_space<vmem>>, vector<1x128x16xbf16>
    %4 = vector.shape_cast %3 : vector<1x128x16xbf16> to vector<128x16xbf16>
    %c0_3 = arith.constant 0 : index
    %c0_4 = arith.constant 0 : index
    %5 = vector.load %arg6[%c0_3, %c0_4] : memref<128x128xf32, #tpu.memory_space<vmem>>, vector<120x128xf32>
    %6 = vector.extract_strided_slice %4 {offsets = [0, 0], sizes = [120, 16], strides = [1, 1]} : vector<128x16xbf16> to vector<120x16xbf16>
    %c0_5 = arith.constant 0 : index
    %c0_6 = arith.constant 0 : index
    %c0_7 = arith.constant 0 : index
    %c0_8 = arith.constant 0 : index
    %7 = vector.load %arg3[%c0_5, %c0_6, %c0_7, %c0_8] : memref<1x3x16x128xbf16, #tpu.memory_space<vmem>>, vector<1x1x16x128xbf16>
    %8 = vector.shape_cast %7 : vector<1x1x16x128xbf16> to vector<16x128xbf16>
    %cst = arith.constant dense<0.000000e+00> : vector<120x128xf32>
    %9 = tpu.matmul %6, %8, %cst {dimension_numbers = #tpu.dot_dimension_numbers<[1], [0], [0], [1], [0, 0, 1, 1], [], []>} : vector<120x16xbf16>, vector<16x128xbf16>, vector<120x128xf32> -> vector<120x128xf32>
    %10 = arith.addf %5, %9 : vector<120x128xf32>
    %11 = vector.extract_strided_slice %4 {offsets = [1, 0], sizes = [120, 16], strides = [1, 1]} : vector<128x16xbf16> to vector<120x16xbf16>
    %c0_9 = arith.constant 0 : index
    %c1 = arith.constant 1 : index
    %c0_10 = arith.constant 0 : index
    %c0_11 = arith.constant 0 : index
    %12 = vector.load %arg3[%c0_9, %c1, %c0_10, %c0_11] : memref<1x3x16x128xbf16, #tpu.memory_space<vmem>>, vector<1x1x16x128xbf16>
    %13 = vector.shape_cast %12 : vector<1x1x16x128xbf16> to vector<16x128xbf16>
    %cst_12 = arith.constant dense<0.000000e+00> : vector<120x128xf32>
    %14 = tpu.matmul %11, %13, %cst_12 {dimension_numbers = #tpu.dot_dimension_numbers<[1], [0], [0], [1], [0, 0, 1, 1], [], []>} : vector<120x16xbf16>, vector<16x128xbf16>, vector<120x128xf32> -> vector<120x128xf32>
    %15 = arith.addf %10, %14 : vector<120x128xf32>
    %16 = vector.extract_strided_slice %4 {offsets = [2, 0], sizes = [120, 16], strides = [1, 1]} : vector<128x16xbf16> to vector<120x16xbf16>
    %c0_13 = arith.constant 0 : index
    %c2 = arith.constant 2 : index
    %c0_14 = arith.constant 0 : index
    %c0_15 = arith.constant 0 : index
    %17 = vector.load %arg3[%c0_13, %c2, %c0_14, %c0_15] : memref<1x3x16x128xbf16, #tpu.memory_space<vmem>>, vector<1x1x16x128xbf16>
    %18 = vector.shape_cast %17 : vector<1x1x16x128xbf16> to vector<16x128xbf16>
    %cst_16 = arith.constant dense<0.000000e+00> : vector<120x128xf32>
    %19 = tpu.matmul %16, %18, %cst_16 {dimension_numbers = #tpu.dot_dimension_numbers<[1], [0], [0], [1], [0, 0, 1, 1], [], []>} : vector<120x16xbf16>, vector<16x128xbf16>, vector<120x128xf32> -> vector<120x128xf32>
    %20 = arith.addf %15, %19 : vector<120x128xf32>
    %c0_17 = arith.constant 0 : index
    %c0_18 = arith.constant 0 : index
    %21 = vector.load %arg6[%c0_17, %c0_18] : memref<128x128xf32, #tpu.memory_space<vmem>>, vector<120x128xf32>
    tpu.vector_store %arg6[%c0_17, %c0_18], %20 {strides = array<i32>} : memref<128x128xf32, #tpu.memory_space<vmem>>, vector<120x128xf32>,
    %c2_i32 = arith.constant 2 : i32
    %22 = arith.cmpi eq, %arg1, %c2_i32 : i32
    %23 = arith.extui %22 : i1 to i32
    %c0_i32_19 = arith.constant 0 : i32
    %24 = arith.cmpi ne, %23, %c0_i32_19 : i32
    scf.if %24 {
      %c0_20 = arith.constant 0 : index
      %c0_21 = arith.constant 0 : index
      %25 = vector.load %arg6[%c0_20, %c0_21] : memref<128x128xf32, #tpu.memory_space<vmem>>, vector<128x128xf32>
      %c0_22 = arith.constant 0 : index
      %c0_23 = arith.constant 0 : index
      %26 = vector.load %arg4[%c0_22, %c0_23] : memref<1x128xf32, #tpu.memory_space<vmem>>, vector<1x128xf32>
      %27 = vector.broadcast %26 : vector<1x128xf32> to vector<128x128xf32>
      %28 = arith.addf %25, %27 : vector<128x128xf32>
      %29 = arith.truncf %28 : vector<128x128xf32> to vector<128x128xbf16>
      %c0_24 = arith.constant 0 : index
      %c0_25 = arith.constant 0 : index
      %30 = vector.load %arg5[%c0_24, %c0_25] : memref<128x128xbf16, #tpu.memory_space<vmem>>, vector<128x128xbf16>
      tpu.vector_store %arg5[%c0_24, %c0_25], %29 {strides = array<i32>} : memref<128x128xbf16, #tpu.memory_space<vmem>>, vector<128x128xbf16>,
    } else {
    }
    return
  }
  func.func @transform_0(%arg0: i32, %arg1: i32) -> (i32, i32, i32) {
    %c0_i32 = arith.constant 0 : i32
    %c0_i32_0 = arith.constant 0 : i32
    return %arg1, %arg0, %c0_i32 : i32, i32, i32
  }
  func.func @transform_1(%arg0: i32, %arg1: i32) -> (i32, i32, i32, i32) {
    %c0_i32 = arith.constant 0 : i32
    %c0_i32_0 = arith.constant 0 : i32
    %c0_i32_1 = arith.constant 0 : i32
    %c0_i32_2 = arith.constant 0 : i32
    return %arg1, %c0_i32, %c0_i32_0, %c0_i32_1 : i32, i32, i32, i32
  }
  func.func @transform_2(%arg0: i32, %arg1: i32) -> (i32, i32) {
    %c0_i32 = arith.constant 0 : i32
    %c0_i32_0 = arith.constant 0 : i32
    %c0_i32_1 = arith.constant 0 : i32
    return %c0_i32, %c0_i32_0 : i32, i32
  }
  func.func @transform_3(%arg0: i32, %arg1: i32) -> (i32, i32) {
    %c0_i32 = arith.constant 0 : i32
    %c0_i32_0 = arith.constant 0 : i32
    return %arg0, %c0_i32 : i32, i32
  }
}

module attributes {stable_mosaic.version = 11 : i64} {
  func.func @_matmul_bias_kernel(%arg0: i32, %arg1: memref<64x8xbf16, #tpu.memory_space<vmem>>, %arg2: memref<8x128xbf16, #tpu.memory_space<vmem>>, %arg3: memref<1x128xf32, #tpu.memory_space<vmem>>, %arg4: memref<64x128xbf16, #tpu.memory_space<vmem>>) attributes {dimension_semantics = [#tpu.dimension_semantics<parallel>], iteration_bounds = array<i64: 1>, scalar_prefetch = 0 : i64, scratch_operands = 0 : i64, tpu.core_type = #tpu.core_type<tc>, window_params = [{transform_indices = @transform_0, window_bounds = array<i64: 64, 8>}, {pipeline_mode = #tpu.pipeline_mode<synchronous>, transform_indices = @transform_1, window_bounds = array<i64: 8, 128>}, {pipeline_mode = #tpu.pipeline_mode<synchronous>, transform_indices = @transform_2, window_bounds = array<i64: 1, 128>}, {transform_indices = @transform_3, window_bounds = array<i64: 64, 128>}]} {
    %c0 = arith.constant 0 : index
    %c0_0 = arith.constant 0 : index
    %0 = vector.load %arg1[%c0, %c0_0] : memref<64x8xbf16, #tpu.memory_space<vmem>>, vector<64x8xbf16>
    %c0_1 = arith.constant 0 : index
    %c0_2 = arith.constant 0 : index
    %1 = vector.load %arg2[%c0_1, %c0_2] : memref<8x128xbf16, #tpu.memory_space<vmem>>, vector<8x128xbf16>
    %cst = arith.constant dense<0.000000e+00> : vector<64x128xf32>
    %2 = tpu.matmul %0, %1, %cst {dimension_numbers = #tpu.dot_dimension_numbers<[1], [0], [0], [1], [0, 0, 1, 1], [], []>} : vector<64x8xbf16>, vector<8x128xbf16>, vector<64x128xf32> -> vector<64x128xf32>
    %c0_3 = arith.constant 0 : index
    %c0_4 = arith.constant 0 : index
    %3 = vector.load %arg3[%c0_3, %c0_4] : memref<1x128xf32, #tpu.memory_space<vmem>>, vector<1x128xf32>
    %4 = vector.broadcast %3 : vector<1x128xf32> to vector<64x128xf32>
    %5 = arith.addf %2, %4 : vector<64x128xf32>
    %6 = arith.truncf %5 : vector<64x128xf32> to vector<64x128xbf16>
    %c0_5 = arith.constant 0 : index
    %c0_6 = arith.constant 0 : index
    %7 = vector.load %arg4[%c0_5, %c0_6] : memref<64x128xbf16, #tpu.memory_space<vmem>>, vector<64x128xbf16>
    tpu.vector_store %arg4[%c0_5, %c0_6], %6 {strides = array<i32>} : memref<64x128xbf16, #tpu.memory_space<vmem>>, vector<64x128xbf16>,
    return
  }
  func.func @transform_0(%arg0: i32) -> (i32, i32) {
    %c0_i32 = arith.constant 0 : i32
    %c0_i32_0 = arith.constant 0 : i32
    return %arg0, %c0_i32 : i32, i32
  }
  func.func @transform_1(%arg0: i32) -> (i32, i32) {
    %c0_i32 = arith.constant 0 : i32
    %c0_i32_0 = arith.constant 0 : i32
    %c0_i32_1 = arith.constant 0 : i32
    return %c0_i32, %c0_i32_0 : i32, i32
  }
  func.func @transform_2(%arg0: i32) -> (i32, i32) {
    %c0_i32 = arith.constant 0 : i32
    %c0_i32_0 = arith.constant 0 : i32
    %c0_i32_1 = arith.constant 0 : i32
    return %c0_i32, %c0_i32_0 : i32, i32
  }
  func.func @transform_3(%arg0: i32) -> (i32, i32) {
    %c0_i32 = arith.constant 0 : i32
    %c0_i32_0 = arith.constant 0 : i32
    return %arg0, %c0_i32 : i32, i32
  }
}

module attributes {stable_mosaic.version = 11 : i64} {
  func.func @_conv3x3_s1_kernel(%arg0: i32, %arg1: i32, %arg2: memref<1x384x8xbf16, #tpu.memory_space<vmem>>, %arg3: memref<1x3x8x128xbf16, #tpu.memory_space<vmem>>, %arg4: memref<1x128xf32, #tpu.memory_space<vmem>>, %arg5: memref<384x128xf32, #tpu.memory_space<vmem>>, %arg6: memref<384x128xf32, #tpu.memory_space<vmem>>) attributes {dimension_semantics = [#tpu.dimension_semantics<parallel>, #tpu.dimension_semantics<arbitrary>], iteration_bounds = array<i64: 1, 3>, scalar_prefetch = 0 : i64, scratch_operands = 1 : i64, tpu.core_type = #tpu.core_type<tc>, window_params = [{transform_indices = @transform_0, window_bounds = array<i64: 1, 384, 8>}, {transform_indices = @transform_1, window_bounds = array<i64: 1, 3, 8, 128>}, {pipeline_mode = #tpu.pipeline_mode<synchronous>, transform_indices = @transform_2, window_bounds = array<i64: 1, 128>}, {transform_indices = @transform_3, window_bounds = array<i64: 384, 128>}]} {
    %c0_i32 = arith.constant 0 : i32
    %0 = arith.cmpi eq, %arg1, %c0_i32 : i32
    %1 = arith.extui %0 : i1 to i32
    %c0_i32_0 = arith.constant 0 : i32
    %2 = arith.cmpi ne, %1, %c0_i32_0 : i32
    scf.if %2 {
      %cst_20 = arith.constant 0.000000e+00 : f32
      %25 = vector.broadcast %cst_20 : f32 to vector<384x128xf32>
      %c0_21 = arith.constant 0 : index
      %c0_22 = arith.constant 0 : index
      %26 = vector.load %arg6[%c0_21, %c0_22] : memref<384x128xf32, #tpu.memory_space<vmem>>, vector<384x128xf32>
      tpu.vector_store %arg6[%c0_21, %c0_22], %25 {strides = array<i32>} : memref<384x128xf32, #tpu.memory_space<vmem>>, vector<384x128xf32>,
    } else {
    }
    %c0 = arith.constant 0 : index
    %c0_1 = arith.constant 0 : index
    %c0_2 = arith.constant 0 : index
    %3 = vector.load %arg2[%c0, %c0_1, %c0_2] : memref<1x384x8xbf16, #tpu.memory_space<vmem>>, vector<1x384x8xbf16>
    %4 = vector.shape_cast %3 : vector<1x384x8xbf16> to vector<384x8xbf16>
    %c0_3 = arith.constant 0 : index
    %c0_4 = arith.constant 0 : index
    %5 = vector.load %arg6[%c0_3, %c0_4] : memref<384x128xf32, #tpu.memory_space<vmem>>, vector<376x128xf32>
    %6 = vector.extract_strided_slice %4 {offsets = [0, 0], sizes = [376, 8], strides = [1, 1]} : vector<384x8xbf16> to vector<376x8xbf16>
    %c0_5 = arith.constant 0 : index
    %c0_6 = arith.constant 0 : index
    %c0_7 = arith.constant 0 : index
    %c0_8 = arith.constant 0 : index
    %7 = vector.load %arg3[%c0_5, %c0_6, %c0_7, %c0_8] : memref<1x3x8x128xbf16, #tpu.memory_space<vmem>>, vector<1x1x8x128xbf16>
    %8 = vector.shape_cast %7 : vector<1x1x8x128xbf16> to vector<8x128xbf16>
    %cst = arith.constant dense<0.000000e+00> : vector<376x128xf32>
    %9 = tpu.matmul %6, %8, %cst {dimension_numbers = #tpu.dot_dimension_numbers<[1], [0], [0], [1], [0, 0, 1, 1], [], []>} : vector<376x8xbf16>, vector<8x128xbf16>, vector<376x128xf32> -> vector<376x128xf32>
    %10 = arith.addf %5, %9 : vector<376x128xf32>
    %11 = vector.extract_strided_slice %4 {offsets = [1, 0], sizes = [376, 8], strides = [1, 1]} : vector<384x8xbf16> to vector<376x8xbf16>
    %c0_9 = arith.constant 0 : index
    %c1 = arith.constant 1 : index
    %c0_10 = arith.constant 0 : index
    %c0_11 = arith.constant 0 : index
    %12 = vector.load %arg3[%c0_9, %c1, %c0_10, %c0_11] : memref<1x3x8x128xbf16, #tpu.memory_space<vmem>>, vector<1x1x8x128xbf16>
    %13 = vector.shape_cast %12 : vector<1x1x8x128xbf16> to vector<8x128xbf16>
    %cst_12 = arith.constant dense<0.000000e+00> : vector<376x128xf32>
    %14 = tpu.matmul %11, %13, %cst_12 {dimension_numbers = #tpu.dot_dimension_numbers<[1], [0], [0], [1], [0, 0, 1, 1], [], []>} : vector<376x8xbf16>, vector<8x128xbf16>, vector<376x128xf32> -> vector<376x128xf32>
    %15 = arith.addf %10, %14 : vector<376x128xf32>
    %16 = vector.extract_strided_slice %4 {offsets = [2, 0], sizes = [376, 8], strides = [1, 1]} : vector<384x8xbf16> to vector<376x8xbf16>
    %c0_13 = arith.constant 0 : index
    %c2 = arith.constant 2 : index
    %c0_14 = arith.constant 0 : index
    %c0_15 = arith.constant 0 : index
    %17 = vector.load %arg3[%c0_13, %c2, %c0_14, %c0_15] : memref<1x3x8x128xbf16, #tpu.memory_space<vmem>>, vector<1x1x8x128xbf16>
    %18 = vector.shape_cast %17 : vector<1x1x8x128xbf16> to vector<8x128xbf16>
    %cst_16 = arith.constant dense<0.000000e+00> : vector<376x128xf32>
    %19 = tpu.matmul %16, %18, %cst_16 {dimension_numbers = #tpu.dot_dimension_numbers<[1], [0], [0], [1], [0, 0, 1, 1], [], []>} : vector<376x8xbf16>, vector<8x128xbf16>, vector<376x128xf32> -> vector<376x128xf32>
    %20 = arith.addf %15, %19 : vector<376x128xf32>
    %c0_17 = arith.constant 0 : index
    %c0_18 = arith.constant 0 : index
    %21 = vector.load %arg6[%c0_17, %c0_18] : memref<384x128xf32, #tpu.memory_space<vmem>>, vector<376x128xf32>
    tpu.vector_store %arg6[%c0_17, %c0_18], %20 {strides = array<i32>} : memref<384x128xf32, #tpu.memory_space<vmem>>, vector<376x128xf32>,
    %c2_i32 = arith.constant 2 : i32
    %22 = arith.cmpi eq, %arg1, %c2_i32 : i32
    %23 = arith.extui %22 : i1 to i32
    %c0_i32_19 = arith.constant 0 : i32
    %24 = arith.cmpi ne, %23, %c0_i32_19 : i32
    scf.if %24 {
      %c0_20 = arith.constant 0 : index
      %c0_21 = arith.constant 0 : index
      %25 = vector.load %arg6[%c0_20, %c0_21] : memref<384x128xf32, #tpu.memory_space<vmem>>, vector<384x128xf32>
      %c0_22 = arith.constant 0 : index
      %c0_23 = arith.constant 0 : index
      %26 = vector.load %arg4[%c0_22, %c0_23] : memref<1x128xf32, #tpu.memory_space<vmem>>, vector<1x128xf32>
      %27 = vector.broadcast %26 : vector<1x128xf32> to vector<384x128xf32>
      %28 = arith.addf %25, %27 : vector<384x128xf32>
      %29 = arith.negf %28 : vector<384x128xf32>
      %30 = math.exp %29 : vector<384x128xf32>
      %cst_24 = arith.constant 1.000000e+00 : f32
      %31 = vector.broadcast %cst_24 : f32 to vector<384x128xf32>
      %32 = arith.addf %31, %30 : vector<384x128xf32>
      %33 = arith.divf %31, %32 : vector<384x128xf32>
      %c0_25 = arith.constant 0 : index
      %c0_26 = arith.constant 0 : index
      %34 = vector.load %arg5[%c0_25, %c0_26] : memref<384x128xf32, #tpu.memory_space<vmem>>, vector<384x128xf32>
      tpu.vector_store %arg5[%c0_25, %c0_26], %33 {strides = array<i32>} : memref<384x128xf32, #tpu.memory_space<vmem>>, vector<384x128xf32>,
    } else {
    }
    return
  }
  func.func @transform_0(%arg0: i32, %arg1: i32) -> (i32, i32, i32) {
    %c0_i32 = arith.constant 0 : i32
    %c0_i32_0 = arith.constant 0 : i32
    return %arg1, %arg0, %c0_i32 : i32, i32, i32
  }
  func.func @transform_1(%arg0: i32, %arg1: i32) -> (i32, i32, i32, i32) {
    %c0_i32 = arith.constant 0 : i32
    %c0_i32_0 = arith.constant 0 : i32
    %c0_i32_1 = arith.constant 0 : i32
    %c0_i32_2 = arith.constant 0 : i32
    return %arg1, %c0_i32, %c0_i32_0, %c0_i32_1 : i32, i32, i32, i32
  }
  func.func @transform_2(%arg0: i32, %arg1: i32) -> (i32, i32) {
    %c0_i32 = arith.constant 0 : i32
    %c0_i32_0 = arith.constant 0 : i32
    %c0_i32_1 = arith.constant 0 : i32
    return %c0_i32, %c0_i32_0 : i32, i32
  }
  func.func @transform_3(%arg0: i32, %arg1: i32) -> (i32, i32) {
    %c0_i32 = arith.constant 0 : i32
    %c0_i32_0 = arith.constant 0 : i32
    return %arg0, %c0_i32 : i32, i32
  }
}

</mosaic_0001>

<llo_original>
// kernel: binary_net_forward.29
$region0: #{binary_net_forward.29}
  #allocation0 [shape = 'u32[]', space=smem, size = 0x4, offset = 0x4, fixed_abs, tag = 'smem constant byte address 0x4 - core index']
  #allocation1 [shape = 'u32[144,128]{1,0:T(1,128)}', space=vmem, size = 0x12000, scoped, tag = 'internal scratch']
  %s0 = inlined_call_operand.vmem [shape: bf16[64,36], index: 0, kind: input, shape index: {}]
  %s1 = inlined_call_operand.vmem [shape: bf16[36,128], index: 1, kind: input, shape index: {}]
  %s2 = inlined_call_operand.vmem [shape: f32[1,128], index: 2, kind: input, shape index: {}]
  %s3 = inlined_call_operand.vmem [shape: bf16[64,128], index: 3, kind: output, shape index: {}]
  %s4 = sld [smem:[#allocation0]]
  $region22: #{binary_net_forward.29} parent=0
    _
  %s6 = ssub.s32 1, %s4
  %s7 = scalar_select 0, %s6, %s4
  // Predicated region
  $region2: #{binary_net_forward.29} parent=0 // pred_check
    _
  $region3: #{binary_net_forward.29} parent=0 // pred_check_branch
    %9 = sbr.rel (0) target = $region5
  $region4: #{binary_net_forward.29} parent=0 // pred_region
    _
  $region5: #{binary_net_forward.29} parent=0 // pred_fallthru
    _
  // Predicated region
  $region6: #{binary_net_forward.29} parent=0 // pred_check
    _
  $region7: #{binary_net_forward.29} parent=0 // pred_check_branch
    %11 = sbr.rel (0) target = $region9
  $region8: #{binary_net_forward.29} parent=0 // pred_region
    _
  $region9: #{binary_net_forward.29} parent=0 // pred_fallthru
    _
  // Predicated region
  $region10: #{binary_net_forward.29} parent=0 // pred_check
    _
  $region11: #{binary_net_forward.29} parent=0 // pred_check_branch
    %13 = sbr.rel (0) target = $region13
  $region12: #{binary_net_forward.29} parent=0 // pred_region
    _
  $region13: #{binary_net_forward.29} parent=0 // pred_fallthru
    _
  %v15 = vld [vmem:[%s0] sm:$0xf]
  %v16 = vld [vmem:[%s0 + $0x4] sm:$0xf]
  %v17 = vld [vmem:[%s0 + $0x8] sm:$0xf]
  %v18 = vld [vmem:[%s0 + $0xc] sm:$0xf]
  %v19 = vld [vmem:[%s0 + $0x10] sm:$0xf]
  %v20 = vld [vmem:[%s0 + $0x14] sm:$0xf]
  %v21 = vld [vmem:[%s0 + $0x18] sm:$0xf]
  %v22 = vld [vmem:[%s0 + $0x1c] sm:$0xf]
  %v23 = vld [vmem:[%s1] sm:$0xf]
  %v24 = vld [vmem:[%s1 + $0x4] sm:$0xf]
  %v25 = vld [vmem:[%s1 + $0x8] sm:$0xf]
  %v26 = vld [vmem:[%s1 + $0xc] sm:$0xf]
  %v27 = vld [vmem:[%s1 + $0x10] sm:$0x3]
  %v28 = vld [vmem:[%s2] sm:$0x1]
  %v30 = vlaneseq
  %v31 = vshrl.u32 %v30, 7
  %v32 = vsub.s32 0, %v31
  %v33 = vrot.slane %v28, %v32
  %v43 = vunpack.c.l.b16 %v15
  %v44 = vunpack.c.l.b16 %v16
  %v45 = vunpack.c.l.b16 %v17
  %v46 = vunpack.c.l.b16 %v18
  %v47 = vunpack.c.l.b16 %v19
  %v48 = vunpack.c.l.b16 %v20
  %v49 = vunpack.c.l.b16 %v21
  %v50 = vunpack.c.l.b16 %v22
  %v51 = vpack.c.b16 %v44, %v43
  %v52 = vpack.c.b16 %v46, %v45
  %v53 = vpack.c.b16 %v48, %v47
  %v54 = vpack.c.b16 %v50, %v49
  %v60 = vunpack.c.l.b16 %v23
  %v61 = vunpack.c.l.b16 %v24
  %v62 = vunpack.c.l.b16 %v25
  %v63 = vunpack.c.l.b16 %v26
  %v64 = vunpack.c.l.b16 %v27
  %v65 = vpack.c.b16 %v61, %v60
  %v66 = vpack.c.b16 %v63, %v62
  %v67 = vpack.c.b16 %v64, %v64
  %vm70 = vcmask 293888
  %v72 = vsel %vm70, %v51, 0
  %v75 = vsel %vm70, %v52, 0
  %v78 = vsel %vm70, %v53, 0
  %v81 = vsel %vm70, %v54, 0
  %vm83 = vcmask 1041408
  %v85 = vsel %vm83, %v67, 0
  %87 = vmatprep.subr.bf16.mxu0 0
  %88 = vmatpush1.bf16.msra.mxu0 0
  %89 = vmatprep.subr.bf16.mxu0 0
  %90 = vmatpush1.bf16.msra.mxu0 0
  %91 = vmatprep.subr.bf16.mxu0 0
  %92 = vmatpush1.bf16.msra.mxu0 0
  %93 = vmatprep.subr.bf16.mxu0 0
  %94 = vmatpush1.bf16.msra.mxu0 0
  %95 = vmatprep.subr.bf16.mxu0 0
  %96 = vmatpush1.bf16.msra.mxu0 0
  %97 = vmatprep.subr.bf16.mxu0 0
  %98 = vmatpush1.bf16.msra.mxu0 %v85
  %99 = vmatprep.subr.bf16.mxu0 0
  %100 = vmatpush1.bf16.msra.mxu0 %v66
  %101 = vmatprep.subr.bf16.mxu0 0
  %102 = vmatpush1.bf16.msra.mxu0 %v65
  %103 = vmatprep.subr.bf16.mxu0 0
  %104 = vmatpush2.bf16.msra.mxu0 0
  %105 = vmatprep.subr.bf16.mxu0 0
  %106 = vmatpush2.bf16.msra.mxu0 0
  %107 = vmatprep.subr.bf16.mxu0 0
  %108 = vmatpush2.bf16.msra.mxu0 0
  %109 = vmatprep.subr.bf16.mxu0 0
  %110 = vmatpush2.bf16.msra.mxu0 0
  %111 = vmatprep.subr.bf16.mxu0 0
  %112 = vmatpush2.bf16.msra.mxu0 0
  %113 = vmatprep.subr.bf16.mxu0 0
  %114 = vmatpush2.bf16.msra.mxu0 0
  %115 = vmatprep.subr.bf16.mxu0 0
  %116 = vmatpush2.bf16.msra.mxu0 0
  %117 = vmatprep.subr.bf16.mxu0 0
  %118 = vmatpush2.bf16.msra.mxu0 0
  %119 = vmatprep.mubr.bf16.mxu0 0
  %120 = vmatmul.mubr.bf16.gmra.mxu0 %v72
  %v121 = vpop.f32.mrf.mxu0
  %v122 = vadd.f32 %v33, %v121
  %v123 = vpop.f32.mrf.mxu0
  %v124 = vpop.f32.mrf.mxu0
  %v125 = vadd.f32 %v33, %v124
  %v126 = vpop.f32.mrf.mxu0
  %127 = vmatprep.mubr.bf16.mxu0 0
  %128 = vmatmul.mubr.bf16.gmra.mxu0 %v75
  %v129 = vpop.f32.mrf.mxu0
  %v130 = vadd.f32 %v33, %v129
  %v131 = vpop.f32.mrf.mxu0
  %v132 = vpop.f32.mrf.mxu0
  %v133 = vadd.f32 %v33, %v132
  %v134 = vpop.f32.mrf.mxu0
  %135 = vmatprep.mubr.bf16.mxu0 0
  %136 = vmatmul.mubr.bf16.gmra.mxu0 %v78
  %v137 = vpop.f32.mrf.mxu0
  %v138 = vadd.f32 %v33, %v137
  %v139 = vpop.f32.mrf.mxu0
  %v140 = vpop.f32.mrf.mxu0
  %v141 = vadd.f32 %v33, %v140
  %v142 = vpop.f32.mrf.mxu0
  %143 = vmatprep.mubr.bf16.mxu0 0
  %144 = vmatmul.mubr.bf16.gmra.mxu0 %v81
  %v145 = vpop.f32.mrf.mxu0
  %v146 = vadd.f32 %v33, %v145
  %v147 = vpop.f32.mrf.mxu0
  %v148 = vpop.f32.mrf.mxu0
  %v149 = vadd.f32 %v33, %v148
  %v150 = vpop.f32.mrf.mxu0
  %151 = vdwg.mxu0
  %v152 = vpack.c.bf16 %v125, %v122
  %v153 = vpack.c.bf16 %v133, %v130
  %v154 = vpack.c.bf16 %v141, %v138
  %v155 = vpack.c.bf16 %v149, %v146
  %v160 = vunpack.c.l.b16 %v152
  %v161 = vunpack.c.h.b16 %v152
  %v162 = vunpack.c.l.b16 %v153
  %v163 = vunpack.c.h.b16 %v153
  %v164 = vunpack.c.l.b16 %v154
  %v165 = vunpack.c.h.b16 %v154
  %v166 = vunpack.c.l.b16 %v155
  %v167 = vunpack.c.h.b16 %v155
  %v168 = vpack.c.b16 %v160, %v160
  %v169 = vpack.c.b16 %v161, %v161
  %v170 = vpack.c.b16 %v162, %v162
  %v171 = vpack.c.b16 %v163, %v163
  %v172 = vpack.c.b16 %v164, %v164
  %v173 = vpack.c.b16 %v165, %v165
  %v174 = vpack.c.b16 %v166, %v166
  %v175 = vpack.c.b16 %v167, %v167
  %184 = vst [vmem:[%s3] sm:$0xf] %v168
  %185 = vst [vmem:[%s3 + $0x4] sm:$0xf] %v169
  %186 = vst [vmem:[%s3 + $0x8] sm:$0xf] %v170
  %187 = vst [vmem:[%s3 + $0xc] sm:$0xf] %v171
  %188 = vst [vmem:[%s3 + $0x10] sm:$0xf] %v172
  %189 = vst [vmem:[%s3 + $0x14] sm:$0xf] %v173
  %190 = vst [vmem:[%s3 + $0x18] sm:$0xf] %v174
  %191 = vst [vmem:[%s3 + $0x1c] sm:$0xf] %v175
  // Predicated region
  $region14: #{binary_net_forward.29} parent=0 // pred_check
    _
  $region15: #{binary_net_forward.29} parent=0 // pred_check_branch
    %193 = sbr.rel (0) target = $region17
  $region16: #{binary_net_forward.29} parent=0 // pred_region
    _
  $region17: #{binary_net_forward.29} parent=0 // pred_fallthru
    _
  // Predicated region
  $region18: #{binary_net_forward.29} parent=0 // pred_check
    _
  $region19: #{binary_net_forward.29} parent=0 // pred_check_branch
    %195 = sbr.rel (0) target = $region21
  $region20: #{binary_net_forward.29} parent=0 // pred_region
    _
  $region21: #{binary_net_forward.29} parent=0 // pred_fallthru
    _

// kernel: binary_net_forward.27
$region0: #{binary_net_forward.27}
  #allocation0 [shape = 'u32[]', space=smem, size = 0x4, offset = 0x4, fixed_abs, tag = 'smem constant byte address 0x4 - core index']
  #allocation1 [shape = 'u32[144,128]{1,0:T(1,128)}', space=vmem, size = 0x12000, scoped, tag = 'internal scratch']
  #allocation2 [shape = 'f32[384,128]{1,0:T(8,128)}', space=vmem, size = 0x30000, scoped, tag = 'scratch operand']
  %s0 = inlined_call_operand.vmem [shape: bf16[3,384,8], index: 0, kind: input, shape index: {}]
  %s1 = inlined_call_operand.vmem [shape: bf16[3,3,8,128], index: 1, kind: input, shape index: {}]
  %s2 = inlined_call_operand.vmem [shape: f32[1,128], index: 2, kind: input, shape index: {}]
  %s3 = inlined_call_operand.vmem [shape: bf16[384,128], index: 3, kind: output, shape index: {}]
  %s4 = sld [smem:[#allocation0]]
  $region53: #{binary_net_forward.27} parent=0
    _
  %s6 = ssub.s32 1, %s4
  %s7 = scalar_select 0, %s6, %s4
  loop: start=0, step=1, limit=5
  $region2: #{binary_net_forward.27} parent=0 // loop_pre_header
    _
  $region3: #{binary_net_forward.27} parent=0 // loop_header
    %s9 = sphi 0, %s13
    %p10 = scmp.ge.s32.totalorder %s9, 5
    %s16 = sphi 0, %s28
    %s17 = sphi 0, %s24
    %s18 = sphi 0, %s16
    %s19 = sphi 0, %s17
    %s20 = sphi 0, %s18
    %s21 = sphi 0, %s19
    %s33 = sphi 0, %s35
    %s36 = sphi 0, %s33
    %s37 = sphi 0, %s36
    %s53 = sphi 0, %s37
    %s59 = sphi 0, %s61
    %s62 = sphi 0, %s59
    %s63 = sphi 0, %s62
    %s79 = sphi 0, %s63
    %s83 = sphi 0, %s83
    %s85 = sphi 0, %s83
    %s86 = sphi 0, %s85
    %s100 = sphi 0, %s86
    %s106 = sphi 0, %s108
    %s109 = sphi 0, %s106
    %s110 = sphi 0, %s109
    %s126 = sphi 0, %s110
  $region4: #{binary_net_forward.27} parent=0 // loop_header_branch
    %12 = sbr.rel (%p10) target = $region8
  $region5: #{binary_net_forward.27} parent=0 // loop_body
    %s14 = ssub.s32 %s9, 1
    %s15 = ssub.s32 %s9, 2
    %s22 = sadd.s32 1, %s17
    %p23 = scmp.ge.s32.totalorder %s22, 3
    %s24 = scalar_select %p23, 0, %s22
    %s25 = sadd.s32 1, %s16
    %s26 = scalar_select %p23, %s25, %s16
    %p27 = scmp.ge.s32.totalorder %s26, 1
    %s28 = scalar_select %p27, 0, %s26
    %s29 = ssub.s32 %s17, %s24
    %s30 = ssub.s32 %s16, %s28
    %s31 = sor.u32 %s29, %s30
    %p32 = scmp.eq.s32.totalorder %s31, 0
    %s34 = sadd.s32 %s33, 1
    %s35 = scalar_select %p32, %s33, %s34
    %p38 = pneg %p32
    %p39 = scmp.eq.s32.totalorder %s9, 2
    %p40 = por %p38, %p39
    %p41 = scmp.ne.s32.totalorder %s33, %s36
    %p42 = scmp.eq.s32.totalorder %s9, 0
    %p43 = por %p41, %p42
    %p44 = scmp.ne.s32.totalorder %s33, %s36
    %p45 = scmp.eq.s32.totalorder %s14, 2
    %p46 = por %p44, %p45
    %p47 = scmp.ne.s32.totalorder %s36, %s37
    %p48 = scmp.eq.s32.totalorder %s14, 0
    %p49 = por %p47, %p48
    %p50 = scmp.ne.s32.totalorder %s36, %s37
    %p51 = scmp.eq.s32.totalorder %s15, 2
    %p52 = por %p50, %p51
    %p54 = scmp.ne.s32.totalorder %s37, %s53
    %p55 = scmp.eq.s32.totalorder %s15, 0
    %p56 = por %p54, %p55
    %s57 = ssub.s32 %s17, %s24
    %p58 = scmp.eq.s32.totalorder %s57, 0
    %s60 = sadd.s32 %s59, 1
    %s61 = scalar_select %p58, %s59, %s60
    %p64 = pneg %p58
    %p65 = scmp.eq.s32.totalorder %s9, 2
    %p66 = por %p64, %p65
    %p67 = scmp.ne.s32.totalorder %s59, %s62
    %p68 = scmp.eq.s32.totalorder %s9, 0
    %p69 = por %p67, %p68
    %p70 = scmp.ne.s32.totalorder %s59, %s62
    %p71 = scmp.eq.s32.totalorder %s14, 2
    %p72 = por %p70, %p71
    %p73 = scmp.ne.s32.totalorder %s62, %s63
    %p74 = scmp.eq.s32.totalorder %s14, 0
    %p75 = por %p73, %p74
    %p76 = scmp.ne.s32.totalorder %s62, %s63
    %p77 = scmp.eq.s32.totalorder %s15, 2
    %p78 = por %p76, %p77
    %p80 = scmp.ne.s32.totalorder %s63, %s79
    %p81 = scmp.eq.s32.totalorder %s15, 0
    %p82 = por %p80, %p81
    %s84 = sadd.s32 %s83, 1
    %p87 = scmp.eq.s32.totalorder %s9, 2
    %p88 = scmp.ne.s32.totalorder %s83, %s85
    %p89 = scmp.eq.s32.totalorder %s9, 0
    %p90 = por %p88, %p89
    %p91 = scmp.ne.s32.totalorder %s83, %s85
    %p92 = scmp.eq.s32.totalorder %s14, 2
    %p93 = por %p91, %p92
    %p94 = scmp.ne.s32.totalorder %s85, %s86
    %p95 = scmp.eq.s32.totalorder %s14, 0
    %p96 = por %p94, %p95
    %p97 = scmp.ne.s32.totalorder %s85, %s86
    %p98 = scmp.eq.s32.totalorder %s15, 2
    %p99 = por %p97, %p98
    %p101 = scmp.ne.s32.totalorder %s86, %s100
    %p102 = scmp.eq.s32.totalorder %s15, 0
    %p103 = por %p101, %p102
    %s104 = ssub.s32 %s16, %s28
    %p105 = scmp.eq.s32.totalorder %s104, 0
    %s107 = sadd.s32 %s106, 1
    %s108 = scalar_select %p105, %s106, %s107
    %p111 = pneg %p105
    %p112 = scmp.eq.s32.totalorder %s9, 2
    %p113 = por %p111, %p112
    %p114 = scmp.ne.s32.totalorder %s106, %s109
    %p115 = scmp.eq.s32.totalorder %s9, 0
    %p116 = por %p114, %p115
    %p117 = scmp.ne.s32.totalorder %s106, %s109
    %p118 = scmp.eq.s32.totalorder %s14, 2
    %p119 = por %p117, %p118
    %p120 = scmp.ne.s32.totalorder %s109, %s110
    %p121 = scmp.eq.s32.totalorder %s14, 0
    %p122 = por %p120, %p121
    %p123 = scmp.ne.s32.totalorder %s109, %s110
    %p124 = scmp.eq.s32.totalorder %s15, 2
    %p125 = por %p123, %p124
    %p127 = scmp.ne.s32.totalorder %s110, %s126
    %p128 = scmp.eq.s32.totalorder %s15, 0
    %p129 = por %p127, %p128
    %p130 = scmp.le.s32.totalorder 1, %s9
    %p131 = scmp.lt.s32.totalorder %s9, 4
    %p132 = pnand %p130, %p131
    %p133 = pneg %p132
    // Predicated region
    $region9: #{binary_net_forward.27} parent=5 // pred_check
      _
    $region10: #{binary_net_forward.27} parent=5 // pred_check_branch
      %135 = sbr.rel (%p132) target = $region12
    $region11: #{binary_net_forward.27} parent=5 // pred_region
      %s136 = ssub.s32 %s9, 1
      // Predicated region
      $region13: #{binary_net_forward.27} parent=11 // pred_check
        %p137 = pneg %p96
      $region14: #{binary_net_forward.27} parent=11 // pred_check_branch
        %139 = sbr.rel (%p137) target = $region16
      $region15: #{binary_net_forward.27} parent=11 // pred_region
        _
      $region16: #{binary_net_forward.27} parent=11 // pred_fallthru
        _
    $region12: #{binary_net_forward.27} parent=5 // pred_fallthru
      _
    %p140 = scmp.lt.s32.totalorder %s9, 3
    // Predicated region
    $region17: #{binary_net_forward.27} parent=5 // pred_check
      %p141 = pneg %p140
    $region18: #{binary_net_forward.27} parent=5 // pred_check_branch
      %143 = sbr.rel (%p141) target = $region20
    $region19: #{binary_net_forward.27} parent=5 // pred_region
      // Predicated region
      $region21: #{binary_net_forward.27} parent=19 // pred_check
        %p144 = pneg %p43
      $region22: #{binary_net_forward.27} parent=19 // pred_check_branch
        %146 = sbr.rel (%p144) target = $region24
      $region23: #{binary_net_forward.27} parent=19 // pred_region
        %s147 = smul.u32 48, %s16
        %p148 = scmp.lt.s32.totalorder %s17, 2
        %s149 = scalar_select %p148, %s17, 2
        %p150 = scmp.lt.s32.totalorder %s147, 47
        %s151 = scalar_select %p150, %s147, 47
        %s152 = smul.addr %s149, 48
        %s153 = sadd.s32 %s151, %s152
        %s154 = smul.addr %s153, 4
        %s155 = scalar_lea.vmem %s0, %s154
        %s156 = smul.u32 48, %s16
      $region24: #{binary_net_forward.27} parent=19 // pred_fallthru
        _
      // Predicated region
      $region25: #{binary_net_forward.27} parent=19 // pred_check
        %p157 = pneg %p69
      $region26: #{binary_net_forward.27} parent=19 // pred_check_branch
        %159 = sbr.rel (%p157) target = $region28
      $region27: #{binary_net_forward.27} parent=19 // pred_region
        %p160 = scmp.lt.s32.totalorder %s17, 2
        %s161 = scalar_select %p160, %s17, 2
        %s162 = smul.addr %s161, 3
        %s163 = smul.addr %s162, 4
        %s164 = scalar_lea.vmem %s1, %s163
      $region28: #{binary_net_forward.27} parent=19 // pred_fallthru
        _
    $region20: #{binary_net_forward.27} parent=5 // pred_fallthru
      _
    %p165 = scmp.le.s32.totalorder 1, %s9
    %p166 = scmp.lt.s32.totalorder %s9, 4
    %p167 = pnand %p165, %p166
    %p168 = pneg %p167
    // Predicated region
    $region29: #{binary_net_forward.27} parent=5 // pred_check
      _
    $region30: #{binary_net_forward.27} parent=5 // pred_check_branch
      %170 = sbr.rel (%p167) target = $region32
    $region31: #{binary_net_forward.27} parent=5 // pred_region
      %s171 = ssub.s32 %s9, 1
      %s172 = smul.u32 48, %s18
      %p173 = scmp.lt.s32.totalorder %s19, 2
      %s174 = scalar_select %p173, %s19, 2
      %p175 = scmp.lt.s32.totalorder %s172, 47
      %s176 = scalar_select %p175, %s172, 47
      %s177 = smul.addr %s174, 48
      %s178 = sadd.s32 %s176, %s177
      %s179 = smul.addr %s178, 4
      %s180 = scalar_lea.vmem %s0, %s179
      %p181 = pneg %p49
      %p182 = pneg %p46
      %p183 = scmp.lt.s32.totalorder %s19, 2
      %s184 = scalar_select %p183, %s19, 2
      %s185 = smul.addr %s184, 3
      %s186 = smul.addr %s185, 4
      %s187 = scalar_lea.vmem %s1, %s186
      %p188 = pneg %p75
      %p189 = pneg %p72
      %p190 = pneg %p96
      %p191 = pneg %p93
      %p192 = pneg %p122
      %p193 = pneg %p119
      %s194 = smul.u32 48, %s18
      %p195 = scmp.lt.s32.totalorder %s194, 47
      %s196 = scalar_select %p195, %s194, 47
      %s197 = smul.addr %s196, 4
      %s198 = scalar_lea.vmem %s3, %s197
      %s199 = smul.u32 48, %s18
      %p200 = scmp.lt.s32.totalorder %s19, 2
      %s201 = scalar_select %p200, %s19, 2
      %p202 = scmp.lt.s32.totalorder %s199, 47
      %s203 = scalar_select %p202, %s199, 47
      %s204 = smul.addr %s201, 48
      %s205 = sadd.s32 %s203, %s204
      %s206 = smul.addr %s205, 4
      %s207 = scalar_lea.vmem %s0, %s206
      %s208 = smul.u32 48, %s18
      %p209 = scmp.lt.s32.totalorder %s19, 2
      %s210 = scalar_select %p209, %s19, 2
      %s211 = smul.addr %s210, 3
      %s212 = smul.addr %s211, 4
      %s213 = scalar_lea.vmem %s1, %s212
      %s214 = smul.u32 48, %s18
      %p215 = scmp.lt.s32.totalorder %s214, 47
      %s216 = scalar_select %p215, %s214, 47
      %s217 = smul.addr %s216, 4
      %s218 = scalar_lea.vmem %s3, %s217
      %s219 = smul.u32 48, %s18
      %p221 = scmp.eq.s32.totalorder %s19, 0
      // Predicated region
      $region33: #{binary_net_forward.27} parent=31 // pred_check
        %p222 = pneg %p221
      $region34: #{binary_net_forward.27} parent=31 // pred_check_branch
        %224 = sbr.rel (%p222) target = $region36
      $region35: #{binary_net_forward.27} parent=31 // pred_region
        %225 = vst [vmem:[#allocation2] sm:$0xff] 0.0
        %226 = vst [vmem:[#allocation2 + $0x8] sm:$0xff] 0.0
        %227 = vst [vmem:[#allocation2 + $0x10] sm:$0xff] 0.0
        %228 = vst [vmem:[#allocation2 + $0x18] sm:$0xff] 0.0
        %229 = vst [vmem:[#allocation2 + $0x20] sm:$0xff] 0.0
        %230 = vst [vmem:[#allocation2 + $0x28] sm:$0xff] 0.0
        %231 = vst [vmem:[#allocation2 + $0x30] sm:$0xff] 0.0
        %232 = vst [vmem:[#allocation2 + $0x38] sm:$0xff] 0.0
        %233 = vst [vmem:[#allocation2 + $0x40] sm:$0xff] 0.0
        %234 = vst [vmem:[#allocation2 + $0x48] sm:$0xff] 0.0
        %235 = vst [vmem:[#allocation2 + $0x50] sm:$0xff] 0.0
        %236 = vst [vmem:[#allocation2 + $0x58] sm:$0xff] 0.0
        %237 = vst [vmem:[#allocation2 + $0x60] sm:$0xff] 0.0
        %238 = vst [vmem:[#allocation2 + $0x68] sm:$0xff] 0.0
        %239 = vst [vmem:[#allocation2 + $0x70] sm:$0xff] 0.0
        %240 = vst [vmem:[#allocation2 + $0x78] sm:$0xff] 0.0
        %241 = vst [vmem:[#allocation2 + $0x80] sm:$0xff] 0.0
        %242 = vst [vmem:[#allocation2 + $0x88] sm:$0xff] 0.0
        %243 = vst [vmem:[#allocation2 + $0x90] sm:$0xff] 0.0
        %244 = vst [vmem:[#allocation2 + $0x98] sm:$0xff] 0.0
        %245 = vst [vmem:[#allocation2 + $0xa0] sm:$0xff] 0.0
        %246 = vst [vmem:[#allocation2 + $0xa8] sm:$0xff] 0.0
        %247 = vst [vmem:[#allocation2 + $0xb0] sm:$0xff] 0.0
        %248 = vst [vmem:[#allocation2 + $0xb8] sm:$0xff] 0.0
        %249 = vst [vmem:[#allocation2 + $0xc0] sm:$0xff] 0.0
        %250 = vst [vmem:[#allocation2 + $0xc8] sm:$0xff] 0.0
        %251 = vst [vmem:[#allocation2 + $0xd0] sm:$0xff] 0.0
        %252 = vst [vmem:[#allocation2 + $0xd8] sm:$0xff] 0.0
        %253 = vst [vmem:[#allocation2 + $0xe0] sm:$0xff] 0.0
        %254 = vst [vmem:[#allocation2 + $0xe8] sm:$0xff] 0.0
        %255 = vst [vmem:[#allocation2 + $0xf0] sm:$0xff] 0.0
        %256 = vst [vmem:[#allocation2 + $0xf8] sm:$0xff] 0.0
        %257 = vst [vmem:[#allocation2 + $0x100] sm:$0xff] 0.0
        %258 = vst [vmem:[#allocation2 + $0x108] sm:$0xff] 0.0
        %259 = vst [vmem:[#allocation2 + $0x110] sm:$0xff] 0.0
        %260 = vst [vmem:[#allocation2 + $0x118] sm:$0xff] 0.0
        %261 = vst [vmem:[#allocation2 + $0x120] sm:$0xff] 0.0
        %262 = vst [vmem:[#allocation2 + $0x128] sm:$0xff] 0.0
        %263 = vst [vmem:[#allocation2 + $0x130] sm:$0xff] 0.0
        %264 = vst [vmem:[#allocation2 + $0x138] sm:$0xff] 0.0
        %265 = vst [vmem:[#allocation2 + $0x140] sm:$0xff] 0.0
        %266 = vst [vmem:[#allocation2 + $0x148] sm:$0xff] 0.0
        %267 = vst [vmem:[#allocation2 + $0x150] sm:$0xff] 0.0
        %268 = vst [vmem:[#allocation2 + $0x158] sm:$0xff] 0.0
        %269 = vst [vmem:[#allocation2 + $0x160] sm:$0xff] 0.0
        %270 = vst [vmem:[#allocation2 + $0x168] sm:$0xff] 0.0
        %271 = vst [vmem:[#allocation2 + $0x170] sm:$0xff] 0.0
        %272 = vst [vmem:[#allocation2 + $0x178] sm:$0xff] 0.0
      $region36: #{binary_net_forward.27} parent=31 // pred_fallthru
        _
      %v273 = vld [vmem:[%s207] sm:$0xf]
      %v274 = vld [vmem:[%s207 + $0x4] sm:$0xf]
      %v275 = vld [vmem:[%s207 + $0x8] sm:$0xf]
      %v276 = vld [vmem:[%s207 + $0xc] sm:$0xf]
      %v277 = vld [vmem:[%s207 + $0x10] sm:$0xf]
      %v278 = vld [vmem:[%s207 + $0x14] sm:$0xf]
      %v279 = vld [vmem:[%s207 + $0x18] sm:$0xf]
      %v280 = vld [vmem:[%s207 + $0x1c] sm:$0xf]
      %v281 = vld [vmem:[%s207 + $0x20] sm:$0xf]
      %v282 = vld [vmem:[%s207 + $0x24] sm:$0xf]
      %v283 = vld [vmem:[%s207 + $0x28] sm:$0xf]
      %v284 = vld [vmem:[%s207 + $0x2c] sm:$0xf]
      %v285 = vld [vmem:[%s207 + $0x30] sm:$0xf]
      %v286 = vld [vmem:[%s207 + $0x34] sm:$0xf]
      %v287 = vld [vmem:[%s207 + $0x38] sm:$0xf]
      %v288 = vld [vmem:[%s207 + $0x3c] sm:$0xf]
      %v289 = vld [vmem:[%s207 + $0x40] sm:$0xf]
      %v290 = vld [vmem:[%s207 + $0x44] sm:$0xf]
      %v291 = vld [vmem:[%s207 + $0x48] sm:$0xf]
      %v292 = vld [vmem:[%s207 + $0x4c] sm:$0xf]
      %v293 = vld [vmem:[%s207 + $0x50] sm:$0xf]
      %v294 = vld [vmem:[%s207 + $0x54] sm:$0xf]
      %v295 = vld [vmem:[%s207 + $0x58] sm:$0xf]
      %v296 = vld [vmem:[%s207 + $0x5c] sm:$0xf]
      %v297 = vld [vmem:[%s207 + $0x60] sm:$0xf]
      %v298 = vld [vmem:[%s207 + $0x64] sm:$0xf]
      %v299 = vld [vmem:[%s207 + $0x68] sm:$0xf]
      %v300 = vld [vmem:[%s207 + $0x6c] sm:$0xf]
      %v301 = vld [vmem:[%s207 + $0x70] sm:$0xf]
      %v302 = vld [vmem:[%s207 + $0x74] sm:$0xf]
      %v303 = vld [vmem:[%s207 + $0x78] sm:$0xf]
      %v304 = vld [vmem:[%s207 + $0x7c] sm:$0xf]
      %v305 = vld [vmem:[%s207 + $0x80] sm:$0xf]
      %v306 = vld [vmem:[%s207 + $0x84] sm:$0xf]
      %v307 = vld [vmem:[%s207 + $0x88] sm:$0xf]
      %v308 = vld [vmem:[%s207 + $0x8c] sm:$0xf]
      %v309 = vld [vmem:[%s207 + $0x90] sm:$0xf]
      %v310 = vld [vmem:[%s207 + $0x94] sm:$0xf]
      %v311 = vld [vmem:[%s207 + $0x98] sm:$0xf]
      %v312 = vld [vmem:[%s207 + $0x9c] sm:$0xf]
      %v313 = vld [vmem:[%s207 + $0xa0] sm:$0xf]
      %v314 = vld [vmem:[%s207 + $0xa4] sm:$0xf]
      %v315 = vld [vmem:[%s207 + $0xa8] sm:$0xf]
      %v316 = vld [vmem:[%s207 + $0xac] sm:$0xf]
      %v317 = vld [vmem:[%s207 + $0xb0] sm:$0xf]
      %v318 = vld [vmem:[%s207 + $0xb4] sm:$0xf]
      %v319 = vld [vmem:[%s207 + $0xb8] sm:$0xf]
      %v320 = vld [vmem:[%s207 + $0xbc] sm:$0xf]
      %v321 = vld [vmem:[#allocation2] sm:$0xff]
      %v322 = vld [vmem:[#allocation2 + $0x8] sm:$0xff]
      %v323 = vld [vmem:[#allocation2 + $0x10] sm:$0xff]
      %v324 = vld [vmem:[#allocation2 + $0x18] sm:$0xff]
      %v325 = vld [vmem:[#allocation2 + $0x20] sm:$0xff]
      %v326 = vld [vmem:[#allocation2 + $0x28] sm:$0xff]
      %v327 = vld [vmem:[#allocation2 + $0x30] sm:$0xff]
      %v328 = vld [vmem:[#allocation2 + $0x38] sm:$0xff]
      %v329 = vld [vmem:[#allocation2 + $0x40] sm:$0xff]
      %v330 = vld [vmem:[#allocation2 + $0x48] sm:$0xff]
      %v331 = vld [vmem:[#allocation2 + $0x50] sm:$0xff]
      %v332 = vld [vmem:[#allocation2 + $0x58] sm:$0xff]
      %v333 = vld [vmem:[#allocation2 + $0x60] sm:$0xff]
      %v334 = vld [vmem:[#allocation2 + $0x68] sm:$0xff]
      %v335 = vld [vmem:[#allocation2 + $0x70] sm:$0xff]
      %v336 = vld [vmem:[#allocation2 + $0x78] sm:$0xff]
      %v337 = vld [vmem:[#allocation2 + $0x80] sm:$0xff]
      %v338 = vld [vmem:[#allocation2 + $0x88] sm:$0xff]
      %v339 = vld [vmem:[#allocation2 + $0x90] sm:$0xff]
      %v340 = vld [vmem:[#allocation2 + $0x98] sm:$0xff]
      %v341 = vld [vmem:[#allocation2 + $0xa0] sm:$0xff]
      %v342 = vld [vmem:[#allocation2 + $0xa8] sm:$0xff]
      %v343 = vld [vmem:[#allocation2 + $0xb0] sm:$0xff]
      %v344 = vld [vmem:[#allocation2 + $0xb8] sm:$0xff]
      %v345 = vld [vmem:[#allocation2 + $0xc0] sm:$0xff]
      %v346 = vld [vmem:[#allocation2 + $0xc8] sm:$0xff]
      %v347 = vld [vmem:[#allocation2 + $0xd0] sm:$0xff]
      %v348 = vld [vmem:[#allocation2 + $0xd8] sm:$0xff]
      %v349 = vld [vmem:[#allocation2 + $0xe0] sm:$0xff]
      %v350 = vld [vmem:[#allocation2 + $0xe8] sm:$0xff]
      %v351 = vld [vmem:[#allocation2 + $0xf0] sm:$0xff]
      %v352 = vld [vmem:[#allocation2 + $0xf8] sm:$0xff]
      %v353 = vld [vmem:[#allocation2 + $0x100] sm:$0xff]
      %v354 = vld [vmem:[#allocation2 + $0x108] sm:$0xff]
      %v355 = vld [vmem:[#allocation2 + $0x110] sm:$0xff]
      %v356 = vld [vmem:[#allocation2 + $0x118] sm:$0xff]
      %v357 = vld [vmem:[#allocation2 + $0x120] sm:$0xff]
      %v358 = vld [vmem:[#allocation2 + $0x128] sm:$0xff]
      %v359 = vld [vmem:[#allocation2 + $0x130] sm:$0xff]
      %v360 = vld [vmem:[#allocation2 + $0x138] sm:$0xff]
      %v361 = vld [vmem:[#allocation2 + $0x140] sm:$0xff]
      %v362 = vld [vmem:[#allocation2 + $0x148] sm:$0xff]
      %v363 = vld [vmem:[#allocation2 + $0x150] sm:$0xff]
      %v364 = vld [vmem:[#allocation2 + $0x158] sm:$0xff]
      %v365 = vld [vmem:[#allocation2 + $0x160] sm:$0xff]
      %v366 = vld [vmem:[#allocation2 + $0x168] sm:$0xff]
      %v367 = vld [vmem:[#allocation2 + $0x170] sm:$0xff]
      %v368 = vld [vmem:[%s213] sm:$0xf]
      %v416 = vunpack.c.l.b16 %v273
      %v417 = vunpack.c.l.b16 %v274
      %v418 = vunpack.c.l.b16 %v275
      %v419 = vunpack.c.l.b16 %v276
      %v420 = vunpack.c.l.b16 %v277
      %v421 = vunpack.c.l.b16 %v278
      %v422 = vunpack.c.l.b16 %v279
      %v423 = vunpack.c.l.b16 %v280
      %v424 = vunpack.c.l.b16 %v281
      %v425 = vunpack.c.l.b16 %v282
      %v426 = vunpack.c.l.b16 %v283
      %v427 = vunpack.c.l.b16 %v284
      %v428 = vunpack.c.l.b16 %v285
      %v429 = vunpack.c.l.b16 %v286
      %v430 = vunpack.c.l.b16 %v287
      %v431 = vunpack.c.l.b16 %v288
      %v432 = vunpack.c.l.b16 %v289
      %v433 = vunpack.c.l.b16 %v290
      %v434 = vunpack.c.l.b16 %v291
      %v435 = vunpack.c.l.b16 %v292
      %v436 = vunpack.c.l.b16 %v293
      %v437 = vunpack.c.l.b16 %v294
      %v438 = vunpack.c.l.b16 %v295
      %v439 = vunpack.c.l.b16 %v296
      %v440 = vunpack.c.l.b16 %v297
      %v441 = vunpack.c.l.b16 %v298
      %v442 = vunpack.c.l.b16 %v299
      %v443 = vunpack.c.l.b16 %v300
      %v444 = vunpack.c.l.b16 %v301
      %v445 = vunpack.c.l.b16 %v302
      %v446 = vunpack.c.l.b16 %v303
      %v447 = vunpack.c.l.b16 %v304
      %v448 = vunpack.c.l.b16 %v305
      %v449 = vunpack.c.l.b16 %v306
      %v450 = vunpack.c.l.b16 %v307
      %v451 = vunpack.c.l.b16 %v308
      %v452 = vunpack.c.l.b16 %v309
      %v453 = vunpack.c.l.b16 %v310
      %v454 = vunpack.c.l.b16 %v311
      %v455 = vunpack.c.l.b16 %v312
      %v456 = vunpack.c.l.b16 %v313
      %v457 = vunpack.c.l.b16 %v314
      %v458 = vunpack.c.l.b16 %v315
      %v459 = vunpack.c.l.b16 %v316
      %v460 = vunpack.c.l.b16 %v317
      %v461 = vunpack.c.l.b16 %v318
      %v462 = vunpack.c.l.b16 %v319
      %v463 = vpack.c.b16 %v417, %v416
      %v464 = vpack.c.b16 %v419, %v418
      %v465 = vpack.c.b16 %v421, %v420
      %v466 = vpack.c.b16 %v423, %v422
      %v467 = vpack.c.b16 %v425, %v424
      %v468 = vpack.c.b16 %v427, %v426
      %v469 = vpack.c.b16 %v429, %v428
      %v470 = vpack.c.b16 %v431, %v430
      %v471 = vpack.c.b16 %v433, %v432
      %v472 = vpack.c.b16 %v435, %v434
      %v473 = vpack.c.b16 %v437, %v436
      %v474 = vpack.c.b16 %v439, %v438
      %v475 = vpack.c.b16 %v441, %v440
      %v476 = vpack.c.b16 %v443, %v442
      %v477 = vpack.c.b16 %v445, %v444
      %v478 = vpack.c.b16 %v447, %v446
      %v479 = vpack.c.b16 %v449, %v448
      %v480 = vpack.c.b16 %v451, %v450
      %v481 = vpack.c.b16 %v453, %v452
      %v482 = vpack.c.b16 %v455, %v454
      %v483 = vpack.c.b16 %v457, %v456
      %v484 = vpack.c.b16 %v459, %v458
      %v485 = vpack.c.b16 %v461, %v460
      %v486 = vpack.c.b16 %v462, %v462
      %vm487 = vcmask 64512
      %v489 = vsel %vm487, %v463, 0
      %v492 = vsel %vm487, %v464, 0
      %v495 = vsel %vm487, %v465, 0
      %v498 = vsel %vm487, %v466, 0
      %v501 = vsel %vm487, %v467, 0
      %v504 = vsel %vm487, %v468, 0
      %v507 = vsel %vm487, %v469, 0
      %v510 = vsel %vm487, %v470, 0
      %v513 = vsel %vm487, %v471, 0
      %v516 = vsel %vm487, %v472, 0
      %v519 = vsel %vm487, %v473, 0
      %v522 = vsel %vm487, %v474, 0
      %v525 = vsel %vm487, %v475, 0
      %v528 = vsel %vm487, %v476, 0
      %v531 = vsel %vm487, %v477, 0
      %v534 = vsel %vm487, %v478, 0
      %v537 = vsel %vm487, %v479, 0
      %v540 = vsel %vm487, %v480, 0
      %v543 = vsel %vm487, %v481, 0
      %v546 = vsel %vm487, %v482, 0
      %v549 = vsel %vm487, %v483, 0
      %v552 = vsel %vm487, %v484, 0
      %v555 = vsel %vm487, %v485, 0
      %v558 = vsel %vm487, %v486, 0
      %vm560 = vcmask 1043456
      %v562 = vsel %vm560, %v368, 0
      %564 = vmatprep.subr.bf16.mxu0 0
      %565 = vmatpush1.bf16.msra.mxu0 0
      %566 = vmatprep.subr.bf16.mxu0 0
      %567 = vmatpush1.bf16.msra.mxu0 0
      %568 = vmatprep.subr.bf16.mxu0 0
      %569 = vmatpush1.bf16.msra.mxu0 0
      %570 = vmatprep.subr.bf16.mxu0 0
      %571 = vmatpush1.bf16.msra.mxu0 0
      %572 = vmatprep.subr.bf16.mxu0 0
      %573 = vmatpush1.bf16.msra.mxu0 0
      %574 = vmatprep.subr.bf16.mxu0 0
      %575 = vmatpush1.bf16.msra.mxu0 0
      %576 = vmatprep.subr.bf16.mxu0 0
      %577 = vmatpush1.bf16.msra.mxu0 0
      %578 = vmatprep.subr.bf16.mxu0 0
      %579 = vmatpush1.bf16.msra.mxu0 %v562
      %580 = vmatprep.subr.bf16.mxu0 0
      %581 = vmatpush2.bf16.msra.mxu0 0
      %582 = vmatprep.subr.bf16.mxu0 0
      %583 = vmatpush2.bf16.msra.mxu0 0
      %584 = vmatprep.subr.bf16.mxu0 0
      %585 = vmatpush2.bf16.msra.mxu0 0
      %586 = vmatprep.subr.bf16.mxu0 0
      %587 = vmatpush2.bf16.msra.mxu0 0
      %588 = vmatprep.subr.bf16.mxu0 0
      %589 = vmatpush2.bf16.msra.mxu0 0
      %590 = vmatprep.subr.bf16.mxu0 0
      %591 = vmatpush2.bf16.msra.mxu0 0
      %592 = vmatprep.subr.bf16.mxu0 0
      %593 = vmatpush2.bf16.msra.mxu0 0
      %594 = vmatprep.subr.bf16.mxu0 0
      %595 = vmatpush2.bf16.msra.mxu0 0
      %596 = vmatprep.mubr.bf16.mxu0 0
      %597 = vmatmul.mubr.bf16.gmra.mxu0 %v489
      %v598 = vpop.f32.mrf.mxu0
      %v599 = vadd.f32 0.0, %v598
      %v600 = vpop.f32.mrf.mxu0
      %v601 = vpop.f32.mrf.mxu0
      %v602 = vadd.f32 0.0, %v601
      %v603 = vpop.f32.mrf.mxu0
      %604 = vmatprep.mubr.bf16.mxu0 0
      %605 = vmatmul.mubr.bf16.gmra.mxu0 %v492
      %v606 = vpop.f32.mrf.mxu0
      %v607 = vadd.f32 0.0, %v606
      %v608 = vpop.f32.mrf.mxu0
      %v609 = vpop.f32.mrf.mxu0
      %v610 = vadd.f32 0.0, %v609
      %v611 = vpop.f32.mrf.mxu0
      %612 = vmatprep.mubr.bf16.mxu0 0
      %613 = vmatmul.mubr.bf16.gmra.mxu0 %v495
      %v614 = vpop.f32.mrf.mxu0
      %v615 = vadd.f32 0.0, %v614
      %v616 = vpop.f32.mrf.mxu0
      %v617 = vpop.f32.mrf.mxu0
      %v618 = vadd.f32 0.0, %v617
      %v619 = vpop.f32.mrf.mxu0
      %620 = vmatprep.mubr.bf16.mxu0 0
      %621 = vmatmul.mubr.bf16.gmra.mxu0 %v498
      %v622 = vpop.f32.mrf.mxu0
      %v623 = vadd.f32 0.0, %v622
      %v624 = vpop.f32.mrf.mxu0
      %v625 = vpop.f32.mrf.mxu0
      %v626 = vadd.f32 0.0, %v625
      %v627 = vpop.f32.mrf.mxu0
      %628 = vmatprep.mubr.bf16.mxu0 0
      %629 = vmatmul.mubr.bf16.gmra.mxu0 %v501
      %v630 = vpop.f32.mrf.mxu0
      %v631 = vadd.f32 0.0, %v630
      %v632 = vpop.f32.mrf.mxu0
      %v633 = vpop.f32.mrf.mxu0
      %v634 = vadd.f32 0.0, %v633
      %v635 = vpop.f32.mrf.mxu0
      %636 = vmatprep.mubr.bf16.mxu0 0
      %637 = vmatmul.mubr.bf16.gmra.mxu0 %v504
      %v638 = vpop.f32.mrf.mxu0
      %v639 = vadd.f32 0.0, %v638
      %v640 = vpop.f32.mrf.mxu0
      %v641 = vpop.f32.mrf.mxu0
      %v642 = vadd.f32 0.0, %v641
      %v643 = vpop.f32.mrf.mxu0
      %644 = vmatprep.mubr.bf16.mxu0 0
      %645 = vmatmul.mubr.bf16.gmra.mxu0 %v507
      %v646 = vpop.f32.mrf.mxu0
      %v647 = vadd.f32 0.0, %v646
      %v648 = vpop.f32.mrf.mxu0
      %v649 = vpop.f32.mrf.mxu0
      %v650 = vadd.f32 0.0, %v649
      %v651 = vpop.f32.mrf.mxu0
      %652 = vmatprep.mubr.bf16.mxu0 0
      %653 = vmatmul.mubr.bf16.gmra.mxu0 %v510
      %v654 = vpop.f32.mrf.mxu0
      %v655 = vadd.f32 0.0, %v654
      %v656 = vpop.f32.mrf.mxu0
      %v657 = vpop.f32.mrf.mxu0
      %v658 = vadd.f32 0.0, %v657
      %v659 = vpop.f32.mrf.mxu0
      %660 = vmatprep.mubr.bf16.mxu0 0
      %661 = vmatmul.mubr.bf16.gmra.mxu0 %v513
      %v662 = vpop.f32.mrf.mxu0
      %v663 = vadd.f32 0.0, %v662
      %v664 = vpop.f32.mrf.mxu0
      %v665 = vpop.f32.mrf.mxu0
      %v666 = vadd.f32 0.0, %v665
      %v667 = vpop.f32.mrf.mxu0
      %668 = vmatprep.mubr.bf16.mxu0 0
      %669 = vmatmul.mubr.bf16.gmra.mxu0 %v516
      %v670 = vpop.f32.mrf.mxu0
      %v671 = vadd.f32 0.0, %v670
      %v672 = vpop.f32.mrf.mxu0
      %v673 = vpop.f32.mrf.mxu0
      %v674 = vadd.f32 0.0, %v673
      %v675 = vpop.f32.mrf.mxu0
      %676 = vmatprep.mubr.bf16.mxu0 0
      %677 = vmatmul.mubr.bf16.gmra.mxu0 %v519
      %v678 = vpop.f32.mrf.mxu0
      %v679 = vadd.f32 0.0, %v678
      %v680 = vpop.f32.mrf.mxu0
      %v681 = vpop.f32.mrf.mxu0
      %v682 = vadd.f32 0.0, %v681
      %v683 = vpop.f32.mrf.mxu0
      %684 = vmatprep.mubr.bf16.mxu0 0
      %685 = vmatmul.mubr.bf16.gmra.mxu0 %v522
      %v686 = vpop.f32.mrf.mxu0
      %v687 = vadd.f32 0.0, %v686
      %v688 = vpop.f32.mrf.mxu0
      %v689 = vpop.f32.mrf.mxu0
      %v690 = vadd.f32 0.0, %v689
      %v691 = vpop.f32.mrf.mxu0
      %692 = vmatprep.mubr.bf16.mxu0 0
      %693 = vmatmul.mubr.bf16.gmra.mxu0 %v525
      %v694 = vpop.f32.mrf.mxu0
      %v695 = vadd.f32 0.0, %v694
      %v696 = vpop.f32.mrf.mxu0
      %v697 = vpop.f32.mrf.mxu0
      %v698 = vadd.f32 0.0, %v697
      %v699 = vpop.f32.mrf.mxu0
      %700 = vmatprep.mubr.bf16.mxu0 0
      %701 = vmatmul.mubr.bf16.gmra.mxu0 %v528
      %v702 = vpop.f32.mrf.mxu0
      %v703 = vadd.f32 0.0, %v702
      %v704 = vpop.f32.mrf.mxu0
      %v705 = vpop.f32.mrf.mxu0
      %v706 = vadd.f32 0.0, %v705
      %v707 = vpop.f32.mrf.mxu0
      %708 = vmatprep.mubr.bf16.mxu0 0
      %709 = vmatmul.mubr.bf16.gmra.mxu0 %v531
      %v710 = vpop.f32.mrf.mxu0
      %v711 = vadd.f32 0.0, %v710
      %v712 = vpop.f32.mrf.mxu0
      %v713 = vpop.f32.mrf.mxu0
      %v714 = vadd.f32 0.0, %v713
      %v715 = vpop.f32.mrf.mxu0
      %716 = vmatprep.mubr.bf16.mxu0 0
      %717 = vmatmul.mubr.bf16.gmra.mxu0 %v534
      %v718 = vpop.f32.mrf.mxu0
      %v719 = vadd.f32 0.0, %v718
      %v720 = vpop.f32.mrf.mxu0
      %v721 = vpop.f32.mrf.mxu0
      %v722 = vadd.f32 0.0, %v721
      %v723 = vpop.f32.mrf.mxu0
      %724 = vmatprep.mubr.bf16.mxu0 0
      %725 = vmatmul.mubr.bf16.gmra.mxu0 %v537
      %v726 = vpop.f32.mrf.mxu0
      %v727 = vadd.f32 0.0, %v726
      %v728 = vpop.f32.mrf.mxu0
      %v729 = vpop.f32.mrf.mxu0
      %v730 = vadd.f32 0.0, %v729
      %v731 = vpop.f32.mrf.mxu0
      %732 = vmatprep.mubr.bf16.mxu0 0
      %733 = vmatmul.mubr.bf16.gmra.mxu0 %v540
      %v734 = vpop.f32.mrf.mxu0
      %v735 = vadd.f32 0.0, %v734
      %v736 = vpop.f32.mrf.mxu0
      %v737 = vpop.f32.mrf.mxu0
      %v738 = vadd.f32 0.0, %v737
      %v739 = vpop.f32.mrf.mxu0
      %740 = vmatprep.mubr.bf16.mxu0 0
      %741 = vmatmul.mubr.bf16.gmra.mxu0 %v543
      %v742 = vpop.f32.mrf.mxu0
      %v743 = vadd.f32 0.0, %v742
      %v744 = vpop.f32.mrf.mxu0
      %v745 = vpop.f32.mrf.mxu0
      %v746 = vadd.f32 0.0, %v745
      %v747 = vpop.f32.mrf.mxu0
      %748 = vmatprep.mubr.bf16.mxu0 0
      %749 = vmatmul.mubr.bf16.gmra.mxu0 %v546
      %v750 = vpop.f32.mrf.mxu0
      %v751 = vadd.f32 0.0, %v750
      %v752 = vpop.f32.mrf.mxu0
      %v753 = vpop.f32.mrf.mxu0
      %v754 = vadd.f32 0.0, %v753
      %v755 = vpop.f32.mrf.mxu0
      %756 = vmatprep.mubr.bf16.mxu0 0
      %757 = vmatmul.mubr.bf16.gmra.mxu0 %v549
      %v758 = vpop.f32.mrf.mxu0
      %v759 = vadd.f32 0.0, %v758
      %v760 = vpop.f32.mrf.mxu0
      %v761 = vpop.f32.mrf.mxu0
      %v762 = vadd.f32 0.0, %v761
      %v763 = vpop.f32.mrf.mxu0
      %764 = vmatprep.mubr.bf16.mxu0 0
      %765 = vmatmul.mubr.bf16.gmra.mxu0 %v552
      %v766 = vpop.f32.mrf.mxu0
      %v767 = vadd.f32 0.0, %v766
      %v768 = vpop.f32.mrf.mxu0
      %v769 = vpop.f32.mrf.mxu0
      %v770 = vadd.f32 0.0, %v769
      %v771 = vpop.f32.mrf.mxu0
      %772 = vmatprep.mubr.bf16.mxu0 0
      %773 = vmatmul.mubr.bf16.gmra.mxu0 %v555
      %v774 = vpop.f32.mrf.mxu0
      %v775 = vadd.f32 0.0, %v774
      %v776 = vpop.f32.mrf.mxu0
      %v777 = vpop.f32.mrf.mxu0
      %v778 = vadd.f32 0.0, %v777
      %v779 = vpop.f32.mrf.mxu0
      %780 = vmatprep.mubr.bf16.mxu0 0
      %781 = vmatmul.mubr.bf16.gmra.mxu0 %v558
      %v782 = vpop.f32.mrf.mxu0
      %v783 = vadd.f32 0.0, %v782
      %v784 = vpop.f32.mrf.mxu0
      %v785 = vpop.f32.mrf.mxu0
      %v786 = vpop.f32.mrf.mxu0
      %787 = vdwg.mxu0
      %v788 = vadd.f32 %v321, %v599
      %v789 = vadd.f32 %v322, %v602
      %v790 = vadd.f32 %v323, %v607
      %v791 = vadd.f32 %v324, %v610
      %v792 = vadd.f32 %v325, %v615
      %v793 = vadd.f32 %v326, %v618
      %v794 = vadd.f32 %v327, %v623
      %v795 = vadd.f32 %v328, %v626
      %v796 = vadd.f32 %v329, %v631
      %v797 = vadd.f32 %v330, %v634
      %v798 = vadd.f32 %v331, %v639
      %v799 = vadd.f32 %v332, %v642
      %v800 = vadd.f32 %v333, %v647
      %v801 = vadd.f32 %v334, %v650
      %v802 = vadd.f32 %v335, %v655
      %v803 = vadd.f32 %v336, %v658
      %v804 = vadd.f32 %v337, %v663
      %v805 = vadd.f32 %v338, %v666
      %v806 = vadd.f32 %v339, %v671
      %v807 = vadd.f32 %v340, %v674
      %v808 = vadd.f32 %v341, %v679
      %v809 = vadd.f32 %v342, %v682
      %v810 = vadd.f32 %v343, %v687
      %v811 = vadd.f32 %v344, %v690
      %v812 = vadd.f32 %v345, %v695
      %v813 = vadd.f32 %v346, %v698
      %v814 = vadd.f32 %v347, %v703
      %v815 = vadd.f32 %v348, %v706
      %v816 = vadd.f32 %v349, %v711
      %v817 = vadd.f32 %v350, %v714
      %v818 = vadd.f32 %v351, %v719
      %v819 = vadd.f32 %v352, %v722
      %v820 = vadd.f32 %v353, %v727
      %v821 = vadd.f32 %v354, %v730
      %v822 = vadd.f32 %v355, %v735
      %v823 = vadd.f32 %v356, %v738
      %v824 = vadd.f32 %v357, %v743
      %v825 = vadd.f32 %v358, %v746
      %v826 = vadd.f32 %v359, %v751
      %v827 = vadd.f32 %v360, %v754
      %v828 = vadd.f32 %v361, %v759
      %v829 = vadd.f32 %v362, %v762
      %v830 = vadd.f32 %v363, %v767
      %v831 = vadd.f32 %v364, %v770
      %v832 = vadd.f32 %v365, %v775
      %v833 = vadd.f32 %v366, %v778
      %v834 = vadd.f32 %v367, %v783
      %s835 = scalar_lea.vmem %s213, 4
      %v836 = vld [vmem:[%s835] sm:$0xf]
      %v838 = vunpack.c.l.b16 %v320
      %v839 = vpack.c.b16 %v838, %v462
      %vm840 = vsmask.f32 7424
      %v841 = vshrl.u32 %v463, 16
      %v843 = vshll.u32 %v463, 16
      %v845 = vrot.slane %v843, 1
      %v846 = vor.u32 %v841, %v845
      %v847 = vshll.u32 %v464, 16
      %v849 = vrot.slane %v847, 1
      %v850 = vsel %vm840, %v846, %v849
      %v851 = vshrl.u32 %v464, 16
      %v853 = vor.u32 %v851, %v849
      %v854 = vshll.u32 %v465, 16
      %v856 = vrot.slane %v854, 1
      %v857 = vsel %vm840, %v853, %v856
      %v858 = vshrl.u32 %v465, 16
      %v860 = vor.u32 %v858, %v856
      %v861 = vshll.u32 %v466, 16
      %v863 = vrot.slane %v861, 1
      %v864 = vsel %vm840, %v860, %v863
      %v865 = vshrl.u32 %v466, 16
      %v867 = vor.u32 %v865, %v863
      %v868 = vshll.u32 %v467, 16
      %v870 = vrot.slane %v868, 1
      %v871 = vsel %vm840, %v867, %v870
      %v872 = vshrl.u32 %v467, 16
      %v874 = vor.u32 %v872, %v870
      %v875 = vshll.u32 %v468, 16
      %v877 = vrot.slane %v875, 1
      %v878 = vsel %vm840, %v874, %v877
      %v879 = vshrl.u32 %v468, 16
      %v881 = vor.u32 %v879, %v877
      %v882 = vshll.u32 %v469, 16
      %v884 = vrot.slane %v882, 1
      %v885 = vsel %vm840, %v881, %v884
      %v886 = vshrl.u32 %v469, 16
      %v888 = vor.u32 %v886, %v884
      %v889 = vshll.u32 %v470, 16
      %v891 = vrot.slane %v889, 1
      %v892 = vsel %vm840, %v888, %v891
      %v893 = vshrl.u32 %v470, 16
      %v895 = vor.u32 %v893, %v891
      %v896 = vshll.u32 %v471, 16
      %v898 = vrot.slane %v896, 1
      %v899 = vsel %vm840, %v895, %v898
      %v900 = vshrl.u32 %v471, 16
      %v902 = vor.u32 %v900, %v898
      %v903 = vshll.u32 %v472, 16
      %v905 = vrot.slane %v903, 1
      %v906 = vsel %vm840, %v902, %v905
      %v907 = vshrl.u32 %v472, 16
      %v909 = vor.u32 %v907, %v905
      %v910 = vshll.u32 %v473, 16
      %v912 = vrot.slane %v910, 1
      %v913 = vsel %vm840, %v909, %v912
      %v914 = vshrl.u32 %v473, 16
      %v916 = vor.u32 %v914, %v912
      %v917 = vshll.u32 %v474, 16
      %v919 = vrot.slane %v917, 1
      %v920 = vsel %vm840, %v916, %v919
      %v921 = vshrl.u32 %v474, 16
      %v923 = vor.u32 %v921, %v919
      %v924 = vshll.u32 %v475, 16
      %v926 = vrot.slane %v924, 1
      %v927 = vsel %vm840, %v923, %v926
      %v928 = vshrl.u32 %v475, 16
      %v930 = vor.u32 %v928, %v926
      %v931 = vshll.u32 %v476, 16
      %v933 = vrot.slane %v931, 1
      %v934 = vsel %vm840, %v930, %v933
      %v935 = vshrl.u32 %v476, 16
      %v937 = vor.u32 %v935, %v933
      %v938 = vshll.u32 %v477, 16
      %v940 = vrot.slane %v938, 1
      %v941 = vsel %vm840, %v937, %v940
      %v942 = vshrl.u32 %v477, 16
      %v944 = vor.u32 %v942, %v940
      %v945 = vshll.u32 %v478, 16
      %v947 = vrot.slane %v945, 1
      %v948 = vsel %vm840, %v944, %v947
      %v949 = vshrl.u32 %v478, 16
      %v951 = vor.u32 %v949, %v947
      %v952 = vshll.u32 %v479, 16
      %v954 = vrot.slane %v952, 1
      %v955 = vsel %vm840, %v951, %v954
      %v956 = vshrl.u32 %v479, 16
      %v958 = vor.u32 %v956, %v954
      %v959 = vshll.u32 %v480, 16
      %v961 = vrot.slane %v959, 1
      %v962 = vsel %vm840, %v958, %v961
      %v963 = vshrl.u32 %v480, 16
      %v965 = vor.u32 %v963, %v961
      %v966 = vshll.u32 %v481, 16
      %v968 = vrot.slane %v966, 1
      %v969 = vsel %vm840, %v965, %v968
      %v970 = vshrl.u32 %v481, 16
      %v972 = vor.u32 %v970, %v968
      %v973 = vshll.u32 %v482, 16
      %v975 = vrot.slane %v973, 1
      %v976 = vsel %vm840, %v972, %v975
      %v977 = vshrl.u32 %v482, 16
      %v979 = vor.u32 %v977, %v975
      %v980 = vshll.u32 %v483, 16
      %v982 = vrot.slane %v980, 1
      %v983 = vsel %vm840, %v979, %v982
      %v984 = vshrl.u32 %v483, 16
      %v986 = vor.u32 %v984, %v982
      %v987 = vshll.u32 %v484, 16
      %v989 = vrot.slane %v987, 1
      %v990 = vsel %vm840, %v986, %v989
      %v991 = vshrl.u32 %v484, 16
      %v993 = vor.u32 %v991, %v989
      %v994 = vshll.u32 %v485, 16
      %v996 = vrot.slane %v994, 1
      %v997 = vsel %vm840, %v993, %v996
      %v998 = vshrl.u32 %v485, 16
      %v1000 = vor.u32 %v998, %v996
      %v1002 = vshll.u32 %v839, 16
      %v1004 = vrot.slane %v1002, 1
      %v1005 = vsel %vm840, %v1000, %v1004
      %v1006 = vshrl.u32 %v839, 16
      %v1008 = vor.u32 %v1006, %v1004
      %v1010 = vsel %vm487, %v850, 0
      %v1013 = vsel %vm487, %v857, 0
      %v1016 = vsel %vm487, %v864, 0
      %v1019 = vsel %vm487, %v871, 0
      %v1022 = vsel %vm487, %v878, 0
      %v1025 = vsel %vm487, %v885, 0
      %v1028 = vsel %vm487, %v892, 0
      %v1031 = vsel %vm487, %v899, 0
      %v1034 = vsel %vm487, %v906, 0
      %v1037 = vsel %vm487, %v913, 0
      %v1040 = vsel %vm487, %v920, 0
      %v1043 = vsel %vm487, %v927, 0
      %v1046 = vsel %vm487, %v934, 0
      %v1049 = vsel %vm487, %v941, 0
      %v1052 = vsel %vm487, %v948, 0
      %v1055 = vsel %vm487, %v955, 0
      %v1058 = vsel %vm487, %v962, 0
      %v1061 = vsel %vm487, %v969, 0
      %v1064 = vsel %vm487, %v976, 0
      %v1067 = vsel %vm487, %v983, 0
      %v1070 = vsel %vm487, %v990, 0
      %v1073 = vsel %vm487, %v997, 0
      %v1076 = vsel %vm487, %v1005, 0
      %v1079 = vsel %vm487, %v1008, 0
      %v1082 = vsel %vm560, %v836, 0
      %1084 = vmatprep.subr.bf16.mxu0 0
      %1085 = vmatpush1.bf16.msra.mxu0 0
      %1086 = vmatprep.subr.bf16.mxu0 0
      %1087 = vmatpush1.bf16.msra.mxu0 0
      %1088 = vmatprep.subr.bf16.mxu0 0
      %1089 = vmatpush1.bf16.msra.mxu0 0
      %1090 = vmatprep.subr.bf16.mxu0 0
      %1091 = vmatpush1.bf16.msra.mxu0 0
      %1092 = vmatprep.subr.bf16.mxu0 0
      %1093 = vmatpush1.bf16.msra.mxu0 0
      %1094 = vmatprep.subr.bf16.mxu0 0
      %1095 = vmatpush1.bf16.msra.mxu0 0
      %1096 = vmatprep.subr.bf16.mxu0 0
      %1097 = vmatpush1.bf16.msra.mxu0 0
      %1098 = vmatprep.subr.bf16.mxu0 0
      %1099 = vmatpush1.bf16.msra.mxu0 %v1082
      %1100 = vmatprep.subr.bf16.mxu0 0
      %1101 = vmatpush2.bf16.msra.mxu0 0
      %1102 = vmatprep.subr.bf16.mxu0 0
      %1103 = vmatpush2.bf16.msra.mxu0 0
      %1104 = vmatprep.subr.bf16.mxu0 0
      %1105 = vmatpush2.bf16.msra.mxu0 0
      %1106 = vmatprep.subr.bf16.mxu0 0
      %1107 = vmatpush2.bf16.msra.mxu0 0
      %1108 = vmatprep.subr.bf16.mxu0 0
      %1109 = vmatpush2.bf16.msra.mxu0 0
      %1110 = vmatprep.subr.bf16.mxu0 0
      %1111 = vmatpush2.bf16.msra.mxu0 0
      %1112 = vmatprep.subr.bf16.mxu0 0
      %1113 = vmatpush2.bf16.msra.mxu0 0
      %1114 = vmatprep.subr.bf16.mxu0 0
      %1115 = vmatpush2.bf16.msra.mxu0 0
      %1116 = vmatprep.mubr.bf16.mxu0 0
      %1117 = vmatmul.mubr.bf16.gmra.mxu0 %v1010
      %v1118 = vpop.f32.mrf.mxu0
      %v1119 = vadd.f32 0.0, %v1118
      %v1120 = vpop.f32.mrf.mxu0
      %v1121 = vpop.f32.mrf.mxu0
      %v1122 = vadd.f32 0.0, %v1121
      %v1123 = vpop.f32.mrf.mxu0
      %1124 = vmatprep.mubr.bf16.mxu0 0
      %1125 = vmatmul.mubr.bf16.gmra.mxu0 %v1013
      %v1126 = vpop.f32.mrf.mxu0
      %v1127 = vadd.f32 0.0, %v1126
      %v1128 = vpop.f32.mrf.mxu0
      %v1129 = vpop.f32.mrf.mxu0
      %v1130 = vadd.f32 0.0, %v1129
      %v1131 = vpop.f32.mrf.mxu0
      %1132 = vmatprep.mubr.bf16.mxu0 0
      %1133 = vmatmul.mubr.bf16.gmra.mxu0 %v1016
      %v1134 = vpop.f32.mrf.mxu0
      %v1135 = vadd.f32 0.0, %v1134
      %v1136 = vpop.f32.mrf.mxu0
      %v1137 = vpop.f32.mrf.mxu0
      %v1138 = vadd.f32 0.0, %v1137
      %v1139 = vpop.f32.mrf.mxu0
      %1140 = vmatprep.mubr.bf16.mxu0 0
      %1141 = vmatmul.mubr.bf16.gmra.mxu0 %v1019
      %v1142 = vpop.f32.mrf.mxu0
      %v1143 = vadd.f32 0.0, %v1142
      %v1144 = vpop.f32.mrf.mxu0
      %v1145 = vpop.f32.mrf.mxu0
      %v1146 = vadd.f32 0.0, %v1145
      %v1147 = vpop.f32.mrf.mxu0
      %1148 = vmatprep.mubr.bf16.mxu0 0
      %1149 = vmatmul.mubr.bf16.gmra.mxu0 %v1022
      %v1150 = vpop.f32.mrf.mxu0
      %v1151 = vadd.f32 0.0, %v1150
      %v1152 = vpop.f32.mrf.mxu0
      %v1153 = vpop.f32.mrf.mxu0
      %v1154 = vadd.f32 0.0, %v1153
      %v1155 = vpop.f32.mrf.mxu0
      %1156 = vmatprep.mubr.bf16.mxu0 0
      %1157 = vmatmul.mubr.bf16.gmra.mxu0 %v1025
      %v1158 = vpop.f32.mrf.mxu0
      %v1159 = vadd.f32 0.0, %v1158
      %v1160 = vpop.f32.mrf.mxu0
      %v1161 = vpop.f32.mrf.mxu0
      %v1162 = vadd.f32 0.0, %v1161
      %v1163 = vpop.f32.mrf.mxu0
      %1164 = vmatprep.mubr.bf16.mxu0 0
      %1165 = vmatmul.mubr.bf16.gmra.mxu0 %v1028
      %v1166 = vpop.f32.mrf.mxu0
      %v1167 = vadd.f32 0.0, %v1166
      %v1168 = vpop.f32.mrf.mxu0
      %v1169 = vpop.f32.mrf.mxu0
      %v1170 = vadd.f32 0.0, %v1169
      %v1171 = vpop.f32.mrf.mxu0
      %1172 = vmatprep.mubr.bf16.mxu0 0
      %1173 = vmatmul.mubr.bf16.gmra.mxu0 %v1031
      %v1174 = vpop.f32.mrf.mxu0
      %v1175 = vadd.f32 0.0, %v1174
      %v1176 = vpop.f32.mrf.mxu0
      %v1177 = vpop.f32.mrf.mxu0
      %v1178 = vadd.f32 0.0, %v1177
      %v1179 = vpop.f32.mrf.mxu0
      %1180 = vmatprep.mubr.bf16.mxu0 0
      %1181 = vmatmul.mubr.bf16.gmra.mxu0 %v1034
      %v1182 = vpop.f32.mrf.mxu0
      %v1183 = vadd.f32 0.0, %v1182
      %v1184 = vpop.f32.mrf.mxu0
      %v1185 = vpop.f32.mrf.mxu0
      %v1186 = vadd.f32 0.0, %v1185
      %v1187 = vpop.f32.mrf.mxu0
      %1188 = vmatprep.mubr.bf16.mxu0 0
      %1189 = vmatmul.mubr.bf16.gmra.mxu0 %v1037
      %v1190 = vpop.f32.mrf.mxu0
      %v1191 = vadd.f32 0.0, %v1190
      %v1192 = vpop.f32.mrf.mxu0
      %v1193 = vpop.f32.mrf.mxu0
      %v1194 = vadd.f32 0.0, %v1193
      %v1195 = vpop.f32.mrf.mxu0
      %1196 = vmatprep.mubr.bf16.mxu0 0
      %1197 = vmatmul.mubr.bf16.gmra.mxu0 %v1040
      %v1198 = vpop.f32.mrf.mxu0
      %v1199 = vadd.f32 0.0, %v1198
      %v1200 = vpop.f32.mrf.mxu0
      %v1201 = vpop.f32.mrf.mxu0
      %v1202 = vadd.f32 0.0, %v1201
      %v1203 = vpop.f32.mrf.mxu0
      %1204 = vmatprep.mubr.bf16.mxu0 0
      %1205 = vmatmul.mubr.bf16.gmra.mxu0 %v1043
      %v1206 = vpop.f32.mrf.mxu0
      %v1207 = vadd.f32 0.0, %v1206
      %v1208 = vpop.f32.mrf.mxu0
      %v1209 = vpop.f32.mrf.mxu0
      %v1210 = vadd.f32 0.0, %v1209
      %v1211 = vpop.f32.mrf.mxu0
      %1212 = vmatprep.mubr.bf16.mxu0 0
      %1213 = vmatmul.mubr.bf16.gmra.mxu0 %v1046
      %v1214 = vpop.f32.mrf.mxu0
      %v1215 = vadd.f32 0.0, %v1214
      %v1216 = vpop.f32.mrf.mxu0
      %v1217 = vpop.f32.mrf.mxu0
      %v1218 = vadd.f32 0.0, %v1217
      %v1219 = vpop.f32.mrf.mxu0
      %1220 = vmatprep.mubr.bf16.mxu0 0
      %1221 = vmatmul.mubr.bf16.gmra.mxu0 %v1049
      %v1222 = vpop.f32.mrf.mxu0
      %v1223 = vadd.f32 0.0, %v1222
      %v1224 = vpop.f32.mrf.mxu0
      %v1225 = vpop.f32.mrf.mxu0
      %v1226 = vadd.f32 0.0, %v1225
      %v1227 = vpop.f32.mrf.mxu0
      %1228 = vmatprep.mubr.bf16.mxu0 0
      %1229 = vmatmul.mubr.bf16.gmra.mxu0 %v1052
      %v1230 = vpop.f32.mrf.mxu0
      %v1231 = vadd.f32 0.0, %v1230
      %v1232 = vpop.f32.mrf.mxu0
      %v1233 = vpop.f32.mrf.mxu0
      %v1234 = vadd.f32 0.0, %v1233
      %v1235 = vpop.f32.mrf.mxu0
      %1236 = vmatprep.mubr.bf16.mxu0 0
      %1237 = vmatmul.mubr.bf16.gmra.mxu0 %v1055
      %v1238 = vpop.f32.mrf.mxu0
      %v1239 = vadd.f32 0.0, %v1238
      %v1240 = vpop.f32.mrf.mxu0
      %v1241 = vpop.f32.mrf.mxu0
      %v1242 = vadd.f32 0.0, %v1241
      %v1243 = vpop.f32.mrf.mxu0
      %1244 = vmatprep.mubr.bf16.mxu0 0
      %1245 = vmatmul.mubr.bf16.gmra.mxu0 %v1058
      %v1246 = vpop.f32.mrf.mxu0
      %v1247 = vadd.f32 0.0, %v1246
      %v1248 = vpop.f32.mrf.mxu0
      %v1249 = vpop.f32.mrf.mxu0
      %v1250 = vadd.f32 0.0, %v1249
      %v1251 = vpop.f32.mrf.mxu0
      %1252 = vmatprep.mubr.bf16.mxu0 0
      %1253 = vmatmul.mubr.bf16.gmra.mxu0 %v1061
      %v1254 = vpop.f32.mrf.mxu0
      %v1255 = vadd.f32 0.0, %v1254
      %v1256 = vpop.f32.mrf.mxu0
      %v1257 = vpop.f32.mrf.mxu0
      %v1258 = vadd.f32 0.0, %v1257
      %v1259 = vpop.f32.mrf.mxu0
      %1260 = vmatprep.mubr.bf16.mxu0 0
      %1261 = vmatmul.mubr.bf16.gmra.mxu0 %v1064
      %v1262 = vpop.f32.mrf.mxu0
      %v1263 = vadd.f32 0.0, %v1262
      %v1264 = vpop.f32.mrf.mxu0
      %v1265 = vpop.f32.mrf.mxu0
      %v1266 = vadd.f32 0.0, %v1265
      %v1267 = vpop.f32.mrf.mxu0
      %1268 = vmatprep.mubr.bf16.mxu0 0
      %1269 = vmatmul.mubr.bf16.gmra.mxu0 %v1067
      %v1270 = vpop.f32.mrf.mxu0
      %v1271 = vadd.f32 0.0, %v1270
      %v1272 = vpop.f32.mrf.mxu0
      %v1273 = vpop.f32.mrf.mxu0
      %v1274 = vadd.f32 0.0, %v1273
      %v1275 = vpop.f32.mrf.mxu0
      %1276 = vmatprep.mubr.bf16.mxu0 0
      %1277 = vmatmul.mubr.bf16.gmra.mxu0 %v1070
      %v1278 = vpop.f32.mrf.mxu0
      %v1279 = vadd.f32 0.0, %v1278
      %v1280 = vpop.f32.mrf.mxu0
      %v1281 = vpop.f32.mrf.mxu0
      %v1282 = vadd.f32 0.0, %v1281
      %v1283 = vpop.f32.mrf.mxu0
      %1284 = vmatprep.mubr.bf16.mxu0 0
      %1285 = vmatmul.mubr.bf16.gmra.mxu0 %v1073
      %v1286 = vpop.f32.mrf.mxu0
      %v1287 = vadd.f32 0.0, %v1286
      %v1288 = vpop.f32.mrf.mxu0
      %v1289 = vpop.f32.mrf.mxu0
      %v1290 = vadd.f32 0.0, %v1289
      %v1291 = vpop.f32.mrf.mxu0
      %1292 = vmatprep.mubr.bf16.mxu0 0
      %1293 = vmatmul.mubr.bf16.gmra.mxu0 %v1076
      %v1294 = vpop.f32.mrf.mxu0
      %v1295 = vadd.f32 0.0, %v1294
      %v1296 = vpop.f32.mrf.mxu0
      %v1297 = vpop.f32.mrf.mxu0
      %v1298 = vadd.f32 0.0, %v1297
      %v1299 = vpop.f32.mrf.mxu0
      %1300 = vmatprep.mubr.bf16.mxu0 0
      %1301 = vmatmul.mubr.bf16.gmra.mxu0 %v1079
      %v1302 = vpop.f32.mrf.mxu0
      %v1303 = vadd.f32 0.0, %v1302
      %v1304 = vpop.f32.mrf.mxu0
      %v1305 = vpop.f32.mrf.mxu0
      %v1306 = vpop.f32.mrf.mxu0
      %1307 = vdwg.mxu0
      %v1308 = vadd.f32 %v788, %v1119
      %v1309 = vadd.f32 %v789, %v1122
      %v1310 = vadd.f32 %v790, %v1127
      %v1311 = vadd.f32 %v791, %v1130
      %v1312 = vadd.f32 %v792, %v1135
      %v1313 = vadd.f32 %v793, %v1138
      %v1314 = vadd.f32 %v794, %v1143
      %v1315 = vadd.f32 %v795, %v1146
      %v1316 = vadd.f32 %v796, %v1151
      %v1317 = vadd.f32 %v797, %v1154
      %v1318 = vadd.f32 %v798, %v1159
      %v1319 = vadd.f32 %v799, %v1162
      %v1320 = vadd.f32 %v800, %v1167
      %v1321 = vadd.f32 %v801, %v1170
      %v1322 = vadd.f32 %v802, %v1175
      %v1323 = vadd.f32 %v803, %v1178
      %v1324 = vadd.f32 %v804, %v1183
      %v1325 = vadd.f32 %v805, %v1186
      %v1326 = vadd.f32 %v806, %v1191
      %v1327 = vadd.f32 %v807, %v1194
      %v1328 = vadd.f32 %v808, %v1199
      %v1329 = vadd.f32 %v809, %v1202
      %v1330 = vadd.f32 %v810, %v1207
      %v1331 = vadd.f32 %v811, %v1210
      %v1332 = vadd.f32 %v812, %v1215
      %v1333 = vadd.f32 %v813, %v1218
      %v1334 = vadd.f32 %v814, %v1223
      %v1335 = vadd.f32 %v815, %v1226
      %v1336 = vadd.f32 %v816, %v1231
      %v1337 = vadd.f32 %v817, %v1234
      %v1338 = vadd.f32 %v818, %v1239
      %v1339 = vadd.f32 %v819, %v1242
      %v1340 = vadd.f32 %v820, %v1247
      %v1341 = vadd.f32 %v821, %v1250
      %v1342 = vadd.f32 %v822, %v1255
      %v1343 = vadd.f32 %v823, %v1258
      %v1344 = vadd.f32 %v824, %v1263
      %v1345 = vadd.f32 %v825, %v1266
      %v1346 = vadd.f32 %v826, %v1271
      %v1347 = vadd.f32 %v827, %v1274
      %v1348 = vadd.f32 %v828, %v1279
      %v1349 = vadd.f32 %v829, %v1282
      %v1350 = vadd.f32 %v830, %v1287
      %v1351 = vadd.f32 %v831, %v1290
      %v1352 = vadd.f32 %v832, %v1295
      %v1353 = vadd.f32 %v833, %v1298
      %v1354 = vadd.f32 %v834, %v1303
      %s1355 = scalar_lea.vmem %s213, 8
      %v1356 = vld [vmem:[%s1355] sm:$0xf]
      %vm1357 = vcmask 1046528
      %v1358 = vrot.slane %v463, 1
      %v1359 = vrot.slane %v464, 1
      %v1360 = vsel %vm1357, %v1358, %v1359
      %v1361 = vrot.slane %v465, 1
      %v1362 = vsel %vm1357, %v1359, %v1361
      %v1363 = vrot.slane %v466, 1
      %v1364 = vsel %vm1357, %v1361, %v1363
      %v1365 = vrot.slane %v467, 1
      %v1366 = vsel %vm1357, %v1363, %v1365
      %v1367 = vrot.slane %v468, 1
      %v1368 = vsel %vm1357, %v1365, %v1367
      %v1369 = vrot.slane %v469, 1
      %v1370 = vsel %vm1357, %v1367, %v1369
      %v1371 = vrot.slane %v470, 1
      %v1372 = vsel %vm1357, %v1369, %v1371
      %v1373 = vrot.slane %v471, 1
      %v1374 = vsel %vm1357, %v1371, %v1373
      %v1375 = vrot.slane %v472, 1
      %v1376 = vsel %vm1357, %v1373, %v1375
      %v1377 = vrot.slane %v473, 1
      %v1378 = vsel %vm1357, %v1375, %v1377
      %v1379 = vrot.slane %v474, 1
      %v1380 = vsel %vm1357, %v1377, %v1379
      %v1381 = vrot.slane %v475, 1
      %v1382 = vsel %vm1357, %v1379, %v1381
      %v1383 = vrot.slane %v476, 1
      %v1384 = vsel %vm1357, %v1381, %v1383
      %v1385 = vrot.slane %v477, 1
      %v1386 = vsel %vm1357, %v1383, %v1385
      %v1387 = vrot.slane %v478, 1
      %v1388 = vsel %vm1357, %v1385, %v1387
      %v1389 = vrot.slane %v479, 1
      %v1390 = vsel %vm1357, %v1387, %v1389
      %v1391 = vrot.slane %v480, 1
      %v1392 = vsel %vm1357, %v1389, %v1391
      %v1393 = vrot.slane %v481, 1
      %v1394 = vsel %vm1357, %v1391, %v1393
      %v1395 = vrot.slane %v482, 1
      %v1396 = vsel %vm1357, %v1393, %v1395
      %v1397 = vrot.slane %v483, 1
      %v1398 = vsel %vm1357, %v1395, %v1397
      %v1399 = vrot.slane %v484, 1
      %v1400 = vsel %vm1357, %v1397, %v1399
      %v1401 = vrot.slane %v485, 1
      %v1402 = vsel %vm1357, %v1399, %v1401
      %v1403 = vrot.slane %v839, 1
      %v1404 = vsel %vm1357, %v1401, %v1403
      %v1406 = vsel %vm487, %v1360, 0
      %v1409 = vsel %vm487, %v1362, 0
      %v1412 = vsel %vm487, %v1364, 0
      %v1415 = vsel %vm487, %v1366, 0
      %v1418 = vsel %vm487, %v1368, 0
      %v1421 = vsel %vm487, %v1370, 0
      %v1424 = vsel %vm487, %v1372, 0
      %v1427 = vsel %vm487, %v1374, 0
      %v1430 = vsel %vm487, %v1376, 0
      %v1433 = vsel %vm487, %v1378, 0
      %v1436 = vsel %vm487, %v1380, 0
      %v1439 = vsel %vm487, %v1382, 0
      %v1442 = vsel %vm487, %v1384, 0
      %v1445 = vsel %vm487, %v1386, 0
      %v1448 = vsel %vm487, %v1388, 0
      %v1451 = vsel %vm487, %v1390, 0
      %v1454 = vsel %vm487, %v1392, 0
      %v1457 = vsel %vm487, %v1394, 0
      %v1460 = vsel %vm487, %v1396, 0
      %v1463 = vsel %vm487, %v1398, 0
      %v1466 = vsel %vm487, %v1400, 0
      %v1469 = vsel %vm487, %v1402, 0
      %v1472 = vsel %vm487, %v1404, 0
      %v1475 = vsel %vm487, %v1403, 0
      %v1478 = vsel %vm560, %v1356, 0
      %1480 = vmatprep.subr.bf16.mxu0 0
      %1481 = vmatpush1.bf16.msra.mxu0 0
      %1482 = vmatprep.subr.bf16.mxu0 0
      %1483 = vmatpush1.bf16.msra.mxu0 0
      %1484 = vmatprep.subr.bf16.mxu0 0
      %1485 = vmatpush1.bf16.msra.mxu0 0
      %1486 = vmatprep.subr.bf16.mxu0 0
      %1487 = vmatpush1.bf16.msra.mxu0 0
      %1488 = vmatprep.subr.bf16.mxu0 0
      %1489 = vmatpush1.bf16.msra.mxu0 0
      %1490 = vmatprep.subr.bf16.mxu0 0
      %1491 = vmatpush1.bf16.msra.mxu0 0
      %1492 = vmatprep.subr.bf16.mxu0 0
      %1493 = vmatpush1.bf16.msra.mxu0 0
      %1494 = vmatprep.subr.bf16.mxu0 0
      %1495 = vmatpush1.bf16.msra.mxu0 %v1478
      %1496 = vmatprep.subr.bf16.mxu0 0
      %1497 = vmatpush2.bf16.msra.mxu0 0
      %1498 = vmatprep.subr.bf16.mxu0 0
      %1499 = vmatpush2.bf16.msra.mxu0 0
      %1500 = vmatprep.subr.bf16.mxu0 0
      %1501 = vmatpush2.bf16.msra.mxu0 0
      %1502 = vmatprep.subr.bf16.mxu0 0
      %1503 = vmatpush2.bf16.msra.mxu0 0
      %1504 = vmatprep.subr.bf16.mxu0 0
      %1505 = vmatpush2.bf16.msra.mxu0 0
      %1506 = vmatprep.subr.bf16.mxu0 0
      %1507 = vmatpush2.bf16.msra.mxu0 0
      %1508 = vmatprep.subr.bf16.mxu0 0
      %1509 = vmatpush2.bf16.msra.mxu0 0
      %1510 = vmatprep.subr.bf16.mxu0 0
      %1511 = vmatpush2.bf16.msra.mxu0 0
      %1512 = vmatprep.mubr.bf16.mxu0 0
      %1513 = vmatmul.mubr.bf16.gmra.mxu0 %v1406
      %v1514 = vpop.f32.mrf.mxu0
      %v1515 = vadd.f32 0.0, %v1514
      %v1516 = vpop.f32.mrf.mxu0
      %v1517 = vpop.f32.mrf.mxu0
      %v1518 = vadd.f32 0.0, %v1517
      %v1519 = vpop.f32.mrf.mxu0
      %1520 = vmatprep.mubr.bf16.mxu0 0
      %1521 = vmatmul.mubr.bf16.gmra.mxu0 %v1409
      %v1522 = vpop.f32.mrf.mxu0
      %v1523 = vadd.f32 0.0, %v1522
      %v1524 = vpop.f32.mrf.mxu0
      %v1525 = vpop.f32.mrf.mxu0
      %v1526 = vadd.f32 0.0, %v1525
      %v1527 = vpop.f32.mrf.mxu0
      %1528 = vmatprep.mubr.bf16.mxu0 0
      %1529 = vmatmul.mubr.bf16.gmra.mxu0 %v1412
      %v1530 = vpop.f32.mrf.mxu0
      %v1531 = vadd.f32 0.0, %v1530
      %v1532 = vpop.f32.mrf.mxu0
      %v1533 = vpop.f32.mrf.mxu0
      %v1534 = vadd.f32 0.0, %v1533
      %v1535 = vpop.f32.mrf.mxu0
      %1536 = vmatprep.mubr.bf16.mxu0 0
      %1537 = vmatmul.mubr.bf16.gmra.mxu0 %v1415
      %v1538 = vpop.f32.mrf.mxu0
      %v1539 = vadd.f32 0.0, %v1538
      %v1540 = vpop.f32.mrf.mxu0
      %v1541 = vpop.f32.mrf.mxu0
      %v1542 = vadd.f32 0.0, %v1541
      %v1543 = vpop.f32.mrf.mxu0
      %1544 = vmatprep.mubr.bf16.mxu0 0
      %1545 = vmatmul.mubr.bf16.gmra.mxu0 %v1418
      %v1546 = vpop.f32.mrf.mxu0
      %v1547 = vadd.f32 0.0, %v1546
      %v1548 = vpop.f32.mrf.mxu0
      %v1549 = vpop.f32.mrf.mxu0
      %v1550 = vadd.f32 0.0, %v1549
      %v1551 = vpop.f32.mrf.mxu0
      %1552 = vmatprep.mubr.bf16.mxu0 0
      %1553 = vmatmul.mubr.bf16.gmra.mxu0 %v1421
      %v1554 = vpop.f32.mrf.mxu0
      %v1555 = vadd.f32 0.0, %v1554
      %v1556 = vpop.f32.mrf.mxu0
      %v1557 = vpop.f32.mrf.mxu0
      %v1558 = vadd.f32 0.0, %v1557
      %v1559 = vpop.f32.mrf.mxu0
      %1560 = vmatprep.mubr.bf16.mxu0 0
      %1561 = vmatmul.mubr.bf16.gmra.mxu0 %v1424
      %v1562 = vpop.f32.mrf.mxu0
      %v1563 = vadd.f32 0.0, %v1562
      %v1564 = vpop.f32.mrf.mxu0
      %v1565 = vpop.f32.mrf.mxu0
      %v1566 = vadd.f32 0.0, %v1565
      %v1567 = vpop.f32.mrf.mxu0
      %1568 = vmatprep.mubr.bf16.mxu0 0
      %1569 = vmatmul.mubr.bf16.gmra.mxu0 %v1427
      %v1570 = vpop.f32.mrf.mxu0
      %v1571 = vadd.f32 0.0, %v1570
      %v1572 = vpop.f32.mrf.mxu0
      %v1573 = vpop.f32.mrf.mxu0
      %v1574 = vadd.f32 0.0, %v1573
      %v1575 = vpop.f32.mrf.mxu0
      %1576 = vmatprep.mubr.bf16.mxu0 0
      %1577 = vmatmul.mubr.bf16.gmra.mxu0 %v1430
      %v1578 = vpop.f32.mrf.mxu0
      %v1579 = vadd.f32 0.0, %v1578
      %v1580 = vpop.f32.mrf.mxu0
      %v1581 = vpop.f32.mrf.mxu0
      %v1582 = vadd.f32 0.0, %v1581
      %v1583 = vpop.f32.mrf.mxu0
      %1584 = vmatprep.mubr.bf16.mxu0 0
      %1585 = vmatmul.mubr.bf16.gmra.mxu0 %v1433
      %v1586 = vpop.f32.mrf.mxu0
      %v1587 = vadd.f32 0.0, %v1586
      %v1588 = vpop.f32.mrf.mxu0
      %v1589 = vpop.f32.mrf.mxu0
      %v1590 = vadd.f32 0.0, %v1589
      %v1591 = vpop.f32.mrf.mxu0
      %1592 = vmatprep.mubr.bf16.mxu0 0
      %1593 = vmatmul.mubr.bf16.gmra.mxu0 %v1436
      %v1594 = vpop.f32.mrf.mxu0
      %v1595 = vadd.f32 0.0, %v1594
      %v1596 = vpop.f32.mrf.mxu0
      %v1597 = vpop.f32.mrf.mxu0
      %v1598 = vadd.f32 0.0, %v1597
      %v1599 = vpop.f32.mrf.mxu0
      %1600 = vmatprep.mubr.bf16.mxu0 0
      %1601 = vmatmul.mubr.bf16.gmra.mxu0 %v1439
      %v1602 = vpop.f32.mrf.mxu0
      %v1603 = vadd.f32 0.0, %v1602
      %v1604 = vpop.f32.mrf.mxu0
      %v1605 = vpop.f32.mrf.mxu0
      %v1606 = vadd.f32 0.0, %v1605
      %v1607 = vpop.f32.mrf.mxu0
      %1608 = vmatprep.mubr.bf16.mxu0 0
      %1609 = vmatmul.mubr.bf16.gmra.mxu0 %v1442
      %v1610 = vpop.f32.mrf.mxu0
      %v1611 = vadd.f32 0.0, %v1610
      %v1612 = vpop.f32.mrf.mxu0
      %v1613 = vpop.f32.mrf.mxu0
      %v1614 = vadd.f32 0.0, %v1613
      %v1615 = vpop.f32.mrf.mxu0
      %1616 = vmatprep.mubr.bf16.mxu0 0
      %1617 = vmatmul.mubr.bf16.gmra.mxu0 %v1445
      %v1618 = vpop.f32.mrf.mxu0
      %v1619 = vadd.f32 0.0, %v1618
      %v1620 = vpop.f32.mrf.mxu0
      %v1621 = vpop.f32.mrf.mxu0
      %v1622 = vadd.f32 0.0, %v1621
      %v1623 = vpop.f32.mrf.mxu0
      %1624 = vmatprep.mubr.bf16.mxu0 0
      %1625 = vmatmul.mubr.bf16.gmra.mxu0 %v1448
      %v1626 = vpop.f32.mrf.mxu0
      %v1627 = vadd.f32 0.0, %v1626
      %v1628 = vpop.f32.mrf.mxu0
      %v1629 = vpop.f32.mrf.mxu0
      %v1630 = vadd.f32 0.0, %v1629
      %v1631 = vpop.f32.mrf.mxu0
      %1632 = vmatprep.mubr.bf16.mxu0 0
      %1633 = vmatmul.mubr.bf16.gmra.mxu0 %v1451
      %v1634 = vpop.f32.mrf.mxu0
      %v1635 = vadd.f32 0.0, %v1634
      %v1636 = vpop.f32.mrf.mxu0
      %v1637 = vpop.f32.mrf.mxu0
      %v1638 = vadd.f32 0.0, %v1637
      %v1639 = vpop.f32.mrf.mxu0
      %1640 = vmatprep.mubr.bf16.mxu0 0
      %1641 = vmatmul.mubr.bf16.gmra.mxu0 %v1454
      %v1642 = vpop.f32.mrf.mxu0
      %v1643 = vadd.f32 0.0, %v1642
      %v1644 = vpop.f32.mrf.mxu0
      %v1645 = vpop.f32.mrf.mxu0
      %v1646 = vadd.f32 0.0, %v1645
      %v1647 = vpop.f32.mrf.mxu0
      %1648 = vmatprep.mubr.bf16.mxu0 0
      %1649 = vmatmul.mubr.bf16.gmra.mxu0 %v1457
      %v1650 = vpop.f32.mrf.mxu0
      %v1651 = vadd.f32 0.0, %v1650
      %v1652 = vpop.f32.mrf.mxu0
      %v1653 = vpop.f32.mrf.mxu0
      %v1654 = vadd.f32 0.0, %v1653
      %v1655 = vpop.f32.mrf.mxu0
      %1656 = vmatprep.mubr.bf16.mxu0 0
      %1657 = vmatmul.mubr.bf16.gmra.mxu0 %v1460
      %v1658 = vpop.f32.mrf.mxu0
      %v1659 = vadd.f32 0.0, %v1658
      %v1660 = vpop.f32.mrf.mxu0
      %v1661 = vpop.f32.mrf.mxu0
      %v1662 = vadd.f32 0.0, %v1661
      %v1663 = vpop.f32.mrf.mxu0
      %1664 = vmatprep.mubr.bf16.mxu0 0
      %1665 = vmatmul.mubr.bf16.gmra.mxu0 %v1463
      %v1666 = vpop.f32.mrf.mxu0
      %v1667 = vadd.f32 0.0, %v1666
      %v1668 = vpop.f32.mrf.mxu0
      %v1669 = vpop.f32.mrf.mxu0
      %v1670 = vadd.f32 0.0, %v1669
      %v1671 = vpop.f32.mrf.mxu0
      %1672 = vmatprep.mubr.bf16.mxu0 0
      %1673 = vmatmul.mubr.bf16.gmra.mxu0 %v1466
      %v1674 = vpop.f32.mrf.mxu0
      %v1675 = vadd.f32 0.0, %v1674
      %v1676 = vpop.f32.mrf.mxu0
      %v1677 = vpop.f32.mrf.mxu0
      %v1678 = vadd.f32 0.0, %v1677
      %v1679 = vpop.f32.mrf.mxu0
      %1680 = vmatprep.mubr.bf16.mxu0 0
      %1681 = vmatmul.mubr.bf16.gmra.mxu0 %v1469
      %v1682 = vpop.f32.mrf.mxu0
      %v1683 = vadd.f32 0.0, %v1682
      %v1684 = vpop.f32.mrf.mxu0
      %v1685 = vpop.f32.mrf.mxu0
      %v1686 = vadd.f32 0.0, %v1685
      %v1687 = vpop.f32.mrf.mxu0
      %1688 = vmatprep.mubr.bf16.mxu0 0
      %1689 = vmatmul.mubr.bf16.gmra.mxu0 %v1472
      %v1690 = vpop.f32.mrf.mxu0
      %v1691 = vadd.f32 0.0, %v1690
      %v1692 = vpop.f32.mrf.mxu0
      %v1693 = vpop.f32.mrf.mxu0
      %v1694 = vadd.f32 0.0, %v1693
      %v1695 = vpop.f32.mrf.mxu0
      %1696 = vmatprep.mubr.bf16.mxu0 0
      %1697 = vmatmul.mubr.bf16.gmra.mxu0 %v1475
      %v1698 = vpop.f32.mrf.mxu0
      %v1699 = vadd.f32 0.0, %v1698
      %v1700 = vpop.f32.mrf.mxu0
      %v1701 = vpop.f32.mrf.mxu0
      %v1702 = vpop.f32.mrf.mxu0
      %1703 = vdwg.mxu0
      %v1704 = vadd.f32 %v1308, %v1515
      %v1705 = vadd.f32 %v1309, %v1518
      %v1706 = vadd.f32 %v1310, %v1523
      %v1707 = vadd.f32 %v1311, %v1526
      %v1708 = vadd.f32 %v1312, %v1531
      %v1709 = vadd.f32 %v1313, %v1534
      %v1710 = vadd.f32 %v1314, %v1539
      %v1711 = vadd.f32 %v1315, %v1542
      %v1712 = vadd.f32 %v1316, %v1547
      %v1713 = vadd.f32 %v1317, %v1550
      %v1714 = vadd.f32 %v1318, %v1555
      %v1715 = vadd.f32 %v1319, %v1558
      %v1716 = vadd.f32 %v1320, %v1563
      %v1717 = vadd.f32 %v1321, %v1566
      %v1718 = vadd.f32 %v1322, %v1571
      %v1719 = vadd.f32 %v1323, %v1574
      %v1720 = vadd.f32 %v1324, %v1579
      %v1721 = vadd.f32 %v1325, %v1582
      %v1722 = vadd.f32 %v1326, %v1587
      %v1723 = vadd.f32 %v1327, %v1590
      %v1724 = vadd.f32 %v1328, %v1595
      %v1725 = vadd.f32 %v1329, %v1598
      %v1726 = vadd.f32 %v1330, %v1603
      %v1727 = vadd.f32 %v1331, %v1606
      %v1728 = vadd.f32 %v1332, %v1611
      %v1729 = vadd.f32 %v1333, %v1614
      %v1730 = vadd.f32 %v1334, %v1619
      %v1731 = vadd.f32 %v1335, %v1622
      %v1732 = vadd.f32 %v1336, %v1627
      %v1733 = vadd.f32 %v1337, %v1630
      %v1734 = vadd.f32 %v1338, %v1635
      %v1735 = vadd.f32 %v1339, %v1638
      %v1736 = vadd.f32 %v1340, %v1643
      %v1737 = vadd.f32 %v1341, %v1646
      %v1738 = vadd.f32 %v1342, %v1651
      %v1739 = vadd.f32 %v1343, %v1654
      %v1740 = vadd.f32 %v1344, %v1659
      %v1741 = vadd.f32 %v1345, %v1662
      %v1742 = vadd.f32 %v1346, %v1667
      %v1743 = vadd.f32 %v1347, %v1670
      %v1744 = vadd.f32 %v1348, %v1675
      %v1745 = vadd.f32 %v1349, %v1678
      %v1746 = vadd.f32 %v1350, %v1683
      %v1747 = vadd.f32 %v1351, %v1686
      %v1748 = vadd.f32 %v1352, %v1691
      %v1749 = vadd.f32 %v1353, %v1694
      %v1750 = vadd.f32 %v1354, %v1699
      %1751 = vst [vmem:[#allocation2] sm:$0xff] %v1704
      %1752 = vst [vmem:[#allocation2 + $0x8] sm:$0xff] %v1705
      %1753 = vst [vmem:[#allocation2 + $0x10] sm:$0xff] %v1706
      %1754 = vst [vmem:[#allocation2 + $0x18] sm:$0xff] %v1707
      %1755 = vst [vmem:[#allocation2 + $0x20] sm:$0xff] %v1708
      %1756 = vst [vmem:[#allocation2 + $0x28] sm:$0xff] %v1709
      %1757 = vst [vmem:[#allocation2 + $0x30] sm:$0xff] %v1710
      %1758 = vst [vmem:[#allocation2 + $0x38] sm:$0xff] %v1711
      %1759 = vst [vmem:[#allocation2 + $0x40] sm:$0xff] %v1712
      %1760 = vst [vmem:[#allocation2 + $0x48] sm:$0xff] %v1713
      %1761 = vst [vmem:[#allocation2 + $0x50] sm:$0xff] %v1714
      %1762 = vst [vmem:[#allocation2 + $0x58] sm:$0xff] %v1715
      %1763 = vst [vmem:[#allocation2 + $0x60] sm:$0xff] %v1716
      %1764 = vst [vmem:[#allocation2 + $0x68] sm:$0xff] %v1717
      %1765 = vst [vmem:[#allocation2 + $0x70] sm:$0xff] %v1718
      %1766 = vst [vmem:[#allocation2 + $0x78] sm:$0xff] %v1719
      %1767 = vst [vmem:[#allocation2 + $0x80] sm:$0xff] %v1720
      %1768 = vst [vmem:[#allocation2 + $0x88] sm:$0xff] %v1721
      %1769 = vst [vmem:[#allocation2 + $0x90] sm:$0xff] %v1722
      %1770 = vst [vmem:[#allocation2 + $0x98] sm:$0xff] %v1723
      %1771 = vst [vmem:[#allocation2 + $0xa0] sm:$0xff] %v1724
      %1772 = vst [vmem:[#allocation2 + $0xa8] sm:$0xff] %v1725
      %1773 = vst [vmem:[#allocation2 + $0xb0] sm:$0xff] %v1726
      %1774 = vst [vmem:[#allocation2 + $0xb8] sm:$0xff] %v1727
      %1775 = vst [vmem:[#allocation2 + $0xc0] sm:$0xff] %v1728
      %1776 = vst [vmem:[#allocation2 + $0xc8] sm:$0xff] %v1729
      %1777 = vst [vmem:[#allocation2 + $0xd0] sm:$0xff] %v1730
      %1778 = vst [vmem:[#allocation2 + $0xd8] sm:$0xff] %v1731
      %1779 = vst [vmem:[#allocation2 + $0xe0] sm:$0xff] %v1732
      %1780 = vst [vmem:[#allocation2 + $0xe8] sm:$0xff] %v1733
      %1781 = vst [vmem:[#allocation2 + $0xf0] sm:$0xff] %v1734
      %1782 = vst [vmem:[#allocation2 + $0xf8] sm:$0xff] %v1735
      %1783 = vst [vmem:[#allocation2 + $0x100] sm:$0xff] %v1736
      %1784 = vst [vmem:[#allocation2 + $0x108] sm:$0xff] %v1737
      %1785 = vst [vmem:[#allocation2 + $0x110] sm:$0xff] %v1738
      %1786 = vst [vmem:[#allocation2 + $0x118] sm:$0xff] %v1739
      %1787 = vst [vmem:[#allocation2 + $0x120] sm:$0xff] %v1740
      %1788 = vst [vmem:[#allocation2 + $0x128] sm:$0xff] %v1741
      %1789 = vst [vmem:[#allocation2 + $0x130] sm:$0xff] %v1742
      %1790 = vst [vmem:[#allocation2 + $0x138] sm:$0xff] %v1743
      %1791 = vst [vmem:[#allocation2 + $0x140] sm:$0xff] %v1744
      %1792 = vst [vmem:[#allocation2 + $0x148] sm:$0xff] %v1745
      %1793 = vst [vmem:[#allocation2 + $0x150] sm:$0xff] %v1746
      %1794 = vst [vmem:[#allocation2 + $0x158] sm:$0xff] %v1747
      %1795 = vst [vmem:[#allocation2 + $0x160] sm:$0xff] %v1748
      %1796 = vst [vmem:[#allocation2 + $0x168] sm:$0xff] %v1749
      %1797 = vst [vmem:[#allocation2 + $0x170] sm:$0xff] %v1750
      %p1798 = scmp.eq.s32.totalorder %s19, 2
      // Predicated region
      $region37: #{binary_net_forward.27} parent=31 // pred_check
        %p1799 = pneg %p1798
      $region38: #{binary_net_forward.27} parent=31 // pred_check_branch
        %1801 = sbr.rel (%p1799) target = $region40
      $region39: #{binary_net_forward.27} parent=31 // pred_region
        %v1802 = vld [vmem:[#allocation2] sm:$0xff]
        %v1803 = vld [vmem:[#allocation2 + $0x8] sm:$0xff]
        %v1804 = vld [vmem:[#allocation2 + $0x10] sm:$0xff]
        %v1805 = vld [vmem:[#allocation2 + $0x18] sm:$0xff]
        %v1806 = vld [vmem:[#allocation2 + $0x20] sm:$0xff]
        %v1807 = vld [vmem:[#allocation2 + $0x28] sm:$0xff]
        %v1808 = vld [vmem:[#allocation2 + $0x30] sm:$0xff]
        %v1809 = vld [vmem:[#allocation2 + $0x38] sm:$0xff]
        %v1810 = vld [vmem:[#allocation2 + $0x40] sm:$0xff]
        %v1811 = vld [vmem:[#allocation2 + $0x48] sm:$0xff]
        %v1812 = vld [vmem:[#allocation2 + $0x50] sm:$0xff]
        %v1813 = vld [vmem:[#allocation2 + $0x58] sm:$0xff]
        %v1814 = vld [vmem:[#allocation2 + $0x60] sm:$0xff]
        %v1815 = vld [vmem:[#allocation2 + $0x68] sm:$0xff]
        %v1816 = vld [vmem:[#allocation2 + $0x70] sm:$0xff]
        %v1817 = vld [vmem:[#allocation2 + $0x78] sm:$0xff]
        %v1818 = vld [vmem:[#allocation2 + $0x80] sm:$0xff]
        %v1819 = vld [vmem:[#allocation2 + $0x88] sm:$0xff]
        %v1820 = vld [vmem:[#allocation2 + $0x90] sm:$0xff]
        %v1821 = vld [vmem:[#allocation2 + $0x98] sm:$0xff]
        %v1822 = vld [vmem:[#allocation2 + $0xa0] sm:$0xff]
        %v1823 = vld [vmem:[#allocation2 + $0xa8] sm:$0xff]
        %v1824 = vld [vmem:[#allocation2 + $0xb0] sm:$0xff]
        %v1825 = vld [vmem:[#allocation2 + $0xb8] sm:$0xff]
        %v1826 = vld [vmem:[#allocation2 + $0xc0] sm:$0xff]
        %v1827 = vld [vmem:[#allocation2 + $0xc8] sm:$0xff]
        %v1828 = vld [vmem:[#allocation2 + $0xd0] sm:$0xff]
        %v1829 = vld [vmem:[#allocation2 + $0xd8] sm:$0xff]
        %v1830 = vld [vmem:[#allocation2 + $0xe0] sm:$0xff]
        %v1831 = vld [vmem:[#allocation2 + $0xe8] sm:$0xff]
        %v1832 = vld [vmem:[#allocation2 + $0xf0] sm:$0xff]
        %v1833 = vld [vmem:[#allocation2 + $0xf8] sm:$0xff]
        %v1834 = vld [vmem:[#allocation2 + $0x100] sm:$0xff]
        %v1835 = vld [vmem:[#allocation2 + $0x108] sm:$0xff]
        %v1836 = vld [vmem:[#allocation2 + $0x110] sm:$0xff]
        %v1837 = vld [vmem:[#allocation2 + $0x118] sm:$0xff]
        %v1838 = vld [vmem:[#allocation2 + $0x120] sm:$0xff]
        %v1839 = vld [vmem:[#allocation2 + $0x128] sm:$0xff]
        %v1840 = vld [vmem:[#allocation2 + $0x130] sm:$0xff]
        %v1841 = vld [vmem:[#allocation2 + $0x138] sm:$0xff]
        %v1842 = vld [vmem:[#allocation2 + $0x140] sm:$0xff]
        %v1843 = vld [vmem:[#allocation2 + $0x148] sm:$0xff]
        %v1844 = vld [vmem:[#allocation2 + $0x150] sm:$0xff]
        %v1845 = vld [vmem:[#allocation2 + $0x158] sm:$0xff]
        %v1846 = vld [vmem:[#allocation2 + $0x160] sm:$0xff]
        %v1847 = vld [vmem:[#allocation2 + $0x168] sm:$0xff]
        %v1848 = vld [vmem:[#allocation2 + $0x170] sm:$0xff]
        %v1849 = vld [vmem:[#allocation2 + $0x178] sm:$0xff]
        %v1850 = vld [vmem:[%s2] sm:$0x1]
        %v1852 = vlaneseq
        %v1853 = vshrl.u32 %v1852, 7
        %v1854 = vsub.s32 0, %v1853
        %v1855 = vrot.slane %v1850, %v1854
        %v1857 = vadd.f32 %v1802, %v1855
        %v1858 = vadd.f32 %v1803, %v1855
        %v1859 = vadd.f32 %v1804, %v1855
        %v1860 = vadd.f32 %v1805, %v1855
        %v1861 = vadd.f32 %v1806, %v1855
        %v1862 = vadd.f32 %v1807, %v1855
        %v1863 = vadd.f32 %v1808, %v1855
        %v1864 = vadd.f32 %v1809, %v1855
        %v1865 = vadd.f32 %v1810, %v1855
        %v1866 = vadd.f32 %v1811, %v1855
        %v1867 = vadd.f32 %v1812, %v1855
        %v1868 = vadd.f32 %v1813, %v1855
        %v1869 = vadd.f32 %v1814, %v1855
        %v1870 = vadd.f32 %v1815, %v1855
        %v1871 = vadd.f32 %v1816, %v1855
        %v1872 = vadd.f32 %v1817, %v1855
        %v1873 = vadd.f32 %v1818, %v1855
        %v1874 = vadd.f32 %v1819, %v1855
        %v1875 = vadd.f32 %v1820, %v1855
        %v1876 = vadd.f32 %v1821, %v1855
        %v1877 = vadd.f32 %v1822, %v1855
        %v1878 = vadd.f32 %v1823, %v1855
        %v1879 = vadd.f32 %v1824, %v1855
        %v1880 = vadd.f32 %v1825, %v1855
        %v1881 = vadd.f32 %v1826, %v1855
        %v1882 = vadd.f32 %v1827, %v1855
        %v1883 = vadd.f32 %v1828, %v1855
        %v1884 = vadd.f32 %v1829, %v1855
        %v1885 = vadd.f32 %v1830, %v1855
        %v1886 = vadd.f32 %v1831, %v1855
        %v1887 = vadd.f32 %v1832, %v1855
        %v1888 = vadd.f32 %v1833, %v1855
        %v1889 = vadd.f32 %v1834, %v1855
        %v1890 = vadd.f32 %v1835, %v1855
        %v1891 = vadd.f32 %v1836, %v1855
        %v1892 = vadd.f32 %v1837, %v1855
        %v1893 = vadd.f32 %v1838, %v1855
        %v1894 = vadd.f32 %v1839, %v1855
        %v1895 = vadd.f32 %v1840, %v1855
        %v1896 = vadd.f32 %v1841, %v1855
        %v1897 = vadd.f32 %v1842, %v1855
        %v1898 = vadd.f32 %v1843, %v1855
        %v1899 = vadd.f32 %v1844, %v1855
        %v1900 = vadd.f32 %v1845, %v1855
        %v1901 = vadd.f32 %v1846, %v1855
        %v1902 = vadd.f32 %v1847, %v1855
        %v1903 = vadd.f32 %v1848, %v1855
        %v1904 = vadd.f32 %v1849, %v1855
        %v1905 = vpack.c.bf16 %v1858, %v1857
        %v1906 = vpack.c.bf16 %v1860, %v1859
        %v1907 = vpack.c.bf16 %v1862, %v1861
        %v1908 = vpack.c.bf16 %v1864, %v1863
        %v1909 = vpack.c.bf16 %v1866, %v1865
        %v1910 = vpack.c.bf16 %v1868, %v1867
        %v1911 = vpack.c.bf16 %v1870, %v1869
        %v1912 = vpack.c.bf16 %v1872, %v1871
        %v1913 = vpack.c.bf16 %v1874, %v1873
        %v1914 = vpack.c.bf16 %v1876, %v1875
        %v1915 = vpack.c.bf16 %v1878, %v1877
        %v1916 = vpack.c.bf16 %v1880, %v1879
        %v1917 = vpack.c.bf16 %v1882, %v1881
        %v1918 = vpack.c.bf16 %v1884, %v1883
        %v1919 = vpack.c.bf16 %v1886, %v1885
        %v1920 = vpack.c.bf16 %v1888, %v1887
        %v1921 = vpack.c.bf16 %v1890, %v1889
        %v1922 = vpack.c.bf16 %v1892, %v1891
        %v1923 = vpack.c.bf16 %v1894, %v1893
        %v1924 = vpack.c.bf16 %v1896, %v1895
        %v1925 = vpack.c.bf16 %v1898, %v1897
        %v1926 = vpack.c.bf16 %v1900, %v1899
        %v1927 = vpack.c.bf16 %v1902, %v1901
        %v1928 = vpack.c.bf16 %v1904, %v1903
        %v1953 = vunpack.c.l.b16 %v1905
        %v1954 = vunpack.c.h.b16 %v1905
        %v1955 = vunpack.c.l.b16 %v1906
        %v1956 = vunpack.c.h.b16 %v1906
        %v1957 = vunpack.c.l.b16 %v1907
        %v1958 = vunpack.c.h.b16 %v1907
        %v1959 = vunpack.c.l.b16 %v1908
        %v1960 = vunpack.c.h.b16 %v1908
        %v1961 = vunpack.c.l.b16 %v1909
        %v1962 = vunpack.c.h.b16 %v1909
        %v1963 = vunpack.c.l.b16 %v1910
        %v1964 = vunpack.c.h.b16 %v1910
        %v1965 = vunpack.c.l.b16 %v1911
        %v1966 = vunpack.c.h.b16 %v1911
        %v1967 = vunpack.c.l.b16 %v1912
        %v1968 = vunpack.c.h.b16 %v1912
        %v1969 = vunpack.c.l.b16 %v1913
        %v1970 = vunpack.c.h.b16 %v1913
        %v1971 = vunpack.c.l.b16 %v1914
        %v1972 = vunpack.c.h.b16 %v1914
        %v1973 = vunpack.c.l.b16 %v1915
        %v1974 = vunpack.c.h.b16 %v1915
        %v1975 = vunpack.c.l.b16 %v1916
        %v1976 = vunpack.c.h.b16 %v1916
        %v1977 = vunpack.c.l.b16 %v1917
        %v1978 = vunpack.c.h.b16 %v1917
        %v1979 = vunpack.c.l.b16 %v1918
        %v1980 = vunpack.c.h.b16 %v1918
        %v1981 = vunpack.c.l.b16 %v1919
        %v1982 = vunpack.c.h.b16 %v1919
        %v1983 = vunpack.c.l.b16 %v1920
        %v1984 = vunpack.c.h.b16 %v1920
        %v1985 = vunpack.c.l.b16 %v1921
        %v1986 = vunpack.c.h.b16 %v1921
        %v1987 = vunpack.c.l.b16 %v1922
        %v1988 = vunpack.c.h.b16 %v1922
        %v1989 = vunpack.c.l.b16 %v1923
        %v1990 = vunpack.c.h.b16 %v1923
        %v1991 = vunpack.c.l.b16 %v1924
        %v1992 = vunpack.c.h.b16 %v1924
        %v1993 = vunpack.c.l.b16 %v1925
        %v1994 = vunpack.c.h.b16 %v1925
        %v1995 = vunpack.c.l.b16 %v1926
        %v1996 = vunpack.c.h.b16 %v1926
        %v1997 = vunpack.c.l.b16 %v1927
        %v1998 = vunpack.c.h.b16 %v1927
        %v1999 = vunpack.c.l.b16 %v1928
        %v2000 = vunpack.c.h.b16 %v1928
        %v2001 = vpack.c.b16 %v1953, %v1953
        %v2002 = vpack.c.b16 %v1954, %v1954
        %v2003 = vpack.c.b16 %v1955, %v1955
        %v2004 = vpack.c.b16 %v1956, %v1956
        %v2005 = vpack.c.b16 %v1957, %v1957
        %v2006 = vpack.c.b16 %v1958, %v1958
        %v2007 = vpack.c.b16 %v1959, %v1959
        %v2008 = vpack.c.b16 %v1960, %v1960
        %v2009 = vpack.c.b16 %v1961, %v1961
        %v2010 = vpack.c.b16 %v1962, %v1962
        %v2011 = vpack.c.b16 %v1963, %v1963
        %v2012 = vpack.c.b16 %v1964, %v1964
        %v2013 = vpack.c.b16 %v1965, %v1965
        %v2014 = vpack.c.b16 %v1966, %v1966
        %v2015 = vpack.c.b16 %v1967, %v1967
        %v2016 = vpack.c.b16 %v1968, %v1968
        %v2017 = vpack.c.b16 %v1969, %v1969
        %v2018 = vpack.c.b16 %v1970, %v1970
        %v2019 = vpack.c.b16 %v1971, %v1971
        %v2020 = vpack.c.b16 %v1972, %v1972
        %v2021 = vpack.c.b16 %v1973, %v1973
        %v2022 = vpack.c.b16 %v1974, %v1974
        %v2023 = vpack.c.b16 %v1975, %v1975
        %v2024 = vpack.c.b16 %v1976, %v1976
        %v2025 = vpack.c.b16 %v1977, %v1977
        %v2026 = vpack.c.b16 %v1978, %v1978
        %v2027 = vpack.c.b16 %v1979, %v1979
        %v2028 = vpack.c.b16 %v1980, %v1980
        %v2029 = vpack.c.b16 %v1981, %v1981
        %v2030 = vpack.c.b16 %v1982, %v1982
        %v2031 = vpack.c.b16 %v1983, %v1983
        %v2032 = vpack.c.b16 %v1984, %v1984
        %v2033 = vpack.c.b16 %v1985, %v1985
        %v2034 = vpack.c.b16 %v1986, %v1986
        %v2035 = vpack.c.b16 %v1987, %v1987
        %v2036 = vpack.c.b16 %v1988, %v1988
        %v2037 = vpack.c.b16 %v1989, %v1989
        %v2038 = vpack.c.b16 %v1990, %v1990
        %v2039 = vpack.c.b16 %v1991, %v1991
        %v2040 = vpack.c.b16 %v1992, %v1992
        %v2041 = vpack.c.b16 %v1993, %v1993
        %v2042 = vpack.c.b16 %v1994, %v1994
        %v2043 = vpack.c.b16 %v1995, %v1995
        %v2044 = vpack.c.b16 %v1996, %v1996
        %v2045 = vpack.c.b16 %v1997, %v1997
        %v2046 = vpack.c.b16 %v1998, %v1998
        %v2047 = vpack.c.b16 %v1999, %v1999
        %v2048 = vpack.c.b16 %v2000, %v2000
        %2097 = vst [vmem:[%s218] sm:$0xf] %v2001
        %2098 = vst [vmem:[%s218 + $0x4] sm:$0xf] %v2002
        %2099 = vst [vmem:[%s218 + $0x8] sm:$0xf] %v2003
        %2100 = vst [vmem:[%s218 + $0xc] sm:$0xf] %v2004
        %2101 = vst [vmem:[%s218 + $0x10] sm:$0xf] %v2005
        %2102 = vst [vmem:[%s218 + $0x14] sm:$0xf] %v2006
        %2103 = vst [vmem:[%s218 + $0x18] sm:$0xf] %v2007
        %2104 = vst [vmem:[%s218 + $0x1c] sm:$0xf] %v2008
        %2105 = vst [vmem:[%s218 + $0x20] sm:$0xf] %v2009
        %2106 = vst [vmem:[%s218 + $0x24] sm:$0xf] %v2010
        %2107 = vst [vmem:[%s218 + $0x28] sm:$0xf] %v2011
        %2108 = vst [vmem:[%s218 + $0x2c] sm:$0xf] %v2012
        %2109 = vst [vmem:[%s218 + $0x30] sm:$0xf] %v2013
        %2110 = vst [vmem:[%s218 + $0x34] sm:$0xf] %v2014
        %2111 = vst [vmem:[%s218 + $0x38] sm:$0xf] %v2015
        %2112 = vst [vmem:[%s218 + $0x3c] sm:$0xf] %v2016
        %2113 = vst [vmem:[%s218 + $0x40] sm:$0xf] %v2017
        %2114 = vst [vmem:[%s218 + $0x44] sm:$0xf] %v2018
        %2115 = vst [vmem:[%s218 + $0x48] sm:$0xf] %v2019
        %2116 = vst [vmem:[%s218 + $0x4c] sm:$0xf] %v2020
        %2117 = vst [vmem:[%s218 + $0x50] sm:$0xf] %v2021
        %2118 = vst [vmem:[%s218 + $0x54] sm:$0xf] %v2022
        %2119 = vst [vmem:[%s218 + $0x58] sm:$0xf] %v2023
        %2120 = vst [vmem:[%s218 + $0x5c] sm:$0xf] %v2024
        %2121 = vst [vmem:[%s218 + $0x60] sm:$0xf] %v2025
        %2122 = vst [vmem:[%s218 + $0x64] sm:$0xf] %v2026
        %2123 = vst [vmem:[%s218 + $0x68] sm:$0xf] %v2027
        %2124 = vst [vmem:[%s218 + $0x6c] sm:$0xf] %v2028
        %2125 = vst [vmem:[%s218 + $0x70] sm:$0xf] %v2029
        %2126 = vst [vmem:[%s218 + $0x74] sm:$0xf] %v2030
        %2127 = vst [vmem:[%s218 + $0x78] sm:$0xf] %v2031
        %2128 = vst [vmem:[%s218 + $0x7c] sm:$0xf] %v2032
        %2129 = vst [vmem:[%s218 + $0x80] sm:$0xf] %v2033
        %2130 = vst [vmem:[%s218 + $0x84] sm:$0xf] %v2034
        %2131 = vst [vmem:[%s218 + $0x88] sm:$0xf] %v2035
        %2132 = vst [vmem:[%s218 + $0x8c] sm:$0xf] %v2036
        %2133 = vst [vmem:[%s218 + $0x90] sm:$0xf] %v2037
        %2134 = vst [vmem:[%s218 + $0x94] sm:$0xf] %v2038
        %2135 = vst [vmem:[%s218 + $0x98] sm:$0xf] %v2039
        %2136 = vst [vmem:[%s218 + $0x9c] sm:$0xf] %v2040
        %2137 = vst [vmem:[%s218 + $0xa0] sm:$0xf] %v2041
        %2138 = vst [vmem:[%s218 + $0xa4] sm:$0xf] %v2042
        %2139 = vst [vmem:[%s218 + $0xa8] sm:$0xf] %v2043
        %2140 = vst [vmem:[%s218 + $0xac] sm:$0xf] %v2044
        %2141 = vst [vmem:[%s218 + $0xb0] sm:$0xf] %v2045
        %2142 = vst [vmem:[%s218 + $0xb4] sm:$0xf] %v2046
        %2143 = vst [vmem:[%s218 + $0xb8] sm:$0xf] %v2047
        %2144 = vst [vmem:[%s218 + $0xbc] sm:$0xf] %v2048
      $region40: #{binary_net_forward.27} parent=31 // pred_fallthru
        _
      %s2145 = smul.u32 48, %s18
      %p2146 = scmp.lt.s32.totalorder %s2145, 47
      %s2147 = scalar_select %p2146, %s2145, 47
      %s2148 = smul.addr %s2147, 4
      %s2149 = scalar_lea.vmem %s3, %s2148
      // Predicated region
      $region41: #{binary_net_forward.27} parent=31 // pred_check
        %p2150 = pneg %p119
      $region42: #{binary_net_forward.27} parent=31 // pred_check_branch
        %2152 = sbr.rel (%p2150) target = $region44
      $region43: #{binary_net_forward.27} parent=31 // pred_region
        %s2153 = smul.u32 48, %s18
      $region44: #{binary_net_forward.27} parent=31 // pred_fallthru
        _
      // Predicated region
      $region45: #{binary_net_forward.27} parent=31 // pred_check
        %p2154 = pneg %p119
      $region46: #{binary_net_forward.27} parent=31 // pred_check_branch
        %2156 = sbr.rel (%p2154) target = $region48
      $region47: #{binary_net_forward.27} parent=31 // pred_region
        %s2157 = smul.u32 48, %s18
        %p2158 = scmp.lt.s32.totalorder %s2157, 47
        %s2159 = scalar_select %p2158, %s2157, 47
        %s2160 = smul.addr %s2159, 4
        %s2161 = scalar_lea.vmem %s3, %s2160
      $region48: #{binary_net_forward.27} parent=31 // pred_fallthru
        _
    $region32: #{binary_net_forward.27} parent=5 // pred_fallthru
      _
    %p2162 = scmp.le.s32.totalorder 2, %s9
    // Predicated region
    $region49: #{binary_net_forward.27} parent=5 // pred_check
      %p2163 = pneg %p2162
    $region50: #{binary_net_forward.27} parent=5 // pred_check_branch
      %2165 = sbr.rel (%p2163) target = $region52
    $region51: #{binary_net_forward.27} parent=5 // pred_region
      %s2166 = ssub.s32 %s9, 2
    $region52: #{binary_net_forward.27} parent=5 // pred_fallthru
      _
  $region6: #{binary_net_forward.27} parent=0 // loop_footer
    %s13 = sadd.s32 1, %s9
  $region7: #{binary_net_forward.27} parent=0 // loop_footer_branch
    %8 = sbr.rel target = $region3
  $region8: #{binary_net_forward.27} parent=0 // loop_exit
    _

// kernel: binary_net_forward.30
$region0: #{binary_net_forward.30}
  #allocation0 [shape = 'u32[]', space=smem, size = 0x4, offset = 0x4, fixed_abs, tag = 'smem constant byte address 0x4 - core index']
  #allocation1 [shape = 'u32[144,128]{1,0:T(1,128)}', space=vmem, size = 0x12000, scoped, tag = 'internal scratch']
  #allocation2 [shape = 'f32[128,128]{1,0:T(8,128)}', space=vmem, size = 0x10000, scoped, tag = 'scratch operand']
  %s0 = inlined_call_operand.vmem [shape: bf16[3,128,8], index: 0, kind: input, shape index: {}]
  %s1 = inlined_call_operand.vmem [shape: bf16[3,3,8,128], index: 1, kind: input, shape index: {}]
  %s2 = inlined_call_operand.vmem [shape: f32[1,128], index: 2, kind: input, shape index: {}]
  %s3 = inlined_call_operand.vmem [shape: bf16[128,128], index: 3, kind: output, shape index: {}]
  %s4 = sld [smem:[#allocation0]]
  $region53: #{binary_net_forward.30} parent=0
    _
  %s6 = ssub.s32 1, %s4
  %s7 = scalar_select 0, %s6, %s4
  loop: start=0, step=1, limit=5
  $region2: #{binary_net_forward.30} parent=0 // loop_pre_header
    _
  $region3: #{binary_net_forward.30} parent=0 // loop_header
    %s9 = sphi 0, %s13
    %p10 = scmp.ge.s32.totalorder %s9, 5
    %s16 = sphi 0, %s28
    %s17 = sphi 0, %s24
    %s18 = sphi 0, %s16
    %s19 = sphi 0, %s17
    %s20 = sphi 0, %s18
    %s21 = sphi 0, %s19
    %s33 = sphi 0, %s35
    %s36 = sphi 0, %s33
    %s37 = sphi 0, %s36
    %s53 = sphi 0, %s37
    %s59 = sphi 0, %s61
    %s62 = sphi 0, %s59
    %s63 = sphi 0, %s62
    %s79 = sphi 0, %s63
    %s83 = sphi 0, %s83
    %s85 = sphi 0, %s83
    %s86 = sphi 0, %s85
    %s100 = sphi 0, %s86
    %s106 = sphi 0, %s108
    %s109 = sphi 0, %s106
    %s110 = sphi 0, %s109
    %s126 = sphi 0, %s110
  $region4: #{binary_net_forward.30} parent=0 // loop_header_branch
    %12 = sbr.rel (%p10) target = $region8
  $region5: #{binary_net_forward.30} parent=0 // loop_body
    %s14 = ssub.s32 %s9, 1
    %s15 = ssub.s32 %s9, 2
    %s22 = sadd.s32 1, %s17
    %p23 = scmp.ge.s32.totalorder %s22, 3
    %s24 = scalar_select %p23, 0, %s22
    %s25 = sadd.s32 1, %s16
    %s26 = scalar_select %p23, %s25, %s16
    %p27 = scmp.ge.s32.totalorder %s26, 1
    %s28 = scalar_select %p27, 0, %s26
    %s29 = ssub.s32 %s17, %s24
    %s30 = ssub.s32 %s16, %s28
    %s31 = sor.u32 %s29, %s30
    %p32 = scmp.eq.s32.totalorder %s31, 0
    %s34 = sadd.s32 %s33, 1
    %s35 = scalar_select %p32, %s33, %s34
    %p38 = pneg %p32
    %p39 = scmp.eq.s32.totalorder %s9, 2
    %p40 = por %p38, %p39
    %p41 = scmp.ne.s32.totalorder %s33, %s36
    %p42 = scmp.eq.s32.totalorder %s9, 0
    %p43 = por %p41, %p42
    %p44 = scmp.ne.s32.totalorder %s33, %s36
    %p45 = scmp.eq.s32.totalorder %s14, 2
    %p46 = por %p44, %p45
    %p47 = scmp.ne.s32.totalorder %s36, %s37
    %p48 = scmp.eq.s32.totalorder %s14, 0
    %p49 = por %p47, %p48
    %p50 = scmp.ne.s32.totalorder %s36, %s37
    %p51 = scmp.eq.s32.totalorder %s15, 2
    %p52 = por %p50, %p51
    %p54 = scmp.ne.s32.totalorder %s37, %s53
    %p55 = scmp.eq.s32.totalorder %s15, 0
    %p56 = por %p54, %p55
    %s57 = ssub.s32 %s17, %s24
    %p58 = scmp.eq.s32.totalorder %s57, 0
    %s60 = sadd.s32 %s59, 1
    %s61 = scalar_select %p58, %s59, %s60
    %p64 = pneg %p58
    %p65 = scmp.eq.s32.totalorder %s9, 2
    %p66 = por %p64, %p65
    %p67 = scmp.ne.s32.totalorder %s59, %s62
    %p68 = scmp.eq.s32.totalorder %s9, 0
    %p69 = por %p67, %p68
    %p70 = scmp.ne.s32.totalorder %s59, %s62
    %p71 = scmp.eq.s32.totalorder %s14, 2
    %p72 = por %p70, %p71
    %p73 = scmp.ne.s32.totalorder %s62, %s63
    %p74 = scmp.eq.s32.totalorder %s14, 0
    %p75 = por %p73, %p74
    %p76 = scmp.ne.s32.totalorder %s62, %s63
    %p77 = scmp.eq.s32.totalorder %s15, 2
    %p78 = por %p76, %p77
    %p80 = scmp.ne.s32.totalorder %s63, %s79
    %p81 = scmp.eq.s32.totalorder %s15, 0
    %p82 = por %p80, %p81
    %s84 = sadd.s32 %s83, 1
    %p87 = scmp.eq.s32.totalorder %s9, 2
    %p88 = scmp.ne.s32.totalorder %s83, %s85
    %p89 = scmp.eq.s32.totalorder %s9, 0
    %p90 = por %p88, %p89
    %p91 = scmp.ne.s32.totalorder %s83, %s85
    %p92 = scmp.eq.s32.totalorder %s14, 2
    %p93 = por %p91, %p92
    %p94 = scmp.ne.s32.totalorder %s85, %s86
    %p95 = scmp.eq.s32.totalorder %s14, 0
    %p96 = por %p94, %p95
    %p97 = scmp.ne.s32.totalorder %s85, %s86
    %p98 = scmp.eq.s32.totalorder %s15, 2
    %p99 = por %p97, %p98
    %p101 = scmp.ne.s32.totalorder %s86, %s100
    %p102 = scmp.eq.s32.totalorder %s15, 0
    %p103 = por %p101, %p102
    %s104 = ssub.s32 %s16, %s28
    %p105 = scmp.eq.s32.totalorder %s104, 0
    %s107 = sadd.s32 %s106, 1
    %s108 = scalar_select %p105, %s106, %s107
    %p111 = pneg %p105
    %p112 = scmp.eq.s32.totalorder %s9, 2
    %p113 = por %p111, %p112
    %p114 = scmp.ne.s32.totalorder %s106, %s109
    %p115 = scmp.eq.s32.totalorder %s9, 0
    %p116 = por %p114, %p115
    %p117 = scmp.ne.s32.totalorder %s106, %s109
    %p118 = scmp.eq.s32.totalorder %s14, 2
    %p119 = por %p117, %p118
    %p120 = scmp.ne.s32.totalorder %s109, %s110
    %p121 = scmp.eq.s32.totalorder %s14, 0
    %p122 = por %p120, %p121
    %p123 = scmp.ne.s32.totalorder %s109, %s110
    %p124 = scmp.eq.s32.totalorder %s15, 2
    %p125 = por %p123, %p124
    %p127 = scmp.ne.s32.totalorder %s110, %s126
    %p128 = scmp.eq.s32.totalorder %s15, 0
    %p129 = por %p127, %p128
    %p130 = scmp.le.s32.totalorder 1, %s9
    %p131 = scmp.lt.s32.totalorder %s9, 4
    %p132 = pnand %p130, %p131
    %p133 = pneg %p132
    // Predicated region
    $region9: #{binary_net_forward.30} parent=5 // pred_check
      _
    $region10: #{binary_net_forward.30} parent=5 // pred_check_branch
      %135 = sbr.rel (%p132) target = $region12
    $region11: #{binary_net_forward.30} parent=5 // pred_region
      %s136 = ssub.s32 %s9, 1
      // Predicated region
      $region13: #{binary_net_forward.30} parent=11 // pred_check
        %p137 = pneg %p96
      $region14: #{binary_net_forward.30} parent=11 // pred_check_branch
        %139 = sbr.rel (%p137) target = $region16
      $region15: #{binary_net_forward.30} parent=11 // pred_region
        _
      $region16: #{binary_net_forward.30} parent=11 // pred_fallthru
        _
    $region12: #{binary_net_forward.30} parent=5 // pred_fallthru
      _
    %p140 = scmp.lt.s32.totalorder %s9, 3
    // Predicated region
    $region17: #{binary_net_forward.30} parent=5 // pred_check
      %p141 = pneg %p140
    $region18: #{binary_net_forward.30} parent=5 // pred_check_branch
      %143 = sbr.rel (%p141) target = $region20
    $region19: #{binary_net_forward.30} parent=5 // pred_region
      // Predicated region
      $region21: #{binary_net_forward.30} parent=19 // pred_check
        %p144 = pneg %p43
      $region22: #{binary_net_forward.30} parent=19 // pred_check_branch
        %146 = sbr.rel (%p144) target = $region24
      $region23: #{binary_net_forward.30} parent=19 // pred_region
        %s147 = smul.u32 16, %s16
        %p148 = scmp.lt.s32.totalorder %s17, 2
        %s149 = scalar_select %p148, %s17, 2
        %p150 = scmp.lt.s32.totalorder %s147, 15
        %s151 = scalar_select %p150, %s147, 15
        %s152 = smul.addr %s149, 16
        %s153 = sadd.s32 %s151, %s152
        %s154 = smul.addr %s153, 4
        %s155 = scalar_lea.vmem %s0, %s154
        %s156 = smul.u32 16, %s16
      $region24: #{binary_net_forward.30} parent=19 // pred_fallthru
        _
      // Predicated region
      $region25: #{binary_net_forward.30} parent=19 // pred_check
        %p157 = pneg %p69
      $region26: #{binary_net_forward.30} parent=19 // pred_check_branch
        %159 = sbr.rel (%p157) target = $region28
      $region27: #{binary_net_forward.30} parent=19 // pred_region
        %p160 = scmp.lt.s32.totalorder %s17, 2
        %s161 = scalar_select %p160, %s17, 2
        %s162 = smul.addr %s161, 3
        %s163 = smul.addr %s162, 4
        %s164 = scalar_lea.vmem %s1, %s163
      $region28: #{binary_net_forward.30} parent=19 // pred_fallthru
        _
    $region20: #{binary_net_forward.30} parent=5 // pred_fallthru
      _
    %p165 = scmp.le.s32.totalorder 1, %s9
    %p166 = scmp.lt.s32.totalorder %s9, 4
    %p167 = pnand %p165, %p166
    %p168 = pneg %p167
    // Predicated region
    $region29: #{binary_net_forward.30} parent=5 // pred_check
      _
    $region30: #{binary_net_forward.30} parent=5 // pred_check_branch
      %170 = sbr.rel (%p167) target = $region32
    $region31: #{binary_net_forward.30} parent=5 // pred_region
      %s171 = ssub.s32 %s9, 1
      %s172 = smul.u32 16, %s18
      %p173 = scmp.lt.s32.totalorder %s19, 2
      %s174 = scalar_select %p173, %s19, 2
      %p175 = scmp.lt.s32.totalorder %s172, 15
      %s176 = scalar_select %p175, %s172, 15
      %s177 = smul.addr %s174, 16
      %s178 = sadd.s32 %s176, %s177
      %s179 = smul.addr %s178, 4
      %s180 = scalar_lea.vmem %s0, %s179
      %p181 = pneg %p49
      %p182 = pneg %p46
      %p183 = scmp.lt.s32.totalorder %s19, 2
      %s184 = scalar_select %p183, %s19, 2
      %s185 = smul.addr %s184, 3
      %s186 = smul.addr %s185, 4
      %s187 = scalar_lea.vmem %s1, %s186
      %p188 = pneg %p75
      %p189 = pneg %p72
      %p190 = pneg %p96
      %p191 = pneg %p93
      %p192 = pneg %p122
      %p193 = pneg %p119
      %s194 = smul.u32 16, %s18
      %p195 = scmp.lt.s32.totalorder %s194, 15
      %s196 = scalar_select %p195, %s194, 15
      %s197 = smul.addr %s196, 4
      %s198 = scalar_lea.vmem %s3, %s197
      %s199 = smul.u32 16, %s18
      %p200 = scmp.lt.s32.totalorder %s19, 2
      %s201 = scalar_select %p200, %s19, 2
      %p202 = scmp.lt.s32.totalorder %s199, 15
      %s203 = scalar_select %p202, %s199, 15
      %s204 = smul.addr %s201, 16
      %s205 = sadd.s32 %s203, %s204
      %s206 = smul.addr %s205, 4
      %s207 = scalar_lea.vmem %s0, %s206
      %s208 = smul.u32 16, %s18
      %p209 = scmp.lt.s32.totalorder %s19, 2
      %s210 = scalar_select %p209, %s19, 2
      %s211 = smul.addr %s210, 3
      %s212 = smul.addr %s211, 4
      %s213 = scalar_lea.vmem %s1, %s212
      %s214 = smul.u32 16, %s18
      %p215 = scmp.lt.s32.totalorder %s214, 15
      %s216 = scalar_select %p215, %s214, 15
      %s217 = smul.addr %s216, 4
      %s218 = scalar_lea.vmem %s3, %s217
      %s219 = smul.u32 16, %s18
      %p221 = scmp.eq.s32.totalorder %s19, 0
      // Predicated region
      $region33: #{binary_net_forward.30} parent=31 // pred_check
        %p222 = pneg %p221
      $region34: #{binary_net_forward.30} parent=31 // pred_check_branch
        %224 = sbr.rel (%p222) target = $region36
      $region35: #{binary_net_forward.30} parent=31 // pred_region
        %225 = vst [vmem:[#allocation2] sm:$0xff] 0.0
        %226 = vst [vmem:[#allocation2 + $0x8] sm:$0xff] 0.0
        %227 = vst [vmem:[#allocation2 + $0x10] sm:$0xff] 0.0
        %228 = vst [vmem:[#allocation2 + $0x18] sm:$0xff] 0.0
        %229 = vst [vmem:[#allocation2 + $0x20] sm:$0xff] 0.0
        %230 = vst [vmem:[#allocation2 + $0x28] sm:$0xff] 0.0
        %231 = vst [vmem:[#allocation2 + $0x30] sm:$0xff] 0.0
        %232 = vst [vmem:[#allocation2 + $0x38] sm:$0xff] 0.0
        %233 = vst [vmem:[#allocation2 + $0x40] sm:$0xff] 0.0
        %234 = vst [vmem:[#allocation2 + $0x48] sm:$0xff] 0.0
        %235 = vst [vmem:[#allocation2 + $0x50] sm:$0xff] 0.0
        %236 = vst [vmem:[#allocation2 + $0x58] sm:$0xff] 0.0
        %237 = vst [vmem:[#allocation2 + $0x60] sm:$0xff] 0.0
        %238 = vst [vmem:[#allocation2 + $0x68] sm:$0xff] 0.0
        %239 = vst [vmem:[#allocation2 + $0x70] sm:$0xff] 0.0
        %240 = vst [vmem:[#allocation2 + $0x78] sm:$0xff] 0.0
      $region36: #{binary_net_forward.30} parent=31 // pred_fallthru
        _
      %v241 = vld [vmem:[%s207] sm:$0xf]
      %v242 = vld [vmem:[%s207 + $0x4] sm:$0xf]
      %v243 = vld [vmem:[%s207 + $0x8] sm:$0xf]
      %v244 = vld [vmem:[%s207 + $0xc] sm:$0xf]
      %v245 = vld [vmem:[%s207 + $0x10] sm:$0xf]
      %v246 = vld [vmem:[%s207 + $0x14] sm:$0xf]
      %v247 = vld [vmem:[%s207 + $0x18] sm:$0xf]
      %v248 = vld [vmem:[%s207 + $0x1c] sm:$0xf]
      %v249 = vld [vmem:[%s207 + $0x20] sm:$0xf]
      %v250 = vld [vmem:[%s207 + $0x24] sm:$0xf]
      %v251 = vld [vmem:[%s207 + $0x28] sm:$0xf]
      %v252 = vld [vmem:[%s207 + $0x2c] sm:$0xf]
      %v253 = vld [vmem:[%s207 + $0x30] sm:$0xf]
      %v254 = vld [vmem:[%s207 + $0x34] sm:$0xf]
      %v255 = vld [vmem:[%s207 + $0x38] sm:$0xf]
      %v256 = vld [vmem:[%s207 + $0x3c] sm:$0xf]
      %v257 = vld [vmem:[#allocation2] sm:$0xff]
      %v258 = vld [vmem:[#allocation2 + $0x8] sm:$0xff]
      %v259 = vld [vmem:[#allocation2 + $0x10] sm:$0xff]
      %v260 = vld [vmem:[#allocation2 + $0x18] sm:$0xff]
      %v261 = vld [vmem:[#allocation2 + $0x20] sm:$0xff]
      %v262 = vld [vmem:[#allocation2 + $0x28] sm:$0xff]
      %v263 = vld [vmem:[#allocation2 + $0x30] sm:$0xff]
      %v264 = vld [vmem:[#allocation2 + $0x38] sm:$0xff]
      %v265 = vld [vmem:[#allocation2 + $0x40] sm:$0xff]
      %v266 = vld [vmem:[#allocation2 + $0x48] sm:$0xff]
      %v267 = vld [vmem:[#allocation2 + $0x50] sm:$0xff]
      %v268 = vld [vmem:[#allocation2 + $0x58] sm:$0xff]
      %v269 = vld [vmem:[#allocation2 + $0x60] sm:$0xff]
      %v270 = vld [vmem:[#allocation2 + $0x68] sm:$0xff]
      %v271 = vld [vmem:[#allocation2 + $0x70] sm:$0xff]
      %v272 = vld [vmem:[%s213] sm:$0xf]
      %v288 = vunpack.c.l.b16 %v241
      %v289 = vunpack.c.l.b16 %v242
      %v290 = vunpack.c.l.b16 %v243
      %v291 = vunpack.c.l.b16 %v244
      %v292 = vunpack.c.l.b16 %v245
      %v293 = vunpack.c.l.b16 %v246
      %v294 = vunpack.c.l.b16 %v247
      %v295 = vunpack.c.l.b16 %v248
      %v296 = vunpack.c.l.b16 %v249
      %v297 = vunpack.c.l.b16 %v250
      %v298 = vunpack.c.l.b16 %v251
      %v299 = vunpack.c.l.b16 %v252
      %v300 = vunpack.c.l.b16 %v253
      %v301 = vunpack.c.l.b16 %v254
      %v302 = vunpack.c.l.b16 %v255
      %v303 = vpack.c.b16 %v289, %v288
      %v304 = vpack.c.b16 %v291, %v290
      %v305 = vpack.c.b16 %v293, %v292
      %v306 = vpack.c.b16 %v295, %v294
      %v307 = vpack.c.b16 %v297, %v296
      %v308 = vpack.c.b16 %v299, %v298
      %v309 = vpack.c.b16 %v301, %v300
      %v310 = vpack.c.b16 %v302, %v302
      %vm311 = vcmask 64512
      %v313 = vsel %vm311, %v303, 0
      %v316 = vsel %vm311, %v304, 0
      %v319 = vsel %vm311, %v305, 0
      %v322 = vsel %vm311, %v306, 0
      %v325 = vsel %vm311, %v307, 0
      %v328 = vsel %vm311, %v308, 0
      %v331 = vsel %vm311, %v309, 0
      %v334 = vsel %vm311, %v310, 0
      %vm336 = vcmask 1043456
      %v338 = vsel %vm336, %v272, 0
      %340 = vmatprep.subr.bf16.mxu0 0
      %341 = vmatpush1.bf16.msra.mxu0 0
      %342 = vmatprep.subr.bf16.mxu0 0
      %343 = vmatpush1.bf16.msra.mxu0 0
      %344 = vmatprep.subr.bf16.mxu0 0
      %345 = vmatpush1.bf16.msra.mxu0 0
      %346 = vmatprep.subr.bf16.mxu0 0
      %347 = vmatpush1.bf16.msra.mxu0 0
      %348 = vmatprep.subr.bf16.mxu0 0
      %349 = vmatpush1.bf16.msra.mxu0 0
      %350 = vmatprep.subr.bf16.mxu0 0
      %351 = vmatpush1.bf16.msra.mxu0 0
      %352 = vmatprep.subr.bf16.mxu0 0
      %353 = vmatpush1.bf16.msra.mxu0 0
      %354 = vmatprep.subr.bf16.mxu0 0
      %355 = vmatpush1.bf16.msra.mxu0 %v338
      %356 = vmatprep.subr.bf16.mxu0 0
      %357 = vmatpush2.bf16.msra.mxu0 0
      %358 = vmatprep.subr.bf16.mxu0 0
      %359 = vmatpush2.bf16.msra.mxu0 0
      %360 = vmatprep.subr.bf16.mxu0 0
      %361 = vmatpush2.bf16.msra.mxu0 0
      %362 = vmatprep.subr.bf16.mxu0 0
      %363 = vmatpush2.bf16.msra.mxu0 0
      %364 = vmatprep.subr.bf16.mxu0 0
      %365 = vmatpush2.bf16.msra.mxu0 0
      %366 = vmatprep.subr.bf16.mxu0 0
      %367 = vmatpush2.bf16.msra.mxu0 0
      %368 = vmatprep.subr.bf16.mxu0 0
      %369 = vmatpush2.bf16.msra.mxu0 0
      %370 = vmatprep.subr.bf16.mxu0 0
      %371 = vmatpush2.bf16.msra.mxu0 0
      %372 = vmatprep.mubr.bf16.mxu0 0
      %373 = vmatmul.mubr.bf16.gmra.mxu0 %v313
      %v374 = vpop.f32.mrf.mxu0
      %v375 = vadd.f32 0.0, %v374
      %v376 = vpop.f32.mrf.mxu0
      %v377 = vpop.f32.mrf.mxu0
      %v378 = vadd.f32 0.0, %v377
      %v379 = vpop.f32.mrf.mxu0
      %380 = vmatprep.mubr.bf16.mxu0 0
      %381 = vmatmul.mubr.bf16.gmra.mxu0 %v316
      %v382 = vpop.f32.mrf.mxu0
      %v383 = vadd.f32 0.0, %v382
      %v384 = vpop.f32.mrf.mxu0
      %v385 = vpop.f32.mrf.mxu0
      %v386 = vadd.f32 0.0, %v385
      %v387 = vpop.f32.mrf.mxu0
      %388 = vmatprep.mubr.bf16.mxu0 0
      %389 = vmatmul.mubr.bf16.gmra.mxu0 %v319
      %v390 = vpop.f32.mrf.mxu0
      %v391 = vadd.f32 0.0, %v390
      %v392 = vpop.f32.mrf.mxu0
      %v393 = vpop.f32.mrf.mxu0
      %v394 = vadd.f32 0.0, %v393
      %v395 = vpop.f32.mrf.mxu0
      %396 = vmatprep.mubr.bf16.mxu0 0
      %397 = vmatmul.mubr.bf16.gmra.mxu0 %v322
      %v398 = vpop.f32.mrf.mxu0
      %v399 = vadd.f32 0.0, %v398
      %v400 = vpop.f32.mrf.mxu0
      %v401 = vpop.f32.mrf.mxu0
      %v402 = vadd.f32 0.0, %v401
      %v403 = vpop.f32.mrf.mxu0
      %404 = vmatprep.mubr.bf16.mxu0 0
      %405 = vmatmul.mubr.bf16.gmra.mxu0 %v325
      %v406 = vpop.f32.mrf.mxu0
      %v407 = vadd.f32 0.0, %v406
      %v408 = vpop.f32.mrf.mxu0
      %v409 = vpop.f32.mrf.mxu0
      %v410 = vadd.f32 0.0, %v409
      %v411 = vpop.f32.mrf.mxu0
      %412 = vmatprep.mubr.bf16.mxu0 0
      %413 = vmatmul.mubr.bf16.gmra.mxu0 %v328
      %v414 = vpop.f32.mrf.mxu0
      %v415 = vadd.f32 0.0, %v414
      %v416 = vpop.f32.mrf.mxu0
      %v417 = vpop.f32.mrf.mxu0
      %v418 = vadd.f32 0.0, %v417
      %v419 = vpop.f32.mrf.mxu0
      %420 = vmatprep.mubr.bf16.mxu0 0
      %421 = vmatmul.mubr.bf16.gmra.mxu0 %v331
      %v422 = vpop.f32.mrf.mxu0
      %v423 = vadd.f32 0.0, %v422
      %v424 = vpop.f32.mrf.mxu0
      %v425 = vpop.f32.mrf.mxu0
      %v426 = vadd.f32 0.0, %v425
      %v427 = vpop.f32.mrf.mxu0
      %428 = vmatprep.mubr.bf16.mxu0 0
      %429 = vmatmul.mubr.bf16.gmra.mxu0 %v334
      %v430 = vpop.f32.mrf.mxu0
      %v431 = vadd.f32 0.0, %v430
      %v432 = vpop.f32.mrf.mxu0
      %v433 = vpop.f32.mrf.mxu0
      %v434 = vpop.f32.mrf.mxu0
      %435 = vdwg.mxu0
      %v436 = vadd.f32 %v257, %v375
      %v437 = vadd.f32 %v258, %v378
      %v438 = vadd.f32 %v259, %v383
      %v439 = vadd.f32 %v260, %v386
      %v440 = vadd.f32 %v261, %v391
      %v441 = vadd.f32 %v262, %v394
      %v442 = vadd.f32 %v263, %v399
      %v443 = vadd.f32 %v264, %v402
      %v444 = vadd.f32 %v265, %v407
      %v445 = vadd.f32 %v266, %v410
      %v446 = vadd.f32 %v267, %v415
      %v447 = vadd.f32 %v268, %v418
      %v448 = vadd.f32 %v269, %v423
      %v449 = vadd.f32 %v270, %v426
      %v450 = vadd.f32 %v271, %v431
      %s451 = scalar_lea.vmem %s213, 4
      %v452 = vld [vmem:[%s451] sm:$0xf]
      %v454 = vunpack.c.l.b16 %v256
      %v455 = vpack.c.b16 %v454, %v302
      %vm456 = vsmask.f32 7424
      %v457 = vshrl.u32 %v303, 16
      %v459 = vshll.u32 %v303, 16
      %v461 = vrot.slane %v459, 1
      %v462 = vor.u32 %v457, %v461
      %v463 = vshll.u32 %v304, 16
      %v465 = vrot.slane %v463, 1
      %v466 = vsel %vm456, %v462, %v465
      %v467 = vshrl.u32 %v304, 16
      %v469 = vor.u32 %v467, %v465
      %v470 = vshll.u32 %v305, 16
      %v472 = vrot.slane %v470, 1
      %v473 = vsel %vm456, %v469, %v472
      %v474 = vshrl.u32 %v305, 16
      %v476 = vor.u32 %v474, %v472
      %v477 = vshll.u32 %v306, 16
      %v479 = vrot.slane %v477, 1
      %v480 = vsel %vm456, %v476, %v479
      %v481 = vshrl.u32 %v306, 16
      %v483 = vor.u32 %v481, %v479
      %v484 = vshll.u32 %v307, 16
      %v486 = vrot.slane %v484, 1
      %v487 = vsel %vm456, %v483, %v486
      %v488 = vshrl.u32 %v307, 16
      %v490 = vor.u32 %v488, %v486
      %v491 = vshll.u32 %v308, 16
      %v493 = vrot.slane %v491, 1
      %v494 = vsel %vm456, %v490, %v493
      %v495 = vshrl.u32 %v308, 16
      %v497 = vor.u32 %v495, %v493
      %v498 = vshll.u32 %v309, 16
      %v500 = vrot.slane %v498, 1
      %v501 = vsel %vm456, %v497, %v500
      %v502 = vshrl.u32 %v309, 16
      %v504 = vor.u32 %v502, %v500
      %v506 = vshll.u32 %v455, 16
      %v508 = vrot.slane %v506, 1
      %v509 = vsel %vm456, %v504, %v508
      %v510 = vshrl.u32 %v455, 16
      %v512 = vor.u32 %v510, %v508
      %v514 = vsel %vm311, %v466, 0
      %v517 = vsel %vm311, %v473, 0
      %v520 = vsel %vm311, %v480, 0
      %v523 = vsel %vm311, %v487, 0
      %v526 = vsel %vm311, %v494, 0
      %v529 = vsel %vm311, %v501, 0
      %v532 = vsel %vm311, %v509, 0
      %v535 = vsel %vm311, %v512, 0
      %v538 = vsel %vm336, %v452, 0
      %540 = vmatprep.subr.bf16.mxu0 0
      %541 = vmatpush1.bf16.msra.mxu0 0
      %542 = vmatprep.subr.bf16.mxu0 0
      %543 = vmatpush1.bf16.msra.mxu0 0
      %544 = vmatprep.subr.bf16.mxu0 0
      %545 = vmatpush1.bf16.msra.mxu0 0
      %546 = vmatprep.subr.bf16.mxu0 0
      %547 = vmatpush1.bf16.msra.mxu0 0
      %548 = vmatprep.subr.bf16.mxu0 0
      %549 = vmatpush1.bf16.msra.mxu0 0
      %550 = vmatprep.subr.bf16.mxu0 0
      %551 = vmatpush1.bf16.msra.mxu0 0
      %552 = vmatprep.subr.bf16.mxu0 0
      %553 = vmatpush1.bf16.msra.mxu0 0
      %554 = vmatprep.subr.bf16.mxu0 0
      %555 = vmatpush1.bf16.msra.mxu0 %v538
      %556 = vmatprep.subr.bf16.mxu0 0
      %557 = vmatpush2.bf16.msra.mxu0 0
      %558 = vmatprep.subr.bf16.mxu0 0
      %559 = vmatpush2.bf16.msra.mxu0 0
      %560 = vmatprep.subr.bf16.mxu0 0
      %561 = vmatpush2.bf16.msra.mxu0 0
      %562 = vmatprep.subr.bf16.mxu0 0
      %563 = vmatpush2.bf16.msra.mxu0 0
      %564 = vmatprep.subr.bf16.mxu0 0
      %565 = vmatpush2.bf16.msra.mxu0 0
      %566 = vmatprep.subr.bf16.mxu0 0
      %567 = vmatpush2.bf16.msra.mxu0 0
      %568 = vmatprep.subr.bf16.mxu0 0
      %569 = vmatpush2.bf16.msra.mxu0 0
      %570 = vmatprep.subr.bf16.mxu0 0
      %571 = vmatpush2.bf16.msra.mxu0 0
      %572 = vmatprep.mubr.bf16.mxu0 0
      %573 = vmatmul.mubr.bf16.gmra.mxu0 %v514
      %v574 = vpop.f32.mrf.mxu0
      %v575 = vadd.f32 0.0, %v574
      %v576 = vpop.f32.mrf.mxu0
      %v577 = vpop.f32.mrf.mxu0
      %v578 = vadd.f32 0.0, %v577
      %v579 = vpop.f32.mrf.mxu0
      %580 = vmatprep.mubr.bf16.mxu0 0
      %581 = vmatmul.mubr.bf16.gmra.mxu0 %v517
      %v582 = vpop.f32.mrf.mxu0
      %v583 = vadd.f32 0.0, %v582
      %v584 = vpop.f32.mrf.mxu0
      %v585 = vpop.f32.mrf.mxu0
      %v586 = vadd.f32 0.0, %v585
      %v587 = vpop.f32.mrf.mxu0
      %588 = vmatprep.mubr.bf16.mxu0 0
      %589 = vmatmul.mubr.bf16.gmra.mxu0 %v520
      %v590 = vpop.f32.mrf.mxu0
      %v591 = vadd.f32 0.0, %v590
      %v592 = vpop.f32.mrf.mxu0
      %v593 = vpop.f32.mrf.mxu0
      %v594 = vadd.f32 0.0, %v593
      %v595 = vpop.f32.mrf.mxu0
      %596 = vmatprep.mubr.bf16.mxu0 0
      %597 = vmatmul.mubr.bf16.gmra.mxu0 %v523
      %v598 = vpop.f32.mrf.mxu0
      %v599 = vadd.f32 0.0, %v598
      %v600 = vpop.f32.mrf.mxu0
      %v601 = vpop.f32.mrf.mxu0
      %v602 = vadd.f32 0.0, %v601
      %v603 = vpop.f32.mrf.mxu0
      %604 = vmatprep.mubr.bf16.mxu0 0
      %605 = vmatmul.mubr.bf16.gmra.mxu0 %v526
      %v606 = vpop.f32.mrf.mxu0
      %v607 = vadd.f32 0.0, %v606
      %v608 = vpop.f32.mrf.mxu0
      %v609 = vpop.f32.mrf.mxu0
      %v610 = vadd.f32 0.0, %v609
      %v611 = vpop.f32.mrf.mxu0
      %612 = vmatprep.mubr.bf16.mxu0 0
      %613 = vmatmul.mubr.bf16.gmra.mxu0 %v529
      %v614 = vpop.f32.mrf.mxu0
      %v615 = vadd.f32 0.0, %v614
      %v616 = vpop.f32.mrf.mxu0
      %v617 = vpop.f32.mrf.mxu0
      %v618 = vadd.f32 0.0, %v617
      %v619 = vpop.f32.mrf.mxu0
      %620 = vmatprep.mubr.bf16.mxu0 0
      %621 = vmatmul.mubr.bf16.gmra.mxu0 %v532
      %v622 = vpop.f32.mrf.mxu0
      %v623 = vadd.f32 0.0, %v622
      %v624 = vpop.f32.mrf.mxu0
      %v625 = vpop.f32.mrf.mxu0
      %v626 = vadd.f32 0.0, %v625
      %v627 = vpop.f32.mrf.mxu0
      %628 = vmatprep.mubr.bf16.mxu0 0
      %629 = vmatmul.mubr.bf16.gmra.mxu0 %v535
      %v630 = vpop.f32.mrf.mxu0
      %v631 = vadd.f32 0.0, %v630
      %v632 = vpop.f32.mrf.mxu0
      %v633 = vpop.f32.mrf.mxu0
      %v634 = vpop.f32.mrf.mxu0
      %635 = vdwg.mxu0
      %v636 = vadd.f32 %v436, %v575
      %v637 = vadd.f32 %v437, %v578
      %v638 = vadd.f32 %v438, %v583
      %v639 = vadd.f32 %v439, %v586
      %v640 = vadd.f32 %v440, %v591
      %v641 = vadd.f32 %v441, %v594
      %v642 = vadd.f32 %v442, %v599
      %v643 = vadd.f32 %v443, %v602
      %v644 = vadd.f32 %v444, %v607
      %v645 = vadd.f32 %v445, %v610
      %v646 = vadd.f32 %v446, %v615
      %v647 = vadd.f32 %v447, %v618
      %v648 = vadd.f32 %v448, %v623
      %v649 = vadd.f32 %v449, %v626
      %v650 = vadd.f32 %v450, %v631
      %s651 = scalar_lea.vmem %s213, 8
      %v652 = vld [vmem:[%s651] sm:$0xf]
      %vm653 = vcmask 1046528
      %v654 = vrot.slane %v303, 1
      %v655 = vrot.slane %v304, 1
      %v656 = vsel %vm653, %v654, %v655
      %v657 = vrot.slane %v305, 1
      %v658 = vsel %vm653, %v655, %v657
      %v659 = vrot.slane %v306, 1
      %v660 = vsel %vm653, %v657, %v659
      %v661 = vrot.slane %v307, 1
      %v662 = vsel %vm653, %v659, %v661
      %v663 = vrot.slane %v308, 1
      %v664 = vsel %vm653, %v661, %v663
      %v665 = vrot.slane %v309, 1
      %v666 = vsel %vm653, %v663, %v665
      %v667 = vrot.slane %v455, 1
      %v668 = vsel %vm653, %v665, %v667
      %v670 = vsel %vm311, %v656, 0
      %v673 = vsel %vm311, %v658, 0
      %v676 = vsel %vm311, %v660, 0
      %v679 = vsel %vm311, %v662, 0
      %v682 = vsel %vm311, %v664, 0
      %v685 = vsel %vm311, %v666, 0
      %v688 = vsel %vm311, %v668, 0
      %v691 = vsel %vm311, %v667, 0
      %v694 = vsel %vm336, %v652, 0
      %696 = vmatprep.subr.bf16.mxu0 0
      %697 = vmatpush1.bf16.msra.mxu0 0
      %698 = vmatprep.subr.bf16.mxu0 0
      %699 = vmatpush1.bf16.msra.mxu0 0
      %700 = vmatprep.subr.bf16.mxu0 0
      %701 = vmatpush1.bf16.msra.mxu0 0
      %702 = vmatprep.subr.bf16.mxu0 0
      %703 = vmatpush1.bf16.msra.mxu0 0
      %704 = vmatprep.subr.bf16.mxu0 0
      %705 = vmatpush1.bf16.msra.mxu0 0
      %706 = vmatprep.subr.bf16.mxu0 0
      %707 = vmatpush1.bf16.msra.mxu0 0
      %708 = vmatprep.subr.bf16.mxu0 0
      %709 = vmatpush1.bf16.msra.mxu0 0
      %710 = vmatprep.subr.bf16.mxu0 0
      %711 = vmatpush1.bf16.msra.mxu0 %v694
      %712 = vmatprep.subr.bf16.mxu0 0
      %713 = vmatpush2.bf16.msra.mxu0 0
      %714 = vmatprep.subr.bf16.mxu0 0
      %715 = vmatpush2.bf16.msra.mxu0 0
      %716 = vmatprep.subr.bf16.mxu0 0
      %717 = vmatpush2.bf16.msra.mxu0 0
      %718 = vmatprep.subr.bf16.mxu0 0
      %719 = vmatpush2.bf16.msra.mxu0 0
      %720 = vmatprep.subr.bf16.mxu0 0
      %721 = vmatpush2.bf16.msra.mxu0 0
      %722 = vmatprep.subr.bf16.mxu0 0
      %723 = vmatpush2.bf16.msra.mxu0 0
      %724 = vmatprep.subr.bf16.mxu0 0
      %725 = vmatpush2.bf16.msra.mxu0 0
      %726 = vmatprep.subr.bf16.mxu0 0
      %727 = vmatpush2.bf16.msra.mxu0 0
      %728 = vmatprep.mubr.bf16.mxu0 0
      %729 = vmatmul.mubr.bf16.gmra.mxu0 %v670
      %v730 = vpop.f32.mrf.mxu0
      %v731 = vadd.f32 0.0, %v730
      %v732 = vpop.f32.mrf.mxu0
      %v733 = vpop.f32.mrf.mxu0
      %v734 = vadd.f32 0.0, %v733
      %v735 = vpop.f32.mrf.mxu0
      %736 = vmatprep.mubr.bf16.mxu0 0
      %737 = vmatmul.mubr.bf16.gmra.mxu0 %v673
      %v738 = vpop.f32.mrf.mxu0
      %v739 = vadd.f32 0.0, %v738
      %v740 = vpop.f32.mrf.mxu0
      %v741 = vpop.f32.mrf.mxu0
      %v742 = vadd.f32 0.0, %v741
      %v743 = vpop.f32.mrf.mxu0
      %744 = vmatprep.mubr.bf16.mxu0 0
      %745 = vmatmul.mubr.bf16.gmra.mxu0 %v676
      %v746 = vpop.f32.mrf.mxu0
      %v747 = vadd.f32 0.0, %v746
      %v748 = vpop.f32.mrf.mxu0
      %v749 = vpop.f32.mrf.mxu0
      %v750 = vadd.f32 0.0, %v749
      %v751 = vpop.f32.mrf.mxu0
      %752 = vmatprep.mubr.bf16.mxu0 0
      %753 = vmatmul.mubr.bf16.gmra.mxu0 %v679
      %v754 = vpop.f32.mrf.mxu0
      %v755 = vadd.f32 0.0, %v754
      %v756 = vpop.f32.mrf.mxu0
      %v757 = vpop.f32.mrf.mxu0
      %v758 = vadd.f32 0.0, %v757
      %v759 = vpop.f32.mrf.mxu0
      %760 = vmatprep.mubr.bf16.mxu0 0
      %761 = vmatmul.mubr.bf16.gmra.mxu0 %v682
      %v762 = vpop.f32.mrf.mxu0
      %v763 = vadd.f32 0.0, %v762
      %v764 = vpop.f32.mrf.mxu0
      %v765 = vpop.f32.mrf.mxu0
      %v766 = vadd.f32 0.0, %v765
      %v767 = vpop.f32.mrf.mxu0
      %768 = vmatprep.mubr.bf16.mxu0 0
      %769 = vmatmul.mubr.bf16.gmra.mxu0 %v685
      %v770 = vpop.f32.mrf.mxu0
      %v771 = vadd.f32 0.0, %v770
      %v772 = vpop.f32.mrf.mxu0
      %v773 = vpop.f32.mrf.mxu0
      %v774 = vadd.f32 0.0, %v773
      %v775 = vpop.f32.mrf.mxu0
      %776 = vmatprep.mubr.bf16.mxu0 0
      %777 = vmatmul.mubr.bf16.gmra.mxu0 %v688
      %v778 = vpop.f32.mrf.mxu0
      %v779 = vadd.f32 0.0, %v778
      %v780 = vpop.f32.mrf.mxu0
      %v781 = vpop.f32.mrf.mxu0
      %v782 = vadd.f32 0.0, %v781
      %v783 = vpop.f32.mrf.mxu0
      %784 = vmatprep.mubr.bf16.mxu0 0
      %785 = vmatmul.mubr.bf16.gmra.mxu0 %v691
      %v786 = vpop.f32.mrf.mxu0
      %v787 = vadd.f32 0.0, %v786
      %v788 = vpop.f32.mrf.mxu0
      %v789 = vpop.f32.mrf.mxu0
      %v790 = vpop.f32.mrf.mxu0
      %791 = vdwg.mxu0
      %v792 = vadd.f32 %v636, %v731
      %v793 = vadd.f32 %v637, %v734
      %v794 = vadd.f32 %v638, %v739
      %v795 = vadd.f32 %v639, %v742
      %v796 = vadd.f32 %v640, %v747
      %v797 = vadd.f32 %v641, %v750
      %v798 = vadd.f32 %v642, %v755
      %v799 = vadd.f32 %v643, %v758
      %v800 = vadd.f32 %v644, %v763
      %v801 = vadd.f32 %v645, %v766
      %v802 = vadd.f32 %v646, %v771
      %v803 = vadd.f32 %v647, %v774
      %v804 = vadd.f32 %v648, %v779
      %v805 = vadd.f32 %v649, %v782
      %v806 = vadd.f32 %v650, %v787
      %807 = vst [vmem:[#allocation2] sm:$0xff] %v792
      %808 = vst [vmem:[#allocation2 + $0x8] sm:$0xff] %v793
      %809 = vst [vmem:[#allocation2 + $0x10] sm:$0xff] %v794
      %810 = vst [vmem:[#allocation2 + $0x18] sm:$0xff] %v795
      %811 = vst [vmem:[#allocation2 + $0x20] sm:$0xff] %v796
      %812 = vst [vmem:[#allocation2 + $0x28] sm:$0xff] %v797
      %813 = vst [vmem:[#allocation2 + $0x30] sm:$0xff] %v798
      %814 = vst [vmem:[#allocation2 + $0x38] sm:$0xff] %v799
      %815 = vst [vmem:[#allocation2 + $0x40] sm:$0xff] %v800
      %816 = vst [vmem:[#allocation2 + $0x48] sm:$0xff] %v801
      %817 = vst [vmem:[#allocation2 + $0x50] sm:$0xff] %v802
      %818 = vst [vmem:[#allocation2 + $0x58] sm:$0xff] %v803
      %819 = vst [vmem:[#allocation2 + $0x60] sm:$0xff] %v804
      %820 = vst [vmem:[#allocation2 + $0x68] sm:$0xff] %v805
      %821 = vst [vmem:[#allocation2 + $0x70] sm:$0xff] %v806
      %p822 = scmp.eq.s32.totalorder %s19, 2
      // Predicated region
      $region37: #{binary_net_forward.30} parent=31 // pred_check
        %p823 = pneg %p822
      $region38: #{binary_net_forward.30} parent=31 // pred_check_branch
        %825 = sbr.rel (%p823) target = $region40
      $region39: #{binary_net_forward.30} parent=31 // pred_region
        %v826 = vld [vmem:[#allocation2] sm:$0xff]
        %v827 = vld [vmem:[#allocation2 + $0x8] sm:$0xff]
        %v828 = vld [vmem:[#allocation2 + $0x10] sm:$0xff]
        %v829 = vld [vmem:[#allocation2 + $0x18] sm:$0xff]
        %v830 = vld [vmem:[#allocation2 + $0x20] sm:$0xff]
        %v831 = vld [vmem:[#allocation2 + $0x28] sm:$0xff]
        %v832 = vld [vmem:[#allocation2 + $0x30] sm:$0xff]
        %v833 = vld [vmem:[#allocation2 + $0x38] sm:$0xff]
        %v834 = vld [vmem:[#allocation2 + $0x40] sm:$0xff]
        %v835 = vld [vmem:[#allocation2 + $0x48] sm:$0xff]
        %v836 = vld [vmem:[#allocation2 + $0x50] sm:$0xff]
        %v837 = vld [vmem:[#allocation2 + $0x58] sm:$0xff]
        %v838 = vld [vmem:[#allocation2 + $0x60] sm:$0xff]
        %v839 = vld [vmem:[#allocation2 + $0x68] sm:$0xff]
        %v840 = vld [vmem:[#allocation2 + $0x70] sm:$0xff]
        %v841 = vld [vmem:[#allocation2 + $0x78] sm:$0xff]
        %v842 = vld [vmem:[%s2] sm:$0x1]
        %v844 = vlaneseq
        %v845 = vshrl.u32 %v844, 7
        %v846 = vsub.s32 0, %v845
        %v847 = vrot.slane %v842, %v846
        %v849 = vadd.f32 %v826, %v847
        %v850 = vadd.f32 %v827, %v847
        %v851 = vadd.f32 %v828, %v847
        %v852 = vadd.f32 %v829, %v847
        %v853 = vadd.f32 %v830, %v847
        %v854 = vadd.f32 %v831, %v847
        %v855 = vadd.f32 %v832, %v847
        %v856 = vadd.f32 %v833, %v847
        %v857 = vadd.f32 %v834, %v847
        %v858 = vadd.f32 %v835, %v847
        %v859 = vadd.f32 %v836, %v847
        %v860 = vadd.f32 %v837, %v847
        %v861 = vadd.f32 %v838, %v847
        %v862 = vadd.f32 %v839, %v847
        %v863 = vadd.f32 %v840, %v847
        %v864 = vadd.f32 %v841, %v847
        %v865 = vpack.c.bf16 %v850, %v849
        %v866 = vpack.c.bf16 %v852, %v851
        %v867 = vpack.c.bf16 %v854, %v853
        %v868 = vpack.c.bf16 %v856, %v855
        %v869 = vpack.c.bf16 %v858, %v857
        %v870 = vpack.c.bf16 %v860, %v859
        %v871 = vpack.c.bf16 %v862, %v861
        %v872 = vpack.c.bf16 %v864, %v863
        %v881 = vunpack.c.l.b16 %v865
        %v882 = vunpack.c.h.b16 %v865
        %v883 = vunpack.c.l.b16 %v866
        %v884 = vunpack.c.h.b16 %v866
        %v885 = vunpack.c.l.b16 %v867
        %v886 = vunpack.c.h.b16 %v867
        %v887 = vunpack.c.l.b16 %v868
        %v888 = vunpack.c.h.b16 %v868
        %v889 = vunpack.c.l.b16 %v869
        %v890 = vunpack.c.h.b16 %v869
        %v891 = vunpack.c.l.b16 %v870
        %v892 = vunpack.c.h.b16 %v870
        %v893 = vunpack.c.l.b16 %v871
        %v894 = vunpack.c.h.b16 %v871
        %v895 = vunpack.c.l.b16 %v872
        %v896 = vunpack.c.h.b16 %v872
        %v897 = vpack.c.b16 %v881, %v881
        %v898 = vpack.c.b16 %v882, %v882
        %v899 = vpack.c.b16 %v883, %v883
        %v900 = vpack.c.b16 %v884, %v884
        %v901 = vpack.c.b16 %v885, %v885
        %v902 = vpack.c.b16 %v886, %v886
        %v903 = vpack.c.b16 %v887, %v887
        %v904 = vpack.c.b16 %v888, %v888
        %v905 = vpack.c.b16 %v889, %v889
        %v906 = vpack.c.b16 %v890, %v890
        %v907 = vpack.c.b16 %v891, %v891
        %v908 = vpack.c.b16 %v892, %v892
        %v909 = vpack.c.b16 %v893, %v893
        %v910 = vpack.c.b16 %v894, %v894
        %v911 = vpack.c.b16 %v895, %v895
        %v912 = vpack.c.b16 %v896, %v896
        %929 = vst [vmem:[%s218] sm:$0xf] %v897
        %930 = vst [vmem:[%s218 + $0x4] sm:$0xf] %v898
        %931 = vst [vmem:[%s218 + $0x8] sm:$0xf] %v899
        %932 = vst [vmem:[%s218 + $0xc] sm:$0xf] %v900
        %933 = vst [vmem:[%s218 + $0x10] sm:$0xf] %v901
        %934 = vst [vmem:[%s218 + $0x14] sm:$0xf] %v902
        %935 = vst [vmem:[%s218 + $0x18] sm:$0xf] %v903
        %936 = vst [vmem:[%s218 + $0x1c] sm:$0xf] %v904
        %937 = vst [vmem:[%s218 + $0x20] sm:$0xf] %v905
        %938 = vst [vmem:[%s218 + $0x24] sm:$0xf] %v906
        %939 = vst [vmem:[%s218 + $0x28] sm:$0xf] %v907
        %940 = vst [vmem:[%s218 + $0x2c] sm:$0xf] %v908
        %941 = vst [vmem:[%s218 + $0x30] sm:$0xf] %v909
        %942 = vst [vmem:[%s218 + $0x34] sm:$0xf] %v910
        %943 = vst [vmem:[%s218 + $0x38] sm:$0xf] %v911
        %944 = vst [vmem:[%s218 + $0x3c] sm:$0xf] %v912
      $region40: #{binary_net_forward.30} parent=31 // pred_fallthru
        _
      %s945 = smul.u32 16, %s18
      %p946 = scmp.lt.s32.totalorder %s945, 15
      %s947 = scalar_select %p946, %s945, 15
      %s948 = smul.addr %s947, 4
      %s949 = scalar_lea.vmem %s3, %s948
      // Predicated region
      $region41: #{binary_net_forward.30} parent=31 // pred_check
        %p950 = pneg %p119
      $region42: #{binary_net_forward.30} parent=31 // pred_check_branch
        %952 = sbr.rel (%p950) target = $region44
      $region43: #{binary_net_forward.30} parent=31 // pred_region
        %s953 = smul.u32 16, %s18
      $region44: #{binary_net_forward.30} parent=31 // pred_fallthru
        _
      // Predicated region
      $region45: #{binary_net_forward.30} parent=31 // pred_check
        %p954 = pneg %p119
      $region46: #{binary_net_forward.30} parent=31 // pred_check_branch
        %956 = sbr.rel (%p954) target = $region48
      $region47: #{binary_net_forward.30} parent=31 // pred_region
        %s957 = smul.u32 16, %s18
        %p958 = scmp.lt.s32.totalorder %s957, 15
        %s959 = scalar_select %p958, %s957, 15
        %s960 = smul.addr %s959, 4
        %s961 = scalar_lea.vmem %s3, %s960
      $region48: #{binary_net_forward.30} parent=31 // pred_fallthru
        _
    $region32: #{binary_net_forward.30} parent=5 // pred_fallthru
      _
    %p962 = scmp.le.s32.totalorder 2, %s9
    // Predicated region
    $region49: #{binary_net_forward.30} parent=5 // pred_check
      %p963 = pneg %p962
    $region50: #{binary_net_forward.30} parent=5 // pred_check_branch
      %965 = sbr.rel (%p963) target = $region52
    $region51: #{binary_net_forward.30} parent=5 // pred_region
      %s966 = ssub.s32 %s9, 2
    $region52: #{binary_net_forward.30} parent=5 // pred_fallthru
      _
  $region6: #{binary_net_forward.30} parent=0 // loop_footer
    %s13 = sadd.s32 1, %s9
  $region7: #{binary_net_forward.30} parent=0 // loop_footer_branch
    %8 = sbr.rel target = $region3
  $region8: #{binary_net_forward.30} parent=0 // loop_exit
    _

// kernel: binary_net_forward.32
$region0: #{binary_net_forward.32}
  #allocation0 [shape = 'u32[]', space=smem, size = 0x4, offset = 0x4, fixed_abs, tag = 'smem constant byte address 0x4 - core index']
  #allocation1 [shape = 'u32[144,128]{1,0:T(1,128)}', space=vmem, size = 0x12000, scoped, tag = 'internal scratch']
  %s0 = inlined_call_operand.vmem [shape: bf16[16,72], index: 0, kind: input, shape index: {}]
  %s1 = inlined_call_operand.vmem [shape: bf16[72,128], index: 1, kind: input, shape index: {}]
  %s2 = inlined_call_operand.vmem [shape: f32[1,128], index: 2, kind: input, shape index: {}]
  %s3 = inlined_call_operand.vmem [shape: bf16[16,128], index: 3, kind: output, shape index: {}]
  %s4 = sld [smem:[#allocation0]]
  $region22: #{binary_net_forward.32} parent=0
    _
  %s6 = ssub.s32 1, %s4
  %s7 = scalar_select 0, %s6, %s4
  // Predicated region
  $region2: #{binary_net_forward.32} parent=0 // pred_check
    _
  $region3: #{binary_net_forward.32} parent=0 // pred_check_branch
    %9 = sbr.rel (0) target = $region5
  $region4: #{binary_net_forward.32} parent=0 // pred_region
    _
  $region5: #{binary_net_forward.32} parent=0 // pred_fallthru
    _
  // Predicated region
  $region6: #{binary_net_forward.32} parent=0 // pred_check
    _
  $region7: #{binary_net_forward.32} parent=0 // pred_check_branch
    %11 = sbr.rel (0) target = $region9
  $region8: #{binary_net_forward.32} parent=0 // pred_region
    _
  $region9: #{binary_net_forward.32} parent=0 // pred_fallthru
    _
  // Predicated region
  $region10: #{binary_net_forward.32} parent=0 // pred_check
    _
  $region11: #{binary_net_forward.32} parent=0 // pred_check_branch
    %13 = sbr.rel (0) target = $region13
  $region12: #{binary_net_forward.32} parent=0 // pred_region
    _
  $region13: #{binary_net_forward.32} parent=0 // pred_fallthru
    _
  %v15 = vld [vmem:[%s0] sm:$0xf]
  %v16 = vld [vmem:[%s0 + $0x4] sm:$0xf]
  %v17 = vld [vmem:[%s1] sm:$0xf]
  %v18 = vld [vmem:[%s1 + $0x4] sm:$0xf]
  %v19 = vld [vmem:[%s1 + $0x8] sm:$0xf]
  %v20 = vld [vmem:[%s1 + $0xc] sm:$0xf]
  %v21 = vld [vmem:[%s1 + $0x10] sm:$0xf]
  %v22 = vld [vmem:[%s1 + $0x14] sm:$0xf]
  %v23 = vld [vmem:[%s1 + $0x18] sm:$0xf]
  %v24 = vld [vmem:[%s1 + $0x1c] sm:$0xf]
  %v25 = vld [vmem:[%s1 + $0x20] sm:$0xf]
  %v26 = vld [vmem:[%s2] sm:$0x1]
  %v28 = vlaneseq
  %v29 = vshrl.u32 %v28, 7
  %v30 = vsub.s32 0, %v29
  %v31 = vrot.slane %v26, %v30
  %v35 = vunpack.c.l.b16 %v15
  %v36 = vunpack.c.l.b16 %v16
  %v37 = vpack.c.b16 %v36, %v35
  %v47 = vunpack.c.l.b16 %v17
  %v48 = vunpack.c.l.b16 %v18
  %v49 = vunpack.c.l.b16 %v19
  %v50 = vunpack.c.l.b16 %v20
  %v51 = vunpack.c.l.b16 %v21
  %v52 = vunpack.c.l.b16 %v22
  %v53 = vunpack.c.l.b16 %v23
  %v54 = vunpack.c.l.b16 %v24
  %v55 = vunpack.c.l.b16 %v25
  %v56 = vpack.c.b16 %v48, %v47
  %v57 = vpack.c.b16 %v50, %v49
  %v58 = vpack.c.b16 %v52, %v51
  %v59 = vpack.c.b16 %v54, %v53
  %v60 = vpack.c.b16 %v55, %v55
  %vm65 = vcmask 588800
  %v67 = vsel %vm65, %v37, 0
  %vm69 = vcmask 1043456
  %v71 = vsel %vm69, %v60, 0
  %73 = vmatprep.subr.bf16.mxu0 0
  %74 = vmatpush1.bf16.msra.mxu0 0
  %75 = vmatprep.subr.bf16.mxu0 0
  %76 = vmatpush1.bf16.msra.mxu0 0
  %77 = vmatprep.subr.bf16.mxu0 0
  %78 = vmatpush1.bf16.msra.mxu0 0
  %79 = vmatprep.subr.bf16.mxu0 0
  %80 = vmatpush1.bf16.msra.mxu0 %v71
  %81 = vmatprep.subr.bf16.mxu0 0
  %82 = vmatpush1.bf16.msra.mxu0 %v59
  %83 = vmatprep.subr.bf16.mxu0 0
  %84 = vmatpush1.bf16.msra.mxu0 %v58
  %85 = vmatprep.subr.bf16.mxu0 0
  %86 = vmatpush1.bf16.msra.mxu0 %v57
  %87 = vmatprep.subr.bf16.mxu0 0
  %88 = vmatpush1.bf16.msra.mxu0 %v56
  %89 = vmatprep.subr.bf16.mxu0 0
  %90 = vmatpush2.bf16.msra.mxu0 0
  %91 = vmatprep.subr.bf16.mxu0 0
  %92 = vmatpush2.bf16.msra.mxu0 0
  %93 = vmatprep.subr.bf16.mxu0 0
  %94 = vmatpush2.bf16.msra.mxu0 0
  %95 = vmatprep.subr.bf16.mxu0 0
  %96 = vmatpush2.bf16.msra.mxu0 0
  %97 = vmatprep.subr.bf16.mxu0 0
  %98 = vmatpush2.bf16.msra.mxu0 0
  %99 = vmatprep.subr.bf16.mxu0 0
  %100 = vmatpush2.bf16.msra.mxu0 0
  %101 = vmatprep.subr.bf16.mxu0 0
  %102 = vmatpush2.bf16.msra.mxu0 0
  %103 = vmatprep.subr.bf16.mxu0 0
  %104 = vmatpush2.bf16.msra.mxu0 0
  %105 = vmatprep.mubr.bf16.mxu0 0
  %106 = vmatmul.mubr.bf16.gmra.mxu0 %v67
  %v107 = vpop.f32.mrf.mxu0
  %v108 = vadd.f32 %v31, %v107
  %v109 = vpop.f32.mrf.mxu0
  %v110 = vpop.f32.mrf.mxu0
  %v111 = vadd.f32 %v31, %v110
  %v112 = vpop.f32.mrf.mxu0
  %113 = vdwg.mxu0
  %v114 = vpack.c.bf16 %v111, %v108
  %v116 = vunpack.c.l.b16 %v114
  %v117 = vunpack.c.h.b16 %v114
  %v118 = vpack.c.b16 %v116, %v116
  %v119 = vpack.c.b16 %v117, %v117
  %122 = vst [vmem:[%s3] sm:$0xf] %v118
  %123 = vst [vmem:[%s3 + $0x4] sm:$0xf] %v119
  // Predicated region
  $region14: #{binary_net_forward.32} parent=0 // pred_check
    _
  $region15: #{binary_net_forward.32} parent=0 // pred_check_branch
    %125 = sbr.rel (0) target = $region17
  $region16: #{binary_net_forward.32} parent=0 // pred_region
    _
  $region17: #{binary_net_forward.32} parent=0 // pred_fallthru
    _
  // Predicated region
  $region18: #{binary_net_forward.32} parent=0 // pred_check
    _
  $region19: #{binary_net_forward.32} parent=0 // pred_check_branch
    %127 = sbr.rel (0) target = $region21
  $region20: #{binary_net_forward.32} parent=0 // pred_region
    _
  $region21: #{binary_net_forward.32} parent=0 // pred_fallthru
    _

// kernel: binary_net_forward.34
$region0: #{binary_net_forward.34}
  #allocation0 [shape = 'u32[]', space=smem, size = 0x4, offset = 0x4, fixed_abs, tag = 'smem constant byte address 0x4 - core index']
  #allocation1 [shape = 'u32[144,128]{1,0:T(1,128)}', space=vmem, size = 0x12000, scoped, tag = 'internal scratch']
  %s0 = inlined_call_operand.vmem [shape: bf16[16,144], index: 0, kind: input, shape index: {}]
  %s1 = inlined_call_operand.vmem [shape: bf16[144,128], index: 1, kind: input, shape index: {}]
  %s2 = inlined_call_operand.vmem [shape: f32[1,128], index: 2, kind: input, shape index: {}]
  %s3 = inlined_call_operand.vmem [shape: bf16[16,128], index: 3, kind: output, shape index: {}]
  %s4 = sld [smem:[#allocation0]]
  $region22: #{binary_net_forward.34} parent=0
    _
  %s6 = ssub.s32 1, %s4
  %s7 = scalar_select 0, %s6, %s4
  // Predicated region
  $region2: #{binary_net_forward.34} parent=0 // pred_check
    _
  $region3: #{binary_net_forward.34} parent=0 // pred_check_branch
    %9 = sbr.rel (0) target = $region5
  $region4: #{binary_net_forward.34} parent=0 // pred_region
    _
  $region5: #{binary_net_forward.34} parent=0 // pred_fallthru
    _
  // Predicated region
  $region6: #{binary_net_forward.34} parent=0 // pred_check
    _
  $region7: #{binary_net_forward.34} parent=0 // pred_check_branch
    %11 = sbr.rel (0) target = $region9
  $region8: #{binary_net_forward.34} parent=0 // pred_region
    _
  $region9: #{binary_net_forward.34} parent=0 // pred_fallthru
    _
  // Predicated region
  $region10: #{binary_net_forward.34} parent=0 // pred_check
    _
  $region11: #{binary_net_forward.34} parent=0 // pred_check_branch
    %13 = sbr.rel (0) target = $region13
  $region12: #{binary_net_forward.34} parent=0 // pred_region
    _
  $region13: #{binary_net_forward.34} parent=0 // pred_fallthru
    _
  %v15 = vld [vmem:[%s0] sm:$0xff]
  %v16 = vld [vmem:[%s0 + $0x8] sm:$0xff]
  %v17 = vld [vmem:[%s1] sm:$0xf]
  %v18 = vld [vmem:[%s1 + $0x4] sm:$0xf]
  %v19 = vld [vmem:[%s1 + $0x8] sm:$0xf]
  %v20 = vld [vmem:[%s1 + $0xc] sm:$0xf]
  %v21 = vld [vmem:[%s1 + $0x10] sm:$0xf]
  %v22 = vld [vmem:[%s1 + $0x14] sm:$0xf]
  %v23 = vld [vmem:[%s1 + $0x18] sm:$0xf]
  %v24 = vld [vmem:[%s1 + $0x1c] sm:$0xf]
  %v25 = vld [vmem:[%s1 + $0x20] sm:$0xf]
  %v26 = vld [vmem:[%s1 + $0x24] sm:$0xf]
  %v27 = vld [vmem:[%s1 + $0x28] sm:$0xf]
  %v28 = vld [vmem:[%s1 + $0x2c] sm:$0xf]
  %v29 = vld [vmem:[%s1 + $0x30] sm:$0xf]
  %v30 = vld [vmem:[%s1 + $0x34] sm:$0xf]
  %v31 = vld [vmem:[%s1 + $0x38] sm:$0xf]
  %v32 = vld [vmem:[%s1 + $0x3c] sm:$0xf]
  %v33 = vld [vmem:[%s1 + $0x40] sm:$0xf]
  %v34 = vld [vmem:[%s1 + $0x44] sm:$0xf]
  %v35 = vld [vmem:[%s2] sm:$0x1]
  %v37 = vlaneseq
  %v38 = vshrl.u32 %v37, 7
  %v39 = vsub.s32 0, %v38
  %v40 = vrot.slane %v35, %v39
  %v44 = vunpack.c.l.b16 %v15
  %v45 = vunpack.c.h.b16 %v15
  %v46 = vunpack.c.l.b16 %v16
  %v47 = vunpack.c.h.b16 %v16
  %v48 = vpack.c.b16 %v46, %v44
  %v49 = vpack.c.b16 %v47, %v45
  %v69 = vunpack.c.l.b16 %v17
  %v70 = vunpack.c.l.b16 %v18
  %v71 = vunpack.c.l.b16 %v19
  %v72 = vunpack.c.l.b16 %v20
  %v73 = vunpack.c.l.b16 %v21
  %v74 = vunpack.c.l.b16 %v22
  %v75 = vunpack.c.l.b16 %v23
  %v76 = vunpack.c.l.b16 %v24
  %v77 = vunpack.c.l.b16 %v25
  %v78 = vunpack.c.l.b16 %v26
  %v79 = vunpack.c.l.b16 %v27
  %v80 = vunpack.c.l.b16 %v28
  %v81 = vunpack.c.l.b16 %v29
  %v82 = vunpack.c.l.b16 %v30
  %v83 = vunpack.c.l.b16 %v31
  %v84 = vunpack.c.l.b16 %v32
  %v85 = vunpack.c.l.b16 %v33
  %v86 = vunpack.c.l.b16 %v34
  %v87 = vpack.c.b16 %v70, %v69
  %v88 = vpack.c.b16 %v72, %v71
  %v89 = vpack.c.b16 %v74, %v73
  %v90 = vpack.c.b16 %v76, %v75
  %v91 = vpack.c.b16 %v78, %v77
  %v92 = vpack.c.b16 %v80, %v79
  %v93 = vpack.c.b16 %v82, %v81
  %v94 = vpack.c.b16 %v84, %v83
  %v95 = vpack.c.b16 %v86, %v85
  %vm105 = vcmask 130048
  %v107 = vsel %vm105, %v49, 0
  %109 = vmatprep.subr.bf16.mxu0 0
  %110 = vmatpush1.bf16.msra.mxu0 %v94
  %111 = vmatprep.subr.bf16.mxu0 0
  %112 = vmatpush1.bf16.msra.mxu0 %v93
  %113 = vmatprep.subr.bf16.mxu0 0
  %114 = vmatpush1.bf16.msra.mxu0 %v92
  %115 = vmatprep.subr.bf16.mxu0 0
  %116 = vmatpush1.bf16.msra.mxu0 %v91
  %117 = vmatprep.subr.bf16.mxu0 0
  %118 = vmatpush1.bf16.msra.mxu0 %v90
  %119 = vmatprep.subr.bf16.mxu0 0
  %120 = vmatpush1.bf16.msra.mxu0 %v89
  %121 = vmatprep.subr.bf16.mxu0 0
  %122 = vmatpush1.bf16.msra.mxu0 %v88
  %123 = vmatprep.subr.bf16.mxu0 0
  %124 = vmatpush1.bf16.msra.mxu0 %v87
  %125 = vmatprep.subr.bf16.mxu0 0
  %126 = vmatpush2.bf16.msra.mxu0 0
  %127 = vmatprep.subr.bf16.mxu0 0
  %128 = vmatpush2.bf16.msra.mxu0 0
  %129 = vmatprep.subr.bf16.mxu0 0
  %130 = vmatpush2.bf16.msra.mxu0 0
  %131 = vmatprep.subr.bf16.mxu0 0
  %132 = vmatpush2.bf16.msra.mxu0 0
  %133 = vmatprep.subr.bf16.mxu0 0
  %134 = vmatpush2.bf16.msra.mxu0 0
  %135 = vmatprep.subr.bf16.mxu0 0
  %136 = vmatpush2.bf16.msra.mxu0 0
  %137 = vmatprep.subr.bf16.mxu0 0
  %138 = vmatpush2.bf16.msra.mxu0 0
  %139 = vmatprep.subr.bf16.mxu0 0
  %140 = vmatpush2.bf16.msra.mxu0 %v95
  %141 = vmatprep.mubr.bf16.mxu0 %v107
  %142 = vmatmul.mubr.bf16.gmra.mxu0 %v48
  %v143 = vpop.f32.mrf.mxu0
  %v144 = vadd.f32 %v40, %v143
  %v145 = vpop.f32.mrf.mxu0
  %v146 = vpop.f32.mrf.mxu0
  %v147 = vadd.f32 %v40, %v146
  %v148 = vpop.f32.mrf.mxu0
  %149 = vdwg.mxu0
  %v150 = vpack.c.bf16 %v147, %v144
  %v152 = vunpack.c.l.b16 %v150
  %v153 = vunpack.c.h.b16 %v150
  %v154 = vpack.c.b16 %v152, %v152
  %v155 = vpack.c.b16 %v153, %v153
  %158 = vst [vmem:[%s3] sm:$0xf] %v154
  %159 = vst [vmem:[%s3 + $0x4] sm:$0xf] %v155
  // Predicated region
  $region14: #{binary_net_forward.34} parent=0 // pred_check
    _
  $region15: #{binary_net_forward.34} parent=0 // pred_check_branch
    %161 = sbr.rel (0) target = $region17
  $region16: #{binary_net_forward.34} parent=0 // pred_region
    _
  $region17: #{binary_net_forward.34} parent=0 // pred_fallthru
    _
  // Predicated region
  $region18: #{binary_net_forward.34} parent=0 // pred_check
    _
  $region19: #{binary_net_forward.34} parent=0 // pred_check_branch
    %163 = sbr.rel (0) target = $region21
  $region20: #{binary_net_forward.34} parent=0 // pred_region
    _
  $region21: #{binary_net_forward.34} parent=0 // pred_fallthru
    _

// kernel: binary_net_forward.35
$region0: #{binary_net_forward.35}
  #allocation0 [shape = 'u32[]', space=smem, size = 0x4, offset = 0x4, fixed_abs, tag = 'smem constant byte address 0x4 - core index']
  #allocation1 [shape = 'u32[144,128]{1,0:T(1,128)}', space=vmem, size = 0x12000, scoped, tag = 'internal scratch']
  %s0 = inlined_call_operand.vmem [shape: bf16[8,144], index: 0, kind: input, shape index: {}]
  %s1 = inlined_call_operand.vmem [shape: bf16[144,128], index: 1, kind: input, shape index: {}]
  %s2 = inlined_call_operand.vmem [shape: f32[1,128], index: 2, kind: input, shape index: {}]
  %s3 = inlined_call_operand.vmem [shape: bf16[8,128], index: 3, kind: output, shape index: {}]
  %s4 = sld [smem:[#allocation0]]
  $region22: #{binary_net_forward.35} parent=0
    _
  %s6 = ssub.s32 1, %s4
  %s7 = scalar_select 0, %s6, %s4
  // Predicated region
  $region2: #{binary_net_forward.35} parent=0 // pred_check
    _
  $region3: #{binary_net_forward.35} parent=0 // pred_check_branch
    %9 = sbr.rel (0) target = $region5
  $region4: #{binary_net_forward.35} parent=0 // pred_region
    _
  $region5: #{binary_net_forward.35} parent=0 // pred_fallthru
    _
  // Predicated region
  $region6: #{binary_net_forward.35} parent=0 // pred_check
    _
  $region7: #{binary_net_forward.35} parent=0 // pred_check_branch
    %11 = sbr.rel (0) target = $region9
  $region8: #{binary_net_forward.35} parent=0 // pred_region
    _
  $region9: #{binary_net_forward.35} parent=0 // pred_fallthru
    _
  // Predicated region
  $region10: #{binary_net_forward.35} parent=0 // pred_check
    _
  $region11: #{binary_net_forward.35} parent=0 // pred_check_branch
    %13 = sbr.rel (0) target = $region13
  $region12: #{binary_net_forward.35} parent=0 // pred_region
    _
  $region13: #{binary_net_forward.35} parent=0 // pred_fallthru
    _
  %v15 = vld [vmem:[%s0] sm:$0xff]
  %v16 = vld [vmem:[%s1] sm:$0xf]
  %v17 = vld [vmem:[%s1 + $0x4] sm:$0xf]
  %v18 = vld [vmem:[%s1 + $0x8] sm:$0xf]
  %v19 = vld [vmem:[%s1 + $0xc] sm:$0xf]
  %v20 = vld [vmem:[%s1 + $0x10] sm:$0xf]
  %v21 = vld [vmem:[%s1 + $0x14] sm:$0xf]
  %v22 = vld [vmem:[%s1 + $0x18] sm:$0xf]
  %v23 = vld [vmem:[%s1 + $0x1c] sm:$0xf]
  %v24 = vld [vmem:[%s1 + $0x20] sm:$0xf]
  %v25 = vld [vmem:[%s1 + $0x24] sm:$0xf]
  %v26 = vld [vmem:[%s1 + $0x28] sm:$0xf]
  %v27 = vld [vmem:[%s1 + $0x2c] sm:$0xf]
  %v28 = vld [vmem:[%s1 + $0x30] sm:$0xf]
  %v29 = vld [vmem:[%s1 + $0x34] sm:$0xf]
  %v30 = vld [vmem:[%s1 + $0x38] sm:$0xf]
  %v31 = vld [vmem:[%s1 + $0x3c] sm:$0xf]
  %v32 = vld [vmem:[%s1 + $0x40] sm:$0xf]
  %v33 = vld [vmem:[%s1 + $0x44] sm:$0xf]
  %v34 = vld [vmem:[%s2] sm:$0x1]
  %v36 = vlaneseq
  %v37 = vshrl.u32 %v36, 7
  %v38 = vsub.s32 0, %v37
  %v39 = vrot.slane %v34, %v38
  %v42 = vunpack.c.l.b16 %v15
  %v43 = vunpack.c.h.b16 %v15
  %v44 = vpack.c.b16 %v42, %v42
  %v45 = vpack.c.b16 %v43, %v43
  %v65 = vunpack.c.l.b16 %v16
  %v66 = vunpack.c.l.b16 %v17
  %v67 = vunpack.c.l.b16 %v18
  %v68 = vunpack.c.l.b16 %v19
  %v69 = vunpack.c.l.b16 %v20
  %v70 = vunpack.c.l.b16 %v21
  %v71 = vunpack.c.l.b16 %v22
  %v72 = vunpack.c.l.b16 %v23
  %v73 = vunpack.c.l.b16 %v24
  %v74 = vunpack.c.l.b16 %v25
  %v75 = vunpack.c.l.b16 %v26
  %v76 = vunpack.c.l.b16 %v27
  %v77 = vunpack.c.l.b16 %v28
  %v78 = vunpack.c.l.b16 %v29
  %v79 = vunpack.c.l.b16 %v30
  %v80 = vunpack.c.l.b16 %v31
  %v81 = vunpack.c.l.b16 %v32
  %v82 = vunpack.c.l.b16 %v33
  %v83 = vpack.c.b16 %v66, %v65
  %v84 = vpack.c.b16 %v68, %v67
  %v85 = vpack.c.b16 %v70, %v69
  %v86 = vpack.c.b16 %v72, %v71
  %v87 = vpack.c.b16 %v74, %v73
  %v88 = vpack.c.b16 %v76, %v75
  %v89 = vpack.c.b16 %v78, %v77
  %v90 = vpack.c.b16 %v80, %v79
  %v91 = vpack.c.b16 %v82, %v81
  %vm101 = vcmask 130048
  %v103 = vsel %vm101, %v45, 0
  %105 = vmatprep.subr.bf16.mxu0 0
  %106 = vmatpush1.bf16.msra.mxu0 %v90
  %107 = vmatprep.subr.bf16.mxu0 0
  %108 = vmatpush1.bf16.msra.mxu0 %v89
  %109 = vmatprep.subr.bf16.mxu0 0
  %110 = vmatpush1.bf16.msra.mxu0 %v88
  %111 = vmatprep.subr.bf16.mxu0 0
  %112 = vmatpush1.bf16.msra.mxu0 %v87
  %113 = vmatprep.subr.bf16.mxu0 0
  %114 = vmatpush1.bf16.msra.mxu0 %v86
  %115 = vmatprep.subr.bf16.mxu0 0
  %116 = vmatpush1.bf16.msra.mxu0 %v85
  %117 = vmatprep.subr.bf16.mxu0 0
  %118 = vmatpush1.bf16.msra.mxu0 %v84
  %119 = vmatprep.subr.bf16.mxu0 0
  %120 = vmatpush1.bf16.msra.mxu0 %v83
  %121 = vmatprep.subr.bf16.mxu0 0
  %122 = vmatpush2.bf16.msra.mxu0 0
  %123 = vmatprep.subr.bf16.mxu0 0
  %124 = vmatpush2.bf16.msra.mxu0 0
  %125 = vmatprep.subr.bf16.mxu0 0
  %126 = vmatpush2.bf16.msra.mxu0 0
  %127 = vmatprep.subr.bf16.mxu0 0
  %128 = vmatpush2.bf16.msra.mxu0 0
  %129 = vmatprep.subr.bf16.mxu0 0
  %130 = vmatpush2.bf16.msra.mxu0 0
  %131 = vmatprep.subr.bf16.mxu0 0
  %132 = vmatpush2.bf16.msra.mxu0 0
  %133 = vmatprep.subr.bf16.mxu0 0
  %134 = vmatpush2.bf16.msra.mxu0 0
  %135 = vmatprep.subr.bf16.mxu0 0
  %136 = vmatpush2.bf16.msra.mxu0 %v91
  %137 = vmatprep.mubr.bf16.mxu0 %v103
  %138 = vmatmul.mubr.bf16.gmra.mxu0 %v44
  %v139 = vpop.f32.mrf.mxu0
  %v140 = vadd.f32 %v39, %v139
  %v141 = vpop.f32.mrf.mxu0
  %v142 = vpop.f32.mrf.mxu0
  %v143 = vpop.f32.mrf.mxu0
  %144 = vdwg.mxu0
  %v145 = vpack.c.bf16 %v140, %v140
  %146 = vst [vmem:[%s3] sm:$0xf] %v145
  // Predicated region
  $region14: #{binary_net_forward.35} parent=0 // pred_check
    _
  $region15: #{binary_net_forward.35} parent=0 // pred_check_branch
    %148 = sbr.rel (0) target = $region17
  $region16: #{binary_net_forward.35} parent=0 // pred_region
    _
  $region17: #{binary_net_forward.35} parent=0 // pred_fallthru
    _
  // Predicated region
  $region18: #{binary_net_forward.35} parent=0 // pred_check
    _
  $region19: #{binary_net_forward.35} parent=0 // pred_check_branch
    %150 = sbr.rel (0) target = $region21
  $region20: #{binary_net_forward.35} parent=0 // pred_region
    _
  $region21: #{binary_net_forward.35} parent=0 // pred_fallthru
    _

// kernel: binary_net_forward.37
$region0: #{binary_net_forward.37}
  #allocation0 [shape = 'u32[]', space=smem, size = 0x4, offset = 0x4, fixed_abs, tag = 'smem constant byte address 0x4 - core index']
  #allocation1 [shape = 'u32[144,128]{1,0:T(1,128)}', space=vmem, size = 0x12000, scoped, tag = 'internal scratch']
  %s0 = inlined_call_operand.vmem [shape: bf16[8,288], index: 0, kind: input, shape index: {}]
  %s1 = inlined_call_operand.vmem [shape: bf16[288,128], index: 1, kind: input, shape index: {}]
  %s2 = inlined_call_operand.vmem [shape: f32[1,128], index: 2, kind: input, shape index: {}]
  %s3 = inlined_call_operand.vmem [shape: bf16[8,128], index: 3, kind: output, shape index: {}]
  %s4 = sld [smem:[#allocation0]]
  $region22: #{binary_net_forward.37} parent=0
    _
  %s6 = ssub.s32 1, %s4
  %s7 = scalar_select 0, %s6, %s4
  // Predicated region
  $region2: #{binary_net_forward.37} parent=0 // pred_check
    _
  $region3: #{binary_net_forward.37} parent=0 // pred_check_branch
    %9 = sbr.rel (0) target = $region5
  $region4: #{binary_net_forward.37} parent=0 // pred_region
    _
  $region5: #{binary_net_forward.37} parent=0 // pred_fallthru
    _
  // Predicated region
  $region6: #{binary_net_forward.37} parent=0 // pred_check
    _
  $region7: #{binary_net_forward.37} parent=0 // pred_check_branch
    %11 = sbr.rel (0) target = $region9
  $region8: #{binary_net_forward.37} parent=0 // pred_region
    _
  $region9: #{binary_net_forward.37} parent=0 // pred_fallthru
    _
  // Predicated region
  $region10: #{binary_net_forward.37} parent=0 // pred_check
    _
  $region11: #{binary_net_forward.37} parent=0 // pred_check_branch
    %13 = sbr.rel (0) target = $region13
  $region12: #{binary_net_forward.37} parent=0 // pred_region
    _
  $region13: #{binary_net_forward.37} parent=0 // pred_fallthru
    _
  %v15 = vld [vmem:[%s0] sm:$0xff]
  %v16 = vld [vmem:[%s0 + $0x8] sm:$0xf]
  %v17 = vld [vmem:[%s1] sm:$0xf]
  %v18 = vld [vmem:[%s1 + $0x4] sm:$0xf]
  %v19 = vld [vmem:[%s1 + $0x8] sm:$0xf]
  %v20 = vld [vmem:[%s1 + $0xc] sm:$0xf]
  %v21 = vld [vmem:[%s1 + $0x10] sm:$0xf]
  %v22 = vld [vmem:[%s1 + $0x14] sm:$0xf]
  %v23 = vld [vmem:[%s1 + $0x18] sm:$0xf]
  %v24 = vld [vmem:[%s1 + $0x1c] sm:$0xf]
  %v25 = vld [vmem:[%s1 + $0x20] sm:$0xf]
  %v26 = vld [vmem:[%s1 + $0x24] sm:$0xf]
  %v27 = vld [vmem:[%s1 + $0x28] sm:$0xf]
  %v28 = vld [vmem:[%s1 + $0x2c] sm:$0xf]
  %v29 = vld [vmem:[%s1 + $0x30] sm:$0xf]
  %v30 = vld [vmem:[%s1 + $0x34] sm:$0xf]
  %v31 = vld [vmem:[%s1 + $0x38] sm:$0xf]
  %v32 = vld [vmem:[%s1 + $0x3c] sm:$0xf]
  %v33 = vld [vmem:[%s1 + $0x40] sm:$0xf]
  %v34 = vld [vmem:[%s1 + $0x44] sm:$0xf]
  %v35 = vld [vmem:[%s1 + $0x48] sm:$0xf]
  %v36 = vld [vmem:[%s1 + $0x4c] sm:$0xf]
  %v37 = vld [vmem:[%s1 + $0x50] sm:$0xf]
  %v38 = vld [vmem:[%s1 + $0x54] sm:$0xf]
  %v39 = vld [vmem:[%s1 + $0x58] sm:$0xf]
  %v40 = vld [vmem:[%s1 + $0x5c] sm:$0xf]
  %v41 = vld [vmem:[%s1 + $0x60] sm:$0xf]
  %v42 = vld [vmem:[%s1 + $0x64] sm:$0xf]
  %v43 = vld [vmem:[%s1 + $0x68] sm:$0xf]
  %v44 = vld [vmem:[%s1 + $0x6c] sm:$0xf]
  %v45 = vld [vmem:[%s1 + $0x70] sm:$0xf]
  %v46 = vld [vmem:[%s1 + $0x74] sm:$0xf]
  %v47 = vld [vmem:[%s1 + $0x78] sm:$0xf]
  %v48 = vld [vmem:[%s1 + $0x7c] sm:$0xf]
  %v49 = vld [vmem:[%s1 + $0x80] sm:$0xf]
  %v50 = vld [vmem:[%s1 + $0x84] sm:$0xf]
  %v51 = vld [vmem:[%s1 + $0x88] sm:$0xf]
  %v52 = vld [vmem:[%s1 + $0x8c] sm:$0xf]
  %v53 = vld [vmem:[%s2] sm:$0x1]
  %v55 = vlaneseq
  %v56 = vshrl.u32 %v55, 7
  %v57 = vsub.s32 0, %v56
  %v58 = vrot.slane %v53, %v57
  %v62 = vunpack.c.l.b16 %v15
  %v63 = vunpack.c.h.b16 %v15
  %v64 = vunpack.c.l.b16 %v16
  %v65 = vpack.c.b16 %v62, %v62
  %v66 = vpack.c.b16 %v63, %v63
  %v67 = vpack.c.b16 %v64, %v64
  %v106 = vunpack.c.l.b16 %v17
  %v107 = vunpack.c.l.b16 %v18
  %v108 = vunpack.c.l.b16 %v19
  %v109 = vunpack.c.l.b16 %v20
  %v110 = vunpack.c.l.b16 %v21
  %v111 = vunpack.c.l.b16 %v22
  %v112 = vunpack.c.l.b16 %v23
  %v113 = vunpack.c.l.b16 %v24
  %v114 = vunpack.c.l.b16 %v25
  %v115 = vunpack.c.l.b16 %v26
  %v116 = vunpack.c.l.b16 %v27
  %v117 = vunpack.c.l.b16 %v28
  %v118 = vunpack.c.l.b16 %v29
  %v119 = vunpack.c.l.b16 %v30
  %v120 = vunpack.c.l.b16 %v31
  %v121 = vunpack.c.l.b16 %v32
  %v122 = vunpack.c.l.b16 %v33
  %v123 = vunpack.c.l.b16 %v34
  %v124 = vunpack.c.l.b16 %v35
  %v125 = vunpack.c.l.b16 %v36
  %v126 = vunpack.c.l.b16 %v37
  %v127 = vunpack.c.l.b16 %v38
  %v128 = vunpack.c.l.b16 %v39
  %v129 = vunpack.c.l.b16 %v40
  %v130 = vunpack.c.l.b16 %v41
  %v131 = vunpack.c.l.b16 %v42
  %v132 = vunpack.c.l.b16 %v43
  %v133 = vunpack.c.l.b16 %v44
  %v134 = vunpack.c.l.b16 %v45
  %v135 = vunpack.c.l.b16 %v46
  %v136 = vunpack.c.l.b16 %v47
  %v137 = vunpack.c.l.b16 %v48
  %v138 = vunpack.c.l.b16 %v49
  %v139 = vunpack.c.l.b16 %v50
  %v140 = vunpack.c.l.b16 %v51
  %v141 = vunpack.c.l.b16 %v52
  %v142 = vpack.c.b16 %v107, %v106
  %v143 = vpack.c.b16 %v109, %v108
  %v144 = vpack.c.b16 %v111, %v110
  %v145 = vpack.c.b16 %v113, %v112
  %v146 = vpack.c.b16 %v115, %v114
  %v147 = vpack.c.b16 %v117, %v116
  %v148 = vpack.c.b16 %v119, %v118
  %v149 = vpack.c.b16 %v121, %v120
  %v150 = vpack.c.b16 %v123, %v122
  %v151 = vpack.c.b16 %v125, %v124
  %v152 = vpack.c.b16 %v127, %v126
  %v153 = vpack.c.b16 %v129, %v128
  %v154 = vpack.c.b16 %v131, %v130
  %v155 = vpack.c.b16 %v133, %v132
  %v156 = vpack.c.b16 %v135, %v134
  %v157 = vpack.c.b16 %v137, %v136
  %v158 = vpack.c.b16 %v139, %v138
  %v159 = vpack.c.b16 %v141, %v140
  %vm178 = vcmask 261120
  %v180 = vsel %vm178, %v67, 0
  %182 = vmatprep.subr.bf16.mxu0 0
  %183 = vmatpush1.bf16.msra.mxu0 %v149
  %184 = vmatprep.subr.bf16.mxu0 0
  %185 = vmatpush1.bf16.msra.mxu0 %v148
  %186 = vmatprep.subr.bf16.mxu0 0
  %187 = vmatpush1.bf16.msra.mxu0 %v147
  %188 = vmatprep.subr.bf16.mxu0 0
  %189 = vmatpush1.bf16.msra.mxu0 %v146
  %190 = vmatprep.subr.bf16.mxu0 0
  %191 = vmatpush1.bf16.msra.mxu0 %v145
  %192 = vmatprep.subr.bf16.mxu0 0
  %193 = vmatpush1.bf16.msra.mxu0 %v144
  %194 = vmatprep.subr.bf16.mxu0 0
  %195 = vmatpush1.bf16.msra.mxu0 %v143
  %196 = vmatprep.subr.bf16.mxu0 0
  %197 = vmatpush1.bf16.msra.mxu0 %v142
  %198 = vmatprep.subr.bf16.mxu0 0
  %199 = vmatpush2.bf16.msra.mxu0 %v157
  %200 = vmatprep.subr.bf16.mxu0 0
  %201 = vmatpush2.bf16.msra.mxu0 %v156
  %202 = vmatprep.subr.bf16.mxu0 0
  %203 = vmatpush2.bf16.msra.mxu0 %v155
  %204 = vmatprep.subr.bf16.mxu0 0
  %205 = vmatpush2.bf16.msra.mxu0 %v154
  %206 = vmatprep.subr.bf16.mxu0 0
  %207 = vmatpush2.bf16.msra.mxu0 %v153
  %208 = vmatprep.subr.bf16.mxu0 0
  %209 = vmatpush2.bf16.msra.mxu0 %v152
  %210 = vmatprep.subr.bf16.mxu0 0
  %211 = vmatpush2.bf16.msra.mxu0 %v151
  %212 = vmatprep.subr.bf16.mxu0 0
  %213 = vmatpush2.bf16.msra.mxu0 %v150
  %214 = vmatprep.mubr.bf16.mxu0 %v66
  %215 = vmatmul.mubr.bf16.gmra.mxu0 %v65
  %v216 = vpop.f32.mrf.mxu0
  %v217 = vadd.f32 %v58, %v216
  %v218 = vpop.f32.mrf.mxu0
  %v219 = vpop.f32.mrf.mxu0
  %v220 = vpop.f32.mrf.mxu0
  %221 = vdwg.mxu0
  %222 = vmatprep.subr.bf16.mxu0 0
  %223 = vmatpush1.bf16.msra.mxu0 0
  %224 = vmatprep.subr.bf16.mxu0 0
  %225 = vmatpush1.bf16.msra.mxu0 0
  %226 = vmatprep.subr.bf16.mxu0 0
  %227 = vmatpush1.bf16.msra.mxu0 0
  %228 = vmatprep.subr.bf16.mxu0 0
  %229 = vmatpush1.bf16.msra.mxu0 0
  %230 = vmatprep.subr.bf16.mxu0 0
  %231 = vmatpush1.bf16.msra.mxu0 0
  %232 = vmatprep.subr.bf16.mxu0 0
  %233 = vmatpush1.bf16.msra.mxu0 0
  %234 = vmatprep.subr.bf16.mxu0 0
  %235 = vmatpush1.bf16.msra.mxu0 %v159
  %236 = vmatprep.subr.bf16.mxu0 0
  %237 = vmatpush1.bf16.msra.mxu0 %v158
  %238 = vmatprep.subr.bf16.mxu0 0
  %239 = vmatpush2.bf16.msra.mxu0 0
  %240 = vmatprep.subr.bf16.mxu0 0
  %241 = vmatpush2.bf16.msra.mxu0 0
  %242 = vmatprep.subr.bf16.mxu0 0
  %243 = vmatpush2.bf16.msra.mxu0 0
  %244 = vmatprep.subr.bf16.mxu0 0
  %245 = vmatpush2.bf16.msra.mxu0 0
  %246 = vmatprep.subr.bf16.mxu0 0
  %247 = vmatpush2.bf16.msra.mxu0 0
  %248 = vmatprep.subr.bf16.mxu0 0
  %249 = vmatpush2.bf16.msra.mxu0 0
  %250 = vmatprep.subr.bf16.mxu0 0
  %251 = vmatpush2.bf16.msra.mxu0 0
  %252 = vmatprep.subr.bf16.mxu0 0
  %253 = vmatpush2.bf16.msra.mxu0 0
  %254 = vmatprep.mubr.bf16.mxu0 0
  %255 = vmatmul.mubr.bf16.gmra.mxu0 %v180
  %v256 = vpop.f32.mrf.mxu0
  %v257 = vadd.f32 %v217, %v256
  %v258 = vpop.f32.mrf.mxu0
  %v259 = vpop.f32.mrf.mxu0
  %v260 = vpop.f32.mrf.mxu0
  %261 = vdwg.mxu0
  %v262 = vpack.c.bf16 %v257, %v257
  %263 = vst [vmem:[%s3] sm:$0xf] %v262
  // Predicated region
  $region14: #{binary_net_forward.37} parent=0 // pred_check
    _
  $region15: #{binary_net_forward.37} parent=0 // pred_check_branch
    %265 = sbr.rel (0) target = $region17
  $region16: #{binary_net_forward.37} parent=0 // pred_region
    _
  $region17: #{binary_net_forward.37} parent=0 // pred_fallthru
    _
  // Predicated region
  $region18: #{binary_net_forward.37} parent=0 // pred_check
    _
  $region19: #{binary_net_forward.37} parent=0 // pred_check_branch
    %267 = sbr.rel (0) target = $region21
  $region20: #{binary_net_forward.37} parent=0 // pred_region
    _
  $region21: #{binary_net_forward.37} parent=0 // pred_fallthru
    _

// kernel: tile.23
$region0: #{tile.23}
  #allocation0 [shape = 's32[1]{0}', space=sflag, size = 0x4, scoped, tag = 'scoped memory for tile.23']
  %s0 = inlined_call_operand.vmem [shape: f32[32], index: 0, kind: input, shape index: {}]
  %s1 = inlined_call_operand.vmem [shape: f32[4,32], index: 1, kind: output, shape index: {}]
  // Predicated region
  $region2: #{tile.23} parent=0 // pred_check
    _
  $region3: #{tile.23} parent=0 // pred_check_branch
    %3 = sbr.rel (0) target = $region5
  $region4: #{tile.23} parent=0 // pred_region
    _
  $region5: #{tile.23} parent=0 // pred_fallthru
    _
  %v4 = vld [vmem:[%s0] ss:$0 sm:$0xff]
  %5 = vst [vmem:[%s1] sm:$0xf] %v4

// kernel: binary_net_forward.40
$region0: #{binary_net_forward.40}
  #allocation0 [shape = 'u32[]', space=smem, size = 0x4, offset = 0x4, fixed_abs, tag = 'smem constant byte address 0x4 - core index']
  #allocation1 [shape = 'u32[144,128]{1,0:T(1,128)}', space=vmem, size = 0x12000, scoped, tag = 'internal scratch']
  %s0 = inlined_call_operand.vmem [shape: bf16[8,576], index: 0, kind: input, shape index: {}]
  %s1 = inlined_call_operand.vmem [shape: bf16[576,128], index: 1, kind: input, shape index: {}]
  %s2 = inlined_call_operand.vmem [shape: f32[1,128], index: 2, kind: input, shape index: {}]
  %s3 = inlined_call_operand.vmem [shape: bf16[8,128], index: 3, kind: output, shape index: {}]
  %s4 = sld [smem:[#allocation0]]
  $region22: #{binary_net_forward.40} parent=0
    _
  %s6 = ssub.s32 1, %s4
  %s7 = scalar_select 0, %s6, %s4
  // Predicated region
  $region2: #{binary_net_forward.40} parent=0 // pred_check
    _
  $region3: #{binary_net_forward.40} parent=0 // pred_check_branch
    %9 = sbr.rel (0) target = $region5
  $region4: #{binary_net_forward.40} parent=0 // pred_region
    _
  $region5: #{binary_net_forward.40} parent=0 // pred_fallthru
    _
  // Predicated region
  $region6: #{binary_net_forward.40} parent=0 // pred_check
    _
  $region7: #{binary_net_forward.40} parent=0 // pred_check_branch
    %11 = sbr.rel (0) target = $region9
  $region8: #{binary_net_forward.40} parent=0 // pred_region
    _
  $region9: #{binary_net_forward.40} parent=0 // pred_fallthru
    _
  // Predicated region
  $region10: #{binary_net_forward.40} parent=0 // pred_check
    _
  $region11: #{binary_net_forward.40} parent=0 // pred_check_branch
    %13 = sbr.rel (0) target = $region13
  $region12: #{binary_net_forward.40} parent=0 // pred_region
    _
  $region13: #{binary_net_forward.40} parent=0 // pred_fallthru
    _
  %v15 = vld [vmem:[%s0] sm:$0xff]
  %v16 = vld [vmem:[%s0 + $0x8] sm:$0xff]
  %v17 = vld [vmem:[%s0 + $0x10] sm:$0xf]
  %v18 = vld [vmem:[%s1] sm:$0xf]
  %v19 = vld [vmem:[%s1 + $0x4] sm:$0xf]
  %v20 = vld [vmem:[%s1 + $0x8] sm:$0xf]
  %v21 = vld [vmem:[%s1 + $0xc] sm:$0xf]
  %v22 = vld [vmem:[%s1 + $0x10] sm:$0xf]
  %v23 = vld [vmem:[%s1 + $0x14] sm:$0xf]
  %v24 = vld [vmem:[%s1 + $0x18] sm:$0xf]
  %v25 = vld [vmem:[%s1 + $0x1c] sm:$0xf]
  %v26 = vld [vmem:[%s1 + $0x20] sm:$0xf]
  %v27 = vld [vmem:[%s1 + $0x24] sm:$0xf]
  %v28 = vld [vmem:[%s1 + $0x28] sm:$0xf]
  %v29 = vld [vmem:[%s1 + $0x2c] sm:$0xf]
  %v30 = vld [vmem:[%s1 + $0x30] sm:$0xf]
  %v31 = vld [vmem:[%s1 + $0x34] sm:$0xf]
  %v32 = vld [vmem:[%s1 + $0x38] sm:$0xf]
  %v33 = vld [vmem:[%s1 + $0x3c] sm:$0xf]
  %v34 = vld [vmem:[%s1 + $0x40] sm:$0xf]
  %v35 = vld [vmem:[%s1 + $0x44] sm:$0xf]
  %v36 = vld [vmem:[%s1 + $0x48] sm:$0xf]
  %v37 = vld [vmem:[%s1 + $0x4c] sm:$0xf]
  %v38 = vld [vmem:[%s1 + $0x50] sm:$0xf]
  %v39 = vld [vmem:[%s1 + $0x54] sm:$0xf]
  %v40 = vld [vmem:[%s1 + $0x58] sm:$0xf]
  %v41 = vld [vmem:[%s1 + $0x5c] sm:$0xf]
  %v42 = vld [vmem:[%s1 + $0x60] sm:$0xf]
  %v43 = vld [vmem:[%s1 + $0x64] sm:$0xf]
  %v44 = vld [vmem:[%s1 + $0x68] sm:$0xf]
  %v45 = vld [vmem:[%s1 + $0x6c] sm:$0xf]
  %v46 = vld [vmem:[%s1 + $0x70] sm:$0xf]
  %v47 = vld [vmem:[%s1 + $0x74] sm:$0xf]
  %v48 = vld [vmem:[%s1 + $0x78] sm:$0xf]
  %v49 = vld [vmem:[%s1 + $0x7c] sm:$0xf]
  %v50 = vld [vmem:[%s1 + $0x80] sm:$0xf]
  %v51 = vld [vmem:[%s1 + $0x84] sm:$0xf]
  %v52 = vld [vmem:[%s1 + $0x88] sm:$0xf]
  %v53 = vld [vmem:[%s1 + $0x8c] sm:$0xf]
  %v54 = vld [vmem:[%s1 + $0x90] sm:$0xf]
  %v55 = vld [vmem:[%s1 + $0x94] sm:$0xf]
  %v56 = vld [vmem:[%s1 + $0x98] sm:$0xf]
  %v57 = vld [vmem:[%s1 + $0x9c] sm:$0xf]
  %v58 = vld [vmem:[%s1 + $0xa0] sm:$0xf]
  %v59 = vld [vmem:[%s1 + $0xa4] sm:$0xf]
  %v60 = vld [vmem:[%s1 + $0xa8] sm:$0xf]
  %v61 = vld [vmem:[%s1 + $0xac] sm:$0xf]
  %v62 = vld [vmem:[%s1 + $0xb0] sm:$0xf]
  %v63 = vld [vmem:[%s1 + $0xb4] sm:$0xf]
  %v64 = vld [vmem:[%s1 + $0xb8] sm:$0xf]
  %v65 = vld [vmem:[%s1 + $0xbc] sm:$0xf]
  %v66 = vld [vmem:[%s1 + $0xc0] sm:$0xf]
  %v67 = vld [vmem:[%s1 + $0xc4] sm:$0xf]
  %v68 = vld [vmem:[%s1 + $0xc8] sm:$0xf]
  %v69 = vld [vmem:[%s1 + $0xcc] sm:$0xf]
  %v70 = vld [vmem:[%s1 + $0xd0] sm:$0xf]
  %v71 = vld [vmem:[%s1 + $0xd4] sm:$0xf]
  %v72 = vld [vmem:[%s1 + $0xd8] sm:$0xf]
  %v73 = vld [vmem:[%s1 + $0xdc] sm:$0xf]
  %v74 = vld [vmem:[%s1 + $0xe0] sm:$0xf]
  %v75 = vld [vmem:[%s1 + $0xe4] sm:$0xf]
  %v76 = vld [vmem:[%s1 + $0xe8] sm:$0xf]
  %v77 = vld [vmem:[%s1 + $0xec] sm:$0xf]
  %v78 = vld [vmem:[%s1 + $0xf0] sm:$0xf]
  %v79 = vld [vmem:[%s1 + $0xf4] sm:$0xf]
  %v80 = vld [vmem:[%s1 + $0xf8] sm:$0xf]
  %v81 = vld [vmem:[%s1 + $0xfc] sm:$0xf]
  %v82 = vld [vmem:[%s1 + $0x100] sm:$0xf]
  %v83 = vld [vmem:[%s1 + $0x104] sm:$0xf]
  %v84 = vld [vmem:[%s1 + $0x108] sm:$0xf]
  %v85 = vld [vmem:[%s1 + $0x10c] sm:$0xf]
  %v86 = vld [vmem:[%s1 + $0x110] sm:$0xf]
  %v87 = vld [vmem:[%s1 + $0x114] sm:$0xf]
  %v88 = vld [vmem:[%s1 + $0x118] sm:$0xf]
  %v89 = vld [vmem:[%s1 + $0x11c] sm:$0xf]
  %v90 = vld [vmem:[%s2] sm:$0x1]
  %v92 = vlaneseq
  %v93 = vshrl.u32 %v92, 7
  %v94 = vsub.s32 0, %v93
  %v95 = vrot.slane %v90, %v94
  %v100 = vunpack.c.l.b16 %v15
  %v101 = vunpack.c.h.b16 %v15
  %v102 = vunpack.c.l.b16 %v16
  %v103 = vunpack.c.h.b16 %v16
  %v104 = vunpack.c.l.b16 %v17
  %v105 = vpack.c.b16 %v100, %v100
  %v106 = vpack.c.b16 %v101, %v101
  %v107 = vpack.c.b16 %v102, %v102
  %v108 = vpack.c.b16 %v103, %v103
  %v109 = vpack.c.b16 %v104, %v104
  %v186 = vunpack.c.l.b16 %v18
  %v187 = vunpack.c.l.b16 %v19
  %v188 = vunpack.c.l.b16 %v20
  %v189 = vunpack.c.l.b16 %v21
  %v190 = vunpack.c.l.b16 %v22
  %v191 = vunpack.c.l.b16 %v23
  %v192 = vunpack.c.l.b16 %v24
  %v193 = vunpack.c.l.b16 %v25
  %v194 = vunpack.c.l.b16 %v26
  %v195 = vunpack.c.l.b16 %v27
  %v196 = vunpack.c.l.b16 %v28
  %v197 = vunpack.c.l.b16 %v29
  %v198 = vunpack.c.l.b16 %v30
  %v199 = vunpack.c.l.b16 %v31
  %v200 = vunpack.c.l.b16 %v32
  %v201 = vunpack.c.l.b16 %v33
  %v202 = vunpack.c.l.b16 %v34
  %v203 = vunpack.c.l.b16 %v35
  %v204 = vunpack.c.l.b16 %v36
  %v205 = vunpack.c.l.b16 %v37
  %v206 = vunpack.c.l.b16 %v38
  %v207 = vunpack.c.l.b16 %v39
  %v208 = vunpack.c.l.b16 %v40
  %v209 = vunpack.c.l.b16 %v41
  %v210 = vunpack.c.l.b16 %v42
  %v211 = vunpack.c.l.b16 %v43
  %v212 = vunpack.c.l.b16 %v44
  %v213 = vunpack.c.l.b16 %v45
  %v214 = vunpack.c.l.b16 %v46
  %v215 = vunpack.c.l.b16 %v47
  %v216 = vunpack.c.l.b16 %v48
  %v217 = vunpack.c.l.b16 %v49
  %v218 = vunpack.c.l.b16 %v50
  %v219 = vunpack.c.l.b16 %v51
  %v220 = vunpack.c.l.b16 %v52
  %v221 = vunpack.c.l.b16 %v53
  %v222 = vunpack.c.l.b16 %v54
  %v223 = vunpack.c.l.b16 %v55
  %v224 = vunpack.c.l.b16 %v56
  %v225 = vunpack.c.l.b16 %v57
  %v226 = vunpack.c.l.b16 %v58
  %v227 = vunpack.c.l.b16 %v59
  %v228 = vunpack.c.l.b16 %v60
  %v229 = vunpack.c.l.b16 %v61
  %v230 = vunpack.c.l.b16 %v62
  %v231 = vunpack.c.l.b16 %v63
  %v232 = vunpack.c.l.b16 %v64
  %v233 = vunpack.c.l.b16 %v65
  %v234 = vunpack.c.l.b16 %v66
  %v235 = vunpack.c.l.b16 %v67
  %v236 = vunpack.c.l.b16 %v68
  %v237 = vunpack.c.l.b16 %v69
  %v238 = vunpack.c.l.b16 %v70
  %v239 = vunpack.c.l.b16 %v71
  %v240 = vunpack.c.l.b16 %v72
  %v241 = vunpack.c.l.b16 %v73
  %v242 = vunpack.c.l.b16 %v74
  %v243 = vunpack.c.l.b16 %v75
  %v244 = vunpack.c.l.b16 %v76
  %v245 = vunpack.c.l.b16 %v77
  %v246 = vunpack.c.l.b16 %v78
  %v247 = vunpack.c.l.b16 %v79
  %v248 = vunpack.c.l.b16 %v80
  %v249 = vunpack.c.l.b16 %v81
  %v250 = vunpack.c.l.b16 %v82
  %v251 = vunpack.c.l.b16 %v83
  %v252 = vunpack.c.l.b16 %v84
  %v253 = vunpack.c.l.b16 %v85
  %v254 = vunpack.c.l.b16 %v86
  %v255 = vunpack.c.l.b16 %v87
  %v256 = vunpack.c.l.b16 %v88
  %v257 = vunpack.c.l.b16 %v89
  %v258 = vpack.c.b16 %v187, %v186
  %v259 = vpack.c.b16 %v189, %v188
  %v260 = vpack.c.b16 %v191, %v190
  %v261 = vpack.c.b16 %v193, %v192
  %v262 = vpack.c.b16 %v195, %v194
  %v263 = vpack.c.b16 %v197, %v196
  %v264 = vpack.c.b16 %v199, %v198
  %v265 = vpack.c.b16 %v201, %v200
  %v266 = vpack.c.b16 %v203, %v202
  %v267 = vpack.c.b16 %v205, %v204
  %v268 = vpack.c.b16 %v207, %v206
  %v269 = vpack.c.b16 %v209, %v208
  %v270 = vpack.c.b16 %v211, %v210
  %v271 = vpack.c.b16 %v213, %v212
  %v272 = vpack.c.b16 %v215, %v214
  %v273 = vpack.c.b16 %v217, %v216
  %v274 = vpack.c.b16 %v219, %v218
  %v275 = vpack.c.b16 %v221, %v220
  %v276 = vpack.c.b16 %v223, %v222
  %v277 = vpack.c.b16 %v225, %v224
  %v278 = vpack.c.b16 %v227, %v226
  %v279 = vpack.c.b16 %v229, %v228
  %v280 = vpack.c.b16 %v231, %v230
  %v281 = vpack.c.b16 %v233, %v232
  %v282 = vpack.c.b16 %v235, %v234
  %v283 = vpack.c.b16 %v237, %v236
  %v284 = vpack.c.b16 %v239, %v238
  %v285 = vpack.c.b16 %v241, %v240
  %v286 = vpack.c.b16 %v243, %v242
  %v287 = vpack.c.b16 %v245, %v244
  %v288 = vpack.c.b16 %v247, %v246
  %v289 = vpack.c.b16 %v249, %v248
  %v290 = vpack.c.b16 %v251, %v250
  %v291 = vpack.c.b16 %v253, %v252
  %v292 = vpack.c.b16 %v255, %v254
  %v293 = vpack.c.b16 %v257, %v256
  %vm330 = vcmask 523264
  %v332 = vsel %vm330, %v109, 0
  %334 = vmatprep.subr.bf16.mxu0 0
  %335 = vmatpush1.bf16.msra.mxu0 %v265
  %336 = vmatprep.subr.bf16.mxu0 0
  %337 = vmatpush1.bf16.msra.mxu0 %v264
  %338 = vmatprep.subr.bf16.mxu0 0
  %339 = vmatpush1.bf16.msra.mxu0 %v263
  %340 = vmatprep.subr.bf16.mxu0 0
  %341 = vmatpush1.bf16.msra.mxu0 %v262
  %342 = vmatprep.subr.bf16.mxu0 0
  %343 = vmatpush1.bf16.msra.mxu0 %v261
  %344 = vmatprep.subr.bf16.mxu0 0
  %345 = vmatpush1.bf16.msra.mxu0 %v260
  %346 = vmatprep.subr.bf16.mxu0 0
  %347 = vmatpush1.bf16.msra.mxu0 %v259
  %348 = vmatprep.subr.bf16.mxu0 0
  %349 = vmatpush1.bf16.msra.mxu0 %v258
  %350 = vmatprep.subr.bf16.mxu0 0
  %351 = vmatpush2.bf16.msra.mxu0 %v273
  %352 = vmatprep.subr.bf16.mxu0 0
  %353 = vmatpush2.bf16.msra.mxu0 %v272
  %354 = vmatprep.subr.bf16.mxu0 0
  %355 = vmatpush2.bf16.msra.mxu0 %v271
  %356 = vmatprep.subr.bf16.mxu0 0
  %357 = vmatpush2.bf16.msra.mxu0 %v270
  %358 = vmatprep.subr.bf16.mxu0 0
  %359 = vmatpush2.bf16.msra.mxu0 %v269
  %360 = vmatprep.subr.bf16.mxu0 0
  %361 = vmatpush2.bf16.msra.mxu0 %v268
  %362 = vmatprep.subr.bf16.mxu0 0
  %363 = vmatpush2.bf16.msra.mxu0 %v267
  %364 = vmatprep.subr.bf16.mxu0 0
  %365 = vmatpush2.bf16.msra.mxu0 %v266
  %366 = vmatprep.mubr.bf16.mxu0 %v106
  %367 = vmatmul.mubr.bf16.gmra.mxu0 %v105
  %v368 = vpop.f32.mrf.mxu0
  %v369 = vadd.f32 %v95, %v368
  %v370 = vpop.f32.mrf.mxu0
  %v371 = vpop.f32.mrf.mxu0
  %v372 = vpop.f32.mrf.mxu0
  %373 = vdwg.mxu0
  %374 = vmatprep.subr.bf16.mxu0 0
  %375 = vmatpush1.bf16.msra.mxu0 %v281
  %376 = vmatprep.subr.bf16.mxu0 0
  %377 = vmatpush1.bf16.msra.mxu0 %v280
  %378 = vmatprep.subr.bf16.mxu0 0
  %379 = vmatpush1.bf16.msra.mxu0 %v279
  %380 = vmatprep.subr.bf16.mxu0 0
  %381 = vmatpush1.bf16.msra.mxu0 %v278
  %382 = vmatprep.subr.bf16.mxu0 0
  %383 = vmatpush1.bf16.msra.mxu0 %v277
  %384 = vmatprep.subr.bf16.mxu0 0
  %385 = vmatpush1.bf16.msra.mxu0 %v276
  %386 = vmatprep.subr.bf16.mxu0 0
  %387 = vmatpush1.bf16.msra.mxu0 %v275
  %388 = vmatprep.subr.bf16.mxu0 0
  %389 = vmatpush1.bf16.msra.mxu0 %v274
  %390 = vmatprep.subr.bf16.mxu0 0
  %391 = vmatpush2.bf16.msra.mxu0 %v289
  %392 = vmatprep.subr.bf16.mxu0 0
  %393 = vmatpush2.bf16.msra.mxu0 %v288
  %394 = vmatprep.subr.bf16.mxu0 0
  %395 = vmatpush2.bf16.msra.mxu0 %v287
  %396 = vmatprep.subr.bf16.mxu0 0
  %397 = vmatpush2.bf16.msra.mxu0 %v286
  %398 = vmatprep.subr.bf16.mxu0 0
  %399 = vmatpush2.bf16.msra.mxu0 %v285
  %400 = vmatprep.subr.bf16.mxu0 0
  %401 = vmatpush2.bf16.msra.mxu0 %v284
  %402 = vmatprep.subr.bf16.mxu0 0
  %403 = vmatpush2.bf16.msra.mxu0 %v283
  %404 = vmatprep.subr.bf16.mxu0 0
  %405 = vmatpush2.bf16.msra.mxu0 %v282
  %406 = vmatprep.mubr.bf16.mxu0 %v108
  %407 = vmatmul.mubr.bf16.gmra.mxu0 %v107
  %v408 = vpop.f32.mrf.mxu0
  %v409 = vadd.f32 %v369, %v408
  %v410 = vpop.f32.mrf.mxu0
  %v411 = vpop.f32.mrf.mxu0
  %v412 = vpop.f32.mrf.mxu0
  %413 = vdwg.mxu0
  %414 = vmatprep.subr.bf16.mxu0 0
  %415 = vmatpush1.bf16.msra.mxu0 0
  %416 = vmatprep.subr.bf16.mxu0 0
  %417 = vmatpush1.bf16.msra.mxu0 0
  %418 = vmatprep.subr.bf16.mxu0 0
  %419 = vmatpush1.bf16.msra.mxu0 0
  %420 = vmatprep.subr.bf16.mxu0 0
  %421 = vmatpush1.bf16.msra.mxu0 0
  %422 = vmatprep.subr.bf16.mxu0 0
  %423 = vmatpush1.bf16.msra.mxu0 %v293
  %424 = vmatprep.subr.bf16.mxu0 0
  %425 = vmatpush1.bf16.msra.mxu0 %v292
  %426 = vmatprep.subr.bf16.mxu0 0
  %427 = vmatpush1.bf16.msra.mxu0 %v291
  %428 = vmatprep.subr.bf16.mxu0 0
  %429 = vmatpush1.bf16.msra.mxu0 %v290
  %430 = vmatprep.subr.bf16.mxu0 0
  %431 = vmatpush2.bf16.msra.mxu0 0
  %432 = vmatprep.subr.bf16.mxu0 0
  %433 = vmatpush2.bf16.msra.mxu0 0
  %434 = vmatprep.subr.bf16.mxu0 0
  %435 = vmatpush2.bf16.msra.mxu0 0
  %436 = vmatprep.subr.bf16.mxu0 0
  %437 = vmatpush2.bf16.msra.mxu0 0
  %438 = vmatprep.subr.bf16.mxu0 0
  %439 = vmatpush2.bf16.msra.mxu0 0
  %440 = vmatprep.subr.bf16.mxu0 0
  %441 = vmatpush2.bf16.msra.mxu0 0
  %442 = vmatprep.subr.bf16.mxu0 0
  %443 = vmatpush2.bf16.msra.mxu0 0
  %444 = vmatprep.subr.bf16.mxu0 0
  %445 = vmatpush2.bf16.msra.mxu0 0
  %446 = vmatprep.mubr.bf16.mxu0 0
  %447 = vmatmul.mubr.bf16.gmra.mxu0 %v332
  %v448 = vpop.f32.mrf.mxu0
  %v449 = vadd.f32 %v409, %v448
  %v450 = vpop.f32.mrf.mxu0
  %v451 = vpop.f32.mrf.mxu0
  %v452 = vpop.f32.mrf.mxu0
  %453 = vdwg.mxu0
  %v454 = vpack.c.bf16 %v449, %v449
  %455 = vst [vmem:[%s3] sm:$0xf] %v454
  // Predicated region
  $region14: #{binary_net_forward.40} parent=0 // pred_check
    _
  $region15: #{binary_net_forward.40} parent=0 // pred_check_branch
    %457 = sbr.rel (0) target = $region17
  $region16: #{binary_net_forward.40} parent=0 // pred_region
    _
  $region17: #{binary_net_forward.40} parent=0 // pred_fallthru
    _
  // Predicated region
  $region18: #{binary_net_forward.40} parent=0 // pred_check
    _
  $region19: #{binary_net_forward.40} parent=0 // pred_check_branch
    %459 = sbr.rel (0) target = $region21
  $region20: #{binary_net_forward.40} parent=0 // pred_region
    _
  $region21: #{binary_net_forward.40} parent=0 // pred_fallthru
    _

// kernel: binary_net_forward.41
$region0: #{binary_net_forward.41}
  #allocation0 [shape = 'u32[]', space=smem, size = 0x4, offset = 0x4, fixed_abs, tag = 'smem constant byte address 0x4 - core index']
  #allocation1 [shape = 'u32[144,128]{1,0:T(1,128)}', space=vmem, size = 0x12000, scoped, tag = 'internal scratch']
  %s0 = inlined_call_operand.vmem [shape: bf16[8,64], index: 0, kind: input, shape index: {}]
  %s1 = inlined_call_operand.vmem [shape: bf16[64,128], index: 1, kind: input, shape index: {}]
  %s2 = inlined_call_operand.vmem [shape: f32[1,128], index: 2, kind: input, shape index: {}]
  %s3 = inlined_call_operand.vmem [shape: bf16[8,128], index: 3, kind: output, shape index: {}]
  %s4 = sld [smem:[#allocation0]]
  $region22: #{binary_net_forward.41} parent=0
    _
  %s6 = ssub.s32 1, %s4
  %s7 = scalar_select 0, %s6, %s4
  // Predicated region
  $region2: #{binary_net_forward.41} parent=0 // pred_check
    _
  $region3: #{binary_net_forward.41} parent=0 // pred_check_branch
    %9 = sbr.rel (0) target = $region5
  $region4: #{binary_net_forward.41} parent=0 // pred_region
    _
  $region5: #{binary_net_forward.41} parent=0 // pred_fallthru
    _
  // Predicated region
  $region6: #{binary_net_forward.41} parent=0 // pred_check
    _
  $region7: #{binary_net_forward.41} parent=0 // pred_check_branch
    %11 = sbr.rel (0) target = $region9
  $region8: #{binary_net_forward.41} parent=0 // pred_region
    _
  $region9: #{binary_net_forward.41} parent=0 // pred_fallthru
    _
  // Predicated region
  $region10: #{binary_net_forward.41} parent=0 // pred_check
    _
  $region11: #{binary_net_forward.41} parent=0 // pred_check_branch
    %13 = sbr.rel (0) target = $region13
  $region12: #{binary_net_forward.41} parent=0 // pred_region
    _
  $region13: #{binary_net_forward.41} parent=0 // pred_fallthru
    _
  %v15 = vld [vmem:[%s0] sm:$0xf]
  %v16 = vld [vmem:[%s1] sm:$0xf]
  %v17 = vld [vmem:[%s1 + $0x4] sm:$0xf]
  %v18 = vld [vmem:[%s1 + $0x8] sm:$0xf]
  %v19 = vld [vmem:[%s1 + $0xc] sm:$0xf]
  %v20 = vld [vmem:[%s1 + $0x10] sm:$0xf]
  %v21 = vld [vmem:[%s1 + $0x14] sm:$0xf]
  %v22 = vld [vmem:[%s1 + $0x18] sm:$0xf]
  %v23 = vld [vmem:[%s1 + $0x1c] sm:$0xf]
  %v24 = vld [vmem:[%s2] sm:$0x1]
  %v26 = vlaneseq
  %v27 = vshrl.u32 %v26, 7
  %v28 = vsub.s32 0, %v27
  %v29 = vrot.slane %v24, %v28
  %v39 = vunpack.c.l.b16 %v16
  %v40 = vunpack.c.l.b16 %v17
  %v41 = vunpack.c.l.b16 %v18
  %v42 = vunpack.c.l.b16 %v19
  %v43 = vunpack.c.l.b16 %v20
  %v44 = vunpack.c.l.b16 %v21
  %v45 = vunpack.c.l.b16 %v22
  %v46 = vunpack.c.l.b16 %v23
  %v47 = vpack.c.b16 %v40, %v39
  %v48 = vpack.c.b16 %v42, %v41
  %v49 = vpack.c.b16 %v44, %v43
  %v50 = vpack.c.b16 %v46, %v45
  %vm55 = vcmask 523264
  %v57 = vsel %vm55, %v15, 0
  %59 = vmatprep.subr.bf16.mxu0 0
  %60 = vmatpush1.bf16.msra.mxu0 0
  %61 = vmatprep.subr.bf16.mxu0 0
  %62 = vmatpush1.bf16.msra.mxu0 0
  %63 = vmatprep.subr.bf16.mxu0 0
  %64 = vmatpush1.bf16.msra.mxu0 0
  %65 = vmatprep.subr.bf16.mxu0 0
  %66 = vmatpush1.bf16.msra.mxu0 0
  %67 = vmatprep.subr.bf16.mxu0 0
  %68 = vmatpush1.bf16.msra.mxu0 %v50
  %69 = vmatprep.subr.bf16.mxu0 0
  %70 = vmatpush1.bf16.msra.mxu0 %v49
  %71 = vmatprep.subr.bf16.mxu0 0
  %72 = vmatpush1.bf16.msra.mxu0 %v48
  %73 = vmatprep.subr.bf16.mxu0 0
  %74 = vmatpush1.bf16.msra.mxu0 %v47
  %75 = vmatprep.subr.bf16.mxu0 0
  %76 = vmatpush2.bf16.msra.mxu0 0
  %77 = vmatprep.subr.bf16.mxu0 0
  %78 = vmatpush2.bf16.msra.mxu0 0
  %79 = vmatprep.subr.bf16.mxu0 0
  %80 = vmatpush2.bf16.msra.mxu0 0
  %81 = vmatprep.subr.bf16.mxu0 0
  %82 = vmatpush2.bf16.msra.mxu0 0
  %83 = vmatprep.subr.bf16.mxu0 0
  %84 = vmatpush2.bf16.msra.mxu0 0
  %85 = vmatprep.subr.bf16.mxu0 0
  %86 = vmatpush2.bf16.msra.mxu0 0
  %87 = vmatprep.subr.bf16.mxu0 0
  %88 = vmatpush2.bf16.msra.mxu0 0
  %89 = vmatprep.subr.bf16.mxu0 0
  %90 = vmatpush2.bf16.msra.mxu0 0
  %91 = vmatprep.mubr.bf16.mxu0 0
  %92 = vmatmul.mubr.bf16.gmra.mxu0 %v57
  %v93 = vpop.f32.mrf.mxu0
  %v94 = vadd.f32 %v29, %v93
  %v95 = vpop.f32.mrf.mxu0
  %v96 = vpop.f32.mrf.mxu0
  %v97 = vpop.f32.mrf.mxu0
  %98 = vdwg.mxu0
  %v99 = vpack.c.bf16 %v94, %v94
  %100 = vst [vmem:[%s3] sm:$0xf] %v99
  // Predicated region
  $region14: #{binary_net_forward.41} parent=0 // pred_check
    _
  $region15: #{binary_net_forward.41} parent=0 // pred_check_branch
    %102 = sbr.rel (0) target = $region17
  $region16: #{binary_net_forward.41} parent=0 // pred_region
    _
  $region17: #{binary_net_forward.41} parent=0 // pred_fallthru
    _
  // Predicated region
  $region18: #{binary_net_forward.41} parent=0 // pred_check
    _
  $region19: #{binary_net_forward.41} parent=0 // pred_check_branch
    %104 = sbr.rel (0) target = $region21
  $region20: #{binary_net_forward.41} parent=0 // pred_region
    _
  $region21: #{binary_net_forward.41} parent=0 // pred_fallthru
    _

// kernel: tile.28
$region0: #{tile.28}
  #allocation0 [shape = 's32[1]{0}', space=sflag, size = 0x4, scoped, tag = 'scoped memory for tile.28']
  %s0 = inlined_call_operand.vmem [shape: f32[16], index: 0, kind: input, shape index: {}]
  %s1 = inlined_call_operand.vmem [shape: f32[4,16], index: 1, kind: output, shape index: {}]
  // Predicated region
  $region2: #{tile.28} parent=0 // pred_check
    _
  $region3: #{tile.28} parent=0 // pred_check_branch
    %3 = sbr.rel (0) target = $region5
  $region4: #{tile.28} parent=0 // pred_region
    _
  $region5: #{tile.28} parent=0 // pred_fallthru
    _
  %v4 = vld [vmem:[%s0] ss:$0 sm:$0xff]
  %5 = vst [vmem:[%s1] sm:$0xf] %v4

// kernel: tile.29
$region0: #{tile.29}
  %s0 = inlined_call_operand.vmem [shape: f32[4,16], index: 0, kind: input, shape index: {}]
  %s1 = inlined_call_operand.vmem [shape: f32[64], index: 1, kind: output, shape index: {}]
  $region1: #{tile.29} parent=0
    #allocation0 [shape = 'u8[4096]{0}', space=vmem, size = 0x1000, scoped, tag = 'scoped mem for output reshape']
    #allocation1 [shape = 'u8[4096]{0}', space=vmem, size = 0x1000, scoped, tag = 'scoped mem for input reshape']
    %s3 = sshll.u32 1, 4
    %s4 = ssub.s32 %s3, 1
    %v5 = vld [vmem:[%s0] sm:%s4]
    %6 = vst [vmem:[#allocation1] sm:%s4] %v5
    %v7 = vld [vmem:[#allocation1] sm:$0x1]
    %vm8 = vcmask 130048
    %9 = vst.msk [vmem:[#allocation0] sm:$0x1] %vm8, %v7
    %s10 = scalar_lea.vmem [#allocation1], 3
    %v11 = vld [vmem:[%s10] sm:$0x1]
    %12 = vrot.lane.b32.xlu0 %v11, 48
    %v13 = vpop.permute.xlu0 %12
    %vm14 = vcmask 523648
    %15 = vst.msk [vmem:[#allocation0] sm:$0x1] %vm14, %v13
    %s16 = scalar_lea.vmem [#allocation1], 2
    %v17 = vld [vmem:[%s16] sm:$0x1]
    %18 = vrot.lane.b32.xlu0 %v17, 32
    %v19 = vpop.permute.xlu0 %18
    %vm20 = vcmask 392448
    %21 = vst.msk [vmem:[#allocation0] sm:$0x1] %vm20, %v19
    %s22 = scalar_lea.vmem [#allocation1], 1
    %v23 = vld [vmem:[%s22] sm:$0x1]
    %24 = vrot.lane.b32.xlu0 %v23, 16
    %v25 = vpop.permute.xlu0 %24
    %vm26 = vcmask 261248
    %27 = vst.msk [vmem:[#allocation0] sm:$0x1] %vm26, %v25
    %s29 = sshll.u32 1, 1
    %s30 = ssub.s32 %s29, 1
    %v32 = vld [vmem:[#allocation0] sm:%s30]
    %s33 = sshll.u32 1, 1
    %s34 = ssub.s32 %s33, 1
    %35 = vst [vmem:[%s1] sm:%s34] %v32

// kernel: binary_net_forward.44
$region0: #{binary_net_forward.44}
  #allocation0 [shape = 'u32[]', space=smem, size = 0x4, offset = 0x4, fixed_abs, tag = 'smem constant byte address 0x4 - core index']
  #allocation1 [shape = 'u32[144,128]{1,0:T(1,128)}', space=vmem, size = 0x12000, scoped, tag = 'internal scratch']
  %s0 = inlined_call_operand.vmem [shape: bf16[8,32], index: 0, kind: input, shape index: {}]
  %s1 = inlined_call_operand.vmem [shape: bf16[32,128], index: 1, kind: input, shape index: {}]
  %s2 = inlined_call_operand.vmem [shape: f32[1,128], index: 2, kind: input, shape index: {}]
  %s3 = inlined_call_operand.vmem [shape: bf16[8,128], index: 3, kind: output, shape index: {}]
  %s4 = sld [smem:[#allocation0]]
  $region22: #{binary_net_forward.44} parent=0
    _
  %s6 = ssub.s32 1, %s4
  %s7 = scalar_select 0, %s6, %s4
  // Predicated region
  $region2: #{binary_net_forward.44} parent=0 // pred_check
    _
  $region3: #{binary_net_forward.44} parent=0 // pred_check_branch
    %9 = sbr.rel (0) target = $region5
  $region4: #{binary_net_forward.44} parent=0 // pred_region
    _
  $region5: #{binary_net_forward.44} parent=0 // pred_fallthru
    _
  // Predicated region
  $region6: #{binary_net_forward.44} parent=0 // pred_check
    _
  $region7: #{binary_net_forward.44} parent=0 // pred_check_branch
    %11 = sbr.rel (0) target = $region9
  $region8: #{binary_net_forward.44} parent=0 // pred_region
    _
  $region9: #{binary_net_forward.44} parent=0 // pred_fallthru
    _
  // Predicated region
  $region10: #{binary_net_forward.44} parent=0 // pred_check
    _
  $region11: #{binary_net_forward.44} parent=0 // pred_check_branch
    %13 = sbr.rel (0) target = $region13
  $region12: #{binary_net_forward.44} parent=0 // pred_region
    _
  $region13: #{binary_net_forward.44} parent=0 // pred_fallthru
    _
  %v15 = vld [vmem:[%s0] sm:$0xf]
  %v16 = vld [vmem:[%s1] sm:$0xf]
  %v17 = vld [vmem:[%s1 + $0x4] sm:$0xf]
  %v18 = vld [vmem:[%s1 + $0x8] sm:$0xf]
  %v19 = vld [vmem:[%s1 + $0xc] sm:$0xf]
  %v20 = vld [vmem:[%s2] sm:$0x1]
  %v22 = vlaneseq
  %v23 = vshrl.u32 %v22, 7
  %v24 = vsub.s32 0, %v23
  %v25 = vrot.slane %v20, %v24
  %v31 = vunpack.c.l.b16 %v16
  %v32 = vunpack.c.l.b16 %v17
  %v33 = vunpack.c.l.b16 %v18
  %v34 = vunpack.c.l.b16 %v19
  %v35 = vpack.c.b16 %v32, %v31
  %v36 = vpack.c.b16 %v34, %v33
  %vm39 = vcmask 261120
  %v41 = vsel %vm39, %v15, 0
  %43 = vmatprep.subr.bf16.mxu0 0
  %44 = vmatpush1.bf16.msra.mxu0 0
  %45 = vmatprep.subr.bf16.mxu0 0
  %46 = vmatpush1.bf16.msra.mxu0 0
  %47 = vmatprep.subr.bf16.mxu0 0
  %48 = vmatpush1.bf16.msra.mxu0 0
  %49 = vmatprep.subr.bf16.mxu0 0
  %50 = vmatpush1.bf16.msra.mxu0 0
  %51 = vmatprep.subr.bf16.mxu0 0
  %52 = vmatpush1.bf16.msra.mxu0 0
  %53 = vmatprep.subr.bf16.mxu0 0
  %54 = vmatpush1.bf16.msra.mxu0 0
  %55 = vmatprep.subr.bf16.mxu0 0
  %56 = vmatpush1.bf16.msra.mxu0 %v36
  %57 = vmatprep.subr.bf16.mxu0 0
  %58 = vmatpush1.bf16.msra.mxu0 %v35
  %59 = vmatprep.subr.bf16.mxu0 0
  %60 = vmatpush2.bf16.msra.mxu0 0
  %61 = vmatprep.subr.bf16.mxu0 0
  %62 = vmatpush2.bf16.msra.mxu0 0
  %63 = vmatprep.subr.bf16.mxu0 0
  %64 = vmatpush2.bf16.msra.mxu0 0
  %65 = vmatprep.subr.bf16.mxu0 0
  %66 = vmatpush2.bf16.msra.mxu0 0
  %67 = vmatprep.subr.bf16.mxu0 0
  %68 = vmatpush2.bf16.msra.mxu0 0
  %69 = vmatprep.subr.bf16.mxu0 0
  %70 = vmatpush2.bf16.msra.mxu0 0
  %71 = vmatprep.subr.bf16.mxu0 0
  %72 = vmatpush2.bf16.msra.mxu0 0
  %73 = vmatprep.subr.bf16.mxu0 0
  %74 = vmatpush2.bf16.msra.mxu0 0
  %75 = vmatprep.mubr.bf16.mxu0 0
  %76 = vmatmul.mubr.bf16.gmra.mxu0 %v41
  %v77 = vpop.f32.mrf.mxu0
  %v78 = vadd.f32 %v25, %v77
  %v79 = vpop.f32.mrf.mxu0
  %v80 = vpop.f32.mrf.mxu0
  %v81 = vpop.f32.mrf.mxu0
  %82 = vdwg.mxu0
  %v83 = vpack.c.bf16 %v78, %v78
  %84 = vst [vmem:[%s3] sm:$0xf] %v83
  // Predicated region
  $region14: #{binary_net_forward.44} parent=0 // pred_check
    _
  $region15: #{binary_net_forward.44} parent=0 // pred_check_branch
    %86 = sbr.rel (0) target = $region17
  $region16: #{binary_net_forward.44} parent=0 // pred_region
    _
  $region17: #{binary_net_forward.44} parent=0 // pred_fallthru
    _
  // Predicated region
  $region18: #{binary_net_forward.44} parent=0 // pred_check
    _
  $region19: #{binary_net_forward.44} parent=0 // pred_check_branch
    %88 = sbr.rel (0) target = $region21
  $region20: #{binary_net_forward.44} parent=0 // pred_region
    _
  $region21: #{binary_net_forward.44} parent=0 // pred_fallthru
    _

// kernel: tile.33
$region0: #{tile.33}
  #allocation0 [shape = 's32[1]{0}', space=sflag, size = 0x4, scoped, tag = 'scoped memory for tile.33']
  %s0 = inlined_call_operand.vmem [shape: f32[8], index: 0, kind: input, shape index: {}]
  %s1 = inlined_call_operand.vmem [shape: f32[4,8], index: 1, kind: output, shape index: {}]
  // Predicated region
  $region2: #{tile.33} parent=0 // pred_check
    _
  $region3: #{tile.33} parent=0 // pred_check_branch
    %3 = sbr.rel (0) target = $region5
  $region4: #{tile.33} parent=0 // pred_region
    _
  $region5: #{tile.33} parent=0 // pred_fallthru
    _
  %v4 = vld [vmem:[%s0] ss:$0 sm:$0xff]
  %5 = vst [vmem:[%s1] sm:$0xf] %v4

// kernel: tile.34
$region0: #{tile.34}
  %s0 = inlined_call_operand.vmem [shape: f32[4,8], index: 0, kind: input, shape index: {}]
  %s1 = inlined_call_operand.vmem [shape: f32[32], index: 1, kind: output, shape index: {}]
  $region1: #{tile.34} parent=0
    #allocation0 [shape = 'u8[4096]{0}', space=vmem, size = 0x1000, scoped, tag = 'scoped mem for output reshape']
    #allocation1 [shape = 'u8[4096]{0}', space=vmem, size = 0x1000, scoped, tag = 'scoped mem for input reshape']
    %s3 = sshll.u32 1, 4
    %s4 = ssub.s32 %s3, 1
    %v5 = vld [vmem:[%s0] sm:%s4]
    %6 = vst [vmem:[#allocation1] sm:%s4] %v5
    %v7 = vld [vmem:[#allocation1] sm:$0x1]
    %vm8 = vcmask 64512
    %9 = vst.msk [vmem:[#allocation0] sm:$0x1] %vm8, %v7
    %s10 = scalar_lea.vmem [#allocation1], 3
    %v11 = vld [vmem:[%s10] sm:$0x1]
    %12 = vrot.lane.b32.xlu0 %v11, 24
    %v13 = vpop.permute.xlu0 %12
    %vm14 = vcmask 261312
    %15 = vst.msk [vmem:[#allocation0] sm:$0x1] %vm14, %v13
    %s16 = scalar_lea.vmem [#allocation1], 2
    %v17 = vld [vmem:[%s16] sm:$0x1]
    %18 = vrot.lane.b32.xlu0 %v17, 16
    %v19 = vpop.permute.xlu0 %18
    %vm20 = vcmask 195712
    %21 = vst.msk [vmem:[#allocation0] sm:$0x1] %vm20, %v19
    %s22 = scalar_lea.vmem [#allocation1], 1
    %v23 = vld [vmem:[%s22] sm:$0x1]
    %24 = vrot.lane.b32.xlu0 %v23, 8
    %v25 = vpop.permute.xlu0 %24
    %vm26 = vcmask 130112
    %27 = vst.msk [vmem:[#allocation0] sm:$0x1] %vm26, %v25
    %s29 = sshll.u32 1, 1
    %s30 = ssub.s32 %s29, 1
    %v32 = vld [vmem:[#allocation0] sm:%s30]
    %s33 = sshll.u32 1, 1
    %s34 = ssub.s32 %s33, 1
    %35 = vst [vmem:[%s1] sm:%s34] %v32

// kernel: binary_net_forward.45
$region0: #{binary_net_forward.45}
  #allocation0 [shape = 'u32[]', space=smem, size = 0x4, offset = 0x4, fixed_abs, tag = 'smem constant byte address 0x4 - core index']
  #allocation1 [shape = 'u32[144,128]{1,0:T(1,128)}', space=vmem, size = 0x12000, scoped, tag = 'internal scratch']
  %s0 = inlined_call_operand.vmem [shape: bf16[16,288], index: 0, kind: input, shape index: {}]
  %s1 = inlined_call_operand.vmem [shape: bf16[288,128], index: 1, kind: input, shape index: {}]
  %s2 = inlined_call_operand.vmem [shape: f32[1,128], index: 2, kind: input, shape index: {}]
  %s3 = inlined_call_operand.vmem [shape: bf16[16,128], index: 3, kind: output, shape index: {}]
  %s4 = sld [smem:[#allocation0]]
  $region22: #{binary_net_forward.45} parent=0
    _
  %s6 = ssub.s32 1, %s4
  %s7 = scalar_select 0, %s6, %s4
  // Predicated region
  $region2: #{binary_net_forward.45} parent=0 // pred_check
    _
  $region3: #{binary_net_forward.45} parent=0 // pred_check_branch
    %9 = sbr.rel (0) target = $region5
  $region4: #{binary_net_forward.45} parent=0 // pred_region
    _
  $region5: #{binary_net_forward.45} parent=0 // pred_fallthru
    _
  // Predicated region
  $region6: #{binary_net_forward.45} parent=0 // pred_check
    _
  $region7: #{binary_net_forward.45} parent=0 // pred_check_branch
    %11 = sbr.rel (0) target = $region9
  $region8: #{binary_net_forward.45} parent=0 // pred_region
    _
  $region9: #{binary_net_forward.45} parent=0 // pred_fallthru
    _
  // Predicated region
  $region10: #{binary_net_forward.45} parent=0 // pred_check
    _
  $region11: #{binary_net_forward.45} parent=0 // pred_check_branch
    %13 = sbr.rel (0) target = $region13
  $region12: #{binary_net_forward.45} parent=0 // pred_region
    _
  $region13: #{binary_net_forward.45} parent=0 // pred_fallthru
    _
  %v15 = vld [vmem:[%s0] sm:$0xff]
  %v16 = vld [vmem:[%s0 + $0x8] sm:$0xf]
  %v17 = vld [vmem:[%s0 + $0xc] sm:$0xff]
  %v18 = vld [vmem:[%s0 + $0x14] sm:$0xf]
  %v19 = vld [vmem:[%s1] sm:$0xf]
  %v20 = vld [vmem:[%s1 + $0x4] sm:$0xf]
  %v21 = vld [vmem:[%s1 + $0x8] sm:$0xf]
  %v22 = vld [vmem:[%s1 + $0xc] sm:$0xf]
  %v23 = vld [vmem:[%s1 + $0x10] sm:$0xf]
  %v24 = vld [vmem:[%s1 + $0x14] sm:$0xf]
  %v25 = vld [vmem:[%s1 + $0x18] sm:$0xf]
  %v26 = vld [vmem:[%s1 + $0x1c] sm:$0xf]
  %v27 = vld [vmem:[%s1 + $0x20] sm:$0xf]
  %v28 = vld [vmem:[%s1 + $0x24] sm:$0xf]
  %v29 = vld [vmem:[%s1 + $0x28] sm:$0xf]
  %v30 = vld [vmem:[%s1 + $0x2c] sm:$0xf]
  %v31 = vld [vmem:[%s1 + $0x30] sm:$0xf]
  %v32 = vld [vmem:[%s1 + $0x34] sm:$0xf]
  %v33 = vld [vmem:[%s1 + $0x38] sm:$0xf]
  %v34 = vld [vmem:[%s1 + $0x3c] sm:$0xf]
  %v35 = vld [vmem:[%s1 + $0x40] sm:$0xf]
  %v36 = vld [vmem:[%s1 + $0x44] sm:$0xf]
  %v37 = vld [vmem:[%s1 + $0x48] sm:$0xf]
  %v38 = vld [vmem:[%s1 + $0x4c] sm:$0xf]
  %v39 = vld [vmem:[%s1 + $0x50] sm:$0xf]
  %v40 = vld [vmem:[%s1 + $0x54] sm:$0xf]
  %v41 = vld [vmem:[%s1 + $0x58] sm:$0xf]
  %v42 = vld [vmem:[%s1 + $0x5c] sm:$0xf]
  %v43 = vld [vmem:[%s1 + $0x60] sm:$0xf]
  %v44 = vld [vmem:[%s1 + $0x64] sm:$0xf]
  %v45 = vld [vmem:[%s1 + $0x68] sm:$0xf]
  %v46 = vld [vmem:[%s1 + $0x6c] sm:$0xf]
  %v47 = vld [vmem:[%s1 + $0x70] sm:$0xf]
  %v48 = vld [vmem:[%s1 + $0x74] sm:$0xf]
  %v49 = vld [vmem:[%s1 + $0x78] sm:$0xf]
  %v50 = vld [vmem:[%s1 + $0x7c] sm:$0xf]
  %v51 = vld [vmem:[%s1 + $0x80] sm:$0xf]
  %v52 = vld [vmem:[%s1 + $0x84] sm:$0xf]
  %v53 = vld [vmem:[%s1 + $0x88] sm:$0xf]
  %v54 = vld [vmem:[%s1 + $0x8c] sm:$0xf]
  %v55 = vld [vmem:[%s2] sm:$0x1]
  %v57 = vlaneseq
  %v58 = vshrl.u32 %v57, 7
  %v59 = vsub.s32 0, %v58
  %v60 = vrot.slane %v55, %v59
  %v66 = vunpack.c.l.b16 %v15
  %v67 = vunpack.c.h.b16 %v15
  %v68 = vunpack.c.l.b16 %v16
  %v69 = vunpack.c.l.b16 %v17
  %v70 = vunpack.c.h.b16 %v17
  %v71 = vunpack.c.l.b16 %v18
  %v72 = vpack.c.b16 %v69, %v66
  %v73 = vpack.c.b16 %v70, %v67
  %v74 = vpack.c.b16 %v71, %v68
  %v113 = vunpack.c.l.b16 %v19
  %v114 = vunpack.c.l.b16 %v20
  %v115 = vunpack.c.l.b16 %v21
  %v116 = vunpack.c.l.b16 %v22
  %v117 = vunpack.c.l.b16 %v23
  %v118 = vunpack.c.l.b16 %v24
  %v119 = vunpack.c.l.b16 %v25
  %v120 = vunpack.c.l.b16 %v26
  %v121 = vunpack.c.l.b16 %v27
  %v122 = vunpack.c.l.b16 %v28
  %v123 = vunpack.c.l.b16 %v29
  %v124 = vunpack.c.l.b16 %v30
  %v125 = vunpack.c.l.b16 %v31
  %v126 = vunpack.c.l.b16 %v32
  %v127 = vunpack.c.l.b16 %v33
  %v128 = vunpack.c.l.b16 %v34
  %v129 = vunpack.c.l.b16 %v35
  %v130 = vunpack.c.l.b16 %v36
  %v131 = vunpack.c.l.b16 %v37
  %v132 = vunpack.c.l.b16 %v38
  %v133 = vunpack.c.l.b16 %v39
  %v134 = vunpack.c.l.b16 %v40
  %v135 = vunpack.c.l.b16 %v41
  %v136 = vunpack.c.l.b16 %v42
  %v137 = vunpack.c.l.b16 %v43
  %v138 = vunpack.c.l.b16 %v44
  %v139 = vunpack.c.l.b16 %v45
  %v140 = vunpack.c.l.b16 %v46
  %v141 = vunpack.c.l.b16 %v47
  %v142 = vunpack.c.l.b16 %v48
  %v143 = vunpack.c.l.b16 %v49
  %v144 = vunpack.c.l.b16 %v50
  %v145 = vunpack.c.l.b16 %v51
  %v146 = vunpack.c.l.b16 %v52
  %v147 = vunpack.c.l.b16 %v53
  %v148 = vunpack.c.l.b16 %v54
  %v149 = vpack.c.b16 %v114, %v113
  %v150 = vpack.c.b16 %v116, %v115
  %v151 = vpack.c.b16 %v118, %v117
  %v152 = vpack.c.b16 %v120, %v119
  %v153 = vpack.c.b16 %v122, %v121
  %v154 = vpack.c.b16 %v124, %v123
  %v155 = vpack.c.b16 %v126, %v125
  %v156 = vpack.c.b16 %v128, %v127
  %v157 = vpack.c.b16 %v130, %v129
  %v158 = vpack.c.b16 %v132, %v131
  %v159 = vpack.c.b16 %v134, %v133
  %v160 = vpack.c.b16 %v136, %v135
  %v161 = vpack.c.b16 %v138, %v137
  %v162 = vpack.c.b16 %v140, %v139
  %v163 = vpack.c.b16 %v142, %v141
  %v164 = vpack.c.b16 %v144, %v143
  %v165 = vpack.c.b16 %v146, %v145
  %v166 = vpack.c.b16 %v148, %v147
  %vm185 = vcmask 261120
  %v187 = vsel %vm185, %v74, 0
  %189 = vmatprep.subr.bf16.mxu0 0
  %190 = vmatpush1.bf16.msra.mxu0 %v156
  %191 = vmatprep.subr.bf16.mxu0 0
  %192 = vmatpush1.bf16.msra.mxu0 %v155
  %193 = vmatprep.subr.bf16.mxu0 0
  %194 = vmatpush1.bf16.msra.mxu0 %v154
  %195 = vmatprep.subr.bf16.mxu0 0
  %196 = vmatpush1.bf16.msra.mxu0 %v153
  %197 = vmatprep.subr.bf16.mxu0 0
  %198 = vmatpush1.bf16.msra.mxu0 %v152
  %199 = vmatprep.subr.bf16.mxu0 0
  %200 = vmatpush1.bf16.msra.mxu0 %v151
  %201 = vmatprep.subr.bf16.mxu0 0
  %202 = vmatpush1.bf16.msra.mxu0 %v150
  %203 = vmatprep.subr.bf16.mxu0 0
  %204 = vmatpush1.bf16.msra.mxu0 %v149
  %205 = vmatprep.subr.bf16.mxu0 0
  %206 = vmatpush2.bf16.msra.mxu0 %v164
  %207 = vmatprep.subr.bf16.mxu0 0
  %208 = vmatpush2.bf16.msra.mxu0 %v163
  %209 = vmatprep.subr.bf16.mxu0 0
  %210 = vmatpush2.bf16.msra.mxu0 %v162
  %211 = vmatprep.subr.bf16.mxu0 0
  %212 = vmatpush2.bf16.msra.mxu0 %v161
  %213 = vmatprep.subr.bf16.mxu0 0
  %214 = vmatpush2.bf16.msra.mxu0 %v160
  %215 = vmatprep.subr.bf16.mxu0 0
  %216 = vmatpush2.bf16.msra.mxu0 %v159
  %217 = vmatprep.subr.bf16.mxu0 0
  %218 = vmatpush2.bf16.msra.mxu0 %v158
  %219 = vmatprep.subr.bf16.mxu0 0
  %220 = vmatpush2.bf16.msra.mxu0 %v157
  %221 = vmatprep.mubr.bf16.mxu0 %v73
  %222 = vmatmul.mubr.bf16.gmra.mxu0 %v72
  %v223 = vpop.f32.mrf.mxu0
  %v224 = vadd.f32 %v60, %v223
  %v225 = vpop.f32.mrf.mxu0
  %v226 = vpop.f32.mrf.mxu0
  %v227 = vadd.f32 %v60, %v226
  %v228 = vpop.f32.mrf.mxu0
  %229 = vdwg.mxu0
  %230 = vmatprep.subr.bf16.mxu0 0
  %231 = vmatpush1.bf16.msra.mxu0 0
  %232 = vmatprep.subr.bf16.mxu0 0
  %233 = vmatpush1.bf16.msra.mxu0 0
  %234 = vmatprep.subr.bf16.mxu0 0
  %235 = vmatpush1.bf16.msra.mxu0 0
  %236 = vmatprep.subr.bf16.mxu0 0
  %237 = vmatpush1.bf16.msra.mxu0 0
  %238 = vmatprep.subr.bf16.mxu0 0
  %239 = vmatpush1.bf16.msra.mxu0 0
  %240 = vmatprep.subr.bf16.mxu0 0
  %241 = vmatpush1.bf16.msra.mxu0 0
  %242 = vmatprep.subr.bf16.mxu0 0
  %243 = vmatpush1.bf16.msra.mxu0 %v166
  %244 = vmatprep.subr.bf16.mxu0 0
  %245 = vmatpush1.bf16.msra.mxu0 %v165
  %246 = vmatprep.subr.bf16.mxu0 0
  %247 = vmatpush2.bf16.msra.mxu0 0
  %248 = vmatprep.subr.bf16.mxu0 0
  %249 = vmatpush2.bf16.msra.mxu0 0
  %250 = vmatprep.subr.bf16.mxu0 0
  %251 = vmatpush2.bf16.msra.mxu0 0
  %252 = vmatprep.subr.bf16.mxu0 0
  %253 = vmatpush2.bf16.msra.mxu0 0
  %254 = vmatprep.subr.bf16.mxu0 0
  %255 = vmatpush2.bf16.msra.mxu0 0
  %256 = vmatprep.subr.bf16.mxu0 0
  %257 = vmatpush2.bf16.msra.mxu0 0
  %258 = vmatprep.subr.bf16.mxu0 0
  %259 = vmatpush2.bf16.msra.mxu0 0
  %260 = vmatprep.subr.bf16.mxu0 0
  %261 = vmatpush2.bf16.msra.mxu0 0
  %262 = vmatprep.mubr.bf16.mxu0 0
  %263 = vmatmul.mubr.bf16.gmra.mxu0 %v187
  %v264 = vpop.f32.mrf.mxu0
  %v265 = vadd.f32 %v224, %v264
  %v266 = vpop.f32.mrf.mxu0
  %v267 = vpop.f32.mrf.mxu0
  %v268 = vadd.f32 %v227, %v267
  %v269 = vpop.f32.mrf.mxu0
  %270 = vdwg.mxu0
  %v271 = vpack.c.bf16 %v268, %v265
  %v273 = vunpack.c.l.b16 %v271
  %v274 = vunpack.c.h.b16 %v271
  %v275 = vpack.c.b16 %v273, %v273
  %v276 = vpack.c.b16 %v274, %v274
  %279 = vst [vmem:[%s3] sm:$0xf] %v275
  %280 = vst [vmem:[%s3 + $0x4] sm:$0xf] %v276
  // Predicated region
  $region14: #{binary_net_forward.45} parent=0 // pred_check
    _
  $region15: #{binary_net_forward.45} parent=0 // pred_check_branch
    %282 = sbr.rel (0) target = $region17
  $region16: #{binary_net_forward.45} parent=0 // pred_region
    _
  $region17: #{binary_net_forward.45} parent=0 // pred_fallthru
    _
  // Predicated region
  $region18: #{binary_net_forward.45} parent=0 // pred_check
    _
  $region19: #{binary_net_forward.45} parent=0 // pred_check_branch
    %284 = sbr.rel (0) target = $region21
  $region20: #{binary_net_forward.45} parent=0 // pred_region
    _
  $region21: #{binary_net_forward.45} parent=0 // pred_fallthru
    _

// kernel: binary_net_forward.47
$region0: #{binary_net_forward.47}
  #allocation0 [shape = 'u32[]', space=smem, size = 0x4, offset = 0x4, fixed_abs, tag = 'smem constant byte address 0x4 - core index']
  #allocation1 [shape = 'u32[144,128]{1,0:T(1,128)}', space=vmem, size = 0x12000, scoped, tag = 'internal scratch']
  %s0 = inlined_call_operand.vmem [shape: bf16[16,16], index: 0, kind: input, shape index: {}]
  %s1 = inlined_call_operand.vmem [shape: bf16[16,128], index: 1, kind: input, shape index: {}]
  %s2 = inlined_call_operand.vmem [shape: f32[1,128], index: 2, kind: input, shape index: {}]
  %s3 = inlined_call_operand.vmem [shape: bf16[16,128], index: 3, kind: output, shape index: {}]
  %s4 = sld [smem:[#allocation0]]
  $region22: #{binary_net_forward.47} parent=0
    _
  %s6 = ssub.s32 1, %s4
  %s7 = scalar_select 0, %s6, %s4
  // Predicated region
  $region2: #{binary_net_forward.47} parent=0 // pred_check
    _
  $region3: #{binary_net_forward.47} parent=0 // pred_check_branch
    %9 = sbr.rel (0) target = $region5
  $region4: #{binary_net_forward.47} parent=0 // pred_region
    _
  $region5: #{binary_net_forward.47} parent=0 // pred_fallthru
    _
  // Predicated region
  $region6: #{binary_net_forward.47} parent=0 // pred_check
    _
  $region7: #{binary_net_forward.47} parent=0 // pred_check_branch
    %11 = sbr.rel (0) target = $region9
  $region8: #{binary_net_forward.47} parent=0 // pred_region
    _
  $region9: #{binary_net_forward.47} parent=0 // pred_fallthru
    _
  // Predicated region
  $region10: #{binary_net_forward.47} parent=0 // pred_check
    _
  $region11: #{binary_net_forward.47} parent=0 // pred_check_branch
    %13 = sbr.rel (0) target = $region13
  $region12: #{binary_net_forward.47} parent=0 // pred_region
    _
  $region13: #{binary_net_forward.47} parent=0 // pred_fallthru
    _
  %v15 = vld [vmem:[%s0] sm:$0xf]
  %v16 = vld [vmem:[%s0 + $0x4] sm:$0xf]
  %v17 = vld [vmem:[%s1] sm:$0xf]
  %v18 = vld [vmem:[%s1 + $0x4] sm:$0xf]
  %v19 = vld [vmem:[%s2] sm:$0x1]
  %v21 = vlaneseq
  %v22 = vshrl.u32 %v21, 7
  %v23 = vsub.s32 0, %v22
  %v24 = vrot.slane %v19, %v23
  %v28 = vunpack.c.l.b16 %v15
  %v29 = vunpack.c.l.b16 %v16
  %v30 = vpack.c.b16 %v29, %v28
  %v33 = vunpack.c.l.b16 %v17
  %v34 = vunpack.c.l.b16 %v18
  %v35 = vpack.c.b16 %v34, %v33
  %vm37 = vcmask 130048
  %v39 = vsel %vm37, %v30, 0
  %41 = vmatprep.subr.bf16.mxu0 0
  %42 = vmatpush1.bf16.msra.mxu0 0
  %43 = vmatprep.subr.bf16.mxu0 0
  %44 = vmatpush1.bf16.msra.mxu0 0
  %45 = vmatprep.subr.bf16.mxu0 0
  %46 = vmatpush1.bf16.msra.mxu0 0
  %47 = vmatprep.subr.bf16.mxu0 0
  %48 = vmatpush1.bf16.msra.mxu0 0
  %49 = vmatprep.subr.bf16.mxu0 0
  %50 = vmatpush1.bf16.msra.mxu0 0
  %51 = vmatprep.subr.bf16.mxu0 0
  %52 = vmatpush1.bf16.msra.mxu0 0
  %53 = vmatprep.subr.bf16.mxu0 0
  %54 = vmatpush1.bf16.msra.mxu0 0
  %55 = vmatprep.subr.bf16.mxu0 0
  %56 = vmatpush1.bf16.msra.mxu0 %v35
  %57 = vmatprep.subr.bf16.mxu0 0
  %58 = vmatpush2.bf16.msra.mxu0 0
  %59 = vmatprep.subr.bf16.mxu0 0
  %60 = vmatpush2.bf16.msra.mxu0 0
  %61 = vmatprep.subr.bf16.mxu0 0
  %62 = vmatpush2.bf16.msra.mxu0 0
  %63 = vmatprep.subr.bf16.mxu0 0
  %64 = vmatpush2.bf16.msra.mxu0 0
  %65 = vmatprep.subr.bf16.mxu0 0
  %66 = vmatpush2.bf16.msra.mxu0 0
  %67 = vmatprep.subr.bf16.mxu0 0
  %68 = vmatpush2.bf16.msra.mxu0 0
  %69 = vmatprep.subr.bf16.mxu0 0
  %70 = vmatpush2.bf16.msra.mxu0 0
  %71 = vmatprep.subr.bf16.mxu0 0
  %72 = vmatpush2.bf16.msra.mxu0 0
  %73 = vmatprep.mubr.bf16.mxu0 0
  %74 = vmatmul.mubr.bf16.gmra.mxu0 %v39
  %v75 = vpop.f32.mrf.mxu0
  %v76 = vadd.f32 %v24, %v75
  %v77 = vpop.f32.mrf.mxu0
  %v78 = vpop.f32.mrf.mxu0
  %v79 = vadd.f32 %v24, %v78
  %v80 = vpop.f32.mrf.mxu0
  %81 = vdwg.mxu0
  %v82 = vpack.c.bf16 %v79, %v76
  %v84 = vunpack.c.l.b16 %v82
  %v85 = vunpack.c.h.b16 %v82
  %v86 = vpack.c.b16 %v84, %v84
  %v87 = vpack.c.b16 %v85, %v85
  %90 = vst [vmem:[%s3] sm:$0xf] %v86
  %91 = vst [vmem:[%s3 + $0x4] sm:$0xf] %v87
  // Predicated region
  $region14: #{binary_net_forward.47} parent=0 // pred_check
    _
  $region15: #{binary_net_forward.47} parent=0 // pred_check_branch
    %93 = sbr.rel (0) target = $region17
  $region16: #{binary_net_forward.47} parent=0 // pred_region
    _
  $region17: #{binary_net_forward.47} parent=0 // pred_fallthru
    _
  // Predicated region
  $region18: #{binary_net_forward.47} parent=0 // pred_check
    _
  $region19: #{binary_net_forward.47} parent=0 // pred_check_branch
    %95 = sbr.rel (0) target = $region21
  $region20: #{binary_net_forward.47} parent=0 // pred_region
    _
  $region21: #{binary_net_forward.47} parent=0 // pred_fallthru
    _

// kernel: tile.38
$region0: #{tile.38}
  #allocation0 [shape = 's32[1]{0}', space=sflag, size = 0x4, scoped, tag = 'scoped memory for tile.38']
  %s0 = inlined_call_operand.vmem [shape: f32[4], index: 0, kind: input, shape index: {}]
  %s1 = inlined_call_operand.vmem [shape: f32[4,4], index: 1, kind: output, shape index: {}]
  // Predicated region
  $region2: #{tile.38} parent=0 // pred_check
    _
  $region3: #{tile.38} parent=0 // pred_check_branch
    %3 = sbr.rel (0) target = $region5
  $region4: #{tile.38} parent=0 // pred_region
    _
  $region5: #{tile.38} parent=0 // pred_fallthru
    _
  %v4 = vld [vmem:[%s0] ss:$0 sm:$0xff]
  %5 = vst [vmem:[%s1] sm:$0xf] %v4

// kernel: tile.39
$region0: #{tile.39}
  %s0 = inlined_call_operand.vmem [shape: f32[4,4], index: 0, kind: input, shape index: {}]
  %s1 = inlined_call_operand.vmem [shape: f32[16], index: 1, kind: output, shape index: {}]
  $region1: #{tile.39} parent=0
    #allocation0 [shape = 'u8[4096]{0}', space=vmem, size = 0x1000, scoped, tag = 'scoped mem for output reshape']
    #allocation1 [shape = 'u8[4096]{0}', space=vmem, size = 0x1000, scoped, tag = 'scoped mem for input reshape']
    %s3 = sshll.u32 1, 4
    %s4 = ssub.s32 %s3, 1
    %v5 = vld [vmem:[%s0] sm:%s4]
    %6 = vst [vmem:[#allocation1] sm:%s4] %v5
    %v7 = vld [vmem:[#allocation1] sm:$0x1]
    %vm8 = vcmask 31744
    %9 = vst.msk [vmem:[#allocation0] sm:$0x1] %vm8, %v7
    %s10 = scalar_lea.vmem [#allocation1], 3
    %v11 = vld [vmem:[%s10] sm:$0x1]
    %12 = vrot.lane.b32.xlu0 %v11, 12
    %v13 = vpop.permute.xlu0 %12
    %vm14 = vcmask 130144
    %15 = vst.msk [vmem:[#allocation0] sm:$0x1] %vm14, %v13
    %s16 = scalar_lea.vmem [#allocation1], 2
    %v17 = vld [vmem:[%s16] sm:$0x1]
    %18 = vrot.lane.b32.xlu0 %v17, 8
    %v19 = vpop.permute.xlu0 %18
    %vm20 = vcmask 97344
    %21 = vst.msk [vmem:[#allocation0] sm:$0x1] %vm20, %v19
    %s22 = scalar_lea.vmem [#allocation1], 1
    %v23 = vld [vmem:[%s22] sm:$0x1]
    %24 = vrot.lane.b32.xlu0 %v23, 4
    %v25 = vpop.permute.xlu0 %24
    %vm26 = vcmask 64544
    %27 = vst.msk [vmem:[#allocation0] sm:$0x1] %vm26, %v25
    %s29 = sshll.u32 1, 1
    %s30 = ssub.s32 %s29, 1
    %v32 = vld [vmem:[#allocation0] sm:%s30]
    %s33 = sshll.u32 1, 1
    %s34 = ssub.s32 %s33, 1
    %35 = vst [vmem:[%s1] sm:%s34] %v32

// kernel: binary_net_forward.50
$region0: #{binary_net_forward.50}
  #allocation0 [shape = 'u32[]', space=smem, size = 0x4, offset = 0x4, fixed_abs, tag = 'smem constant byte address 0x4 - core index']
  #allocation1 [shape = 'u32[144,128]{1,0:T(1,128)}', space=vmem, size = 0x12000, scoped, tag = 'internal scratch']
  %s0 = inlined_call_operand.vmem [shape: bf16[64,8], index: 0, kind: input, shape index: {}]
  %s1 = inlined_call_operand.vmem [shape: bf16[8,128], index: 1, kind: input, shape index: {}]
  %s2 = inlined_call_operand.vmem [shape: f32[1,128], index: 2, kind: input, shape index: {}]
  %s3 = inlined_call_operand.vmem [shape: bf16[64,128], index: 3, kind: output, shape index: {}]
  %s4 = sld [smem:[#allocation0]]
  $region22: #{binary_net_forward.50} parent=0
    _
  %s6 = ssub.s32 1, %s4
  %s7 = scalar_select 0, %s6, %s4
  // Predicated region
  $region2: #{binary_net_forward.50} parent=0 // pred_check
    _
  $region3: #{binary_net_forward.50} parent=0 // pred_check_branch
    %9 = sbr.rel (0) target = $region5
  $region4: #{binary_net_forward.50} parent=0 // pred_region
    _
  $region5: #{binary_net_forward.50} parent=0 // pred_fallthru
    _
  // Predicated region
  $region6: #{binary_net_forward.50} parent=0 // pred_check
    _
  $region7: #{binary_net_forward.50} parent=0 // pred_check_branch
    %11 = sbr.rel (0) target = $region9
  $region8: #{binary_net_forward.50} parent=0 // pred_region
    _
  $region9: #{binary_net_forward.50} parent=0 // pred_fallthru
    _
  // Predicated region
  $region10: #{binary_net_forward.50} parent=0 // pred_check
    _
  $region11: #{binary_net_forward.50} parent=0 // pred_check_branch
    %13 = sbr.rel (0) target = $region13
  $region12: #{binary_net_forward.50} parent=0 // pred_region
    _
  $region13: #{binary_net_forward.50} parent=0 // pred_fallthru
    _
  %v15 = vld [vmem:[%s0] sm:$0xf]
  %v16 = vld [vmem:[%s0 + $0x4] sm:$0xf]
  %v17 = vld [vmem:[%s0 + $0x8] sm:$0xf]
  %v18 = vld [vmem:[%s0 + $0xc] sm:$0xf]
  %v19 = vld [vmem:[%s0 + $0x10] sm:$0xf]
  %v20 = vld [vmem:[%s0 + $0x14] sm:$0xf]
  %v21 = vld [vmem:[%s0 + $0x18] sm:$0xf]
  %v22 = vld [vmem:[%s0 + $0x1c] sm:$0xf]
  %v23 = vld [vmem:[%s1] sm:$0xf]
  %v24 = vld [vmem:[%s2] sm:$0x1]
  %v26 = vlaneseq
  %v27 = vshrl.u32 %v26, 7
  %v28 = vsub.s32 0, %v27
  %v29 = vrot.slane %v24, %v28
  %v39 = vunpack.c.l.b16 %v15
  %v40 = vunpack.c.l.b16 %v16
  %v41 = vunpack.c.l.b16 %v17
  %v42 = vunpack.c.l.b16 %v18
  %v43 = vunpack.c.l.b16 %v19
  %v44 = vunpack.c.l.b16 %v20
  %v45 = vunpack.c.l.b16 %v21
  %v46 = vunpack.c.l.b16 %v22
  %v47 = vpack.c.b16 %v40, %v39
  %v48 = vpack.c.b16 %v42, %v41
  %v49 = vpack.c.b16 %v44, %v43
  %v50 = vpack.c.b16 %v46, %v45
  %vm51 = vcmask 64512
  %v53 = vsel %vm51, %v47, 0
  %v56 = vsel %vm51, %v48, 0
  %v59 = vsel %vm51, %v49, 0
  %v62 = vsel %vm51, %v50, 0
  %vm64 = vcmask 1043456
  %v66 = vsel %vm64, %v23, 0
  %68 = vmatprep.subr.bf16.mxu0 0
  %69 = vmatpush1.bf16.msra.mxu0 0
  %70 = vmatprep.subr.bf16.mxu0 0
  %71 = vmatpush1.bf16.msra.mxu0 0
  %72 = vmatprep.subr.bf16.mxu0 0
  %73 = vmatpush1.bf16.msra.mxu0 0
  %74 = vmatprep.subr.bf16.mxu0 0
  %75 = vmatpush1.bf16.msra.mxu0 0
  %76 = vmatprep.subr.bf16.mxu0 0
  %77 = vmatpush1.bf16.msra.mxu0 0
  %78 = vmatprep.subr.bf16.mxu0 0
  %79 = vmatpush1.bf16.msra.mxu0 0
  %80 = vmatprep.subr.bf16.mxu0 0
  %81 = vmatpush1.bf16.msra.mxu0 0
  %82 = vmatprep.subr.bf16.mxu0 0
  %83 = vmatpush1.bf16.msra.mxu0 %v66
  %84 = vmatprep.subr.bf16.mxu0 0
  %85 = vmatpush2.bf16.msra.mxu0 0
  %86 = vmatprep.subr.bf16.mxu0 0
  %87 = vmatpush2.bf16.msra.mxu0 0
  %88 = vmatprep.subr.bf16.mxu0 0
  %89 = vmatpush2.bf16.msra.mxu0 0
  %90 = vmatprep.subr.bf16.mxu0 0
  %91 = vmatpush2.bf16.msra.mxu0 0
  %92 = vmatprep.subr.bf16.mxu0 0
  %93 = vmatpush2.bf16.msra.mxu0 0
  %94 = vmatprep.subr.bf16.mxu0 0
  %95 = vmatpush2.bf16.msra.mxu0 0
  %96 = vmatprep.subr.bf16.mxu0 0
  %97 = vmatpush2.bf16.msra.mxu0 0
  %98 = vmatprep.subr.bf16.mxu0 0
  %99 = vmatpush2.bf16.msra.mxu0 0
  %100 = vmatprep.mubr.bf16.mxu0 0
  %101 = vmatmul.mubr.bf16.gmra.mxu0 %v53
  %v102 = vpop.f32.mrf.mxu0
  %v103 = vadd.f32 %v29, %v102
  %v104 = vpop.f32.mrf.mxu0
  %v105 = vpop.f32.mrf.mxu0
  %v106 = vadd.f32 %v29, %v105
  %v107 = vpop.f32.mrf.mxu0
  %108 = vmatprep.mubr.bf16.mxu0 0
  %109 = vmatmul.mubr.bf16.gmra.mxu0 %v56
  %v110 = vpop.f32.mrf.mxu0
  %v111 = vadd.f32 %v29, %v110
  %v112 = vpop.f32.mrf.mxu0
  %v113 = vpop.f32.mrf.mxu0
  %v114 = vadd.f32 %v29, %v113
  %v115 = vpop.f32.mrf.mxu0
  %116 = vmatprep.mubr.bf16.mxu0 0
  %117 = vmatmul.mubr.bf16.gmra.mxu0 %v59
  %v118 = vpop.f32.mrf.mxu0
  %v119 = vadd.f32 %v29, %v118
  %v120 = vpop.f32.mrf.mxu0
  %v121 = vpop.f32.mrf.mxu0
  %v122 = vadd.f32 %v29, %v121
  %v123 = vpop.f32.mrf.mxu0
  %124 = vmatprep.mubr.bf16.mxu0 0
  %125 = vmatmul.mubr.bf16.gmra.mxu0 %v62
  %v126 = vpop.f32.mrf.mxu0
  %v127 = vadd.f32 %v29, %v126
  %v128 = vpop.f32.mrf.mxu0
  %v129 = vpop.f32.mrf.mxu0
  %v130 = vadd.f32 %v29, %v129
  %v131 = vpop.f32.mrf.mxu0
  %132 = vdwg.mxu0
  %v133 = vpack.c.bf16 %v106, %v103
  %v134 = vpack.c.bf16 %v114, %v111
  %v135 = vpack.c.bf16 %v122, %v119
  %v136 = vpack.c.bf16 %v130, %v127
  %v141 = vunpack.c.l.b16 %v133
  %v142 = vunpack.c.h.b16 %v133
  %v143 = vunpack.c.l.b16 %v134
  %v144 = vunpack.c.h.b16 %v134
  %v145 = vunpack.c.l.b16 %v135
  %v146 = vunpack.c.h.b16 %v135
  %v147 = vunpack.c.l.b16 %v136
  %v148 = vunpack.c.h.b16 %v136
  %v149 = vpack.c.b16 %v141, %v141
  %v150 = vpack.c.b16 %v142, %v142
  %v151 = vpack.c.b16 %v143, %v143
  %v152 = vpack.c.b16 %v144, %v144
  %v153 = vpack.c.b16 %v145, %v145
  %v154 = vpack.c.b16 %v146, %v146
  %v155 = vpack.c.b16 %v147, %v147
  %v156 = vpack.c.b16 %v148, %v148
  %165 = vst [vmem:[%s3] sm:$0xf] %v149
  %166 = vst [vmem:[%s3 + $0x4] sm:$0xf] %v150
  %167 = vst [vmem:[%s3 + $0x8] sm:$0xf] %v151
  %168 = vst [vmem:[%s3 + $0xc] sm:$0xf] %v152
  %169 = vst [vmem:[%s3 + $0x10] sm:$0xf] %v153
  %170 = vst [vmem:[%s3 + $0x14] sm:$0xf] %v154
  %171 = vst [vmem:[%s3 + $0x18] sm:$0xf] %v155
  %172 = vst [vmem:[%s3 + $0x1c] sm:$0xf] %v156
  // Predicated region
  $region14: #{binary_net_forward.50} parent=0 // pred_check
    _
  $region15: #{binary_net_forward.50} parent=0 // pred_check_branch
    %174 = sbr.rel (0) target = $region17
  $region16: #{binary_net_forward.50} parent=0 // pred_region
    _
  $region17: #{binary_net_forward.50} parent=0 // pred_fallthru
    _
  // Predicated region
  $region18: #{binary_net_forward.50} parent=0 // pred_check
    _
  $region19: #{binary_net_forward.50} parent=0 // pred_check_branch
    %176 = sbr.rel (0) target = $region21
  $region20: #{binary_net_forward.50} parent=0 // pred_region
    _
  $region21: #{binary_net_forward.50} parent=0 // pred_fallthru
    _

// kernel: binary_net_forward.48
$region0: #{binary_net_forward.48}
  #allocation0 [shape = 'u32[]', space=smem, size = 0x4, offset = 0x4, fixed_abs, tag = 'smem constant byte address 0x4 - core index']
  #allocation1 [shape = 'u32[144,128]{1,0:T(1,128)}', space=vmem, size = 0x12000, scoped, tag = 'internal scratch']
  #allocation2 [shape = 'f32[128,128]{1,0:T(8,128)}', space=vmem, size = 0x10000, scoped, tag = 'scratch operand']
  %s0 = inlined_call_operand.vmem [shape: bf16[3,128,16], index: 0, kind: input, shape index: {}]
  %s1 = inlined_call_operand.vmem [shape: bf16[3,3,16,128], index: 1, kind: input, shape index: {}]
  %s2 = inlined_call_operand.vmem [shape: f32[1,128], index: 2, kind: input, shape index: {}]
  %s3 = inlined_call_operand.vmem [shape: bf16[128,128], index: 3, kind: output, shape index: {}]
  %s4 = sld [smem:[#allocation0]]
  $region53: #{binary_net_forward.48} parent=0
    _
  %s6 = ssub.s32 1, %s4
  %s7 = scalar_select 0, %s6, %s4
  loop: start=0, step=1, limit=5
  $region2: #{binary_net_forward.48} parent=0 // loop_pre_header
    _
  $region3: #{binary_net_forward.48} parent=0 // loop_header
    %s9 = sphi 0, %s13
    %p10 = scmp.ge.s32.totalorder %s9, 5
    %s16 = sphi 0, %s28
    %s17 = sphi 0, %s24
    %s18 = sphi 0, %s16
    %s19 = sphi 0, %s17
    %s20 = sphi 0, %s18
    %s21 = sphi 0, %s19
    %s33 = sphi 0, %s35
    %s36 = sphi 0, %s33
    %s37 = sphi 0, %s36
    %s53 = sphi 0, %s37
    %s59 = sphi 0, %s61
    %s62 = sphi 0, %s59
    %s63 = sphi 0, %s62
    %s79 = sphi 0, %s63
    %s83 = sphi 0, %s83
    %s85 = sphi 0, %s83
    %s86 = sphi 0, %s85
    %s100 = sphi 0, %s86
    %s106 = sphi 0, %s108
    %s109 = sphi 0, %s106
    %s110 = sphi 0, %s109
    %s126 = sphi 0, %s110
  $region4: #{binary_net_forward.48} parent=0 // loop_header_branch
    %12 = sbr.rel (%p10) target = $region8
  $region5: #{binary_net_forward.48} parent=0 // loop_body
    %s14 = ssub.s32 %s9, 1
    %s15 = ssub.s32 %s9, 2
    %s22 = sadd.s32 1, %s17
    %p23 = scmp.ge.s32.totalorder %s22, 3
    %s24 = scalar_select %p23, 0, %s22
    %s25 = sadd.s32 1, %s16
    %s26 = scalar_select %p23, %s25, %s16
    %p27 = scmp.ge.s32.totalorder %s26, 1
    %s28 = scalar_select %p27, 0, %s26
    %s29 = ssub.s32 %s17, %s24
    %s30 = ssub.s32 %s16, %s28
    %s31 = sor.u32 %s29, %s30
    %p32 = scmp.eq.s32.totalorder %s31, 0
    %s34 = sadd.s32 %s33, 1
    %s35 = scalar_select %p32, %s33, %s34
    %p38 = pneg %p32
    %p39 = scmp.eq.s32.totalorder %s9, 2
    %p40 = por %p38, %p39
    %p41 = scmp.ne.s32.totalorder %s33, %s36
    %p42 = scmp.eq.s32.totalorder %s9, 0
    %p43 = por %p41, %p42
    %p44 = scmp.ne.s32.totalorder %s33, %s36
    %p45 = scmp.eq.s32.totalorder %s14, 2
    %p46 = por %p44, %p45
    %p47 = scmp.ne.s32.totalorder %s36, %s37
    %p48 = scmp.eq.s32.totalorder %s14, 0
    %p49 = por %p47, %p48
    %p50 = scmp.ne.s32.totalorder %s36, %s37
    %p51 = scmp.eq.s32.totalorder %s15, 2
    %p52 = por %p50, %p51
    %p54 = scmp.ne.s32.totalorder %s37, %s53
    %p55 = scmp.eq.s32.totalorder %s15, 0
    %p56 = por %p54, %p55
    %s57 = ssub.s32 %s17, %s24
    %p58 = scmp.eq.s32.totalorder %s57, 0
    %s60 = sadd.s32 %s59, 1
    %s61 = scalar_select %p58, %s59, %s60
    %p64 = pneg %p58
    %p65 = scmp.eq.s32.totalorder %s9, 2
    %p66 = por %p64, %p65
    %p67 = scmp.ne.s32.totalorder %s59, %s62
    %p68 = scmp.eq.s32.totalorder %s9, 0
    %p69 = por %p67, %p68
    %p70 = scmp.ne.s32.totalorder %s59, %s62
    %p71 = scmp.eq.s32.totalorder %s14, 2
    %p72 = por %p70, %p71
    %p73 = scmp.ne.s32.totalorder %s62, %s63
    %p74 = scmp.eq.s32.totalorder %s14, 0
    %p75 = por %p73, %p74
    %p76 = scmp.ne.s32.totalorder %s62, %s63
    %p77 = scmp.eq.s32.totalorder %s15, 2
    %p78 = por %p76, %p77
    %p80 = scmp.ne.s32.totalorder %s63, %s79
    %p81 = scmp.eq.s32.totalorder %s15, 0
    %p82 = por %p80, %p81
    %s84 = sadd.s32 %s83, 1
    %p87 = scmp.eq.s32.totalorder %s9, 2
    %p88 = scmp.ne.s32.totalorder %s83, %s85
    %p89 = scmp.eq.s32.totalorder %s9, 0
    %p90 = por %p88, %p89
    %p91 = scmp.ne.s32.totalorder %s83, %s85
    %p92 = scmp.eq.s32.totalorder %s14, 2
    %p93 = por %p91, %p92
    %p94 = scmp.ne.s32.totalorder %s85, %s86
    %p95 = scmp.eq.s32.totalorder %s14, 0
    %p96 = por %p94, %p95
    %p97 = scmp.ne.s32.totalorder %s85, %s86
    %p98 = scmp.eq.s32.totalorder %s15, 2
    %p99 = por %p97, %p98
    %p101 = scmp.ne.s32.totalorder %s86, %s100
    %p102 = scmp.eq.s32.totalorder %s15, 0
    %p103 = por %p101, %p102
    %s104 = ssub.s32 %s16, %s28
    %p105 = scmp.eq.s32.totalorder %s104, 0
    %s107 = sadd.s32 %s106, 1
    %s108 = scalar_select %p105, %s106, %s107
    %p111 = pneg %p105
    %p112 = scmp.eq.s32.totalorder %s9, 2
    %p113 = por %p111, %p112
    %p114 = scmp.ne.s32.totalorder %s106, %s109
    %p115 = scmp.eq.s32.totalorder %s9, 0
    %p116 = por %p114, %p115
    %p117 = scmp.ne.s32.totalorder %s106, %s109
    %p118 = scmp.eq.s32.totalorder %s14, 2
    %p119 = por %p117, %p118
    %p120 = scmp.ne.s32.totalorder %s109, %s110
    %p121 = scmp.eq.s32.totalorder %s14, 0
    %p122 = por %p120, %p121
    %p123 = scmp.ne.s32.totalorder %s109, %s110
    %p124 = scmp.eq.s32.totalorder %s15, 2
    %p125 = por %p123, %p124
    %p127 = scmp.ne.s32.totalorder %s110, %s126
    %p128 = scmp.eq.s32.totalorder %s15, 0
    %p129 = por %p127, %p128
    %p130 = scmp.le.s32.totalorder 1, %s9
    %p131 = scmp.lt.s32.totalorder %s9, 4
    %p132 = pnand %p130, %p131
    %p133 = pneg %p132
    // Predicated region
    $region9: #{binary_net_forward.48} parent=5 // pred_check
      _
    $region10: #{binary_net_forward.48} parent=5 // pred_check_branch
      %135 = sbr.rel (%p132) target = $region12
    $region11: #{binary_net_forward.48} parent=5 // pred_region
      %s136 = ssub.s32 %s9, 1
      // Predicated region
      $region13: #{binary_net_forward.48} parent=11 // pred_check
        %p137 = pneg %p96
      $region14: #{binary_net_forward.48} parent=11 // pred_check_branch
        %139 = sbr.rel (%p137) target = $region16
      $region15: #{binary_net_forward.48} parent=11 // pred_region
        _
      $region16: #{binary_net_forward.48} parent=11 // pred_fallthru
        _
    $region12: #{binary_net_forward.48} parent=5 // pred_fallthru
      _
    %p140 = scmp.lt.s32.totalorder %s9, 3
    // Predicated region
    $region17: #{binary_net_forward.48} parent=5 // pred_check
      %p141 = pneg %p140
    $region18: #{binary_net_forward.48} parent=5 // pred_check_branch
      %143 = sbr.rel (%p141) target = $region20
    $region19: #{binary_net_forward.48} parent=5 // pred_region
      // Predicated region
      $region21: #{binary_net_forward.48} parent=19 // pred_check
        %p144 = pneg %p43
      $region22: #{binary_net_forward.48} parent=19 // pred_check_branch
        %146 = sbr.rel (%p144) target = $region24
      $region23: #{binary_net_forward.48} parent=19 // pred_region
        %s147 = smul.u32 16, %s16
        %p148 = scmp.lt.s32.totalorder %s17, 2
        %s149 = scalar_select %p148, %s17, 2
        %p150 = scmp.lt.s32.totalorder %s147, 15
        %s151 = scalar_select %p150, %s147, 15
        %s152 = smul.addr %s149, 16
        %s153 = sadd.s32 %s151, %s152
        %s154 = smul.addr %s153, 4
        %s155 = scalar_lea.vmem %s0, %s154
        %s156 = smul.u32 16, %s16
      $region24: #{binary_net_forward.48} parent=19 // pred_fallthru
        _
      // Predicated region
      $region25: #{binary_net_forward.48} parent=19 // pred_check
        %p157 = pneg %p69
      $region26: #{binary_net_forward.48} parent=19 // pred_check_branch
        %159 = sbr.rel (%p157) target = $region28
      $region27: #{binary_net_forward.48} parent=19 // pred_region
        %p160 = scmp.lt.s32.totalorder %s17, 2
        %s161 = scalar_select %p160, %s17, 2
        %s162 = smul.addr %s161, 6
        %s163 = smul.addr %s162, 4
        %s164 = scalar_lea.vmem %s1, %s163
      $region28: #{binary_net_forward.48} parent=19 // pred_fallthru
        _
    $region20: #{binary_net_forward.48} parent=5 // pred_fallthru
      _
    %p165 = scmp.le.s32.totalorder 1, %s9
    %p166 = scmp.lt.s32.totalorder %s9, 4
    %p167 = pnand %p165, %p166
    %p168 = pneg %p167
    // Predicated region
    $region29: #{binary_net_forward.48} parent=5 // pred_check
      _
    $region30: #{binary_net_forward.48} parent=5 // pred_check_branch
      %170 = sbr.rel (%p167) target = $region32
    $region31: #{binary_net_forward.48} parent=5 // pred_region
      %s171 = ssub.s32 %s9, 1
      %s172 = smul.u32 16, %s18
      %p173 = scmp.lt.s32.totalorder %s19, 2
      %s174 = scalar_select %p173, %s19, 2
      %p175 = scmp.lt.s32.totalorder %s172, 15
      %s176 = scalar_select %p175, %s172, 15
      %s177 = smul.addr %s174, 16
      %s178 = sadd.s32 %s176, %s177
      %s179 = smul.addr %s178, 4
      %s180 = scalar_lea.vmem %s0, %s179
      %p181 = pneg %p49
      %p182 = pneg %p46
      %p183 = scmp.lt.s32.totalorder %s19, 2
      %s184 = scalar_select %p183, %s19, 2
      %s185 = smul.addr %s184, 6
      %s186 = smul.addr %s185, 4
      %s187 = scalar_lea.vmem %s1, %s186
      %p188 = pneg %p75
      %p189 = pneg %p72
      %p190 = pneg %p96
      %p191 = pneg %p93
      %p192 = pneg %p122
      %p193 = pneg %p119
      %s194 = smul.u32 16, %s18
      %p195 = scmp.lt.s32.totalorder %s194, 15
      %s196 = scalar_select %p195, %s194, 15
      %s197 = smul.addr %s196, 4
      %s198 = scalar_lea.vmem %s3, %s197
      %s199 = smul.u32 16, %s18
      %p200 = scmp.lt.s32.totalorder %s19, 2
      %s201 = scalar_select %p200, %s19, 2
      %p202 = scmp.lt.s32.totalorder %s199, 15
      %s203 = scalar_select %p202, %s199, 15
      %s204 = smul.addr %s201, 16
      %s205 = sadd.s32 %s203, %s204
      %s206 = smul.addr %s205, 4
      %s207 = scalar_lea.vmem %s0, %s206
      %s208 = smul.u32 16, %s18
      %p209 = scmp.lt.s32.totalorder %s19, 2
      %s210 = scalar_select %p209, %s19, 2
      %s211 = smul.addr %s210, 6
      %s212 = smul.addr %s211, 4
      %s213 = scalar_lea.vmem %s1, %s212
      %s214 = smul.u32 16, %s18
      %p215 = scmp.lt.s32.totalorder %s214, 15
      %s216 = scalar_select %p215, %s214, 15
      %s217 = smul.addr %s216, 4
      %s218 = scalar_lea.vmem %s3, %s217
      %s219 = smul.u32 16, %s18
      %p221 = scmp.eq.s32.totalorder %s19, 0
      // Predicated region
      $region33: #{binary_net_forward.48} parent=31 // pred_check
        %p222 = pneg %p221
      $region34: #{binary_net_forward.48} parent=31 // pred_check_branch
        %224 = sbr.rel (%p222) target = $region36
      $region35: #{binary_net_forward.48} parent=31 // pred_region
        %225 = vst [vmem:[#allocation2] sm:$0xff] 0.0
        %226 = vst [vmem:[#allocation2 + $0x8] sm:$0xff] 0.0
        %227 = vst [vmem:[#allocation2 + $0x10] sm:$0xff] 0.0
        %228 = vst [vmem:[#allocation2 + $0x18] sm:$0xff] 0.0
        %229 = vst [vmem:[#allocation2 + $0x20] sm:$0xff] 0.0
        %230 = vst [vmem:[#allocation2 + $0x28] sm:$0xff] 0.0
        %231 = vst [vmem:[#allocation2 + $0x30] sm:$0xff] 0.0
        %232 = vst [vmem:[#allocation2 + $0x38] sm:$0xff] 0.0
        %233 = vst [vmem:[#allocation2 + $0x40] sm:$0xff] 0.0
        %234 = vst [vmem:[#allocation2 + $0x48] sm:$0xff] 0.0
        %235 = vst [vmem:[#allocation2 + $0x50] sm:$0xff] 0.0
        %236 = vst [vmem:[#allocation2 + $0x58] sm:$0xff] 0.0
        %237 = vst [vmem:[#allocation2 + $0x60] sm:$0xff] 0.0
        %238 = vst [vmem:[#allocation2 + $0x68] sm:$0xff] 0.0
        %239 = vst [vmem:[#allocation2 + $0x70] sm:$0xff] 0.0
        %240 = vst [vmem:[#allocation2 + $0x78] sm:$0xff] 0.0
      $region36: #{binary_net_forward.48} parent=31 // pred_fallthru
        _
      %v241 = vld [vmem:[%s207] sm:$0xf]
      %v242 = vld [vmem:[%s207 + $0x4] sm:$0xf]
      %v243 = vld [vmem:[%s207 + $0x8] sm:$0xf]
      %v244 = vld [vmem:[%s207 + $0xc] sm:$0xf]
      %v245 = vld [vmem:[%s207 + $0x10] sm:$0xf]
      %v246 = vld [vmem:[%s207 + $0x14] sm:$0xf]
      %v247 = vld [vmem:[%s207 + $0x18] sm:$0xf]
      %v248 = vld [vmem:[%s207 + $0x1c] sm:$0xf]
      %v249 = vld [vmem:[%s207 + $0x20] sm:$0xf]
      %v250 = vld [vmem:[%s207 + $0x24] sm:$0xf]
      %v251 = vld [vmem:[%s207 + $0x28] sm:$0xf]
      %v252 = vld [vmem:[%s207 + $0x2c] sm:$0xf]
      %v253 = vld [vmem:[%s207 + $0x30] sm:$0xf]
      %v254 = vld [vmem:[%s207 + $0x34] sm:$0xf]
      %v255 = vld [vmem:[%s207 + $0x38] sm:$0xf]
      %v256 = vld [vmem:[%s207 + $0x3c] sm:$0xf]
      %v257 = vld [vmem:[#allocation2] sm:$0xff]
      %v258 = vld [vmem:[#allocation2 + $0x8] sm:$0xff]
      %v259 = vld [vmem:[#allocation2 + $0x10] sm:$0xff]
      %v260 = vld [vmem:[#allocation2 + $0x18] sm:$0xff]
      %v261 = vld [vmem:[#allocation2 + $0x20] sm:$0xff]
      %v262 = vld [vmem:[#allocation2 + $0x28] sm:$0xff]
      %v263 = vld [vmem:[#allocation2 + $0x30] sm:$0xff]
      %v264 = vld [vmem:[#allocation2 + $0x38] sm:$0xff]
      %v265 = vld [vmem:[#allocation2 + $0x40] sm:$0xff]
      %v266 = vld [vmem:[#allocation2 + $0x48] sm:$0xff]
      %v267 = vld [vmem:[#allocation2 + $0x50] sm:$0xff]
      %v268 = vld [vmem:[#allocation2 + $0x58] sm:$0xff]
      %v269 = vld [vmem:[#allocation2 + $0x60] sm:$0xff]
      %v270 = vld [vmem:[#allocation2 + $0x68] sm:$0xff]
      %v271 = vld [vmem:[#allocation2 + $0x70] sm:$0xff]
      %v272 = vld [vmem:[%s213] sm:$0xf]
      %v273 = vld [vmem:[%s213 + $0x4] sm:$0xf]
      %v289 = vunpack.c.l.b16 %v241
      %v290 = vunpack.c.l.b16 %v242
      %v291 = vunpack.c.l.b16 %v243
      %v292 = vunpack.c.l.b16 %v244
      %v293 = vunpack.c.l.b16 %v245
      %v294 = vunpack.c.l.b16 %v246
      %v295 = vunpack.c.l.b16 %v247
      %v296 = vunpack.c.l.b16 %v248
      %v297 = vunpack.c.l.b16 %v249
      %v298 = vunpack.c.l.b16 %v250
      %v299 = vunpack.c.l.b16 %v251
      %v300 = vunpack.c.l.b16 %v252
      %v301 = vunpack.c.l.b16 %v253
      %v302 = vunpack.c.l.b16 %v254
      %v303 = vunpack.c.l.b16 %v255
      %v304 = vpack.c.b16 %v290, %v289
      %v305 = vpack.c.b16 %v292, %v291
      %v306 = vpack.c.b16 %v294, %v293
      %v307 = vpack.c.b16 %v296, %v295
      %v308 = vpack.c.b16 %v298, %v297
      %v309 = vpack.c.b16 %v300, %v299
      %v310 = vpack.c.b16 %v302, %v301
      %v311 = vpack.c.b16 %v303, %v303
      %v314 = vunpack.c.l.b16 %v272
      %v315 = vunpack.c.l.b16 %v273
      %v316 = vpack.c.b16 %v315, %v314
      %vm318 = vcmask 130048
      %v320 = vsel %vm318, %v304, 0
      %v323 = vsel %vm318, %v305, 0
      %v326 = vsel %vm318, %v306, 0
      %v329 = vsel %vm318, %v307, 0
      %v332 = vsel %vm318, %v308, 0
      %v335 = vsel %vm318, %v309, 0
      %v338 = vsel %vm318, %v310, 0
      %v341 = vsel %vm318, %v311, 0
      %343 = vmatprep.subr.bf16.mxu0 0
      %344 = vmatpush1.bf16.msra.mxu0 0
      %345 = vmatprep.subr.bf16.mxu0 0
      %346 = vmatpush1.bf16.msra.mxu0 0
      %347 = vmatprep.subr.bf16.mxu0 0
      %348 = vmatpush1.bf16.msra.mxu0 0
      %349 = vmatprep.subr.bf16.mxu0 0
      %350 = vmatpush1.bf16.msra.mxu0 0
      %351 = vmatprep.subr.bf16.mxu0 0
      %352 = vmatpush1.bf16.msra.mxu0 0
      %353 = vmatprep.subr.bf16.mxu0 0
      %354 = vmatpush1.bf16.msra.mxu0 0
      %355 = vmatprep.subr.bf16.mxu0 0
      %356 = vmatpush1.bf16.msra.mxu0 0
      %357 = vmatprep.subr.bf16.mxu0 0
      %358 = vmatpush1.bf16.msra.mxu0 %v316
      %359 = vmatprep.subr.bf16.mxu0 0
      %360 = vmatpush2.bf16.msra.mxu0 0
      %361 = vmatprep.subr.bf16.mxu0 0
      %362 = vmatpush2.bf16.msra.mxu0 0
      %363 = vmatprep.subr.bf16.mxu0 0
      %364 = vmatpush2.bf16.msra.mxu0 0
      %365 = vmatprep.subr.bf16.mxu0 0
      %366 = vmatpush2.bf16.msra.mxu0 0
      %367 = vmatprep.subr.bf16.mxu0 0
      %368 = vmatpush2.bf16.msra.mxu0 0
      %369 = vmatprep.subr.bf16.mxu0 0
      %370 = vmatpush2.bf16.msra.mxu0 0
      %371 = vmatprep.subr.bf16.mxu0 0
      %372 = vmatpush2.bf16.msra.mxu0 0
      %373 = vmatprep.subr.bf16.mxu0 0
      %374 = vmatpush2.bf16.msra.mxu0 0
      %375 = vmatprep.mubr.bf16.mxu0 0
      %376 = vmatmul.mubr.bf16.gmra.mxu0 %v320
      %v377 = vpop.f32.mrf.mxu0
      %v378 = vadd.f32 0.0, %v377
      %v379 = vpop.f32.mrf.mxu0
      %v380 = vpop.f32.mrf.mxu0
      %v381 = vadd.f32 0.0, %v380
      %v382 = vpop.f32.mrf.mxu0
      %383 = vmatprep.mubr.bf16.mxu0 0
      %384 = vmatmul.mubr.bf16.gmra.mxu0 %v323
      %v385 = vpop.f32.mrf.mxu0
      %v386 = vadd.f32 0.0, %v385
      %v387 = vpop.f32.mrf.mxu0
      %v388 = vpop.f32.mrf.mxu0
      %v389 = vadd.f32 0.0, %v388
      %v390 = vpop.f32.mrf.mxu0
      %391 = vmatprep.mubr.bf16.mxu0 0
      %392 = vmatmul.mubr.bf16.gmra.mxu0 %v326
      %v393 = vpop.f32.mrf.mxu0
      %v394 = vadd.f32 0.0, %v393
      %v395 = vpop.f32.mrf.mxu0
      %v396 = vpop.f32.mrf.mxu0
      %v397 = vadd.f32 0.0, %v396
      %v398 = vpop.f32.mrf.mxu0
      %399 = vmatprep.mubr.bf16.mxu0 0
      %400 = vmatmul.mubr.bf16.gmra.mxu0 %v329
      %v401 = vpop.f32.mrf.mxu0
      %v402 = vadd.f32 0.0, %v401
      %v403 = vpop.f32.mrf.mxu0
      %v404 = vpop.f32.mrf.mxu0
      %v405 = vadd.f32 0.0, %v404
      %v406 = vpop.f32.mrf.mxu0
      %407 = vmatprep.mubr.bf16.mxu0 0
      %408 = vmatmul.mubr.bf16.gmra.mxu0 %v332
      %v409 = vpop.f32.mrf.mxu0
      %v410 = vadd.f32 0.0, %v409
      %v411 = vpop.f32.mrf.mxu0
      %v412 = vpop.f32.mrf.mxu0
      %v413 = vadd.f32 0.0, %v412
      %v414 = vpop.f32.mrf.mxu0
      %415 = vmatprep.mubr.bf16.mxu0 0
      %416 = vmatmul.mubr.bf16.gmra.mxu0 %v335
      %v417 = vpop.f32.mrf.mxu0
      %v418 = vadd.f32 0.0, %v417
      %v419 = vpop.f32.mrf.mxu0
      %v420 = vpop.f32.mrf.mxu0
      %v421 = vadd.f32 0.0, %v420
      %v422 = vpop.f32.mrf.mxu0
      %423 = vmatprep.mubr.bf16.mxu0 0
      %424 = vmatmul.mubr.bf16.gmra.mxu0 %v338
      %v425 = vpop.f32.mrf.mxu0
      %v426 = vadd.f32 0.0, %v425
      %v427 = vpop.f32.mrf.mxu0
      %v428 = vpop.f32.mrf.mxu0
      %v429 = vadd.f32 0.0, %v428
      %v430 = vpop.f32.mrf.mxu0
      %431 = vmatprep.mubr.bf16.mxu0 0
      %432 = vmatmul.mubr.bf16.gmra.mxu0 %v341
      %v433 = vpop.f32.mrf.mxu0
      %v434 = vadd.f32 0.0, %v433
      %v435 = vpop.f32.mrf.mxu0
      %v436 = vpop.f32.mrf.mxu0
      %v437 = vpop.f32.mrf.mxu0
      %438 = vdwg.mxu0
      %v439 = vadd.f32 %v257, %v378
      %v440 = vadd.f32 %v258, %v381
      %v441 = vadd.f32 %v259, %v386
      %v442 = vadd.f32 %v260, %v389
      %v443 = vadd.f32 %v261, %v394
      %v444 = vadd.f32 %v262, %v397
      %v445 = vadd.f32 %v263, %v402
      %v446 = vadd.f32 %v264, %v405
      %v447 = vadd.f32 %v265, %v410
      %v448 = vadd.f32 %v266, %v413
      %v449 = vadd.f32 %v267, %v418
      %v450 = vadd.f32 %v268, %v421
      %v451 = vadd.f32 %v269, %v426
      %v452 = vadd.f32 %v270, %v429
      %v453 = vadd.f32 %v271, %v434
      %s454 = scalar_lea.vmem %s213, 8
      %v455 = vld [vmem:[%s454] sm:$0xf]
      %v456 = vld [vmem:[%s454 + $0x4] sm:$0xf]
      %v458 = vunpack.c.l.b16 %v256
      %v459 = vpack.c.b16 %v458, %v303
      %vm460 = vsmask.f32 7424
      %v461 = vshrl.u32 %v304, 16
      %v463 = vshll.u32 %v304, 16
      %v465 = vrot.slane %v463, 1
      %v466 = vor.u32 %v461, %v465
      %v467 = vshll.u32 %v305, 16
      %v469 = vrot.slane %v467, 1
      %v470 = vsel %vm460, %v466, %v469
      %v471 = vshrl.u32 %v305, 16
      %v473 = vor.u32 %v471, %v469
      %v474 = vshll.u32 %v306, 16
      %v476 = vrot.slane %v474, 1
      %v477 = vsel %vm460, %v473, %v476
      %v478 = vshrl.u32 %v306, 16
      %v480 = vor.u32 %v478, %v476
      %v481 = vshll.u32 %v307, 16
      %v483 = vrot.slane %v481, 1
      %v484 = vsel %vm460, %v480, %v483
      %v485 = vshrl.u32 %v307, 16
      %v487 = vor.u32 %v485, %v483
      %v488 = vshll.u32 %v308, 16
      %v490 = vrot.slane %v488, 1
      %v491 = vsel %vm460, %v487, %v490
      %v492 = vshrl.u32 %v308, 16
      %v494 = vor.u32 %v492, %v490
      %v495 = vshll.u32 %v309, 16
      %v497 = vrot.slane %v495, 1
      %v498 = vsel %vm460, %v494, %v497
      %v499 = vshrl.u32 %v309, 16
      %v501 = vor.u32 %v499, %v497
      %v502 = vshll.u32 %v310, 16
      %v504 = vrot.slane %v502, 1
      %v505 = vsel %vm460, %v501, %v504
      %v506 = vshrl.u32 %v310, 16
      %v508 = vor.u32 %v506, %v504
      %v510 = vshll.u32 %v459, 16
      %v512 = vrot.slane %v510, 1
      %v513 = vsel %vm460, %v508, %v512
      %v514 = vshrl.u32 %v459, 16
      %v516 = vor.u32 %v514, %v512
      %v519 = vunpack.c.l.b16 %v455
      %v520 = vunpack.c.l.b16 %v456
      %v521 = vpack.c.b16 %v520, %v519
      %v524 = vsel %vm318, %v470, 0
      %v527 = vsel %vm318, %v477, 0
      %v530 = vsel %vm318, %v484, 0
      %v533 = vsel %vm318, %v491, 0
      %v536 = vsel %vm318, %v498, 0
      %v539 = vsel %vm318, %v505, 0
      %v542 = vsel %vm318, %v513, 0
      %v545 = vsel %vm318, %v516, 0
      %547 = vmatprep.subr.bf16.mxu0 0
      %548 = vmatpush1.bf16.msra.mxu0 0
      %549 = vmatprep.subr.bf16.mxu0 0
      %550 = vmatpush1.bf16.msra.mxu0 0
      %551 = vmatprep.subr.bf16.mxu0 0
      %552 = vmatpush1.bf16.msra.mxu0 0
      %553 = vmatprep.subr.bf16.mxu0 0
      %554 = vmatpush1.bf16.msra.mxu0 0
      %555 = vmatprep.subr.bf16.mxu0 0
      %556 = vmatpush1.bf16.msra.mxu0 0
      %557 = vmatprep.subr.bf16.mxu0 0
      %558 = vmatpush1.bf16.msra.mxu0 0
      %559 = vmatprep.subr.bf16.mxu0 0
      %560 = vmatpush1.bf16.msra.mxu0 0
      %561 = vmatprep.subr.bf16.mxu0 0
      %562 = vmatpush1.bf16.msra.mxu0 %v521
      %563 = vmatprep.subr.bf16.mxu0 0
      %564 = vmatpush2.bf16.msra.mxu0 0
      %565 = vmatprep.subr.bf16.mxu0 0
      %566 = vmatpush2.bf16.msra.mxu0 0
      %567 = vmatprep.subr.bf16.mxu0 0
      %568 = vmatpush2.bf16.msra.mxu0 0
      %569 = vmatprep.subr.bf16.mxu0 0
      %570 = vmatpush2.bf16.msra.mxu0 0
      %571 = vmatprep.subr.bf16.mxu0 0
      %572 = vmatpush2.bf16.msra.mxu0 0
      %573 = vmatprep.subr.bf16.mxu0 0
      %574 = vmatpush2.bf16.msra.mxu0 0
      %575 = vmatprep.subr.bf16.mxu0 0
      %576 = vmatpush2.bf16.msra.mxu0 0
      %577 = vmatprep.subr.bf16.mxu0 0
      %578 = vmatpush2.bf16.msra.mxu0 0
      %579 = vmatprep.mubr.bf16.mxu0 0
      %580 = vmatmul.mubr.bf16.gmra.mxu0 %v524
      %v581 = vpop.f32.mrf.mxu0
      %v582 = vadd.f32 0.0, %v581
      %v583 = vpop.f32.mrf.mxu0
      %v584 = vpop.f32.mrf.mxu0
      %v585 = vadd.f32 0.0, %v584
      %v586 = vpop.f32.mrf.mxu0
      %587 = vmatprep.mubr.bf16.mxu0 0
      %588 = vmatmul.mubr.bf16.gmra.mxu0 %v527
      %v589 = vpop.f32.mrf.mxu0
      %v590 = vadd.f32 0.0, %v589
      %v591 = vpop.f32.mrf.mxu0
      %v592 = vpop.f32.mrf.mxu0
      %v593 = vadd.f32 0.0, %v592
      %v594 = vpop.f32.mrf.mxu0
      %595 = vmatprep.mubr.bf16.mxu0 0
      %596 = vmatmul.mubr.bf16.gmra.mxu0 %v530
      %v597 = vpop.f32.mrf.mxu0
      %v598 = vadd.f32 0.0, %v597
      %v599 = vpop.f32.mrf.mxu0
      %v600 = vpop.f32.mrf.mxu0
      %v601 = vadd.f32 0.0, %v600
      %v602 = vpop.f32.mrf.mxu0
      %603 = vmatprep.mubr.bf16.mxu0 0
      %604 = vmatmul.mubr.bf16.gmra.mxu0 %v533
      %v605 = vpop.f32.mrf.mxu0
      %v606 = vadd.f32 0.0, %v605
      %v607 = vpop.f32.mrf.mxu0
      %v608 = vpop.f32.mrf.mxu0
      %v609 = vadd.f32 0.0, %v608
      %v610 = vpop.f32.mrf.mxu0
      %611 = vmatprep.mubr.bf16.mxu0 0
      %612 = vmatmul.mubr.bf16.gmra.mxu0 %v536
      %v613 = vpop.f32.mrf.mxu0
      %v614 = vadd.f32 0.0, %v613
      %v615 = vpop.f32.mrf.mxu0
      %v616 = vpop.f32.mrf.mxu0
      %v617 = vadd.f32 0.0, %v616
      %v618 = vpop.f32.mrf.mxu0
      %619 = vmatprep.mubr.bf16.mxu0 0
      %620 = vmatmul.mubr.bf16.gmra.mxu0 %v539
      %v621 = vpop.f32.mrf.mxu0
      %v622 = vadd.f32 0.0, %v621
      %v623 = vpop.f32.mrf.mxu0
      %v624 = vpop.f32.mrf.mxu0
      %v625 = vadd.f32 0.0, %v624
      %v626 = vpop.f32.mrf.mxu0
      %627 = vmatprep.mubr.bf16.mxu0 0
      %628 = vmatmul.mubr.bf16.gmra.mxu0 %v542
      %v629 = vpop.f32.mrf.mxu0
      %v630 = vadd.f32 0.0, %v629
      %v631 = vpop.f32.mrf.mxu0
      %v632 = vpop.f32.mrf.mxu0
      %v633 = vadd.f32 0.0, %v632
      %v634 = vpop.f32.mrf.mxu0
      %635 = vmatprep.mubr.bf16.mxu0 0
      %636 = vmatmul.mubr.bf16.gmra.mxu0 %v545
      %v637 = vpop.f32.mrf.mxu0
      %v638 = vadd.f32 0.0, %v637
      %v639 = vpop.f32.mrf.mxu0
      %v640 = vpop.f32.mrf.mxu0
      %v641 = vpop.f32.mrf.mxu0
      %642 = vdwg.mxu0
      %v643 = vadd.f32 %v439, %v582
      %v644 = vadd.f32 %v440, %v585
      %v645 = vadd.f32 %v441, %v590
      %v646 = vadd.f32 %v442, %v593
      %v647 = vadd.f32 %v443, %v598
      %v648 = vadd.f32 %v444, %v601
      %v649 = vadd.f32 %v445, %v606
      %v650 = vadd.f32 %v446, %v609
      %v651 = vadd.f32 %v447, %v614
      %v652 = vadd.f32 %v448, %v617
      %v653 = vadd.f32 %v449, %v622
      %v654 = vadd.f32 %v450, %v625
      %v655 = vadd.f32 %v451, %v630
      %v656 = vadd.f32 %v452, %v633
      %v657 = vadd.f32 %v453, %v638
      %s658 = scalar_lea.vmem %s213, 16
      %v659 = vld [vmem:[%s658] sm:$0xf]
      %v660 = vld [vmem:[%s658 + $0x4] sm:$0xf]
      %vm661 = vcmask 1046528
      %v662 = vrot.slane %v304, 1
      %v663 = vrot.slane %v305, 1
      %v664 = vsel %vm661, %v662, %v663
      %v665 = vrot.slane %v306, 1
      %v666 = vsel %vm661, %v663, %v665
      %v667 = vrot.slane %v307, 1
      %v668 = vsel %vm661, %v665, %v667
      %v669 = vrot.slane %v308, 1
      %v670 = vsel %vm661, %v667, %v669
      %v671 = vrot.slane %v309, 1
      %v672 = vsel %vm661, %v669, %v671
      %v673 = vrot.slane %v310, 1
      %v674 = vsel %vm661, %v671, %v673
      %v675 = vrot.slane %v459, 1
      %v676 = vsel %vm661, %v673, %v675
      %v679 = vunpack.c.l.b16 %v659
      %v680 = vunpack.c.l.b16 %v660
      %v681 = vpack.c.b16 %v680, %v679
      %v684 = vsel %vm318, %v664, 0
      %v687 = vsel %vm318, %v666, 0
      %v690 = vsel %vm318, %v668, 0
      %v693 = vsel %vm318, %v670, 0
      %v696 = vsel %vm318, %v672, 0
      %v699 = vsel %vm318, %v674, 0
      %v702 = vsel %vm318, %v676, 0
      %v705 = vsel %vm318, %v675, 0
      %707 = vmatprep.subr.bf16.mxu0 0
      %708 = vmatpush1.bf16.msra.mxu0 0
      %709 = vmatprep.subr.bf16.mxu0 0
      %710 = vmatpush1.bf16.msra.mxu0 0
      %711 = vmatprep.subr.bf16.mxu0 0
      %712 = vmatpush1.bf16.msra.mxu0 0
      %713 = vmatprep.subr.bf16.mxu0 0
      %714 = vmatpush1.bf16.msra.mxu0 0
      %715 = vmatprep.subr.bf16.mxu0 0
      %716 = vmatpush1.bf16.msra.mxu0 0
      %717 = vmatprep.subr.bf16.mxu0 0
      %718 = vmatpush1.bf16.msra.mxu0 0
      %719 = vmatprep.subr.bf16.mxu0 0
      %720 = vmatpush1.bf16.msra.mxu0 0
      %721 = vmatprep.subr.bf16.mxu0 0
      %722 = vmatpush1.bf16.msra.mxu0 %v681
      %723 = vmatprep.subr.bf16.mxu0 0
      %724 = vmatpush2.bf16.msra.mxu0 0
      %725 = vmatprep.subr.bf16.mxu0 0
      %726 = vmatpush2.bf16.msra.mxu0 0
      %727 = vmatprep.subr.bf16.mxu0 0
      %728 = vmatpush2.bf16.msra.mxu0 0
      %729 = vmatprep.subr.bf16.mxu0 0
      %730 = vmatpush2.bf16.msra.mxu0 0
      %731 = vmatprep.subr.bf16.mxu0 0
      %732 = vmatpush2.bf16.msra.mxu0 0
      %733 = vmatprep.subr.bf16.mxu0 0
      %734 = vmatpush2.bf16.msra.mxu0 0
      %735 = vmatprep.subr.bf16.mxu0 0
      %736 = vmatpush2.bf16.msra.mxu0 0
      %737 = vmatprep.subr.bf16.mxu0 0
      %738 = vmatpush2.bf16.msra.mxu0 0
      %739 = vmatprep.mubr.bf16.mxu0 0
      %740 = vmatmul.mubr.bf16.gmra.mxu0 %v684
      %v741 = vpop.f32.mrf.mxu0
      %v742 = vadd.f32 0.0, %v741
      %v743 = vpop.f32.mrf.mxu0
      %v744 = vpop.f32.mrf.mxu0
      %v745 = vadd.f32 0.0, %v744
      %v746 = vpop.f32.mrf.mxu0
      %747 = vmatprep.mubr.bf16.mxu0 0
      %748 = vmatmul.mubr.bf16.gmra.mxu0 %v687
      %v749 = vpop.f32.mrf.mxu0
      %v750 = vadd.f32 0.0, %v749
      %v751 = vpop.f32.mrf.mxu0
      %v752 = vpop.f32.mrf.mxu0
      %v753 = vadd.f32 0.0, %v752
      %v754 = vpop.f32.mrf.mxu0
      %755 = vmatprep.mubr.bf16.mxu0 0
      %756 = vmatmul.mubr.bf16.gmra.mxu0 %v690
      %v757 = vpop.f32.mrf.mxu0
      %v758 = vadd.f32 0.0, %v757
      %v759 = vpop.f32.mrf.mxu0
      %v760 = vpop.f32.mrf.mxu0
      %v761 = vadd.f32 0.0, %v760
      %v762 = vpop.f32.mrf.mxu0
      %763 = vmatprep.mubr.bf16.mxu0 0
      %764 = vmatmul.mubr.bf16.gmra.mxu0 %v693
      %v765 = vpop.f32.mrf.mxu0
      %v766 = vadd.f32 0.0, %v765
      %v767 = vpop.f32.mrf.mxu0
      %v768 = vpop.f32.mrf.mxu0
      %v769 = vadd.f32 0.0, %v768
      %v770 = vpop.f32.mrf.mxu0
      %771 = vmatprep.mubr.bf16.mxu0 0
      %772 = vmatmul.mubr.bf16.gmra.mxu0 %v696
      %v773 = vpop.f32.mrf.mxu0
      %v774 = vadd.f32 0.0, %v773
      %v775 = vpop.f32.mrf.mxu0
      %v776 = vpop.f32.mrf.mxu0
      %v777 = vadd.f32 0.0, %v776
      %v778 = vpop.f32.mrf.mxu0
      %779 = vmatprep.mubr.bf16.mxu0 0
      %780 = vmatmul.mubr.bf16.gmra.mxu0 %v699
      %v781 = vpop.f32.mrf.mxu0
      %v782 = vadd.f32 0.0, %v781
      %v783 = vpop.f32.mrf.mxu0
      %v784 = vpop.f32.mrf.mxu0
      %v785 = vadd.f32 0.0, %v784
      %v786 = vpop.f32.mrf.mxu0
      %787 = vmatprep.mubr.bf16.mxu0 0
      %788 = vmatmul.mubr.bf16.gmra.mxu0 %v702
      %v789 = vpop.f32.mrf.mxu0
      %v790 = vadd.f32 0.0, %v789
      %v791 = vpop.f32.mrf.mxu0
      %v792 = vpop.f32.mrf.mxu0
      %v793 = vadd.f32 0.0, %v792
      %v794 = vpop.f32.mrf.mxu0
      %795 = vmatprep.mubr.bf16.mxu0 0
      %796 = vmatmul.mubr.bf16.gmra.mxu0 %v705
      %v797 = vpop.f32.mrf.mxu0
      %v798 = vadd.f32 0.0, %v797
      %v799 = vpop.f32.mrf.mxu0
      %v800 = vpop.f32.mrf.mxu0
      %v801 = vpop.f32.mrf.mxu0
      %802 = vdwg.mxu0
      %v803 = vadd.f32 %v643, %v742
      %v804 = vadd.f32 %v644, %v745
      %v805 = vadd.f32 %v645, %v750
      %v806 = vadd.f32 %v646, %v753
      %v807 = vadd.f32 %v647, %v758
      %v808 = vadd.f32 %v648, %v761
      %v809 = vadd.f32 %v649, %v766
      %v810 = vadd.f32 %v650, %v769
      %v811 = vadd.f32 %v651, %v774
      %v812 = vadd.f32 %v652, %v777
      %v813 = vadd.f32 %v653, %v782
      %v814 = vadd.f32 %v654, %v785
      %v815 = vadd.f32 %v655, %v790
      %v816 = vadd.f32 %v656, %v793
      %v817 = vadd.f32 %v657, %v798
      %818 = vst [vmem:[#allocation2] sm:$0xff] %v803
      %819 = vst [vmem:[#allocation2 + $0x8] sm:$0xff] %v804
      %820 = vst [vmem:[#allocation2 + $0x10] sm:$0xff] %v805
      %821 = vst [vmem:[#allocation2 + $0x18] sm:$0xff] %v806
      %822 = vst [vmem:[#allocation2 + $0x20] sm:$0xff] %v807
      %823 = vst [vmem:[#allocation2 + $0x28] sm:$0xff] %v808
      %824 = vst [vmem:[#allocation2 + $0x30] sm:$0xff] %v809
      %825 = vst [vmem:[#allocation2 + $0x38] sm:$0xff] %v810
      %826 = vst [vmem:[#allocation2 + $0x40] sm:$0xff] %v811
      %827 = vst [vmem:[#allocation2 + $0x48] sm:$0xff] %v812
      %828 = vst [vmem:[#allocation2 + $0x50] sm:$0xff] %v813
      %829 = vst [vmem:[#allocation2 + $0x58] sm:$0xff] %v814
      %830 = vst [vmem:[#allocation2 + $0x60] sm:$0xff] %v815
      %831 = vst [vmem:[#allocation2 + $0x68] sm:$0xff] %v816
      %832 = vst [vmem:[#allocation2 + $0x70] sm:$0xff] %v817
      %p833 = scmp.eq.s32.totalorder %s19, 2
      // Predicated region
      $region37: #{binary_net_forward.48} parent=31 // pred_check
        %p834 = pneg %p833
      $region38: #{binary_net_forward.48} parent=31 // pred_check_branch
        %836 = sbr.rel (%p834) target = $region40
      $region39: #{binary_net_forward.48} parent=31 // pred_region
        %v837 = vld [vmem:[#allocation2] sm:$0xff]
        %v838 = vld [vmem:[#allocation2 + $0x8] sm:$0xff]
        %v839 = vld [vmem:[#allocation2 + $0x10] sm:$0xff]
        %v840 = vld [vmem:[#allocation2 + $0x18] sm:$0xff]
        %v841 = vld [vmem:[#allocation2 + $0x20] sm:$0xff]
        %v842 = vld [vmem:[#allocation2 + $0x28] sm:$0xff]
        %v843 = vld [vmem:[#allocation2 + $0x30] sm:$0xff]
        %v844 = vld [vmem:[#allocation2 + $0x38] sm:$0xff]
        %v845 = vld [vmem:[#allocation2 + $0x40] sm:$0xff]
        %v846 = vld [vmem:[#allocation2 + $0x48] sm:$0xff]
        %v847 = vld [vmem:[#allocation2 + $0x50] sm:$0xff]
        %v848 = vld [vmem:[#allocation2 + $0x58] sm:$0xff]
        %v849 = vld [vmem:[#allocation2 + $0x60] sm:$0xff]
        %v850 = vld [vmem:[#allocation2 + $0x68] sm:$0xff]
        %v851 = vld [vmem:[#allocation2 + $0x70] sm:$0xff]
        %v852 = vld [vmem:[#allocation2 + $0x78] sm:$0xff]
        %v853 = vld [vmem:[%s2] sm:$0x1]
        %v855 = vlaneseq
        %v856 = vshrl.u32 %v855, 7
        %v857 = vsub.s32 0, %v856
        %v858 = vrot.slane %v853, %v857
        %v860 = vadd.f32 %v837, %v858
        %v861 = vadd.f32 %v838, %v858
        %v862 = vadd.f32 %v839, %v858
        %v863 = vadd.f32 %v840, %v858
        %v864 = vadd.f32 %v841, %v858
        %v865 = vadd.f32 %v842, %v858
        %v866 = vadd.f32 %v843, %v858
        %v867 = vadd.f32 %v844, %v858
        %v868 = vadd.f32 %v845, %v858
        %v869 = vadd.f32 %v846, %v858
        %v870 = vadd.f32 %v847, %v858
        %v871 = vadd.f32 %v848, %v858
        %v872 = vadd.f32 %v849, %v858
        %v873 = vadd.f32 %v850, %v858
        %v874 = vadd.f32 %v851, %v858
        %v875 = vadd.f32 %v852, %v858
        %v876 = vpack.c.bf16 %v861, %v860
        %v877 = vpack.c.bf16 %v863, %v862
        %v878 = vpack.c.bf16 %v865, %v864
        %v879 = vpack.c.bf16 %v867, %v866
        %v880 = vpack.c.bf16 %v869, %v868
        %v881 = vpack.c.bf16 %v871, %v870
        %v882 = vpack.c.bf16 %v873, %v872
        %v883 = vpack.c.bf16 %v875, %v874
        %v892 = vunpack.c.l.b16 %v876
        %v893 = vunpack.c.h.b16 %v876
        %v894 = vunpack.c.l.b16 %v877
        %v895 = vunpack.c.h.b16 %v877
        %v896 = vunpack.c.l.b16 %v878
        %v897 = vunpack.c.h.b16 %v878
        %v898 = vunpack.c.l.b16 %v879
        %v899 = vunpack.c.h.b16 %v879
        %v900 = vunpack.c.l.b16 %v880
        %v901 = vunpack.c.h.b16 %v880
        %v902 = vunpack.c.l.b16 %v881
        %v903 = vunpack.c.h.b16 %v881
        %v904 = vunpack.c.l.b16 %v882
        %v905 = vunpack.c.h.b16 %v882
        %v906 = vunpack.c.l.b16 %v883
        %v907 = vunpack.c.h.b16 %v883
        %v908 = vpack.c.b16 %v892, %v892
        %v909 = vpack.c.b16 %v893, %v893
        %v910 = vpack.c.b16 %v894, %v894
        %v911 = vpack.c.b16 %v895, %v895
        %v912 = vpack.c.b16 %v896, %v896
        %v913 = vpack.c.b16 %v897, %v897
        %v914 = vpack.c.b16 %v898, %v898
        %v915 = vpack.c.b16 %v899, %v899
        %v916 = vpack.c.b16 %v900, %v900
        %v917 = vpack.c.b16 %v901, %v901
        %v918 = vpack.c.b16 %v902, %v902
        %v919 = vpack.c.b16 %v903, %v903
        %v920 = vpack.c.b16 %v904, %v904
        %v921 = vpack.c.b16 %v905, %v905
        %v922 = vpack.c.b16 %v906, %v906
        %v923 = vpack.c.b16 %v907, %v907
        %940 = vst [vmem:[%s218] sm:$0xf] %v908
        %941 = vst [vmem:[%s218 + $0x4] sm:$0xf] %v909
        %942 = vst [vmem:[%s218 + $0x8] sm:$0xf] %v910
        %943 = vst [vmem:[%s218 + $0xc] sm:$0xf] %v911
        %944 = vst [vmem:[%s218 + $0x10] sm:$0xf] %v912
        %945 = vst [vmem:[%s218 + $0x14] sm:$0xf] %v913
        %946 = vst [vmem:[%s218 + $0x18] sm:$0xf] %v914
        %947 = vst [vmem:[%s218 + $0x1c] sm:$0xf] %v915
        %948 = vst [vmem:[%s218 + $0x20] sm:$0xf] %v916
        %949 = vst [vmem:[%s218 + $0x24] sm:$0xf] %v917
        %950 = vst [vmem:[%s218 + $0x28] sm:$0xf] %v918
        %951 = vst [vmem:[%s218 + $0x2c] sm:$0xf] %v919
        %952 = vst [vmem:[%s218 + $0x30] sm:$0xf] %v920
        %953 = vst [vmem:[%s218 + $0x34] sm:$0xf] %v921
        %954 = vst [vmem:[%s218 + $0x38] sm:$0xf] %v922
        %955 = vst [vmem:[%s218 + $0x3c] sm:$0xf] %v923
      $region40: #{binary_net_forward.48} parent=31 // pred_fallthru
        _
      %s956 = smul.u32 16, %s18
      %p957 = scmp.lt.s32.totalorder %s956, 15
      %s958 = scalar_select %p957, %s956, 15
      %s959 = smul.addr %s958, 4
      %s960 = scalar_lea.vmem %s3, %s959
      // Predicated region
      $region41: #{binary_net_forward.48} parent=31 // pred_check
        %p961 = pneg %p119
      $region42: #{binary_net_forward.48} parent=31 // pred_check_branch
        %963 = sbr.rel (%p961) target = $region44
      $region43: #{binary_net_forward.48} parent=31 // pred_region
        %s964 = smul.u32 16, %s18
      $region44: #{binary_net_forward.48} parent=31 // pred_fallthru
        _
      // Predicated region
      $region45: #{binary_net_forward.48} parent=31 // pred_check
        %p965 = pneg %p119
      $region46: #{binary_net_forward.48} parent=31 // pred_check_branch
        %967 = sbr.rel (%p965) target = $region48
      $region47: #{binary_net_forward.48} parent=31 // pred_region
        %s968 = smul.u32 16, %s18
        %p969 = scmp.lt.s32.totalorder %s968, 15
        %s970 = scalar_select %p969, %s968, 15
        %s971 = smul.addr %s970, 4
        %s972 = scalar_lea.vmem %s3, %s971
      $region48: #{binary_net_forward.48} parent=31 // pred_fallthru
        _
    $region32: #{binary_net_forward.48} parent=5 // pred_fallthru
      _
    %p973 = scmp.le.s32.totalorder 2, %s9
    // Predicated region
    $region49: #{binary_net_forward.48} parent=5 // pred_check
      %p974 = pneg %p973
    $region50: #{binary_net_forward.48} parent=5 // pred_check_branch
      %976 = sbr.rel (%p974) target = $region52
    $region51: #{binary_net_forward.48} parent=5 // pred_region
      %s977 = ssub.s32 %s9, 2
    $region52: #{binary_net_forward.48} parent=5 // pred_fallthru
      _
  $region6: #{binary_net_forward.48} parent=0 // loop_footer
    %s13 = sadd.s32 1, %s9
  $region7: #{binary_net_forward.48} parent=0 // loop_footer_branch
    %8 = sbr.rel target = $region3
  $region8: #{binary_net_forward.48} parent=0 // loop_exit
    _

// kernel: binary_net_forward.53
$region0: #{binary_net_forward.53}
  #allocation0 [shape = 'u32[]', space=smem, size = 0x4, offset = 0x4, fixed_abs, tag = 'smem constant byte address 0x4 - core index']
  #allocation1 [shape = 'u32[144,128]{1,0:T(1,128)}', space=vmem, size = 0x12000, scoped, tag = 'internal scratch']
  #allocation2 [shape = 'f32[384,128]{1,0:T(8,128)}', space=vmem, size = 0x30000, scoped, tag = 'scratch operand']
  %s0 = inlined_call_operand.vmem [shape: bf16[3,384,8], index: 0, kind: input, shape index: {}]
  %s1 = inlined_call_operand.vmem [shape: bf16[3,3,8,128], index: 1, kind: input, shape index: {}]
  %s2 = inlined_call_operand.vmem [shape: f32[1,128], index: 2, kind: input, shape index: {}]
  %s3 = inlined_call_operand.vmem [shape: f32[384,128], index: 3, kind: output, shape index: {}]
  %s4 = sld [smem:[#allocation0]]
  $region53: #{binary_net_forward.53} parent=0
    _
  %s6 = ssub.s32 1, %s4
  %s7 = scalar_select 0, %s6, %s4
  loop: start=0, step=1, limit=5
  $region2: #{binary_net_forward.53} parent=0 // loop_pre_header
    _
  $region3: #{binary_net_forward.53} parent=0 // loop_header
    %s9 = sphi 0, %s13
    %p10 = scmp.ge.s32.totalorder %s9, 5
    %s16 = sphi 0, %s28
    %s17 = sphi 0, %s24
    %s18 = sphi 0, %s16
    %s19 = sphi 0, %s17
    %s20 = sphi 0, %s18
    %s21 = sphi 0, %s19
    %s33 = sphi 0, %s35
    %s36 = sphi 0, %s33
    %s37 = sphi 0, %s36
    %s53 = sphi 0, %s37
    %s59 = sphi 0, %s61
    %s62 = sphi 0, %s59
    %s63 = sphi 0, %s62
    %s79 = sphi 0, %s63
    %s83 = sphi 0, %s83
    %s85 = sphi 0, %s83
    %s86 = sphi 0, %s85
    %s100 = sphi 0, %s86
    %s106 = sphi 0, %s108
    %s109 = sphi 0, %s106
    %s110 = sphi 0, %s109
    %s126 = sphi 0, %s110
  $region4: #{binary_net_forward.53} parent=0 // loop_header_branch
    %12 = sbr.rel (%p10) target = $region8
  $region5: #{binary_net_forward.53} parent=0 // loop_body
    %s14 = ssub.s32 %s9, 1
    %s15 = ssub.s32 %s9, 2
    %s22 = sadd.s32 1, %s17
    %p23 = scmp.ge.s32.totalorder %s22, 3
    %s24 = scalar_select %p23, 0, %s22
    %s25 = sadd.s32 1, %s16
    %s26 = scalar_select %p23, %s25, %s16
    %p27 = scmp.ge.s32.totalorder %s26, 1
    %s28 = scalar_select %p27, 0, %s26
    %s29 = ssub.s32 %s17, %s24
    %s30 = ssub.s32 %s16, %s28
    %s31 = sor.u32 %s29, %s30
    %p32 = scmp.eq.s32.totalorder %s31, 0
    %s34 = sadd.s32 %s33, 1
    %s35 = scalar_select %p32, %s33, %s34
    %p38 = pneg %p32
    %p39 = scmp.eq.s32.totalorder %s9, 2
    %p40 = por %p38, %p39
    %p41 = scmp.ne.s32.totalorder %s33, %s36
    %p42 = scmp.eq.s32.totalorder %s9, 0
    %p43 = por %p41, %p42
    %p44 = scmp.ne.s32.totalorder %s33, %s36
    %p45 = scmp.eq.s32.totalorder %s14, 2
    %p46 = por %p44, %p45
    %p47 = scmp.ne.s32.totalorder %s36, %s37
    %p48 = scmp.eq.s32.totalorder %s14, 0
    %p49 = por %p47, %p48
    %p50 = scmp.ne.s32.totalorder %s36, %s37
    %p51 = scmp.eq.s32.totalorder %s15, 2
    %p52 = por %p50, %p51
    %p54 = scmp.ne.s32.totalorder %s37, %s53
    %p55 = scmp.eq.s32.totalorder %s15, 0
    %p56 = por %p54, %p55
    %s57 = ssub.s32 %s17, %s24
    %p58 = scmp.eq.s32.totalorder %s57, 0
    %s60 = sadd.s32 %s59, 1
    %s61 = scalar_select %p58, %s59, %s60
    %p64 = pneg %p58
    %p65 = scmp.eq.s32.totalorder %s9, 2
    %p66 = por %p64, %p65
    %p67 = scmp.ne.s32.totalorder %s59, %s62
    %p68 = scmp.eq.s32.totalorder %s9, 0
    %p69 = por %p67, %p68
    %p70 = scmp.ne.s32.totalorder %s59, %s62
    %p71 = scmp.eq.s32.totalorder %s14, 2
    %p72 = por %p70, %p71
    %p73 = scmp.ne.s32.totalorder %s62, %s63
    %p74 = scmp.eq.s32.totalorder %s14, 0
    %p75 = por %p73, %p74
    %p76 = scmp.ne.s32.totalorder %s62, %s63
    %p77 = scmp.eq.s32.totalorder %s15, 2
    %p78 = por %p76, %p77
    %p80 = scmp.ne.s32.totalorder %s63, %s79
    %p81 = scmp.eq.s32.totalorder %s15, 0
    %p82 = por %p80, %p81
    %s84 = sadd.s32 %s83, 1
    %p87 = scmp.eq.s32.totalorder %s9, 2
    %p88 = scmp.ne.s32.totalorder %s83, %s85
    %p89 = scmp.eq.s32.totalorder %s9, 0
    %p90 = por %p88, %p89
    %p91 = scmp.ne.s32.totalorder %s83, %s85
    %p92 = scmp.eq.s32.totalorder %s14, 2
    %p93 = por %p91, %p92
    %p94 = scmp.ne.s32.totalorder %s85, %s86
    %p95 = scmp.eq.s32.totalorder %s14, 0
    %p96 = por %p94, %p95
    %p97 = scmp.ne.s32.totalorder %s85, %s86
    %p98 = scmp.eq.s32.totalorder %s15, 2
    %p99 = por %p97, %p98
    %p101 = scmp.ne.s32.totalorder %s86, %s100
    %p102 = scmp.eq.s32.totalorder %s15, 0
    %p103 = por %p101, %p102
    %s104 = ssub.s32 %s16, %s28
    %p105 = scmp.eq.s32.totalorder %s104, 0
    %s107 = sadd.s32 %s106, 1
    %s108 = scalar_select %p105, %s106, %s107
    %p111 = pneg %p105
    %p112 = scmp.eq.s32.totalorder %s9, 2
    %p113 = por %p111, %p112
    %p114 = scmp.ne.s32.totalorder %s106, %s109
    %p115 = scmp.eq.s32.totalorder %s9, 0
    %p116 = por %p114, %p115
    %p117 = scmp.ne.s32.totalorder %s106, %s109
    %p118 = scmp.eq.s32.totalorder %s14, 2
    %p119 = por %p117, %p118
    %p120 = scmp.ne.s32.totalorder %s109, %s110
    %p121 = scmp.eq.s32.totalorder %s14, 0
    %p122 = por %p120, %p121
    %p123 = scmp.ne.s32.totalorder %s109, %s110
    %p124 = scmp.eq.s32.totalorder %s15, 2
    %p125 = por %p123, %p124
    %p127 = scmp.ne.s32.totalorder %s110, %s126
    %p128 = scmp.eq.s32.totalorder %s15, 0
    %p129 = por %p127, %p128
    %p130 = scmp.le.s32.totalorder 1, %s9
    %p131 = scmp.lt.s32.totalorder %s9, 4
    %p132 = pnand %p130, %p131
    %p133 = pneg %p132
    // Predicated region
    $region9: #{binary_net_forward.53} parent=5 // pred_check
      _
    $region10: #{binary_net_forward.53} parent=5 // pred_check_branch
      %135 = sbr.rel (%p132) target = $region12
    $region11: #{binary_net_forward.53} parent=5 // pred_region
      %s136 = ssub.s32 %s9, 1
      // Predicated region
      $region13: #{binary_net_forward.53} parent=11 // pred_check
        %p137 = pneg %p96
      $region14: #{binary_net_forward.53} parent=11 // pred_check_branch
        %139 = sbr.rel (%p137) target = $region16
      $region15: #{binary_net_forward.53} parent=11 // pred_region
        _
      $region16: #{binary_net_forward.53} parent=11 // pred_fallthru
        _
    $region12: #{binary_net_forward.53} parent=5 // pred_fallthru
      _
    %p140 = scmp.lt.s32.totalorder %s9, 3
    // Predicated region
    $region17: #{binary_net_forward.53} parent=5 // pred_check
      %p141 = pneg %p140
    $region18: #{binary_net_forward.53} parent=5 // pred_check_branch
      %143 = sbr.rel (%p141) target = $region20
    $region19: #{binary_net_forward.53} parent=5 // pred_region
      // Predicated region
      $region21: #{binary_net_forward.53} parent=19 // pred_check
        %p144 = pneg %p43
      $region22: #{binary_net_forward.53} parent=19 // pred_check_branch
        %146 = sbr.rel (%p144) target = $region24
      $region23: #{binary_net_forward.53} parent=19 // pred_region
        %s147 = smul.u32 48, %s16
        %p148 = scmp.lt.s32.totalorder %s17, 2
        %s149 = scalar_select %p148, %s17, 2
        %p150 = scmp.lt.s32.totalorder %s147, 47
        %s151 = scalar_select %p150, %s147, 47
        %s152 = smul.addr %s149, 48
        %s153 = sadd.s32 %s151, %s152
        %s154 = smul.addr %s153, 4
        %s155 = scalar_lea.vmem %s0, %s154
        %s156 = smul.u32 48, %s16
      $region24: #{binary_net_forward.53} parent=19 // pred_fallthru
        _
      // Predicated region
      $region25: #{binary_net_forward.53} parent=19 // pred_check
        %p157 = pneg %p69
      $region26: #{binary_net_forward.53} parent=19 // pred_check_branch
        %159 = sbr.rel (%p157) target = $region28
      $region27: #{binary_net_forward.53} parent=19 // pred_region
        %p160 = scmp.lt.s32.totalorder %s17, 2
        %s161 = scalar_select %p160, %s17, 2
        %s162 = smul.addr %s161, 3
        %s163 = smul.addr %s162, 4
        %s164 = scalar_lea.vmem %s1, %s163
      $region28: #{binary_net_forward.53} parent=19 // pred_fallthru
        _
    $region20: #{binary_net_forward.53} parent=5 // pred_fallthru
      _
    %p165 = scmp.le.s32.totalorder 1, %s9
    %p166 = scmp.lt.s32.totalorder %s9, 4
    %p167 = pnand %p165, %p166
    %p168 = pneg %p167
    // Predicated region
    $region29: #{binary_net_forward.53} parent=5 // pred_check
      _
    $region30: #{binary_net_forward.53} parent=5 // pred_check_branch
      %170 = sbr.rel (%p167) target = $region32
    $region31: #{binary_net_forward.53} parent=5 // pred_region
      %s171 = ssub.s32 %s9, 1
      %s172 = smul.u32 48, %s18
      %p173 = scmp.lt.s32.totalorder %s19, 2
      %s174 = scalar_select %p173, %s19, 2
      %p175 = scmp.lt.s32.totalorder %s172, 47
      %s176 = scalar_select %p175, %s172, 47
      %s177 = smul.addr %s174, 48
      %s178 = sadd.s32 %s176, %s177
      %s179 = smul.addr %s178, 4
      %s180 = scalar_lea.vmem %s0, %s179
      %p181 = pneg %p49
      %p182 = pneg %p46
      %p183 = scmp.lt.s32.totalorder %s19, 2
      %s184 = scalar_select %p183, %s19, 2
      %s185 = smul.addr %s184, 3
      %s186 = smul.addr %s185, 4
      %s187 = scalar_lea.vmem %s1, %s186
      %p188 = pneg %p75
      %p189 = pneg %p72
      %p190 = pneg %p96
      %p191 = pneg %p93
      %p192 = pneg %p122
      %p193 = pneg %p119
      %s194 = smul.u32 48, %s18
      %p195 = scmp.lt.s32.totalorder %s194, 47
      %s196 = scalar_select %p195, %s194, 47
      %s197 = smul.addr %s196, 8
      %s198 = scalar_lea.vmem %s3, %s197
      %s199 = smul.u32 48, %s18
      %p200 = scmp.lt.s32.totalorder %s19, 2
      %s201 = scalar_select %p200, %s19, 2
      %p202 = scmp.lt.s32.totalorder %s199, 47
      %s203 = scalar_select %p202, %s199, 47
      %s204 = smul.addr %s201, 48
      %s205 = sadd.s32 %s203, %s204
      %s206 = smul.addr %s205, 4
      %s207 = scalar_lea.vmem %s0, %s206
      %s208 = smul.u32 48, %s18
      %p209 = scmp.lt.s32.totalorder %s19, 2
      %s210 = scalar_select %p209, %s19, 2
      %s211 = smul.addr %s210, 3
      %s212 = smul.addr %s211, 4
      %s213 = scalar_lea.vmem %s1, %s212
      %s214 = smul.u32 48, %s18
      %p215 = scmp.lt.s32.totalorder %s214, 47
      %s216 = scalar_select %p215, %s214, 47
      %s217 = smul.addr %s216, 8
      %s218 = scalar_lea.vmem %s3, %s217
      %s219 = smul.u32 48, %s18
      %p221 = scmp.eq.s32.totalorder %s19, 0
      // Predicated region
      $region33: #{binary_net_forward.53} parent=31 // pred_check
        %p222 = pneg %p221
      $region34: #{binary_net_forward.53} parent=31 // pred_check_branch
        %224 = sbr.rel (%p222) target = $region36
      $region35: #{binary_net_forward.53} parent=31 // pred_region
        %225 = vst [vmem:[#allocation2] sm:$0xff] 0.0
        %226 = vst [vmem:[#allocation2 + $0x8] sm:$0xff] 0.0
        %227 = vst [vmem:[#allocation2 + $0x10] sm:$0xff] 0.0
        %228 = vst [vmem:[#allocation2 + $0x18] sm:$0xff] 0.0
        %229 = vst [vmem:[#allocation2 + $0x20] sm:$0xff] 0.0
        %230 = vst [vmem:[#allocation2 + $0x28] sm:$0xff] 0.0
        %231 = vst [vmem:[#allocation2 + $0x30] sm:$0xff] 0.0
        %232 = vst [vmem:[#allocation2 + $0x38] sm:$0xff] 0.0
        %233 = vst [vmem:[#allocation2 + $0x40] sm:$0xff] 0.0
        %234 = vst [vmem:[#allocation2 + $0x48] sm:$0xff] 0.0
        %235 = vst [vmem:[#allocation2 + $0x50] sm:$0xff] 0.0
        %236 = vst [vmem:[#allocation2 + $0x58] sm:$0xff] 0.0
        %237 = vst [vmem:[#allocation2 + $0x60] sm:$0xff] 0.0
        %238 = vst [vmem:[#allocation2 + $0x68] sm:$0xff] 0.0
        %239 = vst [vmem:[#allocation2 + $0x70] sm:$0xff] 0.0
        %240 = vst [vmem:[#allocation2 + $0x78] sm:$0xff] 0.0
        %241 = vst [vmem:[#allocation2 + $0x80] sm:$0xff] 0.0
        %242 = vst [vmem:[#allocation2 + $0x88] sm:$0xff] 0.0
        %243 = vst [vmem:[#allocation2 + $0x90] sm:$0xff] 0.0
        %244 = vst [vmem:[#allocation2 + $0x98] sm:$0xff] 0.0
        %245 = vst [vmem:[#allocation2 + $0xa0] sm:$0xff] 0.0
        %246 = vst [vmem:[#allocation2 + $0xa8] sm:$0xff] 0.0
        %247 = vst [vmem:[#allocation2 + $0xb0] sm:$0xff] 0.0
        %248 = vst [vmem:[#allocation2 + $0xb8] sm:$0xff] 0.0
        %249 = vst [vmem:[#allocation2 + $0xc0] sm:$0xff] 0.0
        %250 = vst [vmem:[#allocation2 + $0xc8] sm:$0xff] 0.0
        %251 = vst [vmem:[#allocation2 + $0xd0] sm:$0xff] 0.0
        %252 = vst [vmem:[#allocation2 + $0xd8] sm:$0xff] 0.0
        %253 = vst [vmem:[#allocation2 + $0xe0] sm:$0xff] 0.0
        %254 = vst [vmem:[#allocation2 + $0xe8] sm:$0xff] 0.0
        %255 = vst [vmem:[#allocation2 + $0xf0] sm:$0xff] 0.0
        %256 = vst [vmem:[#allocation2 + $0xf8] sm:$0xff] 0.0
        %257 = vst [vmem:[#allocation2 + $0x100] sm:$0xff] 0.0
        %258 = vst [vmem:[#allocation2 + $0x108] sm:$0xff] 0.0
        %259 = vst [vmem:[#allocation2 + $0x110] sm:$0xff] 0.0
        %260 = vst [vmem:[#allocation2 + $0x118] sm:$0xff] 0.0
        %261 = vst [vmem:[#allocation2 + $0x120] sm:$0xff] 0.0
        %262 = vst [vmem:[#allocation2 + $0x128] sm:$0xff] 0.0
        %263 = vst [vmem:[#allocation2 + $0x130] sm:$0xff] 0.0
        %264 = vst [vmem:[#allocation2 + $0x138] sm:$0xff] 0.0
        %265 = vst [vmem:[#allocation2 + $0x140] sm:$0xff] 0.0
        %266 = vst [vmem:[#allocation2 + $0x148] sm:$0xff] 0.0
        %267 = vst [vmem:[#allocation2 + $0x150] sm:$0xff] 0.0
        %268 = vst [vmem:[#allocation2 + $0x158] sm:$0xff] 0.0
        %269 = vst [vmem:[#allocation2 + $0x160] sm:$0xff] 0.0
        %270 = vst [vmem:[#allocation2 + $0x168] sm:$0xff] 0.0
        %271 = vst [vmem:[#allocation2 + $0x170] sm:$0xff] 0.0
        %272 = vst [vmem:[#allocation2 + $0x178] sm:$0xff] 0.0
      $region36: #{binary_net_forward.53} parent=31 // pred_fallthru
        _
      %v273 = vld [vmem:[%s207] sm:$0xf]
      %v274 = vld [vmem:[%s207 + $0x4] sm:$0xf]
      %v275 = vld [vmem:[%s207 + $0x8] sm:$0xf]
      %v276 = vld [vmem:[%s207 + $0xc] sm:$0xf]
      %v277 = vld [vmem:[%s207 + $0x10] sm:$0xf]
      %v278 = vld [vmem:[%s207 + $0x14] sm:$0xf]
      %v279 = vld [vmem:[%s207 + $0x18] sm:$0xf]
      %v280 = vld [vmem:[%s207 + $0x1c] sm:$0xf]
      %v281 = vld [vmem:[%s207 + $0x20] sm:$0xf]
      %v282 = vld [vmem:[%s207 + $0x24] sm:$0xf]
      %v283 = vld [vmem:[%s207 + $0x28] sm:$0xf]
      %v284 = vld [vmem:[%s207 + $0x2c] sm:$0xf]
      %v285 = vld [vmem:[%s207 + $0x30] sm:$0xf]
      %v286 = vld [vmem:[%s207 + $0x34] sm:$0xf]
      %v287 = vld [vmem:[%s207 + $0x38] sm:$0xf]
      %v288 = vld [vmem:[%s207 + $0x3c] sm:$0xf]
      %v289 = vld [vmem:[%s207 + $0x40] sm:$0xf]
      %v290 = vld [vmem:[%s207 + $0x44] sm:$0xf]
      %v291 = vld [vmem:[%s207 + $0x48] sm:$0xf]
      %v292 = vld [vmem:[%s207 + $0x4c] sm:$0xf]
      %v293 = vld [vmem:[%s207 + $0x50] sm:$0xf]
      %v294 = vld [vmem:[%s207 + $0x54] sm:$0xf]
      %v295 = vld [vmem:[%s207 + $0x58] sm:$0xf]
      %v296 = vld [vmem:[%s207 + $0x5c] sm:$0xf]
      %v297 = vld [vmem:[%s207 + $0x60] sm:$0xf]
      %v298 = vld [vmem:[%s207 + $0x64] sm:$0xf]
      %v299 = vld [vmem:[%s207 + $0x68] sm:$0xf]
      %v300 = vld [vmem:[%s207 + $0x6c] sm:$0xf]
      %v301 = vld [vmem:[%s207 + $0x70] sm:$0xf]
      %v302 = vld [vmem:[%s207 + $0x74] sm:$0xf]
      %v303 = vld [vmem:[%s207 + $0x78] sm:$0xf]
      %v304 = vld [vmem:[%s207 + $0x7c] sm:$0xf]
      %v305 = vld [vmem:[%s207 + $0x80] sm:$0xf]
      %v306 = vld [vmem:[%s207 + $0x84] sm:$0xf]
      %v307 = vld [vmem:[%s207 + $0x88] sm:$0xf]
      %v308 = vld [vmem:[%s207 + $0x8c] sm:$0xf]
      %v309 = vld [vmem:[%s207 + $0x90] sm:$0xf]
      %v310 = vld [vmem:[%s207 + $0x94] sm:$0xf]
      %v311 = vld [vmem:[%s207 + $0x98] sm:$0xf]
      %v312 = vld [vmem:[%s207 + $0x9c] sm:$0xf]
      %v313 = vld [vmem:[%s207 + $0xa0] sm:$0xf]
      %v314 = vld [vmem:[%s207 + $0xa4] sm:$0xf]
      %v315 = vld [vmem:[%s207 + $0xa8] sm:$0xf]
      %v316 = vld [vmem:[%s207 + $0xac] sm:$0xf]
      %v317 = vld [vmem:[%s207 + $0xb0] sm:$0xf]
      %v318 = vld [vmem:[%s207 + $0xb4] sm:$0xf]
      %v319 = vld [vmem:[%s207 + $0xb8] sm:$0xf]
      %v320 = vld [vmem:[%s207 + $0xbc] sm:$0xf]
      %v321 = vld [vmem:[#allocation2] sm:$0xff]
      %v322 = vld [vmem:[#allocation2 + $0x8] sm:$0xff]
      %v323 = vld [vmem:[#allocation2 + $0x10] sm:$0xff]
      %v324 = vld [vmem:[#allocation2 + $0x18] sm:$0xff]
      %v325 = vld [vmem:[#allocation2 + $0x20] sm:$0xff]
      %v326 = vld [vmem:[#allocation2 + $0x28] sm:$0xff]
      %v327 = vld [vmem:[#allocation2 + $0x30] sm:$0xff]
      %v328 = vld [vmem:[#allocation2 + $0x38] sm:$0xff]
      %v329 = vld [vmem:[#allocation2 + $0x40] sm:$0xff]
      %v330 = vld [vmem:[#allocation2 + $0x48] sm:$0xff]
      %v331 = vld [vmem:[#allocation2 + $0x50] sm:$0xff]
      %v332 = vld [vmem:[#allocation2 + $0x58] sm:$0xff]
      %v333 = vld [vmem:[#allocation2 + $0x60] sm:$0xff]
      %v334 = vld [vmem:[#allocation2 + $0x68] sm:$0xff]
      %v335 = vld [vmem:[#allocation2 + $0x70] sm:$0xff]
      %v336 = vld [vmem:[#allocation2 + $0x78] sm:$0xff]
      %v337 = vld [vmem:[#allocation2 + $0x80] sm:$0xff]
      %v338 = vld [vmem:[#allocation2 + $0x88] sm:$0xff]
      %v339 = vld [vmem:[#allocation2 + $0x90] sm:$0xff]
      %v340 = vld [vmem:[#allocation2 + $0x98] sm:$0xff]
      %v341 = vld [vmem:[#allocation2 + $0xa0] sm:$0xff]
      %v342 = vld [vmem:[#allocation2 + $0xa8] sm:$0xff]
      %v343 = vld [vmem:[#allocation2 + $0xb0] sm:$0xff]
      %v344 = vld [vmem:[#allocation2 + $0xb8] sm:$0xff]
      %v345 = vld [vmem:[#allocation2 + $0xc0] sm:$0xff]
      %v346 = vld [vmem:[#allocation2 + $0xc8] sm:$0xff]
      %v347 = vld [vmem:[#allocation2 + $0xd0] sm:$0xff]
      %v348 = vld [vmem:[#allocation2 + $0xd8] sm:$0xff]
      %v349 = vld [vmem:[#allocation2 + $0xe0] sm:$0xff]
      %v350 = vld [vmem:[#allocation2 + $0xe8] sm:$0xff]
      %v351 = vld [vmem:[#allocation2 + $0xf0] sm:$0xff]
      %v352 = vld [vmem:[#allocation2 + $0xf8] sm:$0xff]
      %v353 = vld [vmem:[#allocation2 + $0x100] sm:$0xff]
      %v354 = vld [vmem:[#allocation2 + $0x108] sm:$0xff]
      %v355 = vld [vmem:[#allocation2 + $0x110] sm:$0xff]
      %v356 = vld [vmem:[#allocation2 + $0x118] sm:$0xff]
      %v357 = vld [vmem:[#allocation2 + $0x120] sm:$0xff]
      %v358 = vld [vmem:[#allocation2 + $0x128] sm:$0xff]
      %v359 = vld [vmem:[#allocation2 + $0x130] sm:$0xff]
      %v360 = vld [vmem:[#allocation2 + $0x138] sm:$0xff]
      %v361 = vld [vmem:[#allocation2 + $0x140] sm:$0xff]
      %v362 = vld [vmem:[#allocation2 + $0x148] sm:$0xff]
      %v363 = vld [vmem:[#allocation2 + $0x150] sm:$0xff]
      %v364 = vld [vmem:[#allocation2 + $0x158] sm:$0xff]
      %v365 = vld [vmem:[#allocation2 + $0x160] sm:$0xff]
      %v366 = vld [vmem:[#allocation2 + $0x168] sm:$0xff]
      %v367 = vld [vmem:[#allocation2 + $0x170] sm:$0xff]
      %v368 = vld [vmem:[%s213] sm:$0xf]
      %v416 = vunpack.c.l.b16 %v273
      %v417 = vunpack.c.l.b16 %v274
      %v418 = vunpack.c.l.b16 %v275
      %v419 = vunpack.c.l.b16 %v276
      %v420 = vunpack.c.l.b16 %v277
      %v421 = vunpack.c.l.b16 %v278
      %v422 = vunpack.c.l.b16 %v279
      %v423 = vunpack.c.l.b16 %v280
      %v424 = vunpack.c.l.b16 %v281
      %v425 = vunpack.c.l.b16 %v282
      %v426 = vunpack.c.l.b16 %v283
      %v427 = vunpack.c.l.b16 %v284
      %v428 = vunpack.c.l.b16 %v285
      %v429 = vunpack.c.l.b16 %v286
      %v430 = vunpack.c.l.b16 %v287
      %v431 = vunpack.c.l.b16 %v288
      %v432 = vunpack.c.l.b16 %v289
      %v433 = vunpack.c.l.b16 %v290
      %v434 = vunpack.c.l.b16 %v291
      %v435 = vunpack.c.l.b16 %v292
      %v436 = vunpack.c.l.b16 %v293
      %v437 = vunpack.c.l.b16 %v294
      %v438 = vunpack.c.l.b16 %v295
      %v439 = vunpack.c.l.b16 %v296
      %v440 = vunpack.c.l.b16 %v297
      %v441 = vunpack.c.l.b16 %v298
      %v442 = vunpack.c.l.b16 %v299
      %v443 = vunpack.c.l.b16 %v300
      %v444 = vunpack.c.l.b16 %v301
      %v445 = vunpack.c.l.b16 %v302
      %v446 = vunpack.c.l.b16 %v303
      %v447 = vunpack.c.l.b16 %v304
      %v448 = vunpack.c.l.b16 %v305
      %v449 = vunpack.c.l.b16 %v306
      %v450 = vunpack.c.l.b16 %v307
      %v451 = vunpack.c.l.b16 %v308
      %v452 = vunpack.c.l.b16 %v309
      %v453 = vunpack.c.l.b16 %v310
      %v454 = vunpack.c.l.b16 %v311
      %v455 = vunpack.c.l.b16 %v312
      %v456 = vunpack.c.l.b16 %v313
      %v457 = vunpack.c.l.b16 %v314
      %v458 = vunpack.c.l.b16 %v315
      %v459 = vunpack.c.l.b16 %v316
      %v460 = vunpack.c.l.b16 %v317
      %v461 = vunpack.c.l.b16 %v318
      %v462 = vunpack.c.l.b16 %v319
      %v463 = vpack.c.b16 %v417, %v416
      %v464 = vpack.c.b16 %v419, %v418
      %v465 = vpack.c.b16 %v421, %v420
      %v466 = vpack.c.b16 %v423, %v422
      %v467 = vpack.c.b16 %v425, %v424
      %v468 = vpack.c.b16 %v427, %v426
      %v469 = vpack.c.b16 %v429, %v428
      %v470 = vpack.c.b16 %v431, %v430
      %v471 = vpack.c.b16 %v433, %v432
      %v472 = vpack.c.b16 %v435, %v434
      %v473 = vpack.c.b16 %v437, %v436
      %v474 = vpack.c.b16 %v439, %v438
      %v475 = vpack.c.b16 %v441, %v440
      %v476 = vpack.c.b16 %v443, %v442
      %v477 = vpack.c.b16 %v445, %v444
      %v478 = vpack.c.b16 %v447, %v446
      %v479 = vpack.c.b16 %v449, %v448
      %v480 = vpack.c.b16 %v451, %v450
      %v481 = vpack.c.b16 %v453, %v452
      %v482 = vpack.c.b16 %v455, %v454
      %v483 = vpack.c.b16 %v457, %v456
      %v484 = vpack.c.b16 %v459, %v458
      %v485 = vpack.c.b16 %v461, %v460
      %v486 = vpack.c.b16 %v462, %v462
      %vm487 = vcmask 64512
      %v489 = vsel %vm487, %v463, 0
      %v492 = vsel %vm487, %v464, 0
      %v495 = vsel %vm487, %v465, 0
      %v498 = vsel %vm487, %v466, 0
      %v501 = vsel %vm487, %v467, 0
      %v504 = vsel %vm487, %v468, 0
      %v507 = vsel %vm487, %v469, 0
      %v510 = vsel %vm487, %v470, 0
      %v513 = vsel %vm487, %v471, 0
      %v516 = vsel %vm487, %v472, 0
      %v519 = vsel %vm487, %v473, 0
      %v522 = vsel %vm487, %v474, 0
      %v525 = vsel %vm487, %v475, 0
      %v528 = vsel %vm487, %v476, 0
      %v531 = vsel %vm487, %v477, 0
      %v534 = vsel %vm487, %v478, 0
      %v537 = vsel %vm487, %v479, 0
      %v540 = vsel %vm487, %v480, 0
      %v543 = vsel %vm487, %v481, 0
      %v546 = vsel %vm487, %v482, 0
      %v549 = vsel %vm487, %v483, 0
      %v552 = vsel %vm487, %v484, 0
      %v555 = vsel %vm487, %v485, 0
      %v558 = vsel %vm487, %v486, 0
      %vm560 = vcmask 1043456
      %v562 = vsel %vm560, %v368, 0
      %564 = vmatprep.subr.bf16.mxu0 0
      %565 = vmatpush1.bf16.msra.mxu0 0
      %566 = vmatprep.subr.bf16.mxu0 0
      %567 = vmatpush1.bf16.msra.mxu0 0
      %568 = vmatprep.subr.bf16.mxu0 0
      %569 = vmatpush1.bf16.msra.mxu0 0
      %570 = vmatprep.subr.bf16.mxu0 0
      %571 = vmatpush1.bf16.msra.mxu0 0
      %572 = vmatprep.subr.bf16.mxu0 0
      %573 = vmatpush1.bf16.msra.mxu0 0
      %574 = vmatprep.subr.bf16.mxu0 0
      %575 = vmatpush1.bf16.msra.mxu0 0
      %576 = vmatprep.subr.bf16.mxu0 0
      %577 = vmatpush1.bf16.msra.mxu0 0
      %578 = vmatprep.subr.bf16.mxu0 0
      %579 = vmatpush1.bf16.msra.mxu0 %v562
      %580 = vmatprep.subr.bf16.mxu0 0
      %581 = vmatpush2.bf16.msra.mxu0 0
      %582 = vmatprep.subr.bf16.mxu0 0
      %583 = vmatpush2.bf16.msra.mxu0 0
      %584 = vmatprep.subr.bf16.mxu0 0
      %585 = vmatpush2.bf16.msra.mxu0 0
      %586 = vmatprep.subr.bf16.mxu0 0
      %587 = vmatpush2.bf16.msra.mxu0 0
      %588 = vmatprep.subr.bf16.mxu0 0
      %589 = vmatpush2.bf16.msra.mxu0 0
      %590 = vmatprep.subr.bf16.mxu0 0
      %591 = vmatpush2.bf16.msra.mxu0 0
      %592 = vmatprep.subr.bf16.mxu0 0
      %593 = vmatpush2.bf16.msra.mxu0 0
      %594 = vmatprep.subr.bf16.mxu0 0
      %595 = vmatpush2.bf16.msra.mxu0 0
      %596 = vmatprep.mubr.bf16.mxu0 0
      %597 = vmatmul.mubr.bf16.gmra.mxu0 %v489
      %v598 = vpop.f32.mrf.mxu0
      %v599 = vadd.f32 0.0, %v598
      %v600 = vpop.f32.mrf.mxu0
      %v601 = vpop.f32.mrf.mxu0
      %v602 = vadd.f32 0.0, %v601
      %v603 = vpop.f32.mrf.mxu0
      %604 = vmatprep.mubr.bf16.mxu0 0
      %605 = vmatmul.mubr.bf16.gmra.mxu0 %v492
      %v606 = vpop.f32.mrf.mxu0
      %v607 = vadd.f32 0.0, %v606
      %v608 = vpop.f32.mrf.mxu0
      %v609 = vpop.f32.mrf.mxu0
      %v610 = vadd.f32 0.0, %v609
      %v611 = vpop.f32.mrf.mxu0
      %612 = vmatprep.mubr.bf16.mxu0 0
      %613 = vmatmul.mubr.bf16.gmra.mxu0 %v495
      %v614 = vpop.f32.mrf.mxu0
      %v615 = vadd.f32 0.0, %v614
      %v616 = vpop.f32.mrf.mxu0
      %v617 = vpop.f32.mrf.mxu0
      %v618 = vadd.f32 0.0, %v617
      %v619 = vpop.f32.mrf.mxu0
      %620 = vmatprep.mubr.bf16.mxu0 0
      %621 = vmatmul.mubr.bf16.gmra.mxu0 %v498
      %v622 = vpop.f32.mrf.mxu0
      %v623 = vadd.f32 0.0, %v622
      %v624 = vpop.f32.mrf.mxu0
      %v625 = vpop.f32.mrf.mxu0
      %v626 = vadd.f32 0.0, %v625
      %v627 = vpop.f32.mrf.mxu0
      %628 = vmatprep.mubr.bf16.mxu0 0
      %629 = vmatmul.mubr.bf16.gmra.mxu0 %v501
      %v630 = vpop.f32.mrf.mxu0
      %v631 = vadd.f32 0.0, %v630
      %v632 = vpop.f32.mrf.mxu0
      %v633 = vpop.f32.mrf.mxu0
      %v634 = vadd.f32 0.0, %v633
      %v635 = vpop.f32.mrf.mxu0
      %636 = vmatprep.mubr.bf16.mxu0 0
      %637 = vmatmul.mubr.bf16.gmra.mxu0 %v504
      %v638 = vpop.f32.mrf.mxu0
      %v639 = vadd.f32 0.0, %v638
      %v640 = vpop.f32.mrf.mxu0
      %v641 = vpop.f32.mrf.mxu0
      %v642 = vadd.f32 0.0, %v641
      %v643 = vpop.f32.mrf.mxu0
      %644 = vmatprep.mubr.bf16.mxu0 0
      %645 = vmatmul.mubr.bf16.gmra.mxu0 %v507
      %v646 = vpop.f32.mrf.mxu0
      %v647 = vadd.f32 0.0, %v646
      %v648 = vpop.f32.mrf.mxu0
      %v649 = vpop.f32.mrf.mxu0
      %v650 = vadd.f32 0.0, %v649
      %v651 = vpop.f32.mrf.mxu0
      %652 = vmatprep.mubr.bf16.mxu0 0
      %653 = vmatmul.mubr.bf16.gmra.mxu0 %v510
      %v654 = vpop.f32.mrf.mxu0
      %v655 = vadd.f32 0.0, %v654
      %v656 = vpop.f32.mrf.mxu0
      %v657 = vpop.f32.mrf.mxu0
      %v658 = vadd.f32 0.0, %v657
      %v659 = vpop.f32.mrf.mxu0
      %660 = vmatprep.mubr.bf16.mxu0 0
      %661 = vmatmul.mubr.bf16.gmra.mxu0 %v513
      %v662 = vpop.f32.mrf.mxu0
      %v663 = vadd.f32 0.0, %v662
      %v664 = vpop.f32.mrf.mxu0
      %v665 = vpop.f32.mrf.mxu0
      %v666 = vadd.f32 0.0, %v665
      %v667 = vpop.f32.mrf.mxu0
      %668 = vmatprep.mubr.bf16.mxu0 0
      %669 = vmatmul.mubr.bf16.gmra.mxu0 %v516
      %v670 = vpop.f32.mrf.mxu0
      %v671 = vadd.f32 0.0, %v670
      %v672 = vpop.f32.mrf.mxu0
      %v673 = vpop.f32.mrf.mxu0
      %v674 = vadd.f32 0.0, %v673
      %v675 = vpop.f32.mrf.mxu0
      %676 = vmatprep.mubr.bf16.mxu0 0
      %677 = vmatmul.mubr.bf16.gmra.mxu0 %v519
      %v678 = vpop.f32.mrf.mxu0
      %v679 = vadd.f32 0.0, %v678
      %v680 = vpop.f32.mrf.mxu0
      %v681 = vpop.f32.mrf.mxu0
      %v682 = vadd.f32 0.0, %v681
      %v683 = vpop.f32.mrf.mxu0
      %684 = vmatprep.mubr.bf16.mxu0 0
      %685 = vmatmul.mubr.bf16.gmra.mxu0 %v522
      %v686 = vpop.f32.mrf.mxu0
      %v687 = vadd.f32 0.0, %v686
      %v688 = vpop.f32.mrf.mxu0
      %v689 = vpop.f32.mrf.mxu0
      %v690 = vadd.f32 0.0, %v689
      %v691 = vpop.f32.mrf.mxu0
      %692 = vmatprep.mubr.bf16.mxu0 0
      %693 = vmatmul.mubr.bf16.gmra.mxu0 %v525
      %v694 = vpop.f32.mrf.mxu0
      %v695 = vadd.f32 0.0, %v694
      %v696 = vpop.f32.mrf.mxu0
      %v697 = vpop.f32.mrf.mxu0
      %v698 = vadd.f32 0.0, %v697
      %v699 = vpop.f32.mrf.mxu0
      %700 = vmatprep.mubr.bf16.mxu0 0
      %701 = vmatmul.mubr.bf16.gmra.mxu0 %v528
      %v702 = vpop.f32.mrf.mxu0
      %v703 = vadd.f32 0.0, %v702
      %v704 = vpop.f32.mrf.mxu0
      %v705 = vpop.f32.mrf.mxu0
      %v706 = vadd.f32 0.0, %v705
      %v707 = vpop.f32.mrf.mxu0
      %708 = vmatprep.mubr.bf16.mxu0 0
      %709 = vmatmul.mubr.bf16.gmra.mxu0 %v531
      %v710 = vpop.f32.mrf.mxu0
      %v711 = vadd.f32 0.0, %v710
      %v712 = vpop.f32.mrf.mxu0
      %v713 = vpop.f32.mrf.mxu0
      %v714 = vadd.f32 0.0, %v713
      %v715 = vpop.f32.mrf.mxu0
      %716 = vmatprep.mubr.bf16.mxu0 0
      %717 = vmatmul.mubr.bf16.gmra.mxu0 %v534
      %v718 = vpop.f32.mrf.mxu0
      %v719 = vadd.f32 0.0, %v718
      %v720 = vpop.f32.mrf.mxu0
      %v721 = vpop.f32.mrf.mxu0
      %v722 = vadd.f32 0.0, %v721
      %v723 = vpop.f32.mrf.mxu0
      %724 = vmatprep.mubr.bf16.mxu0 0
      %725 = vmatmul.mubr.bf16.gmra.mxu0 %v537
      %v726 = vpop.f32.mrf.mxu0
      %v727 = vadd.f32 0.0, %v726
      %v728 = vpop.f32.mrf.mxu0
      %v729 = vpop.f32.mrf.mxu0
      %v730 = vadd.f32 0.0, %v729
      %v731 = vpop.f32.mrf.mxu0
      %732 = vmatprep.mubr.bf16.mxu0 0
      %733 = vmatmul.mubr.bf16.gmra.mxu0 %v540
      %v734 = vpop.f32.mrf.mxu0
      %v735 = vadd.f32 0.0, %v734
      %v736 = vpop.f32.mrf.mxu0
      %v737 = vpop.f32.mrf.mxu0
      %v738 = vadd.f32 0.0, %v737
      %v739 = vpop.f32.mrf.mxu0
      %740 = vmatprep.mubr.bf16.mxu0 0
      %741 = vmatmul.mubr.bf16.gmra.mxu0 %v543
      %v742 = vpop.f32.mrf.mxu0
      %v743 = vadd.f32 0.0, %v742
      %v744 = vpop.f32.mrf.mxu0
      %v745 = vpop.f32.mrf.mxu0
      %v746 = vadd.f32 0.0, %v745
      %v747 = vpop.f32.mrf.mxu0
      %748 = vmatprep.mubr.bf16.mxu0 0
      %749 = vmatmul.mubr.bf16.gmra.mxu0 %v546
      %v750 = vpop.f32.mrf.mxu0
      %v751 = vadd.f32 0.0, %v750
      %v752 = vpop.f32.mrf.mxu0
      %v753 = vpop.f32.mrf.mxu0
      %v754 = vadd.f32 0.0, %v753
      %v755 = vpop.f32.mrf.mxu0
      %756 = vmatprep.mubr.bf16.mxu0 0
      %757 = vmatmul.mubr.bf16.gmra.mxu0 %v549
      %v758 = vpop.f32.mrf.mxu0
      %v759 = vadd.f32 0.0, %v758
      %v760 = vpop.f32.mrf.mxu0
      %v761 = vpop.f32.mrf.mxu0
      %v762 = vadd.f32 0.0, %v761
      %v763 = vpop.f32.mrf.mxu0
      %764 = vmatprep.mubr.bf16.mxu0 0
      %765 = vmatmul.mubr.bf16.gmra.mxu0 %v552
      %v766 = vpop.f32.mrf.mxu0
      %v767 = vadd.f32 0.0, %v766
      %v768 = vpop.f32.mrf.mxu0
      %v769 = vpop.f32.mrf.mxu0
      %v770 = vadd.f32 0.0, %v769
      %v771 = vpop.f32.mrf.mxu0
      %772 = vmatprep.mubr.bf16.mxu0 0
      %773 = vmatmul.mubr.bf16.gmra.mxu0 %v555
      %v774 = vpop.f32.mrf.mxu0
      %v775 = vadd.f32 0.0, %v774
      %v776 = vpop.f32.mrf.mxu0
      %v777 = vpop.f32.mrf.mxu0
      %v778 = vadd.f32 0.0, %v777
      %v779 = vpop.f32.mrf.mxu0
      %780 = vmatprep.mubr.bf16.mxu0 0
      %781 = vmatmul.mubr.bf16.gmra.mxu0 %v558
      %v782 = vpop.f32.mrf.mxu0
      %v783 = vadd.f32 0.0, %v782
      %v784 = vpop.f32.mrf.mxu0
      %v785 = vpop.f32.mrf.mxu0
      %v786 = vpop.f32.mrf.mxu0
      %787 = vdwg.mxu0
      %v788 = vadd.f32 %v321, %v599
      %v789 = vadd.f32 %v322, %v602
      %v790 = vadd.f32 %v323, %v607
      %v791 = vadd.f32 %v324, %v610
      %v792 = vadd.f32 %v325, %v615
      %v793 = vadd.f32 %v326, %v618
      %v794 = vadd.f32 %v327, %v623
      %v795 = vadd.f32 %v328, %v626
      %v796 = vadd.f32 %v329, %v631
      %v797 = vadd.f32 %v330, %v634
      %v798 = vadd.f32 %v331, %v639
      %v799 = vadd.f32 %v332, %v642
      %v800 = vadd.f32 %v333, %v647
      %v801 = vadd.f32 %v334, %v650
      %v802 = vadd.f32 %v335, %v655
      %v803 = vadd.f32 %v336, %v658
      %v804 = vadd.f32 %v337, %v663
      %v805 = vadd.f32 %v338, %v666
      %v806 = vadd.f32 %v339, %v671
      %v807 = vadd.f32 %v340, %v674
      %v808 = vadd.f32 %v341, %v679
      %v809 = vadd.f32 %v342, %v682
      %v810 = vadd.f32 %v343, %v687
      %v811 = vadd.f32 %v344, %v690
      %v812 = vadd.f32 %v345, %v695
      %v813 = vadd.f32 %v346, %v698
      %v814 = vadd.f32 %v347, %v703
      %v815 = vadd.f32 %v348, %v706
      %v816 = vadd.f32 %v349, %v711
      %v817 = vadd.f32 %v350, %v714
      %v818 = vadd.f32 %v351, %v719
      %v819 = vadd.f32 %v352, %v722
      %v820 = vadd.f32 %v353, %v727
      %v821 = vadd.f32 %v354, %v730
      %v822 = vadd.f32 %v355, %v735
      %v823 = vadd.f32 %v356, %v738
      %v824 = vadd.f32 %v357, %v743
      %v825 = vadd.f32 %v358, %v746
      %v826 = vadd.f32 %v359, %v751
      %v827 = vadd.f32 %v360, %v754
      %v828 = vadd.f32 %v361, %v759
      %v829 = vadd.f32 %v362, %v762
      %v830 = vadd.f32 %v363, %v767
      %v831 = vadd.f32 %v364, %v770
      %v832 = vadd.f32 %v365, %v775
      %v833 = vadd.f32 %v366, %v778
      %v834 = vadd.f32 %v367, %v783
      %s835 = scalar_lea.vmem %s213, 4
      %v836 = vld [vmem:[%s835] sm:$0xf]
      %v838 = vunpack.c.l.b16 %v320
      %v839 = vpack.c.b16 %v838, %v462
      %vm840 = vsmask.f32 7424
      %v841 = vshrl.u32 %v463, 16
      %v843 = vshll.u32 %v463, 16
      %v845 = vrot.slane %v843, 1
      %v846 = vor.u32 %v841, %v845
      %v847 = vshll.u32 %v464, 16
      %v849 = vrot.slane %v847, 1
      %v850 = vsel %vm840, %v846, %v849
      %v851 = vshrl.u32 %v464, 16
      %v853 = vor.u32 %v851, %v849
      %v854 = vshll.u32 %v465, 16
      %v856 = vrot.slane %v854, 1
      %v857 = vsel %vm840, %v853, %v856
      %v858 = vshrl.u32 %v465, 16
      %v860 = vor.u32 %v858, %v856
      %v861 = vshll.u32 %v466, 16
      %v863 = vrot.slane %v861, 1
      %v864 = vsel %vm840, %v860, %v863
      %v865 = vshrl.u32 %v466, 16
      %v867 = vor.u32 %v865, %v863
      %v868 = vshll.u32 %v467, 16
      %v870 = vrot.slane %v868, 1
      %v871 = vsel %vm840, %v867, %v870
      %v872 = vshrl.u32 %v467, 16
      %v874 = vor.u32 %v872, %v870
      %v875 = vshll.u32 %v468, 16
      %v877 = vrot.slane %v875, 1
      %v878 = vsel %vm840, %v874, %v877
      %v879 = vshrl.u32 %v468, 16
      %v881 = vor.u32 %v879, %v877
      %v882 = vshll.u32 %v469, 16
      %v884 = vrot.slane %v882, 1
      %v885 = vsel %vm840, %v881, %v884
      %v886 = vshrl.u32 %v469, 16
      %v888 = vor.u32 %v886, %v884
      %v889 = vshll.u32 %v470, 16
      %v891 = vrot.slane %v889, 1
      %v892 = vsel %vm840, %v888, %v891
      %v893 = vshrl.u32 %v470, 16
      %v895 = vor.u32 %v893, %v891
      %v896 = vshll.u32 %v471, 16
      %v898 = vrot.slane %v896, 1
      %v899 = vsel %vm840, %v895, %v898
      %v900 = vshrl.u32 %v471, 16
      %v902 = vor.u32 %v900, %v898
      %v903 = vshll.u32 %v472, 16
      %v905 = vrot.slane %v903, 1
      %v906 = vsel %vm840, %v902, %v905
      %v907 = vshrl.u32 %v472, 16
      %v909 = vor.u32 %v907, %v905
      %v910 = vshll.u32 %v473, 16
      %v912 = vrot.slane %v910, 1
      %v913 = vsel %vm840, %v909, %v912
      %v914 = vshrl.u32 %v473, 16
      %v916 = vor.u32 %v914, %v912
      %v917 = vshll.u32 %v474, 16
      %v919 = vrot.slane %v917, 1
      %v920 = vsel %vm840, %v916, %v919
      %v921 = vshrl.u32 %v474, 16
      %v923 = vor.u32 %v921, %v919
      %v924 = vshll.u32 %v475, 16
      %v926 = vrot.slane %v924, 1
      %v927 = vsel %vm840, %v923, %v926
      %v928 = vshrl.u32 %v475, 16
      %v930 = vor.u32 %v928, %v926
      %v931 = vshll.u32 %v476, 16
      %v933 = vrot.slane %v931, 1
      %v934 = vsel %vm840, %v930, %v933
      %v935 = vshrl.u32 %v476, 16
      %v937 = vor.u32 %v935, %v933
      %v938 = vshll.u32 %v477, 16
      %v940 = vrot.slane %v938, 1
      %v941 = vsel %vm840, %v937, %v940
      %v942 = vshrl.u32 %v477, 16
      %v944 = vor.u32 %v942, %v940
      %v945 = vshll.u32 %v478, 16
      %v947 = vrot.slane %v945, 1
      %v948 = vsel %vm840, %v944, %v947
      %v949 = vshrl.u32 %v478, 16
      %v951 = vor.u32 %v949, %v947
      %v952 = vshll.u32 %v479, 16
      %v954 = vrot.slane %v952, 1
      %v955 = vsel %vm840, %v951, %v954
      %v956 = vshrl.u32 %v479, 16
      %v958 = vor.u32 %v956, %v954
      %v959 = vshll.u32 %v480, 16
      %v961 = vrot.slane %v959, 1
      %v962 = vsel %vm840, %v958, %v961
      %v963 = vshrl.u32 %v480, 16
      %v965 = vor.u32 %v963, %v961
      %v966 = vshll.u32 %v481, 16
      %v968 = vrot.slane %v966, 1
      %v969 = vsel %vm840, %v965, %v968
      %v970 = vshrl.u32 %v481, 16
      %v972 = vor.u32 %v970, %v968
      %v973 = vshll.u32 %v482, 16
      %v975 = vrot.slane %v973, 1
      %v976 = vsel %vm840, %v972, %v975
      %v977 = vshrl.u32 %v482, 16
      %v979 = vor.u32 %v977, %v975
      %v980 = vshll.u32 %v483, 16
      %v982 = vrot.slane %v980, 1
      %v983 = vsel %vm840, %v979, %v982
      %v984 = vshrl.u32 %v483, 16
      %v986 = vor.u32 %v984, %v982
      %v987 = vshll.u32 %v484, 16
      %v989 = vrot.slane %v987, 1
      %v990 = vsel %vm840, %v986, %v989
      %v991 = vshrl.u32 %v484, 16
      %v993 = vor.u32 %v991, %v989
      %v994 = vshll.u32 %v485, 16
      %v996 = vrot.slane %v994, 1
      %v997 = vsel %vm840, %v993, %v996
      %v998 = vshrl.u32 %v485, 16
      %v1000 = vor.u32 %v998, %v996
      %v1002 = vshll.u32 %v839, 16
      %v1004 = vrot.slane %v1002, 1
      %v1005 = vsel %vm840, %v1000, %v1004
      %v1006 = vshrl.u32 %v839, 16
      %v1008 = vor.u32 %v1006, %v1004
      %v1010 = vsel %vm487, %v850, 0
      %v1013 = vsel %vm487, %v857, 0
      %v1016 = vsel %vm487, %v864, 0
      %v1019 = vsel %vm487, %v871, 0
      %v1022 = vsel %vm487, %v878, 0
      %v1025 = vsel %vm487, %v885, 0
      %v1028 = vsel %vm487, %v892, 0
      %v1031 = vsel %vm487, %v899, 0
      %v1034 = vsel %vm487, %v906, 0
      %v1037 = vsel %vm487, %v913, 0
      %v1040 = vsel %vm487, %v920, 0
      %v1043 = vsel %vm487, %v927, 0
      %v1046 = vsel %vm487, %v934, 0
      %v1049 = vsel %vm487, %v941, 0
      %v1052 = vsel %vm487, %v948, 0
      %v1055 = vsel %vm487, %v955, 0
      %v1058 = vsel %vm487, %v962, 0
      %v1061 = vsel %vm487, %v969, 0
      %v1064 = vsel %vm487, %v976, 0
      %v1067 = vsel %vm487, %v983, 0
      %v1070 = vsel %vm487, %v990, 0
      %v1073 = vsel %vm487, %v997, 0
      %v1076 = vsel %vm487, %v1005, 0
      %v1079 = vsel %vm487, %v1008, 0
      %v1082 = vsel %vm560, %v836, 0
      %1084 = vmatprep.subr.bf16.mxu0 0
      %1085 = vmatpush1.bf16.msra.mxu0 0
      %1086 = vmatprep.subr.bf16.mxu0 0
      %1087 = vmatpush1.bf16.msra.mxu0 0
      %1088 = vmatprep.subr.bf16.mxu0 0
      %1089 = vmatpush1.bf16.msra.mxu0 0
      %1090 = vmatprep.subr.bf16.mxu0 0
      %1091 = vmatpush1.bf16.msra.mxu0 0
      %1092 = vmatprep.subr.bf16.mxu0 0
      %1093 = vmatpush1.bf16.msra.mxu0 0
      %1094 = vmatprep.subr.bf16.mxu0 0
      %1095 = vmatpush1.bf16.msra.mxu0 0
      %1096 = vmatprep.subr.bf16.mxu0 0
      %1097 = vmatpush1.bf16.msra.mxu0 0
      %1098 = vmatprep.subr.bf16.mxu0 0
      %1099 = vmatpush1.bf16.msra.mxu0 %v1082
      %1100 = vmatprep.subr.bf16.mxu0 0
      %1101 = vmatpush2.bf16.msra.mxu0 0
      %1102 = vmatprep.subr.bf16.mxu0 0
      %1103 = vmatpush2.bf16.msra.mxu0 0
      %1104 = vmatprep.subr.bf16.mxu0 0
      %1105 = vmatpush2.bf16.msra.mxu0 0
      %1106 = vmatprep.subr.bf16.mxu0 0
      %1107 = vmatpush2.bf16.msra.mxu0 0
      %1108 = vmatprep.subr.bf16.mxu0 0
      %1109 = vmatpush2.bf16.msra.mxu0 0
      %1110 = vmatprep.subr.bf16.mxu0 0
      %1111 = vmatpush2.bf16.msra.mxu0 0
      %1112 = vmatprep.subr.bf16.mxu0 0
      %1113 = vmatpush2.bf16.msra.mxu0 0
      %1114 = vmatprep.subr.bf16.mxu0 0
      %1115 = vmatpush2.bf16.msra.mxu0 0
      %1116 = vmatprep.mubr.bf16.mxu0 0
      %1117 = vmatmul.mubr.bf16.gmra.mxu0 %v1010
      %v1118 = vpop.f32.mrf.mxu0
      %v1119 = vadd.f32 0.0, %v1118
      %v1120 = vpop.f32.mrf.mxu0
      %v1121 = vpop.f32.mrf.mxu0
      %v1122 = vadd.f32 0.0, %v1121
      %v1123 = vpop.f32.mrf.mxu0
      %1124 = vmatprep.mubr.bf16.mxu0 0
      %1125 = vmatmul.mubr.bf16.gmra.mxu0 %v1013
      %v1126 = vpop.f32.mrf.mxu0
      %v1127 = vadd.f32 0.0, %v1126
      %v1128 = vpop.f32.mrf.mxu0
      %v1129 = vpop.f32.mrf.mxu0
      %v1130 = vadd.f32 0.0, %v1129
      %v1131 = vpop.f32.mrf.mxu0
      %1132 = vmatprep.mubr.bf16.mxu0 0
      %1133 = vmatmul.mubr.bf16.gmra.mxu0 %v1016
      %v1134 = vpop.f32.mrf.mxu0
      %v1135 = vadd.f32 0.0, %v1134
      %v1136 = vpop.f32.mrf.mxu0
      %v1137 = vpop.f32.mrf.mxu0
      %v1138 = vadd.f32 0.0, %v1137
      %v1139 = vpop.f32.mrf.mxu0
      %1140 = vmatprep.mubr.bf16.mxu0 0
      %1141 = vmatmul.mubr.bf16.gmra.mxu0 %v1019
      %v1142 = vpop.f32.mrf.mxu0
      %v1143 = vadd.f32 0.0, %v1142
      %v1144 = vpop.f32.mrf.mxu0
      %v1145 = vpop.f32.mrf.mxu0
      %v1146 = vadd.f32 0.0, %v1145
      %v1147 = vpop.f32.mrf.mxu0
      %1148 = vmatprep.mubr.bf16.mxu0 0
      %1149 = vmatmul.mubr.bf16.gmra.mxu0 %v1022
      %v1150 = vpop.f32.mrf.mxu0
      %v1151 = vadd.f32 0.0, %v1150
      %v1152 = vpop.f32.mrf.mxu0
      %v1153 = vpop.f32.mrf.mxu0
      %v1154 = vadd.f32 0.0, %v1153
      %v1155 = vpop.f32.mrf.mxu0
      %1156 = vmatprep.mubr.bf16.mxu0 0
      %1157 = vmatmul.mubr.bf16.gmra.mxu0 %v1025
      %v1158 = vpop.f32.mrf.mxu0
      %v1159 = vadd.f32 0.0, %v1158
      %v1160 = vpop.f32.mrf.mxu0
      %v1161 = vpop.f32.mrf.mxu0
      %v1162 = vadd.f32 0.0, %v1161
      %v1163 = vpop.f32.mrf.mxu0
      %1164 = vmatprep.mubr.bf16.mxu0 0
      %1165 = vmatmul.mubr.bf16.gmra.mxu0 %v1028
      %v1166 = vpop.f32.mrf.mxu0
      %v1167 = vadd.f32 0.0, %v1166
      %v1168 = vpop.f32.mrf.mxu0
      %v1169 = vpop.f32.mrf.mxu0
      %v1170 = vadd.f32 0.0, %v1169
      %v1171 = vpop.f32.mrf.mxu0
      %1172 = vmatprep.mubr.bf16.mxu0 0
      %1173 = vmatmul.mubr.bf16.gmra.mxu0 %v1031
      %v1174 = vpop.f32.mrf.mxu0
      %v1175 = vadd.f32 0.0, %v1174
      %v1176 = vpop.f32.mrf.mxu0
      %v1177 = vpop.f32.mrf.mxu0
      %v1178 = vadd.f32 0.0, %v1177
      %v1179 = vpop.f32.mrf.mxu0
      %1180 = vmatprep.mubr.bf16.mxu0 0
      %1181 = vmatmul.mubr.bf16.gmra.mxu0 %v1034
      %v1182 = vpop.f32.mrf.mxu0
      %v1183 = vadd.f32 0.0, %v1182
      %v1184 = vpop.f32.mrf.mxu0
      %v1185 = vpop.f32.mrf.mxu0
      %v1186 = vadd.f32 0.0, %v1185
      %v1187 = vpop.f32.mrf.mxu0
      %1188 = vmatprep.mubr.bf16.mxu0 0
      %1189 = vmatmul.mubr.bf16.gmra.mxu0 %v1037
      %v1190 = vpop.f32.mrf.mxu0
      %v1191 = vadd.f32 0.0, %v1190
      %v1192 = vpop.f32.mrf.mxu0
      %v1193 = vpop.f32.mrf.mxu0
      %v1194 = vadd.f32 0.0, %v1193
      %v1195 = vpop.f32.mrf.mxu0
      %1196 = vmatprep.mubr.bf16.mxu0 0
      %1197 = vmatmul.mubr.bf16.gmra.mxu0 %v1040
      %v1198 = vpop.f32.mrf.mxu0
      %v1199 = vadd.f32 0.0, %v1198
      %v1200 = vpop.f32.mrf.mxu0
      %v1201 = vpop.f32.mrf.mxu0
      %v1202 = vadd.f32 0.0, %v1201
      %v1203 = vpop.f32.mrf.mxu0
      %1204 = vmatprep.mubr.bf16.mxu0 0
      %1205 = vmatmul.mubr.bf16.gmra.mxu0 %v1043
      %v1206 = vpop.f32.mrf.mxu0
      %v1207 = vadd.f32 0.0, %v1206
      %v1208 = vpop.f32.mrf.mxu0
      %v1209 = vpop.f32.mrf.mxu0
      %v1210 = vadd.f32 0.0, %v1209
      %v1211 = vpop.f32.mrf.mxu0
      %1212 = vmatprep.mubr.bf16.mxu0 0
      %1213 = vmatmul.mubr.bf16.gmra.mxu0 %v1046
      %v1214 = vpop.f32.mrf.mxu0
      %v1215 = vadd.f32 0.0, %v1214
      %v1216 = vpop.f32.mrf.mxu0
      %v1217 = vpop.f32.mrf.mxu0
      %v1218 = vadd.f32 0.0, %v1217
      %v1219 = vpop.f32.mrf.mxu0
      %1220 = vmatprep.mubr.bf16.mxu0 0
      %1221 = vmatmul.mubr.bf16.gmra.mxu0 %v1049
      %v1222 = vpop.f32.mrf.mxu0
      %v1223 = vadd.f32 0.0, %v1222
      %v1224 = vpop.f32.mrf.mxu0
      %v1225 = vpop.f32.mrf.mxu0
      %v1226 = vadd.f32 0.0, %v1225
      %v1227 = vpop.f32.mrf.mxu0
      %1228 = vmatprep.mubr.bf16.mxu0 0
      %1229 = vmatmul.mubr.bf16.gmra.mxu0 %v1052
      %v1230 = vpop.f32.mrf.mxu0
      %v1231 = vadd.f32 0.0, %v1230
      %v1232 = vpop.f32.mrf.mxu0
      %v1233 = vpop.f32.mrf.mxu0
      %v1234 = vadd.f32 0.0, %v1233
      %v1235 = vpop.f32.mrf.mxu0
      %1236 = vmatprep.mubr.bf16.mxu0 0
      %1237 = vmatmul.mubr.bf16.gmra.mxu0 %v1055
      %v1238 = vpop.f32.mrf.mxu0
      %v1239 = vadd.f32 0.0, %v1238
      %v1240 = vpop.f32.mrf.mxu0
      %v1241 = vpop.f32.mrf.mxu0
      %v1242 = vadd.f32 0.0, %v1241
      %v1243 = vpop.f32.mrf.mxu0
      %1244 = vmatprep.mubr.bf16.mxu0 0
      %1245 = vmatmul.mubr.bf16.gmra.mxu0 %v1058
      %v1246 = vpop.f32.mrf.mxu0
      %v1247 = vadd.f32 0.0, %v1246
      %v1248 = vpop.f32.mrf.mxu0
      %v1249 = vpop.f32.mrf.mxu0
      %v1250 = vadd.f32 0.0, %v1249
      %v1251 = vpop.f32.mrf.mxu0
      %1252 = vmatprep.mubr.bf16.mxu0 0
      %1253 = vmatmul.mubr.bf16.gmra.mxu0 %v1061
      %v1254 = vpop.f32.mrf.mxu0
      %v1255 = vadd.f32 0.0, %v1254
      %v1256 = vpop.f32.mrf.mxu0
      %v1257 = vpop.f32.mrf.mxu0
      %v1258 = vadd.f32 0.0, %v1257
      %v1259 = vpop.f32.mrf.mxu0
      %1260 = vmatprep.mubr.bf16.mxu0 0
      %1261 = vmatmul.mubr.bf16.gmra.mxu0 %v1064
      %v1262 = vpop.f32.mrf.mxu0
      %v1263 = vadd.f32 0.0, %v1262
      %v1264 = vpop.f32.mrf.mxu0
      %v1265 = vpop.f32.mrf.mxu0
      %v1266 = vadd.f32 0.0, %v1265
      %v1267 = vpop.f32.mrf.mxu0
      %1268 = vmatprep.mubr.bf16.mxu0 0
      %1269 = vmatmul.mubr.bf16.gmra.mxu0 %v1067
      %v1270 = vpop.f32.mrf.mxu0
      %v1271 = vadd.f32 0.0, %v1270
      %v1272 = vpop.f32.mrf.mxu0
      %v1273 = vpop.f32.mrf.mxu0
      %v1274 = vadd.f32 0.0, %v1273
      %v1275 = vpop.f32.mrf.mxu0
      %1276 = vmatprep.mubr.bf16.mxu0 0
      %1277 = vmatmul.mubr.bf16.gmra.mxu0 %v1070
      %v1278 = vpop.f32.mrf.mxu0
      %v1279 = vadd.f32 0.0, %v1278
      %v1280 = vpop.f32.mrf.mxu0
      %v1281 = vpop.f32.mrf.mxu0
      %v1282 = vadd.f32 0.0, %v1281
      %v1283 = vpop.f32.mrf.mxu0
      %1284 = vmatprep.mubr.bf16.mxu0 0
      %1285 = vmatmul.mubr.bf16.gmra.mxu0 %v1073
      %v1286 = vpop.f32.mrf.mxu0
      %v1287 = vadd.f32 0.0, %v1286
      %v1288 = vpop.f32.mrf.mxu0
      %v1289 = vpop.f32.mrf.mxu0
      %v1290 = vadd.f32 0.0, %v1289
      %v1291 = vpop.f32.mrf.mxu0
      %1292 = vmatprep.mubr.bf16.mxu0 0
      %1293 = vmatmul.mubr.bf16.gmra.mxu0 %v1076
      %v1294 = vpop.f32.mrf.mxu0
      %v1295 = vadd.f32 0.0, %v1294
      %v1296 = vpop.f32.mrf.mxu0
      %v1297 = vpop.f32.mrf.mxu0
      %v1298 = vadd.f32 0.0, %v1297
      %v1299 = vpop.f32.mrf.mxu0
      %1300 = vmatprep.mubr.bf16.mxu0 0
      %1301 = vmatmul.mubr.bf16.gmra.mxu0 %v1079
      %v1302 = vpop.f32.mrf.mxu0
      %v1303 = vadd.f32 0.0, %v1302
      %v1304 = vpop.f32.mrf.mxu0
      %v1305 = vpop.f32.mrf.mxu0
      %v1306 = vpop.f32.mrf.mxu0
      %1307 = vdwg.mxu0
      %v1308 = vadd.f32 %v788, %v1119
      %v1309 = vadd.f32 %v789, %v1122
      %v1310 = vadd.f32 %v790, %v1127
      %v1311 = vadd.f32 %v791, %v1130
      %v1312 = vadd.f32 %v792, %v1135
      %v1313 = vadd.f32 %v793, %v1138
      %v1314 = vadd.f32 %v794, %v1143
      %v1315 = vadd.f32 %v795, %v1146
      %v1316 = vadd.f32 %v796, %v1151
      %v1317 = vadd.f32 %v797, %v1154
      %v1318 = vadd.f32 %v798, %v1159
      %v1319 = vadd.f32 %v799, %v1162
      %v1320 = vadd.f32 %v800, %v1167
      %v1321 = vadd.f32 %v801, %v1170
      %v1322 = vadd.f32 %v802, %v1175
      %v1323 = vadd.f32 %v803, %v1178
      %v1324 = vadd.f32 %v804, %v1183
      %v1325 = vadd.f32 %v805, %v1186
      %v1326 = vadd.f32 %v806, %v1191
      %v1327 = vadd.f32 %v807, %v1194
      %v1328 = vadd.f32 %v808, %v1199
      %v1329 = vadd.f32 %v809, %v1202
      %v1330 = vadd.f32 %v810, %v1207
      %v1331 = vadd.f32 %v811, %v1210
      %v1332 = vadd.f32 %v812, %v1215
      %v1333 = vadd.f32 %v813, %v1218
      %v1334 = vadd.f32 %v814, %v1223
      %v1335 = vadd.f32 %v815, %v1226
      %v1336 = vadd.f32 %v816, %v1231
      %v1337 = vadd.f32 %v817, %v1234
      %v1338 = vadd.f32 %v818, %v1239
      %v1339 = vadd.f32 %v819, %v1242
      %v1340 = vadd.f32 %v820, %v1247
      %v1341 = vadd.f32 %v821, %v1250
      %v1342 = vadd.f32 %v822, %v1255
      %v1343 = vadd.f32 %v823, %v1258
      %v1344 = vadd.f32 %v824, %v1263
      %v1345 = vadd.f32 %v825, %v1266
      %v1346 = vadd.f32 %v826, %v1271
      %v1347 = vadd.f32 %v827, %v1274
      %v1348 = vadd.f32 %v828, %v1279
      %v1349 = vadd.f32 %v829, %v1282
      %v1350 = vadd.f32 %v830, %v1287
      %v1351 = vadd.f32 %v831, %v1290
      %v1352 = vadd.f32 %v832, %v1295
      %v1353 = vadd.f32 %v833, %v1298
      %v1354 = vadd.f32 %v834, %v1303
      %s1355 = scalar_lea.vmem %s213, 8
      %v1356 = vld [vmem:[%s1355] sm:$0xf]
      %vm1357 = vcmask 1046528
      %v1358 = vrot.slane %v463, 1
      %v1359 = vrot.slane %v464, 1
      %v1360 = vsel %vm1357, %v1358, %v1359
      %v1361 = vrot.slane %v465, 1
      %v1362 = vsel %vm1357, %v1359, %v1361
      %v1363 = vrot.slane %v466, 1
      %v1364 = vsel %vm1357, %v1361, %v1363
      %v1365 = vrot.slane %v467, 1
      %v1366 = vsel %vm1357, %v1363, %v1365
      %v1367 = vrot.slane %v468, 1
      %v1368 = vsel %vm1357, %v1365, %v1367
      %v1369 = vrot.slane %v469, 1
      %v1370 = vsel %vm1357, %v1367, %v1369
      %v1371 = vrot.slane %v470, 1
      %v1372 = vsel %vm1357, %v1369, %v1371
      %v1373 = vrot.slane %v471, 1
      %v1374 = vsel %vm1357, %v1371, %v1373
      %v1375 = vrot.slane %v472, 1
      %v1376 = vsel %vm1357, %v1373, %v1375
      %v1377 = vrot.slane %v473, 1
      %v1378 = vsel %vm1357, %v1375, %v1377
      %v1379 = vrot.slane %v474, 1
      %v1380 = vsel %vm1357, %v1377, %v1379
      %v1381 = vrot.slane %v475, 1
      %v1382 = vsel %vm1357, %v1379, %v1381
      %v1383 = vrot.slane %v476, 1
      %v1384 = vsel %vm1357, %v1381, %v1383
      %v1385 = vrot.slane %v477, 1
      %v1386 = vsel %vm1357, %v1383, %v1385
      %v1387 = vrot.slane %v478, 1
      %v1388 = vsel %vm1357, %v1385, %v1387
      %v1389 = vrot.slane %v479, 1
      %v1390 = vsel %vm1357, %v1387, %v1389
      %v1391 = vrot.slane %v480, 1
      %v1392 = vsel %vm1357, %v1389, %v1391
      %v1393 = vrot.slane %v481, 1
      %v1394 = vsel %vm1357, %v1391, %v1393
      %v1395 = vrot.slane %v482, 1
      %v1396 = vsel %vm1357, %v1393, %v1395
      %v1397 = vrot.slane %v483, 1
      %v1398 = vsel %vm1357, %v1395, %v1397
      %v1399 = vrot.slane %v484, 1
      %v1400 = vsel %vm1357, %v1397, %v1399
      %v1401 = vrot.slane %v485, 1
      %v1402 = vsel %vm1357, %v1399, %v1401
      %v1403 = vrot.slane %v839, 1
      %v1404 = vsel %vm1357, %v1401, %v1403
      %v1406 = vsel %vm487, %v1360, 0
      %v1409 = vsel %vm487, %v1362, 0
      %v1412 = vsel %vm487, %v1364, 0
      %v1415 = vsel %vm487, %v1366, 0
      %v1418 = vsel %vm487, %v1368, 0
      %v1421 = vsel %vm487, %v1370, 0
      %v1424 = vsel %vm487, %v1372, 0
      %v1427 = vsel %vm487, %v1374, 0
      %v1430 = vsel %vm487, %v1376, 0
      %v1433 = vsel %vm487, %v1378, 0
      %v1436 = vsel %vm487, %v1380, 0
      %v1439 = vsel %vm487, %v1382, 0
      %v1442 = vsel %vm487, %v1384, 0
      %v1445 = vsel %vm487, %v1386, 0
      %v1448 = vsel %vm487, %v1388, 0
      %v1451 = vsel %vm487, %v1390, 0
      %v1454 = vsel %vm487, %v1392, 0
      %v1457 = vsel %vm487, %v1394, 0
      %v1460 = vsel %vm487, %v1396, 0
      %v1463 = vsel %vm487, %v1398, 0
      %v1466 = vsel %vm487, %v1400, 0
      %v1469 = vsel %vm487, %v1402, 0
      %v1472 = vsel %vm487, %v1404, 0
      %v1475 = vsel %vm487, %v1403, 0
      %v1478 = vsel %vm560, %v1356, 0
      %1480 = vmatprep.subr.bf16.mxu0 0
      %1481 = vmatpush1.bf16.msra.mxu0 0
      %1482 = vmatprep.subr.bf16.mxu0 0
      %1483 = vmatpush1.bf16.msra.mxu0 0
      %1484 = vmatprep.subr.bf16.mxu0 0
      %1485 = vmatpush1.bf16.msra.mxu0 0
      %1486 = vmatprep.subr.bf16.mxu0 0
      %1487 = vmatpush1.bf16.msra.mxu0 0
      %1488 = vmatprep.subr.bf16.mxu0 0
      %1489 = vmatpush1.bf16.msra.mxu0 0
      %1490 = vmatprep.subr.bf16.mxu0 0
      %1491 = vmatpush1.bf16.msra.mxu0 0
      %1492 = vmatprep.subr.bf16.mxu0 0
      %1493 = vmatpush1.bf16.msra.mxu0 0
      %1494 = vmatprep.subr.bf16.mxu0 0
      %1495 = vmatpush1.bf16.msra.mxu0 %v1478
      %1496 = vmatprep.subr.bf16.mxu0 0
      %1497 = vmatpush2.bf16.msra.mxu0 0
      %1498 = vmatprep.subr.bf16.mxu0 0
      %1499 = vmatpush2.bf16.msra.mxu0 0
      %1500 = vmatprep.subr.bf16.mxu0 0
      %1501 = vmatpush2.bf16.msra.mxu0 0
      %1502 = vmatprep.subr.bf16.mxu0 0
      %1503 = vmatpush2.bf16.msra.mxu0 0
      %1504 = vmatprep.subr.bf16.mxu0 0
      %1505 = vmatpush2.bf16.msra.mxu0 0
      %1506 = vmatprep.subr.bf16.mxu0 0
      %1507 = vmatpush2.bf16.msra.mxu0 0
      %1508 = vmatprep.subr.bf16.mxu0 0
      %1509 = vmatpush2.bf16.msra.mxu0 0
      %1510 = vmatprep.subr.bf16.mxu0 0
      %1511 = vmatpush2.bf16.msra.mxu0 0
      %1512 = vmatprep.mubr.bf16.mxu0 0
      %1513 = vmatmul.mubr.bf16.gmra.mxu0 %v1406
      %v1514 = vpop.f32.mrf.mxu0
      %v1515 = vadd.f32 0.0, %v1514
      %v1516 = vpop.f32.mrf.mxu0
      %v1517 = vpop.f32.mrf.mxu0
      %v1518 = vadd.f32 0.0, %v1517
      %v1519 = vpop.f32.mrf.mxu0
      %1520 = vmatprep.mubr.bf16.mxu0 0
      %1521 = vmatmul.mubr.bf16.gmra.mxu0 %v1409
      %v1522 = vpop.f32.mrf.mxu0
      %v1523 = vadd.f32 0.0, %v1522
      %v1524 = vpop.f32.mrf.mxu0
      %v1525 = vpop.f32.mrf.mxu0
      %v1526 = vadd.f32 0.0, %v1525
      %v1527 = vpop.f32.mrf.mxu0
      %1528 = vmatprep.mubr.bf16.mxu0 0
      %1529 = vmatmul.mubr.bf16.gmra.mxu0 %v1412
      %v1530 = vpop.f32.mrf.mxu0
      %v1531 = vadd.f32 0.0, %v1530
      %v1532 = vpop.f32.mrf.mxu0
      %v1533 = vpop.f32.mrf.mxu0
      %v1534 = vadd.f32 0.0, %v1533
      %v1535 = vpop.f32.mrf.mxu0
      %1536 = vmatprep.mubr.bf16.mxu0 0
      %1537 = vmatmul.mubr.bf16.gmra.mxu0 %v1415
      %v1538 = vpop.f32.mrf.mxu0
      %v1539 = vadd.f32 0.0, %v1538
      %v1540 = vpop.f32.mrf.mxu0
      %v1541 = vpop.f32.mrf.mxu0
      %v1542 = vadd.f32 0.0, %v1541
      %v1543 = vpop.f32.mrf.mxu0
      %1544 = vmatprep.mubr.bf16.mxu0 0
      %1545 = vmatmul.mubr.bf16.gmra.mxu0 %v1418
      %v1546 = vpop.f32.mrf.mxu0
      %v1547 = vadd.f32 0.0, %v1546
      %v1548 = vpop.f32.mrf.mxu0
      %v1549 = vpop.f32.mrf.mxu0
      %v1550 = vadd.f32 0.0, %v1549
      %v1551 = vpop.f32.mrf.mxu0
      %1552 = vmatprep.mubr.bf16.mxu0 0
      %1553 = vmatmul.mubr.bf16.gmra.mxu0 %v1421
      %v1554 = vpop.f32.mrf.mxu0
      %v1555 = vadd.f32 0.0, %v1554
      %v1556 = vpop.f32.mrf.mxu0
      %v1557 = vpop.f32.mrf.mxu0
      %v1558 = vadd.f32 0.0, %v1557
      %v1559 = vpop.f32.mrf.mxu0
      %1560 = vmatprep.mubr.bf16.mxu0 0
      %1561 = vmatmul.mubr.bf16.gmra.mxu0 %v1424
      %v1562 = vpop.f32.mrf.mxu0
      %v1563 = vadd.f32 0.0, %v1562
      %v1564 = vpop.f32.mrf.mxu0
      %v1565 = vpop.f32.mrf.mxu0
      %v1566 = vadd.f32 0.0, %v1565
      %v1567 = vpop.f32.mrf.mxu0
      %1568 = vmatprep.mubr.bf16.mxu0 0
      %1569 = vmatmul.mubr.bf16.gmra.mxu0 %v1427
      %v1570 = vpop.f32.mrf.mxu0
      %v1571 = vadd.f32 0.0, %v1570
      %v1572 = vpop.f32.mrf.mxu0
      %v1573 = vpop.f32.mrf.mxu0
      %v1574 = vadd.f32 0.0, %v1573
      %v1575 = vpop.f32.mrf.mxu0
      %1576 = vmatprep.mubr.bf16.mxu0 0
      %1577 = vmatmul.mubr.bf16.gmra.mxu0 %v1430
      %v1578 = vpop.f32.mrf.mxu0
      %v1579 = vadd.f32 0.0, %v1578
      %v1580 = vpop.f32.mrf.mxu0
      %v1581 = vpop.f32.mrf.mxu0
      %v1582 = vadd.f32 0.0, %v1581
      %v1583 = vpop.f32.mrf.mxu0
      %1584 = vmatprep.mubr.bf16.mxu0 0
      %1585 = vmatmul.mubr.bf16.gmra.mxu0 %v1433
      %v1586 = vpop.f32.mrf.mxu0
      %v1587 = vadd.f32 0.0, %v1586
      %v1588 = vpop.f32.mrf.mxu0
      %v1589 = vpop.f32.mrf.mxu0
      %v1590 = vadd.f32 0.0, %v1589
      %v1591 = vpop.f32.mrf.mxu0
      %1592 = vmatprep.mubr.bf16.mxu0 0
      %1593 = vmatmul.mubr.bf16.gmra.mxu0 %v1436
      %v1594 = vpop.f32.mrf.mxu0
      %v1595 = vadd.f32 0.0, %v1594
      %v1596 = vpop.f32.mrf.mxu0
      %v1597 = vpop.f32.mrf.mxu0
      %v1598 = vadd.f32 0.0, %v1597
      %v1599 = vpop.f32.mrf.mxu0
      %1600 = vmatprep.mubr.bf16.mxu0 0
      %1601 = vmatmul.mubr.bf16.gmra.mxu0 %v1439
      %v1602 = vpop.f32.mrf.mxu0
      %v1603 = vadd.f32 0.0, %v1602
      %v1604 = vpop.f32.mrf.mxu0
      %v1605 = vpop.f32.mrf.mxu0
      %v1606 = vadd.f32 0.0, %v1605
      %v1607 = vpop.f32.mrf.mxu0
      %1608 = vmatprep.mubr.bf16.mxu0 0
      %1609 = vmatmul.mubr.bf16.gmra.mxu0 %v1442
      %v1610 = vpop.f32.mrf.mxu0
      %v1611 = vadd.f32 0.0, %v1610
      %v1612 = vpop.f32.mrf.mxu0
      %v1613 = vpop.f32.mrf.mxu0
      %v1614 = vadd.f32 0.0, %v1613
      %v1615 = vpop.f32.mrf.mxu0
      %1616 = vmatprep.mubr.bf16.mxu0 0
      %1617 = vmatmul.mubr.bf16.gmra.mxu0 %v1445
      %v1618 = vpop.f32.mrf.mxu0
      %v1619 = vadd.f32 0.0, %v1618
      %v1620 = vpop.f32.mrf.mxu0
      %v1621 = vpop.f32.mrf.mxu0
      %v1622 = vadd.f32 0.0, %v1621
      %v1623 = vpop.f32.mrf.mxu0
      %1624 = vmatprep.mubr.bf16.mxu0 0
      %1625 = vmatmul.mubr.bf16.gmra.mxu0 %v1448
      %v1626 = vpop.f32.mrf.mxu0
      %v1627 = vadd.f32 0.0, %v1626
      %v1628 = vpop.f32.mrf.mxu0
      %v1629 = vpop.f32.mrf.mxu0
      %v1630 = vadd.f32 0.0, %v1629
      %v1631 = vpop.f32.mrf.mxu0
      %1632 = vmatprep.mubr.bf16.mxu0 0
      %1633 = vmatmul.mubr.bf16.gmra.mxu0 %v1451
      %v1634 = vpop.f32.mrf.mxu0
      %v1635 = vadd.f32 0.0, %v1634
      %v1636 = vpop.f32.mrf.mxu0
      %v1637 = vpop.f32.mrf.mxu0
      %v1638 = vadd.f32 0.0, %v1637
      %v1639 = vpop.f32.mrf.mxu0
      %1640 = vmatprep.mubr.bf16.mxu0 0
      %1641 = vmatmul.mubr.bf16.gmra.mxu0 %v1454
      %v1642 = vpop.f32.mrf.mxu0
      %v1643 = vadd.f32 0.0, %v1642
      %v1644 = vpop.f32.mrf.mxu0
      %v1645 = vpop.f32.mrf.mxu0
      %v1646 = vadd.f32 0.0, %v1645
      %v1647 = vpop.f32.mrf.mxu0
      %1648 = vmatprep.mubr.bf16.mxu0 0
      %1649 = vmatmul.mubr.bf16.gmra.mxu0 %v1457
      %v1650 = vpop.f32.mrf.mxu0
      %v1651 = vadd.f32 0.0, %v1650
      %v1652 = vpop.f32.mrf.mxu0
      %v1653 = vpop.f32.mrf.mxu0
      %v1654 = vadd.f32 0.0, %v1653
      %v1655 = vpop.f32.mrf.mxu0
      %1656 = vmatprep.mubr.bf16.mxu0 0
      %1657 = vmatmul.mubr.bf16.gmra.mxu0 %v1460
      %v1658 = vpop.f32.mrf.mxu0
      %v1659 = vadd.f32 0.0, %v1658
      %v1660 = vpop.f32.mrf.mxu0
      %v1661 = vpop.f32.mrf.mxu0
      %v1662 = vadd.f32 0.0, %v1661
      %v1663 = vpop.f32.mrf.mxu0
      %1664 = vmatprep.mubr.bf16.mxu0 0
      %1665 = vmatmul.mubr.bf16.gmra.mxu0 %v1463
      %v1666 = vpop.f32.mrf.mxu0
      %v1667 = vadd.f32 0.0, %v1666
      %v1668 = vpop.f32.mrf.mxu0
      %v1669 = vpop.f32.mrf.mxu0
      %v1670 = vadd.f32 0.0, %v1669
      %v1671 = vpop.f32.mrf.mxu0
      %1672 = vmatprep.mubr.bf16.mxu0 0
      %1673 = vmatmul.mubr.bf16.gmra.mxu0 %v1466
      %v1674 = vpop.f32.mrf.mxu0
      %v1675 = vadd.f32 0.0, %v1674
      %v1676 = vpop.f32.mrf.mxu0
      %v1677 = vpop.f32.mrf.mxu0
      %v1678 = vadd.f32 0.0, %v1677
      %v1679 = vpop.f32.mrf.mxu0
      %1680 = vmatprep.mubr.bf16.mxu0 0
      %1681 = vmatmul.mubr.bf16.gmra.mxu0 %v1469
      %v1682 = vpop.f32.mrf.mxu0
      %v1683 = vadd.f32 0.0, %v1682
      %v1684 = vpop.f32.mrf.mxu0
      %v1685 = vpop.f32.mrf.mxu0
      %v1686 = vadd.f32 0.0, %v1685
      %v1687 = vpop.f32.mrf.mxu0
      %1688 = vmatprep.mubr.bf16.mxu0 0
      %1689 = vmatmul.mubr.bf16.gmra.mxu0 %v1472
      %v1690 = vpop.f32.mrf.mxu0
      %v1691 = vadd.f32 0.0, %v1690
      %v1692 = vpop.f32.mrf.mxu0
      %v1693 = vpop.f32.mrf.mxu0
      %v1694 = vadd.f32 0.0, %v1693
      %v1695 = vpop.f32.mrf.mxu0
      %1696 = vmatprep.mubr.bf16.mxu0 0
      %1697 = vmatmul.mubr.bf16.gmra.mxu0 %v1475
      %v1698 = vpop.f32.mrf.mxu0
      %v1699 = vadd.f32 0.0, %v1698
      %v1700 = vpop.f32.mrf.mxu0
      %v1701 = vpop.f32.mrf.mxu0
      %v1702 = vpop.f32.mrf.mxu0
      %1703 = vdwg.mxu0
      %v1704 = vadd.f32 %v1308, %v1515
      %v1705 = vadd.f32 %v1309, %v1518
      %v1706 = vadd.f32 %v1310, %v1523
      %v1707 = vadd.f32 %v1311, %v1526
      %v1708 = vadd.f32 %v1312, %v1531
      %v1709 = vadd.f32 %v1313, %v1534
      %v1710 = vadd.f32 %v1314, %v1539
      %v1711 = vadd.f32 %v1315, %v1542
      %v1712 = vadd.f32 %v1316, %v1547
      %v1713 = vadd.f32 %v1317, %v1550
      %v1714 = vadd.f32 %v1318, %v1555
      %v1715 = vadd.f32 %v1319, %v1558
      %v1716 = vadd.f32 %v1320, %v1563
      %v1717 = vadd.f32 %v1321, %v1566
      %v1718 = vadd.f32 %v1322, %v1571
      %v1719 = vadd.f32 %v1323, %v1574
      %v1720 = vadd.f32 %v1324, %v1579
      %v1721 = vadd.f32 %v1325, %v1582
      %v1722 = vadd.f32 %v1326, %v1587
      %v1723 = vadd.f32 %v1327, %v1590
      %v1724 = vadd.f32 %v1328, %v1595
      %v1725 = vadd.f32 %v1329, %v1598
      %v1726 = vadd.f32 %v1330, %v1603
      %v1727 = vadd.f32 %v1331, %v1606
      %v1728 = vadd.f32 %v1332, %v1611
      %v1729 = vadd.f32 %v1333, %v1614
      %v1730 = vadd.f32 %v1334, %v1619
      %v1731 = vadd.f32 %v1335, %v1622
      %v1732 = vadd.f32 %v1336, %v1627
      %v1733 = vadd.f32 %v1337, %v1630
      %v1734 = vadd.f32 %v1338, %v1635
      %v1735 = vadd.f32 %v1339, %v1638
      %v1736 = vadd.f32 %v1340, %v1643
      %v1737 = vadd.f32 %v1341, %v1646
      %v1738 = vadd.f32 %v1342, %v1651
      %v1739 = vadd.f32 %v1343, %v1654
      %v1740 = vadd.f32 %v1344, %v1659
      %v1741 = vadd.f32 %v1345, %v1662
      %v1742 = vadd.f32 %v1346, %v1667
      %v1743 = vadd.f32 %v1347, %v1670
      %v1744 = vadd.f32 %v1348, %v1675
      %v1745 = vadd.f32 %v1349, %v1678
      %v1746 = vadd.f32 %v1350, %v1683
      %v1747 = vadd.f32 %v1351, %v1686
      %v1748 = vadd.f32 %v1352, %v1691
      %v1749 = vadd.f32 %v1353, %v1694
      %v1750 = vadd.f32 %v1354, %v1699
      %1751 = vst [vmem:[#allocation2] sm:$0xff] %v1704
      %1752 = vst [vmem:[#allocation2 + $0x8] sm:$0xff] %v1705
      %1753 = vst [vmem:[#allocation2 + $0x10] sm:$0xff] %v1706
      %1754 = vst [vmem:[#allocation2 + $0x18] sm:$0xff] %v1707
      %1755 = vst [vmem:[#allocation2 + $0x20] sm:$0xff] %v1708
      %1756 = vst [vmem:[#allocation2 + $0x28] sm:$0xff] %v1709
      %1757 = vst [vmem:[#allocation2 + $0x30] sm:$0xff] %v1710
      %1758 = vst [vmem:[#allocation2 + $0x38] sm:$0xff] %v1711
      %1759 = vst [vmem:[#allocation2 + $0x40] sm:$0xff] %v1712
      %1760 = vst [vmem:[#allocation2 + $0x48] sm:$0xff] %v1713
      %1761 = vst [vmem:[#allocation2 + $0x50] sm:$0xff] %v1714
      %1762 = vst [vmem:[#allocation2 + $0x58] sm:$0xff] %v1715
      %1763 = vst [vmem:[#allocation2 + $0x60] sm:$0xff] %v1716
      %1764 = vst [vmem:[#allocation2 + $0x68] sm:$0xff] %v1717
      %1765 = vst [vmem:[#allocation2 + $0x70] sm:$0xff] %v1718
      %1766 = vst [vmem:[#allocation2 + $0x78] sm:$0xff] %v1719
      %1767 = vst [vmem:[#allocation2 + $0x80] sm:$0xff] %v1720
      %1768 = vst [vmem:[#allocation2 + $0x88] sm:$0xff] %v1721
      %1769 = vst [vmem:[#allocation2 + $0x90] sm:$0xff] %v1722
      %1770 = vst [vmem:[#allocation2 + $0x98] sm:$0xff] %v1723
      %1771 = vst [vmem:[#allocation2 + $0xa0] sm:$0xff] %v1724
      %1772 = vst [vmem:[#allocation2 + $0xa8] sm:$0xff] %v1725
      %1773 = vst [vmem:[#allocation2 + $0xb0] sm:$0xff] %v1726
      %1774 = vst [vmem:[#allocation2 + $0xb8] sm:$0xff] %v1727
      %1775 = vst [vmem:[#allocation2 + $0xc0] sm:$0xff] %v1728
      %1776 = vst [vmem:[#allocation2 + $0xc8] sm:$0xff] %v1729
      %1777 = vst [vmem:[#allocation2 + $0xd0] sm:$0xff] %v1730
      %1778 = vst [vmem:[#allocation2 + $0xd8] sm:$0xff] %v1731
      %1779 = vst [vmem:[#allocation2 + $0xe0] sm:$0xff] %v1732
      %1780 = vst [vmem:[#allocation2 + $0xe8] sm:$0xff] %v1733
      %1781 = vst [vmem:[#allocation2 + $0xf0] sm:$0xff] %v1734
      %1782 = vst [vmem:[#allocation2 + $0xf8] sm:$0xff] %v1735
      %1783 = vst [vmem:[#allocation2 + $0x100] sm:$0xff] %v1736
      %1784 = vst [vmem:[#allocation2 + $0x108] sm:$0xff] %v1737
      %1785 = vst [vmem:[#allocation2 + $0x110] sm:$0xff] %v1738
      %1786 = vst [vmem:[#allocation2 + $0x118] sm:$0xff] %v1739
      %1787 = vst [vmem:[#allocation2 + $0x120] sm:$0xff] %v1740
      %1788 = vst [vmem:[#allocation2 + $0x128] sm:$0xff] %v1741
      %1789 = vst [vmem:[#allocation2 + $0x130] sm:$0xff] %v1742
      %1790 = vst [vmem:[#allocation2 + $0x138] sm:$0xff] %v1743
      %1791 = vst [vmem:[#allocation2 + $0x140] sm:$0xff] %v1744
      %1792 = vst [vmem:[#allocation2 + $0x148] sm:$0xff] %v1745
      %1793 = vst [vmem:[#allocation2 + $0x150] sm:$0xff] %v1746
      %1794 = vst [vmem:[#allocation2 + $0x158] sm:$0xff] %v1747
      %1795 = vst [vmem:[#allocation2 + $0x160] sm:$0xff] %v1748
      %1796 = vst [vmem:[#allocation2 + $0x168] sm:$0xff] %v1749
      %1797 = vst [vmem:[#allocation2 + $0x170] sm:$0xff] %v1750
      %p1798 = scmp.eq.s32.totalorder %s19, 2
      // Predicated region
      $region37: #{binary_net_forward.53} parent=31 // pred_check
        %p1799 = pneg %p1798
      $region38: #{binary_net_forward.53} parent=31 // pred_check_branch
        %1801 = sbr.rel (%p1799) target = $region40
      $region39: #{binary_net_forward.53} parent=31 // pred_region
        %v1802 = vld [vmem:[#allocation2] sm:$0xff]
        %v1803 = vld [vmem:[#allocation2 + $0x8] sm:$0xff]
        %v1804 = vld [vmem:[#allocation2 + $0x10] sm:$0xff]
        %v1805 = vld [vmem:[#allocation2 + $0x18] sm:$0xff]
        %v1806 = vld [vmem:[#allocation2 + $0x20] sm:$0xff]
        %v1807 = vld [vmem:[#allocation2 + $0x28] sm:$0xff]
        %v1808 = vld [vmem:[#allocation2 + $0x30] sm:$0xff]
        %v1809 = vld [vmem:[#allocation2 + $0x38] sm:$0xff]
        %v1810 = vld [vmem:[#allocation2 + $0x40] sm:$0xff]
        %v1811 = vld [vmem:[#allocation2 + $0x48] sm:$0xff]
        %v1812 = vld [vmem:[#allocation2 + $0x50] sm:$0xff]
        %v1813 = vld [vmem:[#allocation2 + $0x58] sm:$0xff]
        %v1814 = vld [vmem:[#allocation2 + $0x60] sm:$0xff]
        %v1815 = vld [vmem:[#allocation2 + $0x68] sm:$0xff]
        %v1816 = vld [vmem:[#allocation2 + $0x70] sm:$0xff]
        %v1817 = vld [vmem:[#allocation2 + $0x78] sm:$0xff]
        %v1818 = vld [vmem:[#allocation2 + $0x80] sm:$0xff]
        %v1819 = vld [vmem:[#allocation2 + $0x88] sm:$0xff]
        %v1820 = vld [vmem:[#allocation2 + $0x90] sm:$0xff]
        %v1821 = vld [vmem:[#allocation2 + $0x98] sm:$0xff]
        %v1822 = vld [vmem:[#allocation2 + $0xa0] sm:$0xff]
        %v1823 = vld [vmem:[#allocation2 + $0xa8] sm:$0xff]
        %v1824 = vld [vmem:[#allocation2 + $0xb0] sm:$0xff]
        %v1825 = vld [vmem:[#allocation2 + $0xb8] sm:$0xff]
        %v1826 = vld [vmem:[#allocation2 + $0xc0] sm:$0xff]
        %v1827 = vld [vmem:[#allocation2 + $0xc8] sm:$0xff]
        %v1828 = vld [vmem:[#allocation2 + $0xd0] sm:$0xff]
        %v1829 = vld [vmem:[#allocation2 + $0xd8] sm:$0xff]
        %v1830 = vld [vmem:[#allocation2 + $0xe0] sm:$0xff]
        %v1831 = vld [vmem:[#allocation2 + $0xe8] sm:$0xff]
        %v1832 = vld [vmem:[#allocation2 + $0xf0] sm:$0xff]
        %v1833 = vld [vmem:[#allocation2 + $0xf8] sm:$0xff]
        %v1834 = vld [vmem:[#allocation2 + $0x100] sm:$0xff]
        %v1835 = vld [vmem:[#allocation2 + $0x108] sm:$0xff]
        %v1836 = vld [vmem:[#allocation2 + $0x110] sm:$0xff]
        %v1837 = vld [vmem:[#allocation2 + $0x118] sm:$0xff]
        %v1838 = vld [vmem:[#allocation2 + $0x120] sm:$0xff]
        %v1839 = vld [vmem:[#allocation2 + $0x128] sm:$0xff]
        %v1840 = vld [vmem:[#allocation2 + $0x130] sm:$0xff]
        %v1841 = vld [vmem:[#allocation2 + $0x138] sm:$0xff]
        %v1842 = vld [vmem:[#allocation2 + $0x140] sm:$0xff]
        %v1843 = vld [vmem:[#allocation2 + $0x148] sm:$0xff]
        %v1844 = vld [vmem:[#allocation2 + $0x150] sm:$0xff]
        %v1845 = vld [vmem:[#allocation2 + $0x158] sm:$0xff]
        %v1846 = vld [vmem:[#allocation2 + $0x160] sm:$0xff]
        %v1847 = vld [vmem:[#allocation2 + $0x168] sm:$0xff]
        %v1848 = vld [vmem:[#allocation2 + $0x170] sm:$0xff]
        %v1849 = vld [vmem:[#allocation2 + $0x178] sm:$0xff]
        %v1850 = vld [vmem:[%s2] sm:$0x1]
        %v1852 = vlaneseq
        %v1853 = vshrl.u32 %v1852, 7
        %v1854 = vsub.s32 0, %v1853
        %v1855 = vrot.slane %v1850, %v1854
        %v1857 = vadd.f32 %v1802, %v1855
        %v1858 = vadd.f32 %v1803, %v1855
        %v1859 = vadd.f32 %v1804, %v1855
        %v1860 = vadd.f32 %v1805, %v1855
        %v1861 = vadd.f32 %v1806, %v1855
        %v1862 = vadd.f32 %v1807, %v1855
        %v1863 = vadd.f32 %v1808, %v1855
        %v1864 = vadd.f32 %v1809, %v1855
        %v1865 = vadd.f32 %v1810, %v1855
        %v1866 = vadd.f32 %v1811, %v1855
        %v1867 = vadd.f32 %v1812, %v1855
        %v1868 = vadd.f32 %v1813, %v1855
        %v1869 = vadd.f32 %v1814, %v1855
        %v1870 = vadd.f32 %v1815, %v1855
        %v1871 = vadd.f32 %v1816, %v1855
        %v1872 = vadd.f32 %v1817, %v1855
        %v1873 = vadd.f32 %v1818, %v1855
        %v1874 = vadd.f32 %v1819, %v1855
        %v1875 = vadd.f32 %v1820, %v1855
        %v1876 = vadd.f32 %v1821, %v1855
        %v1877 = vadd.f32 %v1822, %v1855
        %v1878 = vadd.f32 %v1823, %v1855
        %v1879 = vadd.f32 %v1824, %v1855
        %v1880 = vadd.f32 %v1825, %v1855
        %v1881 = vadd.f32 %v1826, %v1855
        %v1882 = vadd.f32 %v1827, %v1855
        %v1883 = vadd.f32 %v1828, %v1855
        %v1884 = vadd.f32 %v1829, %v1855
        %v1885 = vadd.f32 %v1830, %v1855
        %v1886 = vadd.f32 %v1831, %v1855
        %v1887 = vadd.f32 %v1832, %v1855
        %v1888 = vadd.f32 %v1833, %v1855
        %v1889 = vadd.f32 %v1834, %v1855
        %v1890 = vadd.f32 %v1835, %v1855
        %v1891 = vadd.f32 %v1836, %v1855
        %v1892 = vadd.f32 %v1837, %v1855
        %v1893 = vadd.f32 %v1838, %v1855
        %v1894 = vadd.f32 %v1839, %v1855
        %v1895 = vadd.f32 %v1840, %v1855
        %v1896 = vadd.f32 %v1841, %v1855
        %v1897 = vadd.f32 %v1842, %v1855
        %v1898 = vadd.f32 %v1843, %v1855
        %v1899 = vadd.f32 %v1844, %v1855
        %v1900 = vadd.f32 %v1845, %v1855
        %v1901 = vadd.f32 %v1846, %v1855
        %v1902 = vadd.f32 %v1847, %v1855
        %v1903 = vadd.f32 %v1848, %v1855
        %v1904 = vadd.f32 %v1849, %v1855
        %v1905 = vxor.u32 %v1857, 2147483648
        %v1906 = vxor.u32 %v1858, 2147483648
        %v1907 = vxor.u32 %v1859, 2147483648
        %v1908 = vxor.u32 %v1860, 2147483648
        %v1909 = vxor.u32 %v1861, 2147483648
        %v1910 = vxor.u32 %v1862, 2147483648
        %v1911 = vxor.u32 %v1863, 2147483648
        %v1912 = vxor.u32 %v1864, 2147483648
        %v1913 = vxor.u32 %v1865, 2147483648
        %v1914 = vxor.u32 %v1866, 2147483648
        %v1915 = vxor.u32 %v1867, 2147483648
        %v1916 = vxor.u32 %v1868, 2147483648
        %v1917 = vxor.u32 %v1869, 2147483648
        %v1918 = vxor.u32 %v1870, 2147483648
        %v1919 = vxor.u32 %v1871, 2147483648
        %v1920 = vxor.u32 %v1872, 2147483648
        %v1921 = vxor.u32 %v1873, 2147483648
        %v1922 = vxor.u32 %v1874, 2147483648
        %v1923 = vxor.u32 %v1875, 2147483648
        %v1924 = vxor.u32 %v1876, 2147483648
        %v1925 = vxor.u32 %v1877, 2147483648
        %v1926 = vxor.u32 %v1878, 2147483648
        %v1927 = vxor.u32 %v1879, 2147483648
        %v1928 = vxor.u32 %v1880, 2147483648
        %v1929 = vxor.u32 %v1881, 2147483648
        %v1930 = vxor.u32 %v1882, 2147483648
        %v1931 = vxor.u32 %v1883, 2147483648
        %v1932 = vxor.u32 %v1884, 2147483648
        %v1933 = vxor.u32 %v1885, 2147483648
        %v1934 = vxor.u32 %v1886, 2147483648
        %v1935 = vxor.u32 %v1887, 2147483648
        %v1936 = vxor.u32 %v1888, 2147483648
        %v1937 = vxor.u32 %v1889, 2147483648
        %v1938 = vxor.u32 %v1890, 2147483648
        %v1939 = vxor.u32 %v1891, 2147483648
        %v1940 = vxor.u32 %v1892, 2147483648
        %v1941 = vxor.u32 %v1893, 2147483648
        %v1942 = vxor.u32 %v1894, 2147483648
        %v1943 = vxor.u32 %v1895, 2147483648
        %v1944 = vxor.u32 %v1896, 2147483648
        %v1945 = vxor.u32 %v1897, 2147483648
        %v1946 = vxor.u32 %v1898, 2147483648
        %v1947 = vxor.u32 %v1899, 2147483648
        %v1948 = vxor.u32 %v1900, 2147483648
        %v1949 = vxor.u32 %v1901, 2147483648
        %v1950 = vxor.u32 %v1902, 2147483648
        %v1951 = vxor.u32 %v1903, 2147483648
        %v1952 = vxor.u32 %v1904, 2147483648
        %v1953 = vmul.f32 %v1905, 1.442695
        %v1954 = vpow.pop %v1953
        %v1955 = vmul.f32 %v1906, 1.442695
        %v1956 = vpow.pop %v1955
        %v1957 = vmul.f32 %v1907, 1.442695
        %v1958 = vpow.pop %v1957
        %v1959 = vmul.f32 %v1908, 1.442695
        %v1960 = vpow.pop %v1959
        %v1961 = vmul.f32 %v1909, 1.442695
        %v1962 = vpow.pop %v1961
        %v1963 = vmul.f32 %v1910, 1.442695
        %v1964 = vpow.pop %v1963
        %v1965 = vmul.f32 %v1911, 1.442695
        %v1966 = vpow.pop %v1965
        %v1967 = vmul.f32 %v1912, 1.442695
        %v1968 = vpow.pop %v1967
        %v1969 = vmul.f32 %v1913, 1.442695
        %v1970 = vpow.pop %v1969
        %v1971 = vmul.f32 %v1914, 1.442695
        %v1972 = vpow.pop %v1971
        %v1973 = vmul.f32 %v1915, 1.442695
        %v1974 = vpow.pop %v1973
        %v1975 = vmul.f32 %v1916, 1.442695
        %v1976 = vpow.pop %v1975
        %v1977 = vmul.f32 %v1917, 1.442695
        %v1978 = vpow.pop %v1977
        %v1979 = vmul.f32 %v1918, 1.442695
        %v1980 = vpow.pop %v1979
        %v1981 = vmul.f32 %v1919, 1.442695
        %v1982 = vpow.pop %v1981
        %v1983 = vmul.f32 %v1920, 1.442695
        %v1984 = vpow.pop %v1983
        %v1985 = vmul.f32 %v1921, 1.442695
        %v1986 = vpow.pop %v1985
        %v1987 = vmul.f32 %v1922, 1.442695
        %v1988 = vpow.pop %v1987
        %v1989 = vmul.f32 %v1923, 1.442695
        %v1990 = vpow.pop %v1989
        %v1991 = vmul.f32 %v1924, 1.442695
        %v1992 = vpow.pop %v1991
        %v1993 = vmul.f32 %v1925, 1.442695
        %v1994 = vpow.pop %v1993
        %v1995 = vmul.f32 %v1926, 1.442695
        %v1996 = vpow.pop %v1995
        %v1997 = vmul.f32 %v1927, 1.442695
        %v1998 = vpow.pop %v1997
        %v1999 = vmul.f32 %v1928, 1.442695
        %v2000 = vpow.pop %v1999
        %v2001 = vmul.f32 %v1929, 1.442695
        %v2002 = vpow.pop %v2001
        %v2003 = vmul.f32 %v1930, 1.442695
        %v2004 = vpow.pop %v2003
        %v2005 = vmul.f32 %v1931, 1.442695
        %v2006 = vpow.pop %v2005
        %v2007 = vmul.f32 %v1932, 1.442695
        %v2008 = vpow.pop %v2007
        %v2009 = vmul.f32 %v1933, 1.442695
        %v2010 = vpow.pop %v2009
        %v2011 = vmul.f32 %v1934, 1.442695
        %v2012 = vpow.pop %v2011
        %v2013 = vmul.f32 %v1935, 1.442695
        %v2014 = vpow.pop %v2013
        %v2015 = vmul.f32 %v1936, 1.442695
        %v2016 = vpow.pop %v2015
        %v2017 = vmul.f32 %v1937, 1.442695
        %v2018 = vpow.pop %v2017
        %v2019 = vmul.f32 %v1938, 1.442695
        %v2020 = vpow.pop %v2019
        %v2021 = vmul.f32 %v1939, 1.442695
        %v2022 = vpow.pop %v2021
        %v2023 = vmul.f32 %v1940, 1.442695
        %v2024 = vpow.pop %v2023
        %v2025 = vmul.f32 %v1941, 1.442695
        %v2026 = vpow.pop %v2025
        %v2027 = vmul.f32 %v1942, 1.442695
        %v2028 = vpow.pop %v2027
        %v2029 = vmul.f32 %v1943, 1.442695
        %v2030 = vpow.pop %v2029
        %v2031 = vmul.f32 %v1944, 1.442695
        %v2032 = vpow.pop %v2031
        %v2033 = vmul.f32 %v1945, 1.442695
        %v2034 = vpow.pop %v2033
        %v2035 = vmul.f32 %v1946, 1.442695
        %v2036 = vpow.pop %v2035
        %v2037 = vmul.f32 %v1947, 1.442695
        %v2038 = vpow.pop %v2037
        %v2039 = vmul.f32 %v1948, 1.442695
        %v2040 = vpow.pop %v2039
        %v2041 = vmul.f32 %v1949, 1.442695
        %v2042 = vpow.pop %v2041
        %v2043 = vmul.f32 %v1950, 1.442695
        %v2044 = vpow.pop %v2043
        %v2045 = vmul.f32 %v1951, 1.442695
        %v2046 = vpow.pop %v2045
        %v2047 = vmul.f32 %v1952, 1.442695
        %v2048 = vpow.pop %v2047
        %v2049 = vadd.f32 %v1954, 1.0
        %v2050 = vadd.f32 %v1956, 1.0
        %v2051 = vadd.f32 %v1958, 1.0
        %v2052 = vadd.f32 %v1960, 1.0
        %v2053 = vadd.f32 %v1962, 1.0
        %v2054 = vadd.f32 %v1964, 1.0
        %v2055 = vadd.f32 %v1966, 1.0
        %v2056 = vadd.f32 %v1968, 1.0
        %v2057 = vadd.f32 %v1970, 1.0
        %v2058 = vadd.f32 %v1972, 1.0
        %v2059 = vadd.f32 %v1974, 1.0
        %v2060 = vadd.f32 %v1976, 1.0
        %v2061 = vadd.f32 %v1978, 1.0
        %v2062 = vadd.f32 %v1980, 1.0
        %v2063 = vadd.f32 %v1982, 1.0
        %v2064 = vadd.f32 %v1984, 1.0
        %v2065 = vadd.f32 %v1986, 1.0
        %v2066 = vadd.f32 %v1988, 1.0
        %v2067 = vadd.f32 %v1990, 1.0
        %v2068 = vadd.f32 %v1992, 1.0
        %v2069 = vadd.f32 %v1994, 1.0
        %v2070 = vadd.f32 %v1996, 1.0
        %v2071 = vadd.f32 %v1998, 1.0
        %v2072 = vadd.f32 %v2000, 1.0
        %v2073 = vadd.f32 %v2002, 1.0
        %v2074 = vadd.f32 %v2004, 1.0
        %v2075 = vadd.f32 %v2006, 1.0
        %v2076 = vadd.f32 %v2008, 1.0
        %v2077 = vadd.f32 %v2010, 1.0
        %v2078 = vadd.f32 %v2012, 1.0
        %v2079 = vadd.f32 %v2014, 1.0
        %v2080 = vadd.f32 %v2016, 1.0
        %v2081 = vadd.f32 %v2018, 1.0
        %v2082 = vadd.f32 %v2020, 1.0
        %v2083 = vadd.f32 %v2022, 1.0
        %v2084 = vadd.f32 %v2024, 1.0
        %v2085 = vadd.f32 %v2026, 1.0
        %v2086 = vadd.f32 %v2028, 1.0
        %v2087 = vadd.f32 %v2030, 1.0
        %v2088 = vadd.f32 %v2032, 1.0
        %v2089 = vadd.f32 %v2034, 1.0
        %v2090 = vadd.f32 %v2036, 1.0
        %v2091 = vadd.f32 %v2038, 1.0
        %v2092 = vadd.f32 %v2040, 1.0
        %v2093 = vadd.f32 %v2042, 1.0
        %v2094 = vadd.f32 %v2044, 1.0
        %v2095 = vadd.f32 %v2046, 1.0
        %v2096 = vadd.f32 %v2048, 1.0
        %v2097 = vrcp.pop %v2049
        %v2098 = vmul.f32 1.0, %v2097
        %v2099 = vrcp.pop %v2050
        %v2100 = vmul.f32 1.0, %v2099
        %v2101 = vrcp.pop %v2051
        %v2102 = vmul.f32 1.0, %v2101
        %v2103 = vrcp.pop %v2052
        %v2104 = vmul.f32 1.0, %v2103
        %v2105 = vrcp.pop %v2053
        %v2106 = vmul.f32 1.0, %v2105
        %v2107 = vrcp.pop %v2054
        %v2108 = vmul.f32 1.0, %v2107
        %v2109 = vrcp.pop %v2055
        %v2110 = vmul.f32 1.0, %v2109
        %v2111 = vrcp.pop %v2056
        %v2112 = vmul.f32 1.0, %v2111
        %v2113 = vrcp.pop %v2057
        %v2114 = vmul.f32 1.0, %v2113
        %v2115 = vrcp.pop %v2058
        %v2116 = vmul.f32 1.0, %v2115
        %v2117 = vrcp.pop %v2059
        %v2118 = vmul.f32 1.0, %v2117
        %v2119 = vrcp.pop %v2060
        %v2120 = vmul.f32 1.0, %v2119
        %v2121 = vrcp.pop %v2061
        %v2122 = vmul.f32 1.0, %v2121
        %v2123 = vrcp.pop %v2062
        %v2124 = vmul.f32 1.0, %v2123
        %v2125 = vrcp.pop %v2063
        %v2126 = vmul.f32 1.0, %v2125
        %v2127 = vrcp.pop %v2064
        %v2128 = vmul.f32 1.0, %v2127
        %v2129 = vrcp.pop %v2065
        %v2130 = vmul.f32 1.0, %v2129
        %v2131 = vrcp.pop %v2066
        %v2132 = vmul.f32 1.0, %v2131
        %v2133 = vrcp.pop %v2067
        %v2134 = vmul.f32 1.0, %v2133
        %v2135 = vrcp.pop %v2068
        %v2136 = vmul.f32 1.0, %v2135
        %v2137 = vrcp.pop %v2069
        %v2138 = vmul.f32 1.0, %v2137
        %v2139 = vrcp.pop %v2070
        %v2140 = vmul.f32 1.0, %v2139
        %v2141 = vrcp.pop %v2071
        %v2142 = vmul.f32 1.0, %v2141
        %v2143 = vrcp.pop %v2072
        %v2144 = vmul.f32 1.0, %v2143
        %v2145 = vrcp.pop %v2073
        %v2146 = vmul.f32 1.0, %v2145
        %v2147 = vrcp.pop %v2074
        %v2148 = vmul.f32 1.0, %v2147
        %v2149 = vrcp.pop %v2075
        %v2150 = vmul.f32 1.0, %v2149
        %v2151 = vrcp.pop %v2076
        %v2152 = vmul.f32 1.0, %v2151
        %v2153 = vrcp.pop %v2077
        %v2154 = vmul.f32 1.0, %v2153
        %v2155 = vrcp.pop %v2078
        %v2156 = vmul.f32 1.0, %v2155
        %v2157 = vrcp.pop %v2079
        %v2158 = vmul.f32 1.0, %v2157
        %v2159 = vrcp.pop %v2080
        %v2160 = vmul.f32 1.0, %v2159
        %v2161 = vrcp.pop %v2081
        %v2162 = vmul.f32 1.0, %v2161
        %v2163 = vrcp.pop %v2082
        %v2164 = vmul.f32 1.0, %v2163
        %v2165 = vrcp.pop %v2083
        %v2166 = vmul.f32 1.0, %v2165
        %v2167 = vrcp.pop %v2084
        %v2168 = vmul.f32 1.0, %v2167
        %v2169 = vrcp.pop %v2085
        %v2170 = vmul.f32 1.0, %v2169
        %v2171 = vrcp.pop %v2086
        %v2172 = vmul.f32 1.0, %v2171
        %v2173 = vrcp.pop %v2087
        %v2174 = vmul.f32 1.0, %v2173
        %v2175 = vrcp.pop %v2088
        %v2176 = vmul.f32 1.0, %v2175
        %v2177 = vrcp.pop %v2089
        %v2178 = vmul.f32 1.0, %v2177
        %v2179 = vrcp.pop %v2090
        %v2180 = vmul.f32 1.0, %v2179
        %v2181 = vrcp.pop %v2091
        %v2182 = vmul.f32 1.0, %v2181
        %v2183 = vrcp.pop %v2092
        %v2184 = vmul.f32 1.0, %v2183
        %v2185 = vrcp.pop %v2093
        %v2186 = vmul.f32 1.0, %v2185
        %v2187 = vrcp.pop %v2094
        %v2188 = vmul.f32 1.0, %v2187
        %v2189 = vrcp.pop %v2095
        %v2190 = vmul.f32 1.0, %v2189
        %v2191 = vrcp.pop %v2096
        %v2192 = vmul.f32 1.0, %v2191
        %2193 = vst [vmem:[%s218] sm:$0xff] %v2098
        %2194 = vst [vmem:[%s218 + $0x8] sm:$0xff] %v2100
        %2195 = vst [vmem:[%s218 + $0x10] sm:$0xff] %v2102
        %2196 = vst [vmem:[%s218 + $0x18] sm:$0xff] %v2104
        %2197 = vst [vmem:[%s218 + $0x20] sm:$0xff] %v2106
        %2198 = vst [vmem:[%s218 + $0x28] sm:$0xff] %v2108
        %2199 = vst [vmem:[%s218 + $0x30] sm:$0xff] %v2110
        %2200 = vst [vmem:[%s218 + $0x38] sm:$0xff] %v2112
        %2201 = vst [vmem:[%s218 + $0x40] sm:$0xff] %v2114
        %2202 = vst [vmem:[%s218 + $0x48] sm:$0xff] %v2116
        %2203 = vst [vmem:[%s218 + $0x50] sm:$0xff] %v2118
        %2204 = vst [vmem:[%s218 + $0x58] sm:$0xff] %v2120
        %2205 = vst [vmem:[%s218 + $0x60] sm:$0xff] %v2122
        %2206 = vst [vmem:[%s218 + $0x68] sm:$0xff] %v2124
        %2207 = vst [vmem:[%s218 + $0x70] sm:$0xff] %v2126
        %2208 = vst [vmem:[%s218 + $0x78] sm:$0xff] %v2128
        %2209 = vst [vmem:[%s218 + $0x80] sm:$0xff] %v2130
        %2210 = vst [vmem:[%s218 + $0x88] sm:$0xff] %v2132
        %2211 = vst [vmem:[%s218 + $0x90] sm:$0xff] %v2134
        %2212 = vst [vmem:[%s218 + $0x98] sm:$0xff] %v2136
        %2213 = vst [vmem:[%s218 + $0xa0] sm:$0xff] %v2138
        %2214 = vst [vmem:[%s218 + $0xa8] sm:$0xff] %v2140
        %2215 = vst [vmem:[%s218 + $0xb0] sm:$0xff] %v2142
        %2216 = vst [vmem:[%s218 + $0xb8] sm:$0xff] %v2144
        %2217 = vst [vmem:[%s218 + $0xc0] sm:$0xff] %v2146
        %2218 = vst [vmem:[%s218 + $0xc8] sm:$0xff] %v2148
        %2219 = vst [vmem:[%s218 + $0xd0] sm:$0xff] %v2150
        %2220 = vst [vmem:[%s218 + $0xd8] sm:$0xff] %v2152
        %2221 = vst [vmem:[%s218 + $0xe0] sm:$0xff] %v2154
        %2222 = vst [vmem:[%s218 + $0xe8] sm:$0xff] %v2156
        %2223 = vst [vmem:[%s218 + $0xf0] sm:$0xff] %v2158
        %2224 = vst [vmem:[%s218 + $0xf8] sm:$0xff] %v2160
        %2225 = vst [vmem:[%s218 + $0x100] sm:$0xff] %v2162
        %2226 = vst [vmem:[%s218 + $0x108] sm:$0xff] %v2164
        %2227 = vst [vmem:[%s218 + $0x110] sm:$0xff] %v2166
        %2228 = vst [vmem:[%s218 + $0x118] sm:$0xff] %v2168
        %2229 = vst [vmem:[%s218 + $0x120] sm:$0xff] %v2170
        %2230 = vst [vmem:[%s218 + $0x128] sm:$0xff] %v2172
        %2231 = vst [vmem:[%s218 + $0x130] sm:$0xff] %v2174
        %2232 = vst [vmem:[%s218 + $0x138] sm:$0xff] %v2176
        %2233 = vst [vmem:[%s218 + $0x140] sm:$0xff] %v2178
        %2234 = vst [vmem:[%s218 + $0x148] sm:$0xff] %v2180
        %2235 = vst [vmem:[%s218 + $0x150] sm:$0xff] %v2182
        %2236 = vst [vmem:[%s218 + $0x158] sm:$0xff] %v2184
        %2237 = vst [vmem:[%s218 + $0x160] sm:$0xff] %v2186
        %2238 = vst [vmem:[%s218 + $0x168] sm:$0xff] %v2188
        %2239 = vst [vmem:[%s218 + $0x170] sm:$0xff] %v2190
        %2240 = vst [vmem:[%s218 + $0x178] sm:$0xff] %v2192
      $region40: #{binary_net_forward.53} parent=31 // pred_fallthru
        _
      %s2241 = smul.u32 48, %s18
      %p2242 = scmp.lt.s32.totalorder %s2241, 47
      %s2243 = scalar_select %p2242, %s2241, 47
      %s2244 = smul.addr %s2243, 8
      %s2245 = scalar_lea.vmem %s3, %s2244
      // Predicated region
      $region41: #{binary_net_forward.53} parent=31 // pred_check
        %p2246 = pneg %p119
      $region42: #{binary_net_forward.53} parent=31 // pred_check_branch
        %2248 = sbr.rel (%p2246) target = $region44
      $region43: #{binary_net_forward.53} parent=31 // pred_region
        %s2249 = smul.u32 48, %s18
      $region44: #{binary_net_forward.53} parent=31 // pred_fallthru
        _
      // Predicated region
      $region45: #{binary_net_forward.53} parent=31 // pred_check
        %p2250 = pneg %p119
      $region46: #{binary_net_forward.53} parent=31 // pred_check_branch
        %2252 = sbr.rel (%p2250) target = $region48
      $region47: #{binary_net_forward.53} parent=31 // pred_region
        %s2253 = smul.u32 48, %s18
        %p2254 = scmp.lt.s32.totalorder %s2253, 47
        %s2255 = scalar_select %p2254, %s2253, 47
        %s2256 = smul.addr %s2255, 8
        %s2257 = scalar_lea.vmem %s3, %s2256
      $region48: #{binary_net_forward.53} parent=31 // pred_fallthru
        _
    $region32: #{binary_net_forward.53} parent=5 // pred_fallthru
      _
    %p2258 = scmp.le.s32.totalorder 2, %s9
    // Predicated region
    $region49: #{binary_net_forward.53} parent=5 // pred_check
      %p2259 = pneg %p2258
    $region50: #{binary_net_forward.53} parent=5 // pred_check_branch
      %2261 = sbr.rel (%p2259) target = $region52
    $region51: #{binary_net_forward.53} parent=5 // pred_region
      %s2262 = ssub.s32 %s9, 2
    $region52: #{binary_net_forward.53} parent=5 // pred_fallthru
      _
  $region6: #{binary_net_forward.53} parent=0 // loop_footer
    %s13 = sadd.s32 1, %s9
  $region7: #{binary_net_forward.53} parent=0 // loop_footer_branch
    %8 = sbr.rel target = $region3
  $region8: #{binary_net_forward.53} parent=0 // loop_exit
    _

</llo_original>
